<compile_context>
chip_gen: v6e
topology: v6e:2x2x1
jax: 0.10.0
libtpu: 0.0.40
codegen_flags: <defaults>
</compile_context>

<pallas_src>
import functools

import jax
import jax.numpy as jnp
from jax.experimental import pallas as pl
from jax.experimental.pallas import tpu as pltpu

LRELU_SLOPE = 0.2
BN_EPS = 1e-5


# ----------------------------------------------------------------------------
# Helpers
# ----------------------------------------------------------------------------
def _pack_of(c_out):
    """Lane-packing factor so that pack * c_out == 128 (1 if not possible)."""
    return 128 // c_out if (c_out <= 128 and 128 % c_out == 0) else 1


def _pick_tile(m, cap):
    """Largest divisor of m that is <= cap (no silent single-giant-block)."""
    cap = min(cap, m)
    for t in range(cap, 0, -1):
        if m % t == 0:
            return t
    return m


def _im2col_nhwc(x, kh, kw, stride, pad):
    """x: (B, H, W, C) NHWC -> (B*Ho*Wo, kh*kw*C) with K ordered (i, j, c)."""
    B, H, W, C = x.shape
    xp = jnp.pad(x, ((0, 0), (pad, pad), (pad, pad), (0, 0)))
    Ho = (H + 2 * pad - kh) // stride + 1
    Wo = (W + 2 * pad - kw) // stride + 1
    if Ho == 1 and Wo == 1:
        # single output position: the patch is just the top-left kh x kw window
        return xp[:, :kh, :kw, :].reshape(B, kh * kw * C), Ho, Wo
    cols = []
    for i in range(kh):
        for j in range(kw):
            cols.append(xp[:, i:i + stride * Ho:stride, j:j + stride * Wo:stride, :])
    p = jnp.stack(cols, axis=3)                      # (B, Ho, Wo, kh*kw, C)
    p = p.reshape(B * Ho * Wo, kh * kw * C)          # K ordered (i, j, c)
    return p, Ho, Wo


# ----------------------------------------------------------------------------
# Pallas kernels
# ----------------------------------------------------------------------------
def _matmul_lrelu_kernel(p_ref, w_ref, o_ref):
    # bf16 operands, fp32 accumulation; fp32 epilogue; bf16 store (lane-dense).
    y = jnp.dot(p_ref[...], w_ref[...], preferred_element_type=jnp.float32)
    y = jnp.where(y > 0, y, LRELU_SLOPE * y)
    o_ref[...] = y.astype(o_ref.dtype)


def _matmul_bn_lrelu_kernel(p_ref, w_ref, g_ref, b_ref, o_ref,
                            acc_ref, ssum_ref, ssq_ref,
                            *, tile_m, pack, n_ch, m_total):
    """Streamed conv + exact batch-stat BN + LeakyReLU on a lane-packed layout.

    grid axis 0 tiles M ('arbitrary'); the fp32 pre-activation block (Mp, 128)
    lives in VMEM scratch, per-lane sum / sum-of-squares live in (1, 128)
    scratch; the final grid step combines the per-group statistics (XLU lane
    rolls), normalizes, applies LeakyReLU, and does ONE lane-dense bf16 store
    of the whole output block.
    """
    i = pl.program_id(0)

    @pl.when(i == 0)
    def _init():
        ssum_ref[...] = jnp.zeros_like(ssum_ref)
        ssq_ref[...] = jnp.zeros_like(ssq_ref)

    y = jnp.dot(p_ref[...], w_ref[...], preferred_element_type=jnp.float32)
    ssum_ref[...] += jnp.sum(y, axis=0, keepdims=True)
    ssq_ref[...] += jnp.sum(y * y, axis=0, keepdims=True)
    row0 = pl.multiple_of(i * tile_m, tile_m)
    acc_ref[pl.ds(row0, tile_m), :] = y

    @pl.when(i == pl.num_programs(0) - 1)
    def _finalize():
        # Cross-group combine (+ broadcast back) over the `pack` channel groups
        # via lane rotations on the XLU: lanes g*n_ch + c all hold channel c.
        s = ssum_ref[...]
        sq = ssq_ref[...]
        for g in range(1, pack):
            s = s + pltpu.roll(ssum_ref[...], shift=g * n_ch, axis=1)
            sq = sq + pltpu.roll(ssq_ref[...], shift=g * n_ch, axis=1)
        mean = s / m_total
        var = sq / m_total - mean * mean          # biased variance (PyTorch BN fwd)
        scale = jax.lax.rsqrt(var + BN_EPS) * g_ref[...]
        shift = b_ref[...] - mean * scale
        z = acc_ref[...] * scale + shift
        z = jnp.where(z > 0, z, LRELU_SLOPE * z)
        o_ref[...] = z.astype(o_ref.dtype)


def _conv4_bn_lrelu_fc_kernel(p_ref, w_ref, g_ref, b_ref, fw_ref, fb_ref,
                              o_ref, acc_ref):
    """K-tiled GEMV for the 16x16/16 conv + BN + LeakyReLU + fused Linear."""
    k = pl.program_id(0)

    @pl.when(k == 0)
    def _init():
        acc_ref[...] = jnp.zeros_like(acc_ref)

    acc_ref[...] += jnp.dot(p_ref[...], w_ref[...],
                            preferred_element_type=jnp.float32)

    @pl.when(k == pl.num_programs(0) - 1)
    def _finalize():
        y = acc_ref[...]                                    # (B, C4) fp32
        mean = jnp.mean(y, axis=0, keepdims=True)           # batch stats (training fwd)
        var = jnp.mean(jnp.square(y - mean), axis=0, keepdims=True)
        h = (y - mean) * jax.lax.rsqrt(var + BN_EPS) * g_ref[...] + b_ref[...]
        h = jnp.where(h > 0, h, LRELU_SLOPE * h)
        o_ref[...] = (jnp.dot(h, fw_ref[...], preferred_element_type=jnp.float32)
                      + fb_ref[...])


# ----------------------------------------------------------------------------
# Pallas wrappers
# ----------------------------------------------------------------------------
def conv_lrelu_packed(patches, w_big, pack, n_out, *, tile_cap=256):
    """Conv (im2col matmul, lane-packed) + LeakyReLU, M-tiled ('parallel')."""
    M, K = patches.shape
    assert M % pack == 0, (M, pack)
    Mp, Kp = M // pack, K * pack
    Np = w_big.shape[1]                     # = pack * n_out (128 when packed)
    pp = patches.reshape(Mp, Kp)            # contiguous view, zero-copy
    tm = _pick_tile(Mp, tile_cap)
    out = pl.pallas_call(
        _matmul_lrelu_kernel,
        out_shape=jax.ShapeDtypeStruct((Mp, Np), jnp.bfloat16),
        grid_spec=pltpu.PrefetchScalarGridSpec(
            num_scalar_prefetch=0,
            grid=(Mp // tm,),
            in_specs=[
                pl.BlockSpec((tm, Kp), lambda i: (i, 0)),
                pl.BlockSpec((Kp, Np), lambda i: (0, 0)),
            ],
            out_specs=pl.BlockSpec((tm, Np), lambda i: (i, 0)),
        ),
        compiler_params=pltpu.CompilerParams(dimension_semantics=("parallel",)),
    )(pp, w_big)
    return out.reshape(M, n_out)


def conv_bn_lrelu_packed(patches, w_big, gamma_t, beta_t, pack, n_out,
                         *, tile_cap=128):
    """Conv + BatchNorm(batch stats) + LeakyReLU with streamed patch tiles."""
    M, K = patches.shape
    assert M % pack == 0, (M, pack)
    Mp, Kp = M // pack, K * pack
    Np = w_big.shape[1]
    pp = patches.reshape(Mp, Kp)
    tm = _pick_tile(Mp, tile_cap)
    kernel = functools.partial(_matmul_bn_lrelu_kernel,
                               tile_m=tm, pack=pack, n_ch=n_out,
                               m_total=float(M))
    out = pl.pallas_call(
        kernel,
        out_shape=jax.ShapeDtypeStruct((Mp, Np), jnp.bfloat16),
        grid_spec=pltpu.PrefetchScalarGridSpec(
            num_scalar_prefetch=0,
            grid=(Mp // tm,),
            in_specs=[
                pl.BlockSpec((tm, Kp), lambda i: (i, 0)),
                pl.BlockSpec((Kp, Np), lambda i: (0, 0)),
                pl.BlockSpec((1, Np), lambda i: (0, 0)),
                pl.BlockSpec((1, Np), lambda i: (0, 0)),
            ],
            # Output block resident in VMEM across all M tiles; written exactly
            # once (single full-lane bf16 store) on the last grid step.
            out_specs=pl.BlockSpec((Mp, Np), lambda i: (0, 0)),
            scratch_shapes=[pltpu.VMEM((Mp, Np), jnp.float32),
                            pltpu.VMEM((1, Np), jnp.float32),
                            pltpu.VMEM((1, Np), jnp.float32)],
        ),
        compiler_params=pltpu.CompilerParams(dimension_semantics=("arbitrary",)),
    )(pp, w_big, gamma_t, beta_t)
    return out.reshape(M, n_out)


def conv4_bn_lrelu_fc(patches, w_mat, gamma, beta, fc_w, fc_b, *, tk_cap=2048):
    """Layer-4 GEMV (K-tiled reduction) + BN + LeakyReLU + fused Linear."""
    Bm, K = patches.shape
    C4 = w_mat.shape[1]
    n_z = fc_w.shape[1]
    tk = _pick_tile(K, tk_cap)
    return pl.pallas_call(
        _conv4_bn_lrelu_fc_kernel,
        out_shape=jax.ShapeDtypeStruct((Bm, n_z), jnp.float32),
        grid_spec=pltpu.PrefetchScalarGridSpec(
            num_scalar_prefetch=0,
            grid=(K // tk,),
            in_specs=[
                pl.BlockSpec((Bm, tk), lambda k: (0, k)),
                pl.BlockSpec((tk, C4), lambda k: (k, 0)),
                pl.BlockSpec((1, C4), lambda k: (0, 0)),
                pl.BlockSpec((1, C4), lambda k: (0, 0)),
                pl.BlockSpec((C4, n_z), lambda k: (0, 0)),
                pl.BlockSpec((1, n_z), lambda k: (0, 0)),
            ],
            out_specs=pl.BlockSpec((Bm, n_z), lambda k: (0, 0)),
            scratch_shapes=[pltpu.VMEM((Bm, C4), jnp.float32)],
        ),
        compiler_params=pltpu.CompilerParams(dimension_semantics=("arbitrary",)),
    )(patches, w_mat, gamma.reshape(1, C4), beta.reshape(1, C4),
      fc_w, fc_b.reshape(1, n_z))


# ----------------------------------------------------------------------------
# Encoder forward (mirrors the nn.Sequential in the PyTorch module)
# ----------------------------------------------------------------------------
def encoder_forward(x_nchw, w, *, dim_h):
    B = x_nchw.shape[0]
    # NHWC + bf16 once at the input; everything downstream stays NHWC/bf16.
    x = jnp.transpose(x_nchw, (0, 2, 3, 1)).astype(jnp.bfloat16)
    c1, c2, c3 = dim_h, dim_h * 2, dim_h * 4

    # Conv2d(n_channel, dim_h, 4, 2, 1, bias=False) + LeakyReLU(0.2)
    p, Ho, Wo = _im2col_nhwc(x, 4, 4, 2, 1)
    y = conv_lrelu_packed(p, w["w1_big"], _pack_of(c1), c1)
    x = y.reshape(B, Ho, Wo, c1)

    # Conv2d(dim_h, dim_h*2, 4, 2, 1) + BatchNorm2d + LeakyReLU(0.2)
    p, Ho, Wo = _im2col_nhwc(x, 4, 4, 2, 1)
    y = conv_bn_lrelu_packed(p, w["w2_big"], w["g2_t"], w["b2_t"], _pack_of(c2), c2)
    x = y.reshape(B, Ho, Wo, c2)

    # Conv2d(dim_h*2, dim_h*4, 4, 2, 1) + BatchNorm2d + LeakyReLU(0.2)
    p, Ho, Wo = _im2col_nhwc(x, 4, 4, 2, 1)
    y = conv_bn_lrelu_packed(p, w["w3_big"], w["g3_t"], w["b3_t"], _pack_of(c3), c3)
    x = y.reshape(B, Ho, Wo, c3)

    # Conv2d(dim_h*4, dim_h*8, 16, 16, 1) + BN + LeakyReLU, then squeeze + fc,
    # all fused into one K-tiled kernel producing (B, n_z) directly.
    p, Ho, Wo = _im2col_nhwc(x, 16, 16, 16, 1)
    assert Ho == 1 and Wo == 1
    return conv4_bn_lrelu_fc(p, w["w4_mat"], w["g4"], w["b4"],
                             w["fc_w"], w["fc_b"])


# ----------------------------------------------------------------------------
# Parameters: PyTorch-layout init + packing into kernel-ready matrices
# ----------------------------------------------------------------------------
def init_torch_params(key, n_channel, dim_h, n_z):
    ks = jax.random.split(key, 6)

    def conv_w(k, cout, cin, kh, kw):
        scale = (cin * kh * kw) ** -0.5
        return jax.random.normal(k, (cout, cin, kh, kw), jnp.float32) * scale

    return {
        "conv1_w": conv_w(ks[0], dim_h, n_channel, 4, 4),
        "conv2_w": conv_w(ks[1], dim_h * 2, dim_h, 4, 4),
        "bn2_g": jnp.ones((dim_h * 2,), jnp.float32),
        "bn2_b": jnp.zeros((dim_h * 2,), jnp.float32),
        "conv3_w": conv_w(ks[2], dim_h * 4, dim_h * 2, 4, 4),
        "bn3_g": jnp.ones((dim_h * 4,), jnp.float32),
        "bn3_b": jnp.zeros((dim_h * 4,), jnp.float32),
        "conv4_w": conv_w(ks[3], dim_h * 8, dim_h * 4, 16, 16),
        "bn4_g": jnp.ones((dim_h * 8,), jnp.float32),
        "bn4_b": jnp.zeros((dim_h * 8,), jnp.float32),
        "fc_w": jax.random.normal(ks[4], (n_z, dim_h * 8), jnp.float32) * 0.05,
        "fc_b": jax.random.normal(ks[5], (n_z,), jnp.float32) * 0.05,
    }


def _conv_w_to_mat(w):
    # torch (Cout, Cin, kh, kw) -> (kh*kw*Cin, Cout), matching NHWC im2col K order.
    cout, cin, kh, kw = w.shape
    return jnp.transpose(w, (2, 3, 1, 0)).reshape(kh * kw * cin, cout)


def pack_params(raw, dim_h):
    def packed_conv(name, cout):
        pack = _pack_of(cout)
        wm = _conv_w_to_mat(raw[name])
        if pack > 1:  # block-diagonal expansion -> lane-dense (…,128) outputs
            wm = jnp.kron(jnp.eye(pack, dtype=wm.dtype), wm)
        return wm.astype(jnp.bfloat16), pack

    w1, _ = packed_conv("conv1_w", dim_h)
    w2, p2 = packed_conv("conv2_w", dim_h * 2)
    w3, p3 = packed_conv("conv3_w", dim_h * 4)
    return {
        "w1_big": w1,
        "w2_big": w2,
        "g2_t": jnp.tile(raw["bn2_g"], p2).reshape(1, -1),
        "b2_t": jnp.tile(raw["bn2_b"], p2).reshape(1, -1),
        "w3_big": w3,
        "g3_t": jnp.tile(raw["bn3_g"], p3).reshape(1, -1),
        "b3_t": jnp.tile(raw["bn3_b"], p3).reshape(1, -1),
        "w4_mat": _conv_w_to_mat(raw["conv4_w"]).astype(jnp.bfloat16),
        "g4": raw["bn4_g"].reshape(1, -1),
        "b4": raw["bn4_b"].reshape(1, -1),
        "fc_w": raw["fc_w"].T,                 # (dim_h*8, n_z), fp32
        "fc_b": raw["fc_b"].reshape(1, -1),
    }


if __name__ == "__main__":
    # Small channel/latent dims; spatial 128 is the smallest size that reaches
    # the final 16x16-stride-16 conv with a 1x1 output, as the module's
    # squeeze + Linear(dim_h*8, n_z) assumes.
    n_channel, dim_h, n_z = 3, 8, 8
    B, H, W = 2, 128, 128

    key = jax.random.PRNGKey(0)
    kx, kp = jax.random.split(key)
    x = jax.random.normal(kx, (B, n_channel, H, W), jnp.float32)
    weights = pack_params(init_torch_params(kp, n_channel, dim_h, n_z), dim_h)

    fwd = jax.jit(functools.partial(encoder_forward, dim_h=dim_h))
    out = jax.block_until_ready(fwd(x, weights))

    assert out.shape == (B, n_z), out.shape
    assert bool(jnp.all(jnp.isfinite(out)))
    print("KERNEL_OK")
</pallas_src>

<mosaic_0001>
module attributes {stable_mosaic.version = 11 : i64} {
  func.func @_matmul_lrelu_kernel(%arg0: i32, %arg1: memref<256x768xbf16, #tpu.memory_space<vmem>>, %arg2: memref<768x128xbf16, #tpu.memory_space<vmem>>, %arg3: memref<256x128xbf16, #tpu.memory_space<vmem>>) attributes {dimension_semantics = [#tpu.dimension_semantics<parallel>], iteration_bounds = array<i64: 2>, scalar_prefetch = 0 : i64, scratch_operands = 0 : i64, tpu.core_type = #tpu.core_type<tc>, window_params = [{transform_indices = @transform_0, window_bounds = array<i64: 256, 768>}, {pipeline_mode = #tpu.pipeline_mode<synchronous>, transform_indices = @transform_1, window_bounds = array<i64: 768, 128>}, {transform_indices = @transform_2, window_bounds = array<i64: 256, 128>}]} {
    %c0 = arith.constant 0 : index
    %c0_0 = arith.constant 0 : index
    %0 = vector.load %arg1[%c0, %c0_0] : memref<256x768xbf16, #tpu.memory_space<vmem>>, vector<256x768xbf16>
    %c0_1 = arith.constant 0 : index
    %c0_2 = arith.constant 0 : index
    %1 = vector.load %arg2[%c0_1, %c0_2] : memref<768x128xbf16, #tpu.memory_space<vmem>>, vector<768x128xbf16>
    %cst = arith.constant dense<0.000000e+00> : vector<256x128xf32>
    %2 = tpu.matmul %0, %1, %cst {dimension_numbers = #tpu.dot_dimension_numbers<[1], [0], [0], [1], [0, 0, 1, 1], [], []>} : vector<256x768xbf16>, vector<768x128xbf16>, vector<256x128xf32> -> vector<256x128xf32>
    %cst_3 = arith.constant 0.000000e+00 : f32
    %3 = vector.broadcast %cst_3 : f32 to vector<256x128xf32>
    %4 = arith.cmpf ogt, %2, %3 : vector<256x128xf32>
    %cst_4 = arith.constant 2.000000e-01 : f32
    %5 = vector.broadcast %cst_4 : f32 to vector<256x128xf32>
    %6 = arith.mulf %5, %2 : vector<256x128xf32>
    %7 = arith.select %4, %2, %6 : vector<256x128xi1>, vector<256x128xf32>
    %8 = arith.truncf %7 : vector<256x128xf32> to vector<256x128xbf16>
    %c0_5 = arith.constant 0 : index
    %c0_6 = arith.constant 0 : index
    %9 = vector.load %arg3[%c0_5, %c0_6] : memref<256x128xbf16, #tpu.memory_space<vmem>>, vector<256x128xbf16>
    tpu.vector_store %arg3[%c0_5, %c0_6], %8 {strides = array<i32>} : memref<256x128xbf16, #tpu.memory_space<vmem>>, vector<256x128xbf16>,
    return
  }
  func.func @transform_0(%arg0: i32) -> (i32, i32) {
    %c0_i32 = arith.constant 0 : i32
    %c0_i32_0 = arith.constant 0 : i32
    return %arg0, %c0_i32 : i32, i32
  }
  func.func @transform_1(%arg0: i32) -> (i32, i32) {
    %c0_i32 = arith.constant 0 : i32
    %c0_i32_0 = arith.constant 0 : i32
    %c0_i32_1 = arith.constant 0 : i32
    return %c0_i32, %c0_i32_0 : i32, i32
  }
  func.func @transform_2(%arg0: i32) -> (i32, i32) {
    %c0_i32 = arith.constant 0 : i32
    %c0_i32_0 = arith.constant 0 : i32
    return %arg0, %c0_i32 : i32, i32
  }
}

module attributes {stable_mosaic.version = 11 : i64} {
  func.func @_matmul_bn_lrelu_kernel(%arg0: i32, %arg1: memref<128x1024xbf16, #tpu.memory_space<vmem>>, %arg2: memref<1024x128xbf16, #tpu.memory_space<vmem>>, %arg3: memref<1x128xf32, #tpu.memory_space<vmem>>, %arg4: memref<1x128xf32, #tpu.memory_space<vmem>>, %arg5: memref<256x128xbf16, #tpu.memory_space<vmem>>, %arg6: memref<256x128xf32, #tpu.memory_space<vmem>>, %arg7: memref<1x128xf32, #tpu.memory_space<vmem>>, %arg8: memref<1x128xf32, #tpu.memory_space<vmem>>) attributes {dimension_semantics = [#tpu.dimension_semantics<arbitrary>], iteration_bounds = array<i64: 2>, scalar_prefetch = 0 : i64, scratch_operands = 3 : i64, tpu.core_type = #tpu.core_type<tc>, window_params = [{transform_indices = @transform_0, window_bounds = array<i64: 128, 1024>}, {pipeline_mode = #tpu.pipeline_mode<synchronous>, transform_indices = @transform_1, window_bounds = array<i64: 1024, 128>}, {pipeline_mode = #tpu.pipeline_mode<synchronous>, transform_indices = @transform_2, window_bounds = array<i64: 1, 128>}, {pipeline_mode = #tpu.pipeline_mode<synchronous>, transform_indices = @transform_3, window_bounds = array<i64: 1, 128>}, {pipeline_mode = #tpu.pipeline_mode<synchronous>, transform_indices = @transform_4, window_bounds = array<i64: 256, 128>}]} {
    %c0_i32 = arith.constant 0 : i32
    %0 = arith.cmpi eq, %arg0, %c0_i32 : i32
    %1 = arith.extui %0 : i1 to i32
    %c0_i32_0 = arith.constant 0 : i32
    %2 = arith.cmpi ne, %1, %c0_i32_0 : i32
    scf.if %2 {
      %cst_16 = arith.constant 0.000000e+00 : f32
      %24 = vector.broadcast %cst_16 : f32 to vector<1x128xf32>
      %c0_17 = arith.constant 0 : index
      %c0_18 = arith.constant 0 : index
      %25 = vector.load %arg7[%c0_17, %c0_18] : memref<1x128xf32, #tpu.memory_space<vmem>>, vector<1x128xf32>
      tpu.vector_store %arg7[%c0_17, %c0_18], %24 {strides = array<i32>} : memref<1x128xf32, #tpu.memory_space<vmem>>, vector<1x128xf32>,
      %cst_19 = arith.constant 0.000000e+00 : f32
      %26 = vector.broadcast %cst_19 : f32 to vector<1x128xf32>
      %c0_20 = arith.constant 0 : index
      %c0_21 = arith.constant 0 : index
      %27 = vector.load %arg8[%c0_20, %c0_21] : memref<1x128xf32, #tpu.memory_space<vmem>>, vector<1x128xf32>
      tpu.vector_store %arg8[%c0_20, %c0_21], %26 {strides = array<i32>} : memref<1x128xf32, #tpu.memory_space<vmem>>, vector<1x128xf32>,
    } else {
    }
    %c0 = arith.constant 0 : index
    %c0_1 = arith.constant 0 : index
    %3 = vector.load %arg1[%c0, %c0_1] : memref<128x1024xbf16, #tpu.memory_space<vmem>>, vector<128x1024xbf16>
    %c0_2 = arith.constant 0 : index
    %c0_3 = arith.constant 0 : index
    %4 = vector.load %arg2[%c0_2, %c0_3] : memref<1024x128xbf16, #tpu.memory_space<vmem>>, vector<1024x128xbf16>
    %cst = arith.constant dense<0.000000e+00> : vector<128x128xf32>
    %5 = tpu.matmul %3, %4, %cst {dimension_numbers = #tpu.dot_dimension_numbers<[1], [0], [0], [1], [0, 0, 1, 1], [], []>} : vector<128x1024xbf16>, vector<1024x128xbf16>, vector<128x128xf32> -> vector<128x128xf32>
    %c0_4 = arith.constant 0 : index
    %c0_5 = arith.constant 0 : index
    %6 = vector.load %arg7[%c0_4, %c0_5] : memref<1x128xf32, #tpu.memory_space<vmem>>, vector<1x128xf32>
    %cst_6 = arith.constant dense<0.000000e+00> : vector<128xf32>
    %7 = vector.multi_reduction <add>, %5, %cst_6 [0] : vector<128x128xf32> to vector<128xf32>
    %8 = vector.shape_cast %7 : vector<128xf32> to vector<1x128xf32>
    %9 = arith.addf %6, %8 : vector<1x128xf32>
    %c0_7 = arith.constant 0 : index
    %c0_8 = arith.constant 0 : index
    %10 = vector.load %arg7[%c0_7, %c0_8] : memref<1x128xf32, #tpu.memory_space<vmem>>, vector<1x128xf32>
    tpu.vector_store %arg7[%c0_7, %c0_8], %9 {strides = array<i32>} : memref<1x128xf32, #tpu.memory_space<vmem>>, vector<1x128xf32>,
    %c0_9 = arith.constant 0 : index
    %c0_10 = arith.constant 0 : index
    %11 = vector.load %arg8[%c0_9, %c0_10] : memref<1x128xf32, #tpu.memory_space<vmem>>, vector<1x128xf32>
    %12 = arith.mulf %5, %5 : vector<128x128xf32>
    %cst_11 = arith.constant dense<0.000000e+00> : vector<128xf32>
    %13 = vector.multi_reduction <add>, %12, %cst_11 [0] : vector<128x128xf32> to vector<128xf32>
    %14 = vector.shape_cast %13 : vector<128xf32> to vector<1x128xf32>
    %15 = arith.addf %11, %14 : vector<1x128xf32>
    %c0_12 = arith.constant 0 : index
    %c0_13 = arith.constant 0 : index
    %16 = vector.load %arg8[%c0_12, %c0_13] : memref<1x128xf32, #tpu.memory_space<vmem>>, vector<1x128xf32>
    tpu.vector_store %arg8[%c0_12, %c0_13], %15 {strides = array<i32>} : memref<1x128xf32, #tpu.memory_space<vmem>>, vector<1x128xf32>,
    %c128_i32 = arith.constant 128 : i32
    %17 = arith.muli %arg0, %c128_i32 : i32
    %18 = tpu.assume_multiple %17, 128 : i32
    %19 = arith.index_cast %18 : i32 to index
    %c0_14 = arith.constant 0 : index
    %20 = vector.load %arg6[%19, %c0_14] : memref<256x128xf32, #tpu.memory_space<vmem>>, vector<128x128xf32>
    tpu.vector_store %arg6[%19, %c0_14], %5 {strides = array<i32>} : memref<256x128xf32, #tpu.memory_space<vmem>>, vector<128x128xf32>,
    %c1_i32 = arith.constant 1 : i32
    %21 = arith.cmpi eq, %arg0, %c1_i32 : i32
    %22 = arith.extui %21 : i1 to i32
    %c0_i32_15 = arith.constant 0 : i32
    %23 = arith.cmpi ne, %22, %c0_i32_15 : i32
    scf.if %23 {
      %c0_16 = arith.constant 0 : index
      %c0_17 = arith.constant 0 : index
      %24 = vector.load %arg7[%c0_16, %c0_17] : memref<1x128xf32, #tpu.memory_space<vmem>>, vector<1x128xf32>
      %c0_18 = arith.constant 0 : index
      %c0_19 = arith.constant 0 : index
      %25 = vector.load %arg8[%c0_18, %c0_19] : memref<1x128xf32, #tpu.memory_space<vmem>>, vector<1x128xf32>
      %c0_20 = arith.constant 0 : index
      %c0_21 = arith.constant 0 : index
      %26 = vector.load %arg7[%c0_20, %c0_21] : memref<1x128xf32, #tpu.memory_space<vmem>>, vector<1x128xf32>
      %c16_i32 = arith.constant 16 : i32
      %27 = tpu.dynamic_rotate %26 by %c16_i32 dim 1 : vector<1x128xf32>, i32 -> vector<1x128xf32>
      %28 = arith.addf %24, %27 : vector<1x128xf32>
      %c0_22 = arith.constant 0 : index
      %c0_23 = arith.constant 0 : index
      %29 = vector.load %arg8[%c0_22, %c0_23] : memref<1x128xf32, #tpu.memory_space<vmem>>, vector<1x128xf32>
      %c16_i32_24 = arith.constant 16 : i32
      %30 = tpu.dynamic_rotate %29 by %c16_i32_24 dim 1 : vector<1x128xf32>, i32 -> vector<1x128xf32>
      %31 = arith.addf %25, %30 : vector<1x128xf32>
      %c0_25 = arith.constant 0 : index
      %c0_26 = arith.constant 0 : index
      %32 = vector.load %arg7[%c0_25, %c0_26] : memref<1x128xf32, #tpu.memory_space<vmem>>, vector<1x128xf32>
      %c32_i32 = arith.constant 32 : i32
      %33 = tpu.dynamic_rotate %32 by %c32_i32 dim 1 : vector<1x128xf32>, i32 -> vector<1x128xf32>
      %34 = arith.addf %28, %33 : vector<1x128xf32>
      %c0_27 = arith.constant 0 : index
      %c0_28 = arith.constant 0 : index
      %35 = vector.load %arg8[%c0_27, %c0_28] : memref<1x128xf32, #tpu.memory_space<vmem>>, vector<1x128xf32>
      %c32_i32_29 = arith.constant 32 : i32
      %36 = tpu.dynamic_rotate %35 by %c32_i32_29 dim 1 : vector<1x128xf32>, i32 -> vector<1x128xf32>
      %37 = arith.addf %31, %36 : vector<1x128xf32>
      %c0_30 = arith.constant 0 : index
      %c0_31 = arith.constant 0 : index
      %38 = vector.load %arg7[%c0_30, %c0_31] : memref<1x128xf32, #tpu.memory_space<vmem>>, vector<1x128xf32>
      %c48_i32 = arith.constant 48 : i32
      %39 = tpu.dynamic_rotate %38 by %c48_i32 dim 1 : vector<1x128xf32>, i32 -> vector<1x128xf32>
      %40 = arith.addf %34, %39 : vector<1x128xf32>
      %c0_32 = arith.constant 0 : index
      %c0_33 = arith.constant 0 : index
      %41 = vector.load %arg8[%c0_32, %c0_33] : memref<1x128xf32, #tpu.memory_space<vmem>>, vector<1x128xf32>
      %c48_i32_34 = arith.constant 48 : i32
      %42 = tpu.dynamic_rotate %41 by %c48_i32_34 dim 1 : vector<1x128xf32>, i32 -> vector<1x128xf32>
      %43 = arith.addf %37, %42 : vector<1x128xf32>
      %c0_35 = arith.constant 0 : index
      %c0_36 = arith.constant 0 : index
      %44 = vector.load %arg7[%c0_35, %c0_36] : memref<1x128xf32, #tpu.memory_space<vmem>>, vector<1x128xf32>
      %c64_i32 = arith.constant 64 : i32
      %45 = tpu.dynamic_rotate %44 by %c64_i32 dim 1 : vector<1x128xf32>, i32 -> vector<1x128xf32>
      %46 = arith.addf %40, %45 : vector<1x128xf32>
      %c0_37 = arith.constant 0 : index
      %c0_38 = arith.constant 0 : index
      %47 = vector.load %arg8[%c0_37, %c0_38] : memref<1x128xf32, #tpu.memory_space<vmem>>, vector<1x128xf32>
      %c64_i32_39 = arith.constant 64 : i32
      %48 = tpu.dynamic_rotate %47 by %c64_i32_39 dim 1 : vector<1x128xf32>, i32 -> vector<1x128xf32>
      %49 = arith.addf %43, %48 : vector<1x128xf32>
      %c0_40 = arith.constant 0 : index
      %c0_41 = arith.constant 0 : index
      %50 = vector.load %arg7[%c0_40, %c0_41] : memref<1x128xf32, #tpu.memory_space<vmem>>, vector<1x128xf32>
      %c80_i32 = arith.constant 80 : i32
      %51 = tpu.dynamic_rotate %50 by %c80_i32 dim 1 : vector<1x128xf32>, i32 -> vector<1x128xf32>
      %52 = arith.addf %46, %51 : vector<1x128xf32>
      %c0_42 = arith.constant 0 : index
      %c0_43 = arith.constant 0 : index
      %53 = vector.load %arg8[%c0_42, %c0_43] : memref<1x128xf32, #tpu.memory_space<vmem>>, vector<1x128xf32>
      %c80_i32_44 = arith.constant 80 : i32
      %54 = tpu.dynamic_rotate %53 by %c80_i32_44 dim 1 : vector<1x128xf32>, i32 -> vector<1x128xf32>
      %55 = arith.addf %49, %54 : vector<1x128xf32>
      %c0_45 = arith.constant 0 : index
      %c0_46 = arith.constant 0 : index
      %56 = vector.load %arg7[%c0_45, %c0_46] : memref<1x128xf32, #tpu.memory_space<vmem>>, vector<1x128xf32>
      %c96_i32 = arith.constant 96 : i32
      %57 = tpu.dynamic_rotate %56 by %c96_i32 dim 1 : vector<1x128xf32>, i32 -> vector<1x128xf32>
      %58 = arith.addf %52, %57 : vector<1x128xf32>
      %c0_47 = arith.constant 0 : index
      %c0_48 = arith.constant 0 : index
      %59 = vector.load %arg8[%c0_47, %c0_48] : memref<1x128xf32, #tpu.memory_space<vmem>>, vector<1x128xf32>
      %c96_i32_49 = arith.constant 96 : i32
      %60 = tpu.dynamic_rotate %59 by %c96_i32_49 dim 1 : vector<1x128xf32>, i32 -> vector<1x128xf32>
      %61 = arith.addf %55, %60 : vector<1x128xf32>
      %c0_50 = arith.constant 0 : index
      %c0_51 = arith.constant 0 : index
      %62 = vector.load %arg7[%c0_50, %c0_51] : memref<1x128xf32, #tpu.memory_space<vmem>>, vector<1x128xf32>
      %c112_i32 = arith.constant 112 : i32
      %63 = tpu.dynamic_rotate %62 by %c112_i32 dim 1 : vector<1x128xf32>, i32 -> vector<1x128xf32>
      %64 = arith.addf %58, %63 : vector<1x128xf32>
      %c0_52 = arith.constant 0 : index
      %c0_53 = arith.constant 0 : index
      %65 = vector.load %arg8[%c0_52, %c0_53] : memref<1x128xf32, #tpu.memory_space<vmem>>, vector<1x128xf32>
      %c112_i32_54 = arith.constant 112 : i32
      %66 = tpu.dynamic_rotate %65 by %c112_i32_54 dim 1 : vector<1x128xf32>, i32 -> vector<1x128xf32>
      %67 = arith.addf %61, %66 : vector<1x128xf32>
      %cst_55 = arith.constant 2.048000e+03 : f32
      %68 = vector.broadcast %cst_55 : f32 to vector<1x128xf32>
      %69 = arith.divf %64, %68 : vector<1x128xf32>
      %cst_56 = arith.constant 2.048000e+03 : f32
      %70 = vector.broadcast %cst_56 : f32 to vector<1x128xf32>
      %71 = arith.divf %67, %70 : vector<1x128xf32>
      %72 = arith.mulf %69, %69 : vector<1x128xf32>
      %73 = arith.subf %71, %72 : vector<1x128xf32>
      %cst_57 = arith.constant 9.99999974E-6 : f32
      %74 = vector.broadcast %cst_57 : f32 to vector<1x128xf32>
      %75 = arith.addf %73, %74 : vector<1x128xf32>
      %76 = math.rsqrt %75 : vector<1x128xf32>
      %c0_58 = arith.constant 0 : index
      %c0_59 = arith.constant 0 : index
      %77 = vector.load %arg3[%c0_58, %c0_59] : memref<1x128xf32, #tpu.memory_space<vmem>>, vector<1x128xf32>
      %78 = arith.mulf %76, %77 : vector<1x128xf32>
      %c0_60 = arith.constant 0 : index
      %c0_61 = arith.constant 0 : index
      %79 = vector.load %arg4[%c0_60, %c0_61] : memref<1x128xf32, #tpu.memory_space<vmem>>, vector<1x128xf32>
      %80 = arith.mulf %69, %78 : vector<1x128xf32>
      %81 = arith.subf %79, %80 : vector<1x128xf32>
      %c0_62 = arith.constant 0 : index
      %c0_63 = arith.constant 0 : index
      %82 = vector.load %arg6[%c0_62, %c0_63] : memref<256x128xf32, #tpu.memory_space<vmem>>, vector<256x128xf32>
      %83 = vector.broadcast %78 : vector<1x128xf32> to vector<256x128xf32>
      %84 = arith.mulf %82, %83 : vector<256x128xf32>
      %85 = vector.broadcast %81 : vector<1x128xf32> to vector<256x128xf32>
      %86 = arith.addf %84, %85 : vector<256x128xf32>
      %cst_64 = arith.constant 0.000000e+00 : f32
      %87 = vector.broadcast %cst_64 : f32 to vector<256x128xf32>
      %88 = arith.cmpf ogt, %86, %87 : vector<256x128xf32>
      %cst_65 = arith.constant 2.000000e-01 : f32
      %89 = vector.broadcast %cst_65 : f32 to vector<256x128xf32>
      %90 = arith.mulf %89, %86 : vector<256x128xf32>
      %91 = arith.select %88, %86, %90 : vector<256x128xi1>, vector<256x128xf32>
      %92 = arith.truncf %91 : vector<256x128xf32> to vector<256x128xbf16>
      %c0_66 = arith.constant 0 : index
      %c0_67 = arith.constant 0 : index
      %93 = vector.load %arg5[%c0_66, %c0_67] : memref<256x128xbf16, #tpu.memory_space<vmem>>, vector<256x128xbf16>
      tpu.vector_store %arg5[%c0_66, %c0_67], %92 {strides = array<i32>} : memref<256x128xbf16, #tpu.memory_space<vmem>>, vector<256x128xbf16>,
    } else {
    }
    return
  }
  func.func @transform_0(%arg0: i32) -> (i32, i32) {
    %c0_i32 = arith.constant 0 : i32
    %c0_i32_0 = arith.constant 0 : i32
    return %arg0, %c0_i32 : i32, i32
  }
  func.func @transform_1(%arg0: i32) -> (i32, i32) {
    %c0_i32 = arith.constant 0 : i32
    %c0_i32_0 = arith.constant 0 : i32
    %c0_i32_1 = arith.constant 0 : i32
    return %c0_i32, %c0_i32_0 : i32, i32
  }
  func.func @transform_2(%arg0: i32) -> (i32, i32) {
    %c0_i32 = arith.constant 0 : i32
    %c0_i32_0 = arith.constant 0 : i32
    %c0_i32_1 = arith.constant 0 : i32
    return %c0_i32, %c0_i32_0 : i32, i32
  }
  func.func @transform_3(%arg0: i32) -> (i32, i32) {
    %c0_i32 = arith.constant 0 : i32
    %c0_i32_0 = arith.constant 0 : i32
    %c0_i32_1 = arith.constant 0 : i32
    return %c0_i32, %c0_i32_0 : i32, i32
  }
  func.func @transform_4(%arg0: i32) -> (i32, i32) {
    %c0_i32 = arith.constant 0 : i32
    %c0_i32_0 = arith.constant 0 : i32
    %c0_i32_1 = arith.constant 0 : i32
    return %c0_i32, %c0_i32_0 : i32, i32
  }
}

module attributes {stable_mosaic.version = 11 : i64} {
  func.func @_matmul_bn_lrelu_kernel(%arg0: i32, %arg1: memref<128x1024xbf16, #tpu.memory_space<vmem>>, %arg2: memref<1024x128xbf16, #tpu.memory_space<vmem>>, %arg3: memref<1x128xf32, #tpu.memory_space<vmem>>, %arg4: memref<1x128xf32, #tpu.memory_space<vmem>>, %arg5: memref<128x128xbf16, #tpu.memory_space<vmem>>, %arg6: memref<128x128xf32, #tpu.memory_space<vmem>>, %arg7: memref<1x128xf32, #tpu.memory_space<vmem>>, %arg8: memref<1x128xf32, #tpu.memory_space<vmem>>) attributes {dimension_semantics = [#tpu.dimension_semantics<arbitrary>], iteration_bounds = array<i64: 1>, scalar_prefetch = 0 : i64, scratch_operands = 3 : i64, tpu.core_type = #tpu.core_type<tc>, window_params = [{transform_indices = @transform_0, window_bounds = array<i64: 128, 1024>}, {pipeline_mode = #tpu.pipeline_mode<synchronous>, transform_indices = @transform_1, window_bounds = array<i64: 1024, 128>}, {pipeline_mode = #tpu.pipeline_mode<synchronous>, transform_indices = @transform_2, window_bounds = array<i64: 1, 128>}, {pipeline_mode = #tpu.pipeline_mode<synchronous>, transform_indices = @transform_3, window_bounds = array<i64: 1, 128>}, {pipeline_mode = #tpu.pipeline_mode<synchronous>, transform_indices = @transform_4, window_bounds = array<i64: 128, 128>}]} {
    %c0_i32 = arith.constant 0 : i32
    %0 = arith.cmpi eq, %arg0, %c0_i32 : i32
    %1 = arith.extui %0 : i1 to i32
    %c0_i32_0 = arith.constant 0 : i32
    %2 = arith.cmpi ne, %1, %c0_i32_0 : i32
    scf.if %2 {
      %cst_17 = arith.constant 0.000000e+00 : f32
      %24 = vector.broadcast %cst_17 : f32 to vector<1x128xf32>
      %c0_18 = arith.constant 0 : index
      %c0_19 = arith.constant 0 : index
      %25 = vector.load %arg7[%c0_18, %c0_19] : memref<1x128xf32, #tpu.memory_space<vmem>>, vector<1x128xf32>
      tpu.vector_store %arg7[%c0_18, %c0_19], %24 {strides = array<i32>} : memref<1x128xf32, #tpu.memory_space<vmem>>, vector<1x128xf32>,
      %cst_20 = arith.constant 0.000000e+00 : f32
      %26 = vector.broadcast %cst_20 : f32 to vector<1x128xf32>
      %c0_21 = arith.constant 0 : index
      %c0_22 = arith.constant 0 : index
      %27 = vector.load %arg8[%c0_21, %c0_22] : memref<1x128xf32, #tpu.memory_space<vmem>>, vector<1x128xf32>
      tpu.vector_store %arg8[%c0_21, %c0_22], %26 {strides = array<i32>} : memref<1x128xf32, #tpu.memory_space<vmem>>, vector<1x128xf32>,
    } else {
    }
    %c0 = arith.constant 0 : index
    %c0_1 = arith.constant 0 : index
    %3 = vector.load %arg1[%c0, %c0_1] : memref<128x1024xbf16, #tpu.memory_space<vmem>>, vector<128x1024xbf16>
    %c0_2 = arith.constant 0 : index
    %c0_3 = arith.constant 0 : index
    %4 = vector.load %arg2[%c0_2, %c0_3] : memref<1024x128xbf16, #tpu.memory_space<vmem>>, vector<1024x128xbf16>
    %cst = arith.constant dense<0.000000e+00> : vector<128x128xf32>
    %5 = tpu.matmul %3, %4, %cst {dimension_numbers = #tpu.dot_dimension_numbers<[1], [0], [0], [1], [0, 0, 1, 1], [], []>} : vector<128x1024xbf16>, vector<1024x128xbf16>, vector<128x128xf32> -> vector<128x128xf32>
    %c0_4 = arith.constant 0 : index
    %c0_5 = arith.constant 0 : index
    %6 = vector.load %arg7[%c0_4, %c0_5] : memref<1x128xf32, #tpu.memory_space<vmem>>, vector<1x128xf32>
    %cst_6 = arith.constant dense<0.000000e+00> : vector<128xf32>
    %7 = vector.multi_reduction <add>, %5, %cst_6 [0] : vector<128x128xf32> to vector<128xf32>
    %8 = vector.shape_cast %7 : vector<128xf32> to vector<1x128xf32>
    %9 = arith.addf %6, %8 : vector<1x128xf32>
    %c0_7 = arith.constant 0 : index
    %c0_8 = arith.constant 0 : index
    %10 = vector.load %arg7[%c0_7, %c0_8] : memref<1x128xf32, #tpu.memory_space<vmem>>, vector<1x128xf32>
    tpu.vector_store %arg7[%c0_7, %c0_8], %9 {strides = array<i32>} : memref<1x128xf32, #tpu.memory_space<vmem>>, vector<1x128xf32>,
    %c0_9 = arith.constant 0 : index
    %c0_10 = arith.constant 0 : index
    %11 = vector.load %arg8[%c0_9, %c0_10] : memref<1x128xf32, #tpu.memory_space<vmem>>, vector<1x128xf32>
    %12 = arith.mulf %5, %5 : vector<128x128xf32>
    %cst_11 = arith.constant dense<0.000000e+00> : vector<128xf32>
    %13 = vector.multi_reduction <add>, %12, %cst_11 [0] : vector<128x128xf32> to vector<128xf32>
    %14 = vector.shape_cast %13 : vector<128xf32> to vector<1x128xf32>
    %15 = arith.addf %11, %14 : vector<1x128xf32>
    %c0_12 = arith.constant 0 : index
    %c0_13 = arith.constant 0 : index
    %16 = vector.load %arg8[%c0_12, %c0_13] : memref<1x128xf32, #tpu.memory_space<vmem>>, vector<1x128xf32>
    tpu.vector_store %arg8[%c0_12, %c0_13], %15 {strides = array<i32>} : memref<1x128xf32, #tpu.memory_space<vmem>>, vector<1x128xf32>,
    %c128_i32 = arith.constant 128 : i32
    %17 = arith.muli %arg0, %c128_i32 : i32
    %18 = tpu.assume_multiple %17, 128 : i32
    %19 = arith.index_cast %18 : i32 to index
    %c0_14 = arith.constant 0 : index
    %20 = vector.load %arg6[%19, %c0_14] : memref<128x128xf32, #tpu.memory_space<vmem>>, vector<128x128xf32>
    tpu.vector_store %arg6[%19, %c0_14], %5 {strides = array<i32>} : memref<128x128xf32, #tpu.memory_space<vmem>>, vector<128x128xf32>,
    %c0_i32_15 = arith.constant 0 : i32
    %21 = arith.cmpi eq, %arg0, %c0_i32_15 : i32
    %22 = arith.extui %21 : i1 to i32
    %c0_i32_16 = arith.constant 0 : i32
    %23 = arith.cmpi ne, %22, %c0_i32_16 : i32
    scf.if %23 {
      %c0_17 = arith.constant 0 : index
      %c0_18 = arith.constant 0 : index
      %24 = vector.load %arg7[%c0_17, %c0_18] : memref<1x128xf32, #tpu.memory_space<vmem>>, vector<1x128xf32>
      %c0_19 = arith.constant 0 : index
      %c0_20 = arith.constant 0 : index
      %25 = vector.load %arg8[%c0_19, %c0_20] : memref<1x128xf32, #tpu.memory_space<vmem>>, vector<1x128xf32>
      %c0_21 = arith.constant 0 : index
      %c0_22 = arith.constant 0 : index
      %26 = vector.load %arg7[%c0_21, %c0_22] : memref<1x128xf32, #tpu.memory_space<vmem>>, vector<1x128xf32>
      %c32_i32 = arith.constant 32 : i32
      %27 = tpu.dynamic_rotate %26 by %c32_i32 dim 1 : vector<1x128xf32>, i32 -> vector<1x128xf32>
      %28 = arith.addf %24, %27 : vector<1x128xf32>
      %c0_23 = arith.constant 0 : index
      %c0_24 = arith.constant 0 : index
      %29 = vector.load %arg8[%c0_23, %c0_24] : memref<1x128xf32, #tpu.memory_space<vmem>>, vector<1x128xf32>
      %c32_i32_25 = arith.constant 32 : i32
      %30 = tpu.dynamic_rotate %29 by %c32_i32_25 dim 1 : vector<1x128xf32>, i32 -> vector<1x128xf32>
      %31 = arith.addf %25, %30 : vector<1x128xf32>
      %c0_26 = arith.constant 0 : index
      %c0_27 = arith.constant 0 : index
      %32 = vector.load %arg7[%c0_26, %c0_27] : memref<1x128xf32, #tpu.memory_space<vmem>>, vector<1x128xf32>
      %c64_i32 = arith.constant 64 : i32
      %33 = tpu.dynamic_rotate %32 by %c64_i32 dim 1 : vector<1x128xf32>, i32 -> vector<1x128xf32>
      %34 = arith.addf %28, %33 : vector<1x128xf32>
      %c0_28 = arith.constant 0 : index
      %c0_29 = arith.constant 0 : index
      %35 = vector.load %arg8[%c0_28, %c0_29] : memref<1x128xf32, #tpu.memory_space<vmem>>, vector<1x128xf32>
      %c64_i32_30 = arith.constant 64 : i32
      %36 = tpu.dynamic_rotate %35 by %c64_i32_30 dim 1 : vector<1x128xf32>, i32 -> vector<1x128xf32>
      %37 = arith.addf %31, %36 : vector<1x128xf32>
      %c0_31 = arith.constant 0 : index
      %c0_32 = arith.constant 0 : index
      %38 = vector.load %arg7[%c0_31, %c0_32] : memref<1x128xf32, #tpu.memory_space<vmem>>, vector<1x128xf32>
      %c96_i32 = arith.constant 96 : i32
      %39 = tpu.dynamic_rotate %38 by %c96_i32 dim 1 : vector<1x128xf32>, i32 -> vector<1x128xf32>
      %40 = arith.addf %34, %39 : vector<1x128xf32>
      %c0_33 = arith.constant 0 : index
      %c0_34 = arith.constant 0 : index
      %41 = vector.load %arg8[%c0_33, %c0_34] : memref<1x128xf32, #tpu.memory_space<vmem>>, vector<1x128xf32>
      %c96_i32_35 = arith.constant 96 : i32
      %42 = tpu.dynamic_rotate %41 by %c96_i32_35 dim 1 : vector<1x128xf32>, i32 -> vector<1x128xf32>
      %43 = arith.addf %37, %42 : vector<1x128xf32>
      %cst_36 = arith.constant 5.120000e+02 : f32
      %44 = vector.broadcast %cst_36 : f32 to vector<1x128xf32>
      %45 = arith.divf %40, %44 : vector<1x128xf32>
      %cst_37 = arith.constant 5.120000e+02 : f32
      %46 = vector.broadcast %cst_37 : f32 to vector<1x128xf32>
      %47 = arith.divf %43, %46 : vector<1x128xf32>
      %48 = arith.mulf %45, %45 : vector<1x128xf32>
      %49 = arith.subf %47, %48 : vector<1x128xf32>
      %cst_38 = arith.constant 9.99999974E-6 : f32
      %50 = vector.broadcast %cst_38 : f32 to vector<1x128xf32>
      %51 = arith.addf %49, %50 : vector<1x128xf32>
      %52 = math.rsqrt %51 : vector<1x128xf32>
      %c0_39 = arith.constant 0 : index
      %c0_40 = arith.constant 0 : index
      %53 = vector.load %arg3[%c0_39, %c0_40] : memref<1x128xf32, #tpu.memory_space<vmem>>, vector<1x128xf32>
      %54 = arith.mulf %52, %53 : vector<1x128xf32>
      %c0_41 = arith.constant 0 : index
      %c0_42 = arith.constant 0 : index
      %55 = vector.load %arg4[%c0_41, %c0_42] : memref<1x128xf32, #tpu.memory_space<vmem>>, vector<1x128xf32>
      %56 = arith.mulf %45, %54 : vector<1x128xf32>
      %57 = arith.subf %55, %56 : vector<1x128xf32>
      %c0_43 = arith.constant 0 : index
      %c0_44 = arith.constant 0 : index
      %58 = vector.load %arg6[%c0_43, %c0_44] : memref<128x128xf32, #tpu.memory_space<vmem>>, vector<128x128xf32>
      %59 = vector.broadcast %54 : vector<1x128xf32> to vector<128x128xf32>
      %60 = arith.mulf %58, %59 : vector<128x128xf32>
      %61 = vector.broadcast %57 : vector<1x128xf32> to vector<128x128xf32>
      %62 = arith.addf %60, %61 : vector<128x128xf32>
      %cst_45 = arith.constant 0.000000e+00 : f32
      %63 = vector.broadcast %cst_45 : f32 to vector<128x128xf32>
      %64 = arith.cmpf ogt, %62, %63 : vector<128x128xf32>
      %cst_46 = arith.constant 2.000000e-01 : f32
      %65 = vector.broadcast %cst_46 : f32 to vector<128x128xf32>
      %66 = arith.mulf %65, %62 : vector<128x128xf32>
      %67 = arith.select %64, %62, %66 : vector<128x128xi1>, vector<128x128xf32>
      %68 = arith.truncf %67 : vector<128x128xf32> to vector<128x128xbf16>
      %c0_47 = arith.constant 0 : index
      %c0_48 = arith.constant 0 : index
      %69 = vector.load %arg5[%c0_47, %c0_48] : memref<128x128xbf16, #tpu.memory_space<vmem>>, vector<128x128xbf16>
      tpu.vector_store %arg5[%c0_47, %c0_48], %68 {strides = array<i32>} : memref<128x128xbf16, #tpu.memory_space<vmem>>, vector<128x128xbf16>,
    } else {
    }
    return
  }
  func.func @transform_0(%arg0: i32) -> (i32, i32) {
    %c0_i32 = arith.constant 0 : i32
    %c0_i32_0 = arith.constant 0 : i32
    return %arg0, %c0_i32 : i32, i32
  }
  func.func @transform_1(%arg0: i32) -> (i32, i32) {
    %c0_i32 = arith.constant 0 : i32
    %c0_i32_0 = arith.constant 0 : i32
    %c0_i32_1 = arith.constant 0 : i32
    return %c0_i32, %c0_i32_0 : i32, i32
  }
  func.func @transform_2(%arg0: i32) -> (i32, i32) {
    %c0_i32 = arith.constant 0 : i32
    %c0_i32_0 = arith.constant 0 : i32
    %c0_i32_1 = arith.constant 0 : i32
    return %c0_i32, %c0_i32_0 : i32, i32
  }
  func.func @transform_3(%arg0: i32) -> (i32, i32) {
    %c0_i32 = arith.constant 0 : i32
    %c0_i32_0 = arith.constant 0 : i32
    %c0_i32_1 = arith.constant 0 : i32
    return %c0_i32, %c0_i32_0 : i32, i32
  }
  func.func @transform_4(%arg0: i32) -> (i32, i32) {
    %c0_i32 = arith.constant 0 : i32
    %c0_i32_0 = arith.constant 0 : i32
    %c0_i32_1 = arith.constant 0 : i32
    return %c0_i32, %c0_i32_0 : i32, i32
  }
}

module attributes {stable_mosaic.version = 11 : i64} {
  func.func @_conv4_bn_lrelu_fc_kernel(%arg0: i32, %arg1: memref<2x2048xbf16, #tpu.memory_space<vmem>>, %arg2: memref<2048x64xbf16, #tpu.memory_space<vmem>>, %arg3: memref<1x64xf32, #tpu.memory_space<vmem>>, %arg4: memref<1x64xf32, #tpu.memory_space<vmem>>, %arg5: memref<64x8xf32, #tpu.memory_space<vmem>>, %arg6: memref<1x8xf32, #tpu.memory_space<vmem>>, %arg7: memref<2x8xf32, #tpu.memory_space<vmem>>, %arg8: memref<2x64xf32, #tpu.memory_space<vmem>>) attributes {dimension_semantics = [#tpu.dimension_semantics<arbitrary>], iteration_bounds = array<i64: 4>, scalar_prefetch = 0 : i64, scratch_operands = 1 : i64, tpu.core_type = #tpu.core_type<tc>, window_params = [{transform_indices = @transform_0, window_bounds = array<i64: 2, 2048>}, {transform_indices = @transform_1, window_bounds = array<i64: 2048, 64>}, {pipeline_mode = #tpu.pipeline_mode<synchronous>, transform_indices = @transform_2, window_bounds = array<i64: 1, 64>}, {pipeline_mode = #tpu.pipeline_mode<synchronous>, transform_indices = @transform_3, window_bounds = array<i64: 1, 64>}, {pipeline_mode = #tpu.pipeline_mode<synchronous>, transform_indices = @transform_4, window_bounds = array<i64: 64, 8>}, {pipeline_mode = #tpu.pipeline_mode<synchronous>, transform_indices = @transform_5, window_bounds = array<i64: 1, 8>}, {pipeline_mode = #tpu.pipeline_mode<synchronous>, transform_indices = @transform_6, window_bounds = array<i64: 2, 8>}]} {
    %c0_i32 = arith.constant 0 : i32
    %0 = arith.cmpi eq, %arg0, %c0_i32 : i32
    %1 = arith.extui %0 : i1 to i32
    %c0_i32_0 = arith.constant 0 : i32
    %2 = arith.cmpi ne, %1, %c0_i32_0 : i32
    scf.if %2 {
      %cst_9 = arith.constant 0.000000e+00 : f32
      %12 = vector.broadcast %cst_9 : f32 to vector<2x64xf32>
      %c0_10 = arith.constant 0 : index
      %c0_11 = arith.constant 0 : index
      %13 = vector.load %arg8[%c0_10, %c0_11] : memref<2x64xf32, #tpu.memory_space<vmem>>, vector<2x64xf32>
      tpu.vector_store %arg8[%c0_10, %c0_11], %12 {strides = array<i32>} : memref<2x64xf32, #tpu.memory_space<vmem>>, vector<2x64xf32>,
    } else {
    }
    %c0 = arith.constant 0 : index
    %c0_1 = arith.constant 0 : index
    %3 = vector.load %arg8[%c0, %c0_1] : memref<2x64xf32, #tpu.memory_space<vmem>>, vector<2x64xf32>
    %c0_2 = arith.constant 0 : index
    %c0_3 = arith.constant 0 : index
    %4 = vector.load %arg1[%c0_2, %c0_3] : memref<2x2048xbf16, #tpu.memory_space<vmem>>, vector<2x2048xbf16>
    %c0_4 = arith.constant 0 : index
    %c0_5 = arith.constant 0 : index
    %5 = vector.load %arg2[%c0_4, %c0_5] : memref<2048x64xbf16, #tpu.memory_space<vmem>>, vector<2048x64xbf16>
    %cst = arith.constant dense<0.000000e+00> : vector<2x64xf32>
    %6 = tpu.matmul %4, %5, %cst {dimension_numbers = #tpu.dot_dimension_numbers<[1], [0], [0], [1], [0, 0, 1, 1], [], []>} : vector<2x2048xbf16>, vector<2048x64xbf16>, vector<2x64xf32> -> vector<2x64xf32>
    %7 = arith.addf %3, %6 : vector<2x64xf32>
    %c0_6 = arith.constant 0 : index
    %c0_7 = arith.constant 0 : index
    %8 = vector.load %arg8[%c0_6, %c0_7] : memref<2x64xf32, #tpu.memory_space<vmem>>, vector<2x64xf32>
    tpu.vector_store %arg8[%c0_6, %c0_7], %7 {strides = array<i32>} : memref<2x64xf32, #tpu.memory_space<vmem>>, vector<2x64xf32>,
    %c3_i32 = arith.constant 3 : i32
    %9 = arith.cmpi eq, %arg0, %c3_i32 : i32
    %10 = arith.extui %9 : i1 to i32
    %c0_i32_8 = arith.constant 0 : i32
    %11 = arith.cmpi ne, %10, %c0_i32_8 : i32
    scf.if %11 {
      %c0_9 = arith.constant 0 : index
      %c0_10 = arith.constant 0 : index
      %12 = vector.load %arg8[%c0_9, %c0_10] : memref<2x64xf32, #tpu.memory_space<vmem>>, vector<2x64xf32>
      %cst_11 = arith.constant dense<0.000000e+00> : vector<64xf32>
      %13 = vector.multi_reduction <add>, %12, %cst_11 [0] : vector<2x64xf32> to vector<64xf32>
      %14 = vector.shape_cast %13 : vector<64xf32> to vector<1x64xf32>
      %cst_12 = arith.constant 2.000000e+00 : f32
      %15 = vector.broadcast %cst_12 : f32 to vector<1x64xf32>
      %16 = arith.divf %14, %15 : vector<1x64xf32>
      %17 = vector.broadcast %16 : vector<1x64xf32> to vector<2x64xf32>
      %18 = arith.subf %12, %17 : vector<2x64xf32>
      %19 = arith.mulf %18, %18 : vector<2x64xf32>
      %cst_13 = arith.constant dense<0.000000e+00> : vector<64xf32>
      %20 = vector.multi_reduction <add>, %19, %cst_13 [0] : vector<2x64xf32> to vector<64xf32>
      %21 = vector.shape_cast %20 : vector<64xf32> to vector<1x64xf32>
      %cst_14 = arith.constant 2.000000e+00 : f32
      %22 = vector.broadcast %cst_14 : f32 to vector<1x64xf32>
      %23 = arith.divf %21, %22 : vector<1x64xf32>
      %24 = vector.broadcast %16 : vector<1x64xf32> to vector<2x64xf32>
      %25 = arith.subf %12, %24 : vector<2x64xf32>
      %cst_15 = arith.constant 9.99999974E-6 : f32
      %26 = vector.broadcast %cst_15 : f32 to vector<1x64xf32>
      %27 = arith.addf %23, %26 : vector<1x64xf32>
      %28 = math.rsqrt %27 : vector<1x64xf32>
      %29 = vector.broadcast %28 : vector<1x64xf32> to vector<2x64xf32>
      %30 = arith.mulf %25, %29 : vector<2x64xf32>
      %c0_16 = arith.constant 0 : index
      %c0_17 = arith.constant 0 : index
      %31 = vector.load %arg3[%c0_16, %c0_17] : memref<1x64xf32, #tpu.memory_space<vmem>>, vector<1x64xf32>
      %32 = vector.broadcast %31 : vector<1x64xf32> to vector<2x64xf32>
      %33 = arith.mulf %30, %32 : vector<2x64xf32>
      %c0_18 = arith.constant 0 : index
      %c0_19 = arith.constant 0 : index
      %34 = vector.load %arg4[%c0_18, %c0_19] : memref<1x64xf32, #tpu.memory_space<vmem>>, vector<1x64xf32>
      %35 = vector.broadcast %34 : vector<1x64xf32> to vector<2x64xf32>
      %36 = arith.addf %33, %35 : vector<2x64xf32>
      %cst_20 = arith.constant 0.000000e+00 : f32
      %37 = vector.broadcast %cst_20 : f32 to vector<2x64xf32>
      %38 = arith.cmpf ogt, %36, %37 : vector<2x64xf32>
      %cst_21 = arith.constant 2.000000e-01 : f32
      %39 = vector.broadcast %cst_21 : f32 to vector<2x64xf32>
      %40 = arith.mulf %39, %36 : vector<2x64xf32>
      %41 = arith.select %38, %36, %40 : vector<2x64xi1>, vector<2x64xf32>
      %c0_22 = arith.constant 0 : index
      %c0_23 = arith.constant 0 : index
      %42 = vector.load %arg5[%c0_22, %c0_23] : memref<64x8xf32, #tpu.memory_space<vmem>>, vector<64x8xf32>
      %cst_24 = arith.constant dense<0.000000e+00> : vector<2x8xf32>
      %43 = tpu.matmul %41, %42, %cst_24 {dimension_numbers = #tpu.dot_dimension_numbers<[1], [0], [0], [1], [0, 0, 1, 1], [], []>} : vector<2x64xf32>, vector<64x8xf32>, vector<2x8xf32> -> vector<2x8xf32>
      %c0_25 = arith.constant 0 : index
      %c0_26 = arith.constant 0 : index
      %44 = vector.load %arg6[%c0_25, %c0_26] : memref<1x8xf32, #tpu.memory_space<vmem>>, vector<1x8xf32>
      %45 = vector.broadcast %44 : vector<1x8xf32> to vector<2x8xf32>
      %46 = arith.addf %43, %45 : vector<2x8xf32>
      %c0_27 = arith.constant 0 : index
      %c0_28 = arith.constant 0 : index
      %47 = vector.load %arg7[%c0_27, %c0_28] : memref<2x8xf32, #tpu.memory_space<vmem>>, vector<2x8xf32>
      tpu.vector_store %arg7[%c0_27, %c0_28], %46 {strides = array<i32>} : memref<2x8xf32, #tpu.memory_space<vmem>>, vector<2x8xf32>,
    } else {
    }
    return
  }
  func.func @transform_0(%arg0: i32) -> (i32, i32) {
    %c0_i32 = arith.constant 0 : i32
    %c0_i32_0 = arith.constant 0 : i32
    return %c0_i32, %arg0 : i32, i32
  }
  func.func @transform_1(%arg0: i32) -> (i32, i32) {
    %c0_i32 = arith.constant 0 : i32
    %c0_i32_0 = arith.constant 0 : i32
    return %arg0, %c0_i32 : i32, i32
  }
  func.func @transform_2(%arg0: i32) -> (i32, i32) {
    %c0_i32 = arith.constant 0 : i32
    %c0_i32_0 = arith.constant 0 : i32
    %c0_i32_1 = arith.constant 0 : i32
    return %c0_i32, %c0_i32_0 : i32, i32
  }
  func.func @transform_3(%arg0: i32) -> (i32, i32) {
    %c0_i32 = arith.constant 0 : i32
    %c0_i32_0 = arith.constant 0 : i32
    %c0_i32_1 = arith.constant 0 : i32
    return %c0_i32, %c0_i32_0 : i32, i32
  }
  func.func @transform_4(%arg0: i32) -> (i32, i32) {
    %c0_i32 = arith.constant 0 : i32
    %c0_i32_0 = arith.constant 0 : i32
    %c0_i32_1 = arith.constant 0 : i32
    return %c0_i32, %c0_i32_0 : i32, i32
  }
  func.func @transform_5(%arg0: i32) -> (i32, i32) {
    %c0_i32 = arith.constant 0 : i32
    %c0_i32_0 = arith.constant 0 : i32
    %c0_i32_1 = arith.constant 0 : i32
    return %c0_i32, %c0_i32_0 : i32, i32
  }
  func.func @transform_6(%arg0: i32) -> (i32, i32) {
    %c0_i32 = arith.constant 0 : i32
    %c0_i32_0 = arith.constant 0 : i32
    %c0_i32_1 = arith.constant 0 : i32
    return %c0_i32, %c0_i32_0 : i32, i32
  }
}

</mosaic_0001>

<llo_original>
// kernel: encoder_forward.4
$region0: #{encoder_forward.4}
  #allocation0 [shape = 'u32[]', space=smem, size = 0x4, offset = 0x4, fixed_abs, tag = 'smem constant byte address 0x4 - core index']
  #allocation1 [shape = 'u32[144,128]{1,0:T(1,128)}', space=vmem, size = 0x12000, scoped, tag = 'internal scratch']
  %s0 = inlined_call_operand.vmem [shape: bf16[512,768], index: 0, kind: input, shape index: {}]
  %s1 = inlined_call_operand.vmem [shape: bf16[768,128], index: 1, kind: input, shape index: {}]
  %s2 = inlined_call_operand.vmem [shape: bf16[512,128], index: 2, kind: output, shape index: {}]
  %s3 = sld [smem:[#allocation0]]
  $region41: #{encoder_forward.4} parent=0
    _
  %s5 = ssub.s32 1, %s3
  %s6 = scalar_select 0, %s5, %s3
  loop: start=0, step=1, limit=4
  $region2: #{encoder_forward.4} parent=0 // loop_pre_header
    _
  $region3: #{encoder_forward.4} parent=0 // loop_header
    %s8 = sphi 0, %s12
    %p9 = scmp.ge.s32.totalorder %s8, 4
    %s18 = sphi 0, %s20
    %s21 = sphi 0, %s18
    %s22 = sphi 0, %s21
    %s38 = sphi 0, %s22
    %s42 = sphi 0, %s42
    %s44 = sphi 0, %s42
    %s45 = sphi 0, %s44
    %s59 = sphi 0, %s45
    %s65 = sphi 0, %s67
    %s68 = sphi 0, %s65
    %s69 = sphi 0, %s68
    %s85 = sphi 0, %s69
  $region4: #{encoder_forward.4} parent=0 // loop_header_branch
    %11 = sbr.rel (%p9) target = $region8
  $region5: #{encoder_forward.4} parent=0 // loop_body
    %s13 = ssub.s32 %s8, 1
    %s14 = ssub.s32 %s8, 2
    %s15 = sadd.s32 %s8, 1
    %s16 = ssub.s32 %s8, %s15
    %p17 = scmp.eq.s32.totalorder %s16, 0
    %s19 = sadd.s32 %s18, 1
    %s20 = scalar_select %p17, %s18, %s19
    %p23 = pneg %p17
    %p24 = scmp.eq.s32.totalorder %s8, 1
    %p25 = por %p23, %p24
    %p26 = scmp.ne.s32.totalorder %s18, %s21
    %p27 = scmp.eq.s32.totalorder %s8, 0
    %p28 = por %p26, %p27
    %p29 = scmp.ne.s32.totalorder %s18, %s21
    %p30 = scmp.eq.s32.totalorder %s13, 1
    %p31 = por %p29, %p30
    %p32 = scmp.ne.s32.totalorder %s21, %s22
    %p33 = scmp.eq.s32.totalorder %s13, 0
    %p34 = por %p32, %p33
    %p35 = scmp.ne.s32.totalorder %s21, %s22
    %p36 = scmp.eq.s32.totalorder %s14, 1
    %p37 = por %p35, %p36
    %p39 = scmp.ne.s32.totalorder %s22, %s38
    %p40 = scmp.eq.s32.totalorder %s14, 0
    %p41 = por %p39, %p40
    %s43 = sadd.s32 %s42, 1
    %p46 = scmp.eq.s32.totalorder %s8, 1
    %p47 = scmp.ne.s32.totalorder %s42, %s44
    %p48 = scmp.eq.s32.totalorder %s8, 0
    %p49 = por %p47, %p48
    %p50 = scmp.ne.s32.totalorder %s42, %s44
    %p51 = scmp.eq.s32.totalorder %s13, 1
    %p52 = por %p50, %p51
    %p53 = scmp.ne.s32.totalorder %s44, %s45
    %p54 = scmp.eq.s32.totalorder %s13, 0
    %p55 = por %p53, %p54
    %p56 = scmp.ne.s32.totalorder %s44, %s45
    %p57 = scmp.eq.s32.totalorder %s14, 1
    %p58 = por %p56, %p57
    %p60 = scmp.ne.s32.totalorder %s45, %s59
    %p61 = scmp.eq.s32.totalorder %s14, 0
    %p62 = por %p60, %p61
    %s63 = ssub.s32 %s8, %s15
    %p64 = scmp.eq.s32.totalorder %s63, 0
    %s66 = sadd.s32 %s65, 1
    %s67 = scalar_select %p64, %s65, %s66
    %p70 = pneg %p64
    %p71 = scmp.eq.s32.totalorder %s8, 1
    %p72 = por %p70, %p71
    %p73 = scmp.ne.s32.totalorder %s65, %s68
    %p74 = scmp.eq.s32.totalorder %s8, 0
    %p75 = por %p73, %p74
    %p76 = scmp.ne.s32.totalorder %s65, %s68
    %p77 = scmp.eq.s32.totalorder %s13, 1
    %p78 = por %p76, %p77
    %p79 = scmp.ne.s32.totalorder %s68, %s69
    %p80 = scmp.eq.s32.totalorder %s13, 0
    %p81 = por %p79, %p80
    %p82 = scmp.ne.s32.totalorder %s68, %s69
    %p83 = scmp.eq.s32.totalorder %s14, 1
    %p84 = por %p82, %p83
    %p86 = scmp.ne.s32.totalorder %s69, %s85
    %p87 = scmp.eq.s32.totalorder %s14, 0
    %p88 = por %p86, %p87
    %p89 = scmp.le.s32.totalorder 1, %s8
    %p90 = scmp.lt.s32.totalorder %s8, 3
    %p91 = pnand %p89, %p90
    %p92 = pneg %p91
    // Predicated region
    $region9: #{encoder_forward.4} parent=5 // pred_check
      _
    $region10: #{encoder_forward.4} parent=5 // pred_check_branch
      %94 = sbr.rel (%p91) target = $region12
    $region11: #{encoder_forward.4} parent=5 // pred_region
      %s95 = ssub.s32 %s8, 1
      // Predicated region
      $region13: #{encoder_forward.4} parent=11 // pred_check
        %p96 = pneg %p55
      $region14: #{encoder_forward.4} parent=11 // pred_check_branch
        %98 = sbr.rel (%p96) target = $region16
      $region15: #{encoder_forward.4} parent=11 // pred_region
        _
      $region16: #{encoder_forward.4} parent=11 // pred_fallthru
        _
    $region12: #{encoder_forward.4} parent=5 // pred_fallthru
      _
    %p99 = scmp.lt.s32.totalorder %s8, 2
    // Predicated region
    $region17: #{encoder_forward.4} parent=5 // pred_check
      %p100 = pneg %p99
    $region18: #{encoder_forward.4} parent=5 // pred_check_branch
      %102 = sbr.rel (%p100) target = $region20
    $region19: #{encoder_forward.4} parent=5 // pred_region
      // Predicated region
      $region21: #{encoder_forward.4} parent=19 // pred_check
        %p103 = pneg %p28
      $region22: #{encoder_forward.4} parent=19 // pred_check_branch
        %105 = sbr.rel (%p103) target = $region24
      $region23: #{encoder_forward.4} parent=19 // pred_region
        %s106 = smul.u32 32, %s8
        %p107 = scmp.lt.s32.totalorder %s106, 63
        %s108 = scalar_select %p107, %s106, 63
        %s109 = smul.addr %s108, 6
        %s110 = smul.addr %s109, 4
        %s111 = scalar_lea.vmem %s0, %s110
        %s112 = smul.u32 32, %s8
      $region24: #{encoder_forward.4} parent=19 // pred_fallthru
        _
    $region20: #{encoder_forward.4} parent=5 // pred_fallthru
      _
    %p113 = scmp.le.s32.totalorder 1, %s8
    %p114 = scmp.lt.s32.totalorder %s8, 3
    %p115 = pnand %p113, %p114
    %p116 = pneg %p115
    // Predicated region
    $region25: #{encoder_forward.4} parent=5 // pred_check
      _
    $region26: #{encoder_forward.4} parent=5 // pred_check_branch
      %118 = sbr.rel (%p115) target = $region28
    $region27: #{encoder_forward.4} parent=5 // pred_region
      %s119 = ssub.s32 %s8, 1
      %s120 = smul.u32 32, %s13
      %p121 = scmp.lt.s32.totalorder %s120, 63
      %s122 = scalar_select %p121, %s120, 63
      %s123 = smul.addr %s122, 6
      %s124 = smul.addr %s123, 4
      %s125 = scalar_lea.vmem %s0, %s124
      %p126 = pneg %p34
      %p127 = pneg %p31
      %p128 = pneg %p55
      %p129 = pneg %p52
      %p130 = pneg %p81
      %p131 = pneg %p78
      %s132 = smul.u32 32, %s13
      %p133 = scmp.lt.s32.totalorder %s132, 63
      %s134 = scalar_select %p133, %s132, 63
      %s135 = smul.addr %s134, 4
      %s136 = scalar_lea.vmem %s2, %s135
      %s137 = smul.u32 32, %s13
      %p138 = scmp.lt.s32.totalorder %s137, 63
      %s139 = scalar_select %p138, %s137, 63
      %s140 = smul.addr %s139, 6
      %s141 = smul.addr %s140, 4
      %s142 = scalar_lea.vmem %s0, %s141
      %s143 = smul.u32 32, %s13
      %s144 = smul.u32 32, %s13
      %p145 = scmp.lt.s32.totalorder %s144, 63
      %s146 = scalar_select %p145, %s144, 63
      %s147 = smul.addr %s146, 4
      %s148 = scalar_lea.vmem %s2, %s147
      %s149 = smul.u32 32, %s13
      %v151 = vld [vmem:[%s142] sm:$0xff]
      %v152 = vld [vmem:[%s142 + $0x8] sm:$0xff]
      %v153 = vld [vmem:[%s142 + $0x10] sm:$0xff]
      %v154 = vld [vmem:[%s142 + $0x18] sm:$0xff]
      %v155 = vld [vmem:[%s142 + $0x20] sm:$0xff]
      %v156 = vld [vmem:[%s142 + $0x28] sm:$0xff]
      %v157 = vld [vmem:[%s142 + $0x30] sm:$0xff]
      %v158 = vld [vmem:[%s142 + $0x38] sm:$0xff]
      %v159 = vld [vmem:[%s142 + $0x40] sm:$0xff]
      %v160 = vld [vmem:[%s142 + $0x48] sm:$0xff]
      %v161 = vld [vmem:[%s142 + $0x50] sm:$0xff]
      %v162 = vld [vmem:[%s142 + $0x58] sm:$0xff]
      %v163 = vld [vmem:[%s142 + $0x60] sm:$0xff]
      %v164 = vld [vmem:[%s142 + $0x68] sm:$0xff]
      %v165 = vld [vmem:[%s142 + $0x70] sm:$0xff]
      %v166 = vld [vmem:[%s142 + $0x78] sm:$0xff]
      %v167 = vld [vmem:[%s142 + $0x80] sm:$0xff]
      %v168 = vld [vmem:[%s142 + $0x88] sm:$0xff]
      %v169 = vld [vmem:[%s142 + $0x90] sm:$0xff]
      %v170 = vld [vmem:[%s142 + $0x98] sm:$0xff]
      %v171 = vld [vmem:[%s142 + $0xa0] sm:$0xff]
      %v172 = vld [vmem:[%s142 + $0xa8] sm:$0xff]
      %v173 = vld [vmem:[%s142 + $0xb0] sm:$0xff]
      %v174 = vld [vmem:[%s142 + $0xb8] sm:$0xff]
      %v175 = vld [vmem:[%s142 + $0xc0] sm:$0xff]
      %v176 = vld [vmem:[%s142 + $0xc8] sm:$0xff]
      %v177 = vld [vmem:[%s142 + $0xd0] sm:$0xff]
      %v178 = vld [vmem:[%s142 + $0xd8] sm:$0xff]
      %v179 = vld [vmem:[%s142 + $0xe0] sm:$0xff]
      %v180 = vld [vmem:[%s142 + $0xe8] sm:$0xff]
      %v181 = vld [vmem:[%s142 + $0xf0] sm:$0xff]
      %v182 = vld [vmem:[%s142 + $0xf8] sm:$0xff]
      %v183 = vld [vmem:[%s142 + $0x100] sm:$0xff]
      %v184 = vld [vmem:[%s142 + $0x108] sm:$0xff]
      %v185 = vld [vmem:[%s142 + $0x110] sm:$0xff]
      %v186 = vld [vmem:[%s142 + $0x118] sm:$0xff]
      %v187 = vld [vmem:[%s142 + $0x120] sm:$0xff]
      %v188 = vld [vmem:[%s142 + $0x128] sm:$0xff]
      %v189 = vld [vmem:[%s142 + $0x130] sm:$0xff]
      %v190 = vld [vmem:[%s142 + $0x138] sm:$0xff]
      %v191 = vld [vmem:[%s142 + $0x140] sm:$0xff]
      %v192 = vld [vmem:[%s142 + $0x148] sm:$0xff]
      %v193 = vld [vmem:[%s142 + $0x150] sm:$0xff]
      %v194 = vld [vmem:[%s142 + $0x158] sm:$0xff]
      %v195 = vld [vmem:[%s142 + $0x160] sm:$0xff]
      %v196 = vld [vmem:[%s142 + $0x168] sm:$0xff]
      %v197 = vld [vmem:[%s142 + $0x170] sm:$0xff]
      %v198 = vld [vmem:[%s142 + $0x178] sm:$0xff]
      %v199 = vld [vmem:[%s142 + $0x180] sm:$0xff]
      %v200 = vld [vmem:[%s142 + $0x188] sm:$0xff]
      %v201 = vld [vmem:[%s142 + $0x190] sm:$0xff]
      %v202 = vld [vmem:[%s142 + $0x198] sm:$0xff]
      %v203 = vld [vmem:[%s142 + $0x1a0] sm:$0xff]
      %v204 = vld [vmem:[%s142 + $0x1a8] sm:$0xff]
      %v205 = vld [vmem:[%s142 + $0x1b0] sm:$0xff]
      %v206 = vld [vmem:[%s142 + $0x1b8] sm:$0xff]
      %v207 = vld [vmem:[%s142 + $0x1c0] sm:$0xff]
      %v208 = vld [vmem:[%s142 + $0x1c8] sm:$0xff]
      %v209 = vld [vmem:[%s142 + $0x1d0] sm:$0xff]
      %v210 = vld [vmem:[%s142 + $0x1d8] sm:$0xff]
      %v211 = vld [vmem:[%s142 + $0x1e0] sm:$0xff]
      %v212 = vld [vmem:[%s142 + $0x1e8] sm:$0xff]
      %v213 = vld [vmem:[%s142 + $0x1f0] sm:$0xff]
      %v214 = vld [vmem:[%s142 + $0x1f8] sm:$0xff]
      %v215 = vld [vmem:[%s142 + $0x200] sm:$0xff]
      %v216 = vld [vmem:[%s142 + $0x208] sm:$0xff]
      %v217 = vld [vmem:[%s142 + $0x210] sm:$0xff]
      %v218 = vld [vmem:[%s142 + $0x218] sm:$0xff]
      %v219 = vld [vmem:[%s142 + $0x220] sm:$0xff]
      %v220 = vld [vmem:[%s142 + $0x228] sm:$0xff]
      %v221 = vld [vmem:[%s142 + $0x230] sm:$0xff]
      %v222 = vld [vmem:[%s142 + $0x238] sm:$0xff]
      %v223 = vld [vmem:[%s142 + $0x240] sm:$0xff]
      %v224 = vld [vmem:[%s142 + $0x248] sm:$0xff]
      %v225 = vld [vmem:[%s142 + $0x250] sm:$0xff]
      %v226 = vld [vmem:[%s142 + $0x258] sm:$0xff]
      %v227 = vld [vmem:[%s142 + $0x260] sm:$0xff]
      %v228 = vld [vmem:[%s142 + $0x268] sm:$0xff]
      %v229 = vld [vmem:[%s142 + $0x270] sm:$0xff]
      %v230 = vld [vmem:[%s142 + $0x278] sm:$0xff]
      %v231 = vld [vmem:[%s142 + $0x280] sm:$0xff]
      %v232 = vld [vmem:[%s142 + $0x288] sm:$0xff]
      %v233 = vld [vmem:[%s142 + $0x290] sm:$0xff]
      %v234 = vld [vmem:[%s142 + $0x298] sm:$0xff]
      %v235 = vld [vmem:[%s142 + $0x2a0] sm:$0xff]
      %v236 = vld [vmem:[%s142 + $0x2a8] sm:$0xff]
      %v237 = vld [vmem:[%s142 + $0x2b0] sm:$0xff]
      %v238 = vld [vmem:[%s142 + $0x2b8] sm:$0xff]
      %v239 = vld [vmem:[%s142 + $0x2c0] sm:$0xff]
      %v240 = vld [vmem:[%s142 + $0x2c8] sm:$0xff]
      %v241 = vld [vmem:[%s142 + $0x2d0] sm:$0xff]
      %v242 = vld [vmem:[%s142 + $0x2d8] sm:$0xff]
      %v243 = vld [vmem:[%s142 + $0x2e0] sm:$0xff]
      %v244 = vld [vmem:[%s142 + $0x2e8] sm:$0xff]
      %v245 = vld [vmem:[%s142 + $0x2f0] sm:$0xff]
      %v246 = vld [vmem:[%s142 + $0x2f8] sm:$0xff]
      %v247 = vld [vmem:[%s1] sm:$0xf]
      %v248 = vld [vmem:[%s1 + $0x4] sm:$0xf]
      %v249 = vld [vmem:[%s1 + $0x8] sm:$0xf]
      %v250 = vld [vmem:[%s1 + $0xc] sm:$0xf]
      %v251 = vld [vmem:[%s1 + $0x10] sm:$0xf]
      %v252 = vld [vmem:[%s1 + $0x14] sm:$0xf]
      %v253 = vld [vmem:[%s1 + $0x18] sm:$0xf]
      %v254 = vld [vmem:[%s1 + $0x1c] sm:$0xf]
      %v255 = vld [vmem:[%s1 + $0x20] sm:$0xf]
      %v256 = vld [vmem:[%s1 + $0x24] sm:$0xf]
      %v257 = vld [vmem:[%s1 + $0x28] sm:$0xf]
      %v258 = vld [vmem:[%s1 + $0x2c] sm:$0xf]
      %v259 = vld [vmem:[%s1 + $0x30] sm:$0xf]
      %v260 = vld [vmem:[%s1 + $0x34] sm:$0xf]
      %v261 = vld [vmem:[%s1 + $0x38] sm:$0xf]
      %v262 = vld [vmem:[%s1 + $0x3c] sm:$0xf]
      %v263 = vld [vmem:[%s1 + $0x40] sm:$0xf]
      %v264 = vld [vmem:[%s1 + $0x44] sm:$0xf]
      %v265 = vld [vmem:[%s1 + $0x48] sm:$0xf]
      %v266 = vld [vmem:[%s1 + $0x4c] sm:$0xf]
      %v267 = vld [vmem:[%s1 + $0x50] sm:$0xf]
      %v268 = vld [vmem:[%s1 + $0x54] sm:$0xf]
      %v269 = vld [vmem:[%s1 + $0x58] sm:$0xf]
      %v270 = vld [vmem:[%s1 + $0x5c] sm:$0xf]
      %v271 = vld [vmem:[%s1 + $0x60] sm:$0xf]
      %v272 = vld [vmem:[%s1 + $0x64] sm:$0xf]
      %v273 = vld [vmem:[%s1 + $0x68] sm:$0xf]
      %v274 = vld [vmem:[%s1 + $0x6c] sm:$0xf]
      %v275 = vld [vmem:[%s1 + $0x70] sm:$0xf]
      %v276 = vld [vmem:[%s1 + $0x74] sm:$0xf]
      %v277 = vld [vmem:[%s1 + $0x78] sm:$0xf]
      %v278 = vld [vmem:[%s1 + $0x7c] sm:$0xf]
      %v279 = vld [vmem:[%s1 + $0x80] sm:$0xf]
      %v280 = vld [vmem:[%s1 + $0x84] sm:$0xf]
      %v281 = vld [vmem:[%s1 + $0x88] sm:$0xf]
      %v282 = vld [vmem:[%s1 + $0x8c] sm:$0xf]
      %v283 = vld [vmem:[%s1 + $0x90] sm:$0xf]
      %v284 = vld [vmem:[%s1 + $0x94] sm:$0xf]
      %v285 = vld [vmem:[%s1 + $0x98] sm:$0xf]
      %v286 = vld [vmem:[%s1 + $0x9c] sm:$0xf]
      %v287 = vld [vmem:[%s1 + $0xa0] sm:$0xf]
      %v288 = vld [vmem:[%s1 + $0xa4] sm:$0xf]
      %v289 = vld [vmem:[%s1 + $0xa8] sm:$0xf]
      %v290 = vld [vmem:[%s1 + $0xac] sm:$0xf]
      %v291 = vld [vmem:[%s1 + $0xb0] sm:$0xf]
      %v292 = vld [vmem:[%s1 + $0xb4] sm:$0xf]
      %v293 = vld [vmem:[%s1 + $0xb8] sm:$0xf]
      %v294 = vld [vmem:[%s1 + $0xbc] sm:$0xf]
      %v295 = vld [vmem:[%s1 + $0xc0] sm:$0xf]
      %v296 = vld [vmem:[%s1 + $0xc4] sm:$0xf]
      %v297 = vld [vmem:[%s1 + $0xc8] sm:$0xf]
      %v298 = vld [vmem:[%s1 + $0xcc] sm:$0xf]
      %v299 = vld [vmem:[%s1 + $0xd0] sm:$0xf]
      %v300 = vld [vmem:[%s1 + $0xd4] sm:$0xf]
      %v301 = vld [vmem:[%s1 + $0xd8] sm:$0xf]
      %v302 = vld [vmem:[%s1 + $0xdc] sm:$0xf]
      %v303 = vld [vmem:[%s1 + $0xe0] sm:$0xf]
      %v304 = vld [vmem:[%s1 + $0xe4] sm:$0xf]
      %v305 = vld [vmem:[%s1 + $0xe8] sm:$0xf]
      %v306 = vld [vmem:[%s1 + $0xec] sm:$0xf]
      %v307 = vld [vmem:[%s1 + $0xf0] sm:$0xf]
      %v308 = vld [vmem:[%s1 + $0xf4] sm:$0xf]
      %v309 = vld [vmem:[%s1 + $0xf8] sm:$0xf]
      %v310 = vld [vmem:[%s1 + $0xfc] sm:$0xf]
      %v311 = vld [vmem:[%s1 + $0x100] sm:$0xf]
      %v312 = vld [vmem:[%s1 + $0x104] sm:$0xf]
      %v313 = vld [vmem:[%s1 + $0x108] sm:$0xf]
      %v314 = vld [vmem:[%s1 + $0x10c] sm:$0xf]
      %v315 = vld [vmem:[%s1 + $0x110] sm:$0xf]
      %v316 = vld [vmem:[%s1 + $0x114] sm:$0xf]
      %v317 = vld [vmem:[%s1 + $0x118] sm:$0xf]
      %v318 = vld [vmem:[%s1 + $0x11c] sm:$0xf]
      %v319 = vld [vmem:[%s1 + $0x120] sm:$0xf]
      %v320 = vld [vmem:[%s1 + $0x124] sm:$0xf]
      %v321 = vld [vmem:[%s1 + $0x128] sm:$0xf]
      %v322 = vld [vmem:[%s1 + $0x12c] sm:$0xf]
      %v323 = vld [vmem:[%s1 + $0x130] sm:$0xf]
      %v324 = vld [vmem:[%s1 + $0x134] sm:$0xf]
      %v325 = vld [vmem:[%s1 + $0x138] sm:$0xf]
      %v326 = vld [vmem:[%s1 + $0x13c] sm:$0xf]
      %v327 = vld [vmem:[%s1 + $0x140] sm:$0xf]
      %v328 = vld [vmem:[%s1 + $0x144] sm:$0xf]
      %v329 = vld [vmem:[%s1 + $0x148] sm:$0xf]
      %v330 = vld [vmem:[%s1 + $0x14c] sm:$0xf]
      %v331 = vld [vmem:[%s1 + $0x150] sm:$0xf]
      %v332 = vld [vmem:[%s1 + $0x154] sm:$0xf]
      %v333 = vld [vmem:[%s1 + $0x158] sm:$0xf]
      %v334 = vld [vmem:[%s1 + $0x15c] sm:$0xf]
      %v335 = vld [vmem:[%s1 + $0x160] sm:$0xf]
      %v336 = vld [vmem:[%s1 + $0x164] sm:$0xf]
      %v337 = vld [vmem:[%s1 + $0x168] sm:$0xf]
      %v338 = vld [vmem:[%s1 + $0x16c] sm:$0xf]
      %v339 = vld [vmem:[%s1 + $0x170] sm:$0xf]
      %v340 = vld [vmem:[%s1 + $0x174] sm:$0xf]
      %v341 = vld [vmem:[%s1 + $0x178] sm:$0xf]
      %v342 = vld [vmem:[%s1 + $0x17c] sm:$0xf]
      %v439 = vunpack.c.l.b16 %v151
      %v440 = vunpack.c.h.b16 %v151
      %v441 = vunpack.c.l.b16 %v152
      %v442 = vunpack.c.h.b16 %v152
      %v443 = vunpack.c.l.b16 %v153
      %v444 = vunpack.c.h.b16 %v153
      %v445 = vunpack.c.l.b16 %v154
      %v446 = vunpack.c.h.b16 %v154
      %v447 = vunpack.c.l.b16 %v155
      %v448 = vunpack.c.h.b16 %v155
      %v449 = vunpack.c.l.b16 %v156
      %v450 = vunpack.c.h.b16 %v156
      %v451 = vunpack.c.l.b16 %v157
      %v452 = vunpack.c.h.b16 %v157
      %v453 = vunpack.c.l.b16 %v158
      %v454 = vunpack.c.h.b16 %v158
      %v455 = vunpack.c.l.b16 %v159
      %v456 = vunpack.c.h.b16 %v159
      %v457 = vunpack.c.l.b16 %v160
      %v458 = vunpack.c.h.b16 %v160
      %v459 = vunpack.c.l.b16 %v161
      %v460 = vunpack.c.h.b16 %v161
      %v461 = vunpack.c.l.b16 %v162
      %v462 = vunpack.c.h.b16 %v162
      %v463 = vunpack.c.l.b16 %v163
      %v464 = vunpack.c.h.b16 %v163
      %v465 = vunpack.c.l.b16 %v164
      %v466 = vunpack.c.h.b16 %v164
      %v467 = vunpack.c.l.b16 %v165
      %v468 = vunpack.c.h.b16 %v165
      %v469 = vunpack.c.l.b16 %v166
      %v470 = vunpack.c.h.b16 %v166
      %v471 = vunpack.c.l.b16 %v167
      %v472 = vunpack.c.h.b16 %v167
      %v473 = vunpack.c.l.b16 %v168
      %v474 = vunpack.c.h.b16 %v168
      %v475 = vunpack.c.l.b16 %v169
      %v476 = vunpack.c.h.b16 %v169
      %v477 = vunpack.c.l.b16 %v170
      %v478 = vunpack.c.h.b16 %v170
      %v479 = vunpack.c.l.b16 %v171
      %v480 = vunpack.c.h.b16 %v171
      %v481 = vunpack.c.l.b16 %v172
      %v482 = vunpack.c.h.b16 %v172
      %v483 = vunpack.c.l.b16 %v173
      %v484 = vunpack.c.h.b16 %v173
      %v485 = vunpack.c.l.b16 %v174
      %v486 = vunpack.c.h.b16 %v174
      %v487 = vunpack.c.l.b16 %v175
      %v488 = vunpack.c.h.b16 %v175
      %v489 = vunpack.c.l.b16 %v176
      %v490 = vunpack.c.h.b16 %v176
      %v491 = vunpack.c.l.b16 %v177
      %v492 = vunpack.c.h.b16 %v177
      %v493 = vunpack.c.l.b16 %v178
      %v494 = vunpack.c.h.b16 %v178
      %v495 = vunpack.c.l.b16 %v179
      %v496 = vunpack.c.h.b16 %v179
      %v497 = vunpack.c.l.b16 %v180
      %v498 = vunpack.c.h.b16 %v180
      %v499 = vunpack.c.l.b16 %v181
      %v500 = vunpack.c.h.b16 %v181
      %v501 = vunpack.c.l.b16 %v182
      %v502 = vunpack.c.h.b16 %v182
      %v503 = vunpack.c.l.b16 %v183
      %v504 = vunpack.c.h.b16 %v183
      %v505 = vunpack.c.l.b16 %v184
      %v506 = vunpack.c.h.b16 %v184
      %v507 = vunpack.c.l.b16 %v185
      %v508 = vunpack.c.h.b16 %v185
      %v509 = vunpack.c.l.b16 %v186
      %v510 = vunpack.c.h.b16 %v186
      %v511 = vunpack.c.l.b16 %v187
      %v512 = vunpack.c.h.b16 %v187
      %v513 = vunpack.c.l.b16 %v188
      %v514 = vunpack.c.h.b16 %v188
      %v515 = vunpack.c.l.b16 %v189
      %v516 = vunpack.c.h.b16 %v189
      %v517 = vunpack.c.l.b16 %v190
      %v518 = vunpack.c.h.b16 %v190
      %v519 = vunpack.c.l.b16 %v191
      %v520 = vunpack.c.h.b16 %v191
      %v521 = vunpack.c.l.b16 %v192
      %v522 = vunpack.c.h.b16 %v192
      %v523 = vunpack.c.l.b16 %v193
      %v524 = vunpack.c.h.b16 %v193
      %v525 = vunpack.c.l.b16 %v194
      %v526 = vunpack.c.h.b16 %v194
      %v527 = vunpack.c.l.b16 %v195
      %v528 = vunpack.c.h.b16 %v195
      %v529 = vunpack.c.l.b16 %v196
      %v530 = vunpack.c.h.b16 %v196
      %v531 = vunpack.c.l.b16 %v197
      %v532 = vunpack.c.h.b16 %v197
      %v533 = vunpack.c.l.b16 %v198
      %v534 = vunpack.c.h.b16 %v198
      %v535 = vunpack.c.l.b16 %v199
      %v536 = vunpack.c.h.b16 %v199
      %v537 = vunpack.c.l.b16 %v200
      %v538 = vunpack.c.h.b16 %v200
      %v539 = vunpack.c.l.b16 %v201
      %v540 = vunpack.c.h.b16 %v201
      %v541 = vunpack.c.l.b16 %v202
      %v542 = vunpack.c.h.b16 %v202
      %v543 = vunpack.c.l.b16 %v203
      %v544 = vunpack.c.h.b16 %v203
      %v545 = vunpack.c.l.b16 %v204
      %v546 = vunpack.c.h.b16 %v204
      %v547 = vunpack.c.l.b16 %v205
      %v548 = vunpack.c.h.b16 %v205
      %v549 = vunpack.c.l.b16 %v206
      %v550 = vunpack.c.h.b16 %v206
      %v551 = vunpack.c.l.b16 %v207
      %v552 = vunpack.c.h.b16 %v207
      %v553 = vunpack.c.l.b16 %v208
      %v554 = vunpack.c.h.b16 %v208
      %v555 = vunpack.c.l.b16 %v209
      %v556 = vunpack.c.h.b16 %v209
      %v557 = vunpack.c.l.b16 %v210
      %v558 = vunpack.c.h.b16 %v210
      %v559 = vunpack.c.l.b16 %v211
      %v560 = vunpack.c.h.b16 %v211
      %v561 = vunpack.c.l.b16 %v212
      %v562 = vunpack.c.h.b16 %v212
      %v563 = vunpack.c.l.b16 %v213
      %v564 = vunpack.c.h.b16 %v213
      %v565 = vunpack.c.l.b16 %v214
      %v566 = vunpack.c.h.b16 %v214
      %v567 = vunpack.c.l.b16 %v215
      %v568 = vunpack.c.h.b16 %v215
      %v569 = vunpack.c.l.b16 %v216
      %v570 = vunpack.c.h.b16 %v216
      %v571 = vunpack.c.l.b16 %v217
      %v572 = vunpack.c.h.b16 %v217
      %v573 = vunpack.c.l.b16 %v218
      %v574 = vunpack.c.h.b16 %v218
      %v575 = vunpack.c.l.b16 %v219
      %v576 = vunpack.c.h.b16 %v219
      %v577 = vunpack.c.l.b16 %v220
      %v578 = vunpack.c.h.b16 %v220
      %v579 = vunpack.c.l.b16 %v221
      %v580 = vunpack.c.h.b16 %v221
      %v581 = vunpack.c.l.b16 %v222
      %v582 = vunpack.c.h.b16 %v222
      %v583 = vunpack.c.l.b16 %v223
      %v584 = vunpack.c.h.b16 %v223
      %v585 = vunpack.c.l.b16 %v224
      %v586 = vunpack.c.h.b16 %v224
      %v587 = vunpack.c.l.b16 %v225
      %v588 = vunpack.c.h.b16 %v225
      %v589 = vunpack.c.l.b16 %v226
      %v590 = vunpack.c.h.b16 %v226
      %v591 = vunpack.c.l.b16 %v227
      %v592 = vunpack.c.h.b16 %v227
      %v593 = vunpack.c.l.b16 %v228
      %v594 = vunpack.c.h.b16 %v228
      %v595 = vunpack.c.l.b16 %v229
      %v596 = vunpack.c.h.b16 %v229
      %v597 = vunpack.c.l.b16 %v230
      %v598 = vunpack.c.h.b16 %v230
      %v599 = vunpack.c.l.b16 %v231
      %v600 = vunpack.c.h.b16 %v231
      %v601 = vunpack.c.l.b16 %v232
      %v602 = vunpack.c.h.b16 %v232
      %v603 = vunpack.c.l.b16 %v233
      %v604 = vunpack.c.h.b16 %v233
      %v605 = vunpack.c.l.b16 %v234
      %v606 = vunpack.c.h.b16 %v234
      %v607 = vunpack.c.l.b16 %v235
      %v608 = vunpack.c.h.b16 %v235
      %v609 = vunpack.c.l.b16 %v236
      %v610 = vunpack.c.h.b16 %v236
      %v611 = vunpack.c.l.b16 %v237
      %v612 = vunpack.c.h.b16 %v237
      %v613 = vunpack.c.l.b16 %v238
      %v614 = vunpack.c.h.b16 %v238
      %v615 = vunpack.c.l.b16 %v239
      %v616 = vunpack.c.h.b16 %v239
      %v617 = vunpack.c.l.b16 %v240
      %v618 = vunpack.c.h.b16 %v240
      %v619 = vunpack.c.l.b16 %v241
      %v620 = vunpack.c.h.b16 %v241
      %v621 = vunpack.c.l.b16 %v242
      %v622 = vunpack.c.h.b16 %v242
      %v623 = vunpack.c.l.b16 %v243
      %v624 = vunpack.c.h.b16 %v243
      %v625 = vunpack.c.l.b16 %v244
      %v626 = vunpack.c.h.b16 %v244
      %v627 = vunpack.c.l.b16 %v245
      %v628 = vunpack.c.h.b16 %v245
      %v629 = vunpack.c.l.b16 %v246
      %v630 = vunpack.c.h.b16 %v246
      %v631 = vpack.c.b16 %v445, %v439
      %v632 = vpack.c.b16 %v446, %v440
      %v633 = vpack.c.b16 %v447, %v441
      %v634 = vpack.c.b16 %v448, %v442
      %v635 = vpack.c.b16 %v449, %v443
      %v636 = vpack.c.b16 %v450, %v444
      %v637 = vpack.c.b16 %v457, %v451
      %v638 = vpack.c.b16 %v458, %v452
      %v639 = vpack.c.b16 %v459, %v453
      %v640 = vpack.c.b16 %v460, %v454
      %v641 = vpack.c.b16 %v461, %v455
      %v642 = vpack.c.b16 %v462, %v456
      %v643 = vpack.c.b16 %v469, %v463
      %v644 = vpack.c.b16 %v470, %v464
      %v645 = vpack.c.b16 %v471, %v465
      %v646 = vpack.c.b16 %v472, %v466
      %v647 = vpack.c.b16 %v473, %v467
      %v648 = vpack.c.b16 %v474, %v468
      %v649 = vpack.c.b16 %v481, %v475
      %v650 = vpack.c.b16 %v482, %v476
      %v651 = vpack.c.b16 %v483, %v477
      %v652 = vpack.c.b16 %v484, %v478
      %v653 = vpack.c.b16 %v485, %v479
      %v654 = vpack.c.b16 %v486, %v480
      %v655 = vpack.c.b16 %v493, %v487
      %v656 = vpack.c.b16 %v494, %v488
      %v657 = vpack.c.b16 %v495, %v489
      %v658 = vpack.c.b16 %v496, %v490
      %v659 = vpack.c.b16 %v497, %v491
      %v660 = vpack.c.b16 %v498, %v492
      %v661 = vpack.c.b16 %v505, %v499
      %v662 = vpack.c.b16 %v506, %v500
      %v663 = vpack.c.b16 %v507, %v501
      %v664 = vpack.c.b16 %v508, %v502
      %v665 = vpack.c.b16 %v509, %v503
      %v666 = vpack.c.b16 %v510, %v504
      %v667 = vpack.c.b16 %v517, %v511
      %v668 = vpack.c.b16 %v518, %v512
      %v669 = vpack.c.b16 %v519, %v513
      %v670 = vpack.c.b16 %v520, %v514
      %v671 = vpack.c.b16 %v521, %v515
      %v672 = vpack.c.b16 %v522, %v516
      %v673 = vpack.c.b16 %v529, %v523
      %v674 = vpack.c.b16 %v530, %v524
      %v675 = vpack.c.b16 %v531, %v525
      %v676 = vpack.c.b16 %v532, %v526
      %v677 = vpack.c.b16 %v533, %v527
      %v678 = vpack.c.b16 %v534, %v528
      %v679 = vpack.c.b16 %v541, %v535
      %v680 = vpack.c.b16 %v542, %v536
      %v681 = vpack.c.b16 %v543, %v537
      %v682 = vpack.c.b16 %v544, %v538
      %v683 = vpack.c.b16 %v545, %v539
      %v684 = vpack.c.b16 %v546, %v540
      %v685 = vpack.c.b16 %v553, %v547
      %v686 = vpack.c.b16 %v554, %v548
      %v687 = vpack.c.b16 %v555, %v549
      %v688 = vpack.c.b16 %v556, %v550
      %v689 = vpack.c.b16 %v557, %v551
      %v690 = vpack.c.b16 %v558, %v552
      %v691 = vpack.c.b16 %v565, %v559
      %v692 = vpack.c.b16 %v566, %v560
      %v693 = vpack.c.b16 %v567, %v561
      %v694 = vpack.c.b16 %v568, %v562
      %v695 = vpack.c.b16 %v569, %v563
      %v696 = vpack.c.b16 %v570, %v564
      %v697 = vpack.c.b16 %v577, %v571
      %v698 = vpack.c.b16 %v578, %v572
      %v699 = vpack.c.b16 %v579, %v573
      %v700 = vpack.c.b16 %v580, %v574
      %v701 = vpack.c.b16 %v581, %v575
      %v702 = vpack.c.b16 %v582, %v576
      %v703 = vpack.c.b16 %v589, %v583
      %v704 = vpack.c.b16 %v590, %v584
      %v705 = vpack.c.b16 %v591, %v585
      %v706 = vpack.c.b16 %v592, %v586
      %v707 = vpack.c.b16 %v593, %v587
      %v708 = vpack.c.b16 %v594, %v588
      %v709 = vpack.c.b16 %v601, %v595
      %v710 = vpack.c.b16 %v602, %v596
      %v711 = vpack.c.b16 %v603, %v597
      %v712 = vpack.c.b16 %v604, %v598
      %v713 = vpack.c.b16 %v605, %v599
      %v714 = vpack.c.b16 %v606, %v600
      %v715 = vpack.c.b16 %v613, %v607
      %v716 = vpack.c.b16 %v614, %v608
      %v717 = vpack.c.b16 %v615, %v609
      %v718 = vpack.c.b16 %v616, %v610
      %v719 = vpack.c.b16 %v617, %v611
      %v720 = vpack.c.b16 %v618, %v612
      %v721 = vpack.c.b16 %v625, %v619
      %v722 = vpack.c.b16 %v626, %v620
      %v723 = vpack.c.b16 %v627, %v621
      %v724 = vpack.c.b16 %v628, %v622
      %v725 = vpack.c.b16 %v629, %v623
      %v726 = vpack.c.b16 %v630, %v624
      %v919 = vunpack.c.l.b16 %v247
      %v920 = vunpack.c.l.b16 %v248
      %v921 = vunpack.c.l.b16 %v249
      %v922 = vunpack.c.l.b16 %v250
      %v923 = vunpack.c.l.b16 %v251
      %v924 = vunpack.c.l.b16 %v252
      %v925 = vunpack.c.l.b16 %v253
      %v926 = vunpack.c.l.b16 %v254
      %v927 = vunpack.c.l.b16 %v255
      %v928 = vunpack.c.l.b16 %v256
      %v929 = vunpack.c.l.b16 %v257
      %v930 = vunpack.c.l.b16 %v258
      %v931 = vunpack.c.l.b16 %v259
      %v932 = vunpack.c.l.b16 %v260
      %v933 = vunpack.c.l.b16 %v261
      %v934 = vunpack.c.l.b16 %v262
      %v935 = vunpack.c.l.b16 %v263
      %v936 = vunpack.c.l.b16 %v264
      %v937 = vunpack.c.l.b16 %v265
      %v938 = vunpack.c.l.b16 %v266
      %v939 = vunpack.c.l.b16 %v267
      %v940 = vunpack.c.l.b16 %v268
      %v941 = vunpack.c.l.b16 %v269
      %v942 = vunpack.c.l.b16 %v270
      %v943 = vunpack.c.l.b16 %v271
      %v944 = vunpack.c.l.b16 %v272
      %v945 = vunpack.c.l.b16 %v273
      %v946 = vunpack.c.l.b16 %v274
      %v947 = vunpack.c.l.b16 %v275
      %v948 = vunpack.c.l.b16 %v276
      %v949 = vunpack.c.l.b16 %v277
      %v950 = vunpack.c.l.b16 %v278
      %v951 = vunpack.c.l.b16 %v279
      %v952 = vunpack.c.l.b16 %v280
      %v953 = vunpack.c.l.b16 %v281
      %v954 = vunpack.c.l.b16 %v282
      %v955 = vunpack.c.l.b16 %v283
      %v956 = vunpack.c.l.b16 %v284
      %v957 = vunpack.c.l.b16 %v285
      %v958 = vunpack.c.l.b16 %v286
      %v959 = vunpack.c.l.b16 %v287
      %v960 = vunpack.c.l.b16 %v288
      %v961 = vunpack.c.l.b16 %v289
      %v962 = vunpack.c.l.b16 %v290
      %v963 = vunpack.c.l.b16 %v291
      %v964 = vunpack.c.l.b16 %v292
      %v965 = vunpack.c.l.b16 %v293
      %v966 = vunpack.c.l.b16 %v294
      %v967 = vunpack.c.l.b16 %v295
      %v968 = vunpack.c.l.b16 %v296
      %v969 = vunpack.c.l.b16 %v297
      %v970 = vunpack.c.l.b16 %v298
      %v971 = vunpack.c.l.b16 %v299
      %v972 = vunpack.c.l.b16 %v300
      %v973 = vunpack.c.l.b16 %v301
      %v974 = vunpack.c.l.b16 %v302
      %v975 = vunpack.c.l.b16 %v303
      %v976 = vunpack.c.l.b16 %v304
      %v977 = vunpack.c.l.b16 %v305
      %v978 = vunpack.c.l.b16 %v306
      %v979 = vunpack.c.l.b16 %v307
      %v980 = vunpack.c.l.b16 %v308
      %v981 = vunpack.c.l.b16 %v309
      %v982 = vunpack.c.l.b16 %v310
      %v983 = vunpack.c.l.b16 %v311
      %v984 = vunpack.c.l.b16 %v312
      %v985 = vunpack.c.l.b16 %v313
      %v986 = vunpack.c.l.b16 %v314
      %v987 = vunpack.c.l.b16 %v315
      %v988 = vunpack.c.l.b16 %v316
      %v989 = vunpack.c.l.b16 %v317
      %v990 = vunpack.c.l.b16 %v318
      %v991 = vunpack.c.l.b16 %v319
      %v992 = vunpack.c.l.b16 %v320
      %v993 = vunpack.c.l.b16 %v321
      %v994 = vunpack.c.l.b16 %v322
      %v995 = vunpack.c.l.b16 %v323
      %v996 = vunpack.c.l.b16 %v324
      %v997 = vunpack.c.l.b16 %v325
      %v998 = vunpack.c.l.b16 %v326
      %v999 = vunpack.c.l.b16 %v327
      %v1000 = vunpack.c.l.b16 %v328
      %v1001 = vunpack.c.l.b16 %v329
      %v1002 = vunpack.c.l.b16 %v330
      %v1003 = vunpack.c.l.b16 %v331
      %v1004 = vunpack.c.l.b16 %v332
      %v1005 = vunpack.c.l.b16 %v333
      %v1006 = vunpack.c.l.b16 %v334
      %v1007 = vunpack.c.l.b16 %v335
      %v1008 = vunpack.c.l.b16 %v336
      %v1009 = vunpack.c.l.b16 %v337
      %v1010 = vunpack.c.l.b16 %v338
      %v1011 = vunpack.c.l.b16 %v339
      %v1012 = vunpack.c.l.b16 %v340
      %v1013 = vunpack.c.l.b16 %v341
      %v1014 = vunpack.c.l.b16 %v342
      %v1015 = vpack.c.b16 %v920, %v919
      %v1016 = vpack.c.b16 %v922, %v921
      %v1017 = vpack.c.b16 %v924, %v923
      %v1018 = vpack.c.b16 %v926, %v925
      %v1019 = vpack.c.b16 %v928, %v927
      %v1020 = vpack.c.b16 %v930, %v929
      %v1021 = vpack.c.b16 %v932, %v931
      %v1022 = vpack.c.b16 %v934, %v933
      %v1023 = vpack.c.b16 %v936, %v935
      %v1024 = vpack.c.b16 %v938, %v937
      %v1025 = vpack.c.b16 %v940, %v939
      %v1026 = vpack.c.b16 %v942, %v941
      %v1027 = vpack.c.b16 %v944, %v943
      %v1028 = vpack.c.b16 %v946, %v945
      %v1029 = vpack.c.b16 %v948, %v947
      %v1030 = vpack.c.b16 %v950, %v949
      %v1031 = vpack.c.b16 %v952, %v951
      %v1032 = vpack.c.b16 %v954, %v953
      %v1033 = vpack.c.b16 %v956, %v955
      %v1034 = vpack.c.b16 %v958, %v957
      %v1035 = vpack.c.b16 %v960, %v959
      %v1036 = vpack.c.b16 %v962, %v961
      %v1037 = vpack.c.b16 %v964, %v963
      %v1038 = vpack.c.b16 %v966, %v965
      %v1039 = vpack.c.b16 %v968, %v967
      %v1040 = vpack.c.b16 %v970, %v969
      %v1041 = vpack.c.b16 %v972, %v971
      %v1042 = vpack.c.b16 %v974, %v973
      %v1043 = vpack.c.b16 %v976, %v975
      %v1044 = vpack.c.b16 %v978, %v977
      %v1045 = vpack.c.b16 %v980, %v979
      %v1046 = vpack.c.b16 %v982, %v981
      %v1047 = vpack.c.b16 %v984, %v983
      %v1048 = vpack.c.b16 %v986, %v985
      %v1049 = vpack.c.b16 %v988, %v987
      %v1050 = vpack.c.b16 %v990, %v989
      %v1051 = vpack.c.b16 %v992, %v991
      %v1052 = vpack.c.b16 %v994, %v993
      %v1053 = vpack.c.b16 %v996, %v995
      %v1054 = vpack.c.b16 %v998, %v997
      %v1055 = vpack.c.b16 %v1000, %v999
      %v1056 = vpack.c.b16 %v1002, %v1001
      %v1057 = vpack.c.b16 %v1004, %v1003
      %v1058 = vpack.c.b16 %v1006, %v1005
      %v1059 = vpack.c.b16 %v1008, %v1007
      %v1060 = vpack.c.b16 %v1010, %v1009
      %v1061 = vpack.c.b16 %v1012, %v1011
      %v1062 = vpack.c.b16 %v1014, %v1013
      %1111 = vmatprep.subr.bf16.mxu0 0
      %1112 = vmatpush1.bf16.msra.mxu0 %v1022
      %1113 = vmatprep.subr.bf16.mxu0 0
      %1114 = vmatpush1.bf16.msra.mxu0 %v1021
      %1115 = vmatprep.subr.bf16.mxu0 0
      %1116 = vmatpush1.bf16.msra.mxu0 %v1020
      %1117 = vmatprep.subr.bf16.mxu0 0
      %1118 = vmatpush1.bf16.msra.mxu0 %v1019
      %1119 = vmatprep.subr.bf16.mxu0 0
      %1120 = vmatpush1.bf16.msra.mxu0 %v1018
      %1121 = vmatprep.subr.bf16.mxu0 0
      %1122 = vmatpush1.bf16.msra.mxu0 %v1017
      %1123 = vmatprep.subr.bf16.mxu0 0
      %1124 = vmatpush1.bf16.msra.mxu0 %v1016
      %1125 = vmatprep.subr.bf16.mxu0 0
      %1126 = vmatpush1.bf16.msra.mxu0 %v1015
      %1127 = vmatprep.subr.bf16.mxu0 0
      %1128 = vmatpush2.bf16.msra.mxu0 %v1030
      %1129 = vmatprep.subr.bf16.mxu0 0
      %1130 = vmatpush2.bf16.msra.mxu0 %v1029
      %1131 = vmatprep.subr.bf16.mxu0 0
      %1132 = vmatpush2.bf16.msra.mxu0 %v1028
      %1133 = vmatprep.subr.bf16.mxu0 0
      %1134 = vmatpush2.bf16.msra.mxu0 %v1027
      %1135 = vmatprep.subr.bf16.mxu0 0
      %1136 = vmatpush2.bf16.msra.mxu0 %v1026
      %1137 = vmatprep.subr.bf16.mxu0 0
      %1138 = vmatpush2.bf16.msra.mxu0 %v1025
      %1139 = vmatprep.subr.bf16.mxu0 0
      %1140 = vmatpush2.bf16.msra.mxu0 %v1024
      %1141 = vmatprep.subr.bf16.mxu0 0
      %1142 = vmatpush2.bf16.msra.mxu0 %v1023
      %1143 = vmatprep.mubr.bf16.mxu0 %v632
      %1144 = vmatmul.mubr.bf16.gmra.mxu0 %v631
      %v1145 = vpop.f32.mrf.mxu0
      %v1146 = vadd.f32 0.0, %v1145
      %v1147 = vpop.f32.mrf.mxu0
      %v1148 = vpop.f32.mrf.mxu0
      %v1149 = vadd.f32 0.0, %v1148
      %v1150 = vpop.f32.mrf.mxu0
      %1151 = vmatprep.mubr.bf16.mxu0 %v638
      %1152 = vmatmul.mubr.bf16.gmra.mxu0 %v637
      %v1153 = vpop.f32.mrf.mxu0
      %v1154 = vadd.f32 0.0, %v1153
      %v1155 = vpop.f32.mrf.mxu0
      %v1156 = vpop.f32.mrf.mxu0
      %v1157 = vadd.f32 0.0, %v1156
      %v1158 = vpop.f32.mrf.mxu0
      %1159 = vmatprep.mubr.bf16.mxu0 %v644
      %1160 = vmatmul.mubr.bf16.gmra.mxu0 %v643
      %v1161 = vpop.f32.mrf.mxu0
      %v1162 = vadd.f32 0.0, %v1161
      %v1163 = vpop.f32.mrf.mxu0
      %v1164 = vpop.f32.mrf.mxu0
      %v1165 = vadd.f32 0.0, %v1164
      %v1166 = vpop.f32.mrf.mxu0
      %1167 = vmatprep.mubr.bf16.mxu0 %v650
      %1168 = vmatmul.mubr.bf16.gmra.mxu0 %v649
      %v1169 = vpop.f32.mrf.mxu0
      %v1170 = vadd.f32 0.0, %v1169
      %v1171 = vpop.f32.mrf.mxu0
      %v1172 = vpop.f32.mrf.mxu0
      %v1173 = vadd.f32 0.0, %v1172
      %v1174 = vpop.f32.mrf.mxu0
      %1175 = vmatprep.mubr.bf16.mxu0 %v656
      %1176 = vmatmul.mubr.bf16.gmra.mxu0 %v655
      %v1177 = vpop.f32.mrf.mxu0
      %v1178 = vadd.f32 0.0, %v1177
      %v1179 = vpop.f32.mrf.mxu0
      %v1180 = vpop.f32.mrf.mxu0
      %v1181 = vadd.f32 0.0, %v1180
      %v1182 = vpop.f32.mrf.mxu0
      %1183 = vmatprep.mubr.bf16.mxu0 %v662
      %1184 = vmatmul.mubr.bf16.gmra.mxu0 %v661
      %v1185 = vpop.f32.mrf.mxu0
      %v1186 = vadd.f32 0.0, %v1185
      %v1187 = vpop.f32.mrf.mxu0
      %v1188 = vpop.f32.mrf.mxu0
      %v1189 = vadd.f32 0.0, %v1188
      %v1190 = vpop.f32.mrf.mxu0
      %1191 = vmatprep.mubr.bf16.mxu0 %v668
      %1192 = vmatmul.mubr.bf16.gmra.mxu0 %v667
      %v1193 = vpop.f32.mrf.mxu0
      %v1194 = vadd.f32 0.0, %v1193
      %v1195 = vpop.f32.mrf.mxu0
      %v1196 = vpop.f32.mrf.mxu0
      %v1197 = vadd.f32 0.0, %v1196
      %v1198 = vpop.f32.mrf.mxu0
      %1199 = vmatprep.mubr.bf16.mxu0 %v674
      %1200 = vmatmul.mubr.bf16.gmra.mxu0 %v673
      %v1201 = vpop.f32.mrf.mxu0
      %v1202 = vadd.f32 0.0, %v1201
      %v1203 = vpop.f32.mrf.mxu0
      %v1204 = vpop.f32.mrf.mxu0
      %v1205 = vadd.f32 0.0, %v1204
      %v1206 = vpop.f32.mrf.mxu0
      %1207 = vmatprep.mubr.bf16.mxu0 %v680
      %1208 = vmatmul.mubr.bf16.gmra.mxu0 %v679
      %v1209 = vpop.f32.mrf.mxu0
      %v1210 = vadd.f32 0.0, %v1209
      %v1211 = vpop.f32.mrf.mxu0
      %v1212 = vpop.f32.mrf.mxu0
      %v1213 = vadd.f32 0.0, %v1212
      %v1214 = vpop.f32.mrf.mxu0
      %1215 = vmatprep.mubr.bf16.mxu0 %v686
      %1216 = vmatmul.mubr.bf16.gmra.mxu0 %v685
      %v1217 = vpop.f32.mrf.mxu0
      %v1218 = vadd.f32 0.0, %v1217
      %v1219 = vpop.f32.mrf.mxu0
      %v1220 = vpop.f32.mrf.mxu0
      %v1221 = vadd.f32 0.0, %v1220
      %v1222 = vpop.f32.mrf.mxu0
      %1223 = vmatprep.mubr.bf16.mxu0 %v692
      %1224 = vmatmul.mubr.bf16.gmra.mxu0 %v691
      %v1225 = vpop.f32.mrf.mxu0
      %v1226 = vadd.f32 0.0, %v1225
      %v1227 = vpop.f32.mrf.mxu0
      %v1228 = vpop.f32.mrf.mxu0
      %v1229 = vadd.f32 0.0, %v1228
      %v1230 = vpop.f32.mrf.mxu0
      %1231 = vmatprep.mubr.bf16.mxu0 %v698
      %1232 = vmatmul.mubr.bf16.gmra.mxu0 %v697
      %v1233 = vpop.f32.mrf.mxu0
      %v1234 = vadd.f32 0.0, %v1233
      %v1235 = vpop.f32.mrf.mxu0
      %v1236 = vpop.f32.mrf.mxu0
      %v1237 = vadd.f32 0.0, %v1236
      %v1238 = vpop.f32.mrf.mxu0
      %1239 = vmatprep.mubr.bf16.mxu0 %v704
      %1240 = vmatmul.mubr.bf16.gmra.mxu0 %v703
      %v1241 = vpop.f32.mrf.mxu0
      %v1242 = vadd.f32 0.0, %v1241
      %v1243 = vpop.f32.mrf.mxu0
      %v1244 = vpop.f32.mrf.mxu0
      %v1245 = vadd.f32 0.0, %v1244
      %v1246 = vpop.f32.mrf.mxu0
      %1247 = vmatprep.mubr.bf16.mxu0 %v710
      %1248 = vmatmul.mubr.bf16.gmra.mxu0 %v709
      %v1249 = vpop.f32.mrf.mxu0
      %v1250 = vadd.f32 0.0, %v1249
      %v1251 = vpop.f32.mrf.mxu0
      %v1252 = vpop.f32.mrf.mxu0
      %v1253 = vadd.f32 0.0, %v1252
      %v1254 = vpop.f32.mrf.mxu0
      %1255 = vmatprep.mubr.bf16.mxu0 %v716
      %1256 = vmatmul.mubr.bf16.gmra.mxu0 %v715
      %v1257 = vpop.f32.mrf.mxu0
      %v1258 = vadd.f32 0.0, %v1257
      %v1259 = vpop.f32.mrf.mxu0
      %v1260 = vpop.f32.mrf.mxu0
      %v1261 = vadd.f32 0.0, %v1260
      %v1262 = vpop.f32.mrf.mxu0
      %1263 = vmatprep.mubr.bf16.mxu0 %v722
      %1264 = vmatmul.mubr.bf16.gmra.mxu0 %v721
      %v1265 = vpop.f32.mrf.mxu0
      %v1266 = vadd.f32 0.0, %v1265
      %v1267 = vpop.f32.mrf.mxu0
      %v1268 = vpop.f32.mrf.mxu0
      %v1269 = vadd.f32 0.0, %v1268
      %v1270 = vpop.f32.mrf.mxu0
      %1271 = vdwg.mxu0
      %1272 = vmatprep.subr.bf16.mxu0 0
      %1273 = vmatpush1.bf16.msra.mxu0 %v1038
      %1274 = vmatprep.subr.bf16.mxu0 0
      %1275 = vmatpush1.bf16.msra.mxu0 %v1037
      %1276 = vmatprep.subr.bf16.mxu0 0
      %1277 = vmatpush1.bf16.msra.mxu0 %v1036
      %1278 = vmatprep.subr.bf16.mxu0 0
      %1279 = vmatpush1.bf16.msra.mxu0 %v1035
      %1280 = vmatprep.subr.bf16.mxu0 0
      %1281 = vmatpush1.bf16.msra.mxu0 %v1034
      %1282 = vmatprep.subr.bf16.mxu0 0
      %1283 = vmatpush1.bf16.msra.mxu0 %v1033
      %1284 = vmatprep.subr.bf16.mxu0 0
      %1285 = vmatpush1.bf16.msra.mxu0 %v1032
      %1286 = vmatprep.subr.bf16.mxu0 0
      %1287 = vmatpush1.bf16.msra.mxu0 %v1031
      %1288 = vmatprep.subr.bf16.mxu0 0
      %1289 = vmatpush2.bf16.msra.mxu0 %v1046
      %1290 = vmatprep.subr.bf16.mxu0 0
      %1291 = vmatpush2.bf16.msra.mxu0 %v1045
      %1292 = vmatprep.subr.bf16.mxu0 0
      %1293 = vmatpush2.bf16.msra.mxu0 %v1044
      %1294 = vmatprep.subr.bf16.mxu0 0
      %1295 = vmatpush2.bf16.msra.mxu0 %v1043
      %1296 = vmatprep.subr.bf16.mxu0 0
      %1297 = vmatpush2.bf16.msra.mxu0 %v1042
      %1298 = vmatprep.subr.bf16.mxu0 0
      %1299 = vmatpush2.bf16.msra.mxu0 %v1041
      %1300 = vmatprep.subr.bf16.mxu0 0
      %1301 = vmatpush2.bf16.msra.mxu0 %v1040
      %1302 = vmatprep.subr.bf16.mxu0 0
      %1303 = vmatpush2.bf16.msra.mxu0 %v1039
      %1304 = vmatprep.mubr.bf16.mxu0 %v634
      %1305 = vmatmul.mubr.bf16.gmra.mxu0 %v633
      %v1306 = vpop.f32.mrf.mxu0
      %v1307 = vadd.f32 %v1146, %v1306
      %v1308 = vpop.f32.mrf.mxu0
      %v1309 = vpop.f32.mrf.mxu0
      %v1310 = vadd.f32 %v1149, %v1309
      %v1311 = vpop.f32.mrf.mxu0
      %1312 = vmatprep.mubr.bf16.mxu0 %v640
      %1313 = vmatmul.mubr.bf16.gmra.mxu0 %v639
      %v1314 = vpop.f32.mrf.mxu0
      %v1315 = vadd.f32 %v1154, %v1314
      %v1316 = vpop.f32.mrf.mxu0
      %v1317 = vpop.f32.mrf.mxu0
      %v1318 = vadd.f32 %v1157, %v1317
      %v1319 = vpop.f32.mrf.mxu0
      %1320 = vmatprep.mubr.bf16.mxu0 %v646
      %1321 = vmatmul.mubr.bf16.gmra.mxu0 %v645
      %v1322 = vpop.f32.mrf.mxu0
      %v1323 = vadd.f32 %v1162, %v1322
      %v1324 = vpop.f32.mrf.mxu0
      %v1325 = vpop.f32.mrf.mxu0
      %v1326 = vadd.f32 %v1165, %v1325
      %v1327 = vpop.f32.mrf.mxu0
      %1328 = vmatprep.mubr.bf16.mxu0 %v652
      %1329 = vmatmul.mubr.bf16.gmra.mxu0 %v651
      %v1330 = vpop.f32.mrf.mxu0
      %v1331 = vadd.f32 %v1170, %v1330
      %v1332 = vpop.f32.mrf.mxu0
      %v1333 = vpop.f32.mrf.mxu0
      %v1334 = vadd.f32 %v1173, %v1333
      %v1335 = vpop.f32.mrf.mxu0
      %1336 = vmatprep.mubr.bf16.mxu0 %v658
      %1337 = vmatmul.mubr.bf16.gmra.mxu0 %v657
      %v1338 = vpop.f32.mrf.mxu0
      %v1339 = vadd.f32 %v1178, %v1338
      %v1340 = vpop.f32.mrf.mxu0
      %v1341 = vpop.f32.mrf.mxu0
      %v1342 = vadd.f32 %v1181, %v1341
      %v1343 = vpop.f32.mrf.mxu0
      %1344 = vmatprep.mubr.bf16.mxu0 %v664
      %1345 = vmatmul.mubr.bf16.gmra.mxu0 %v663
      %v1346 = vpop.f32.mrf.mxu0
      %v1347 = vadd.f32 %v1186, %v1346
      %v1348 = vpop.f32.mrf.mxu0
      %v1349 = vpop.f32.mrf.mxu0
      %v1350 = vadd.f32 %v1189, %v1349
      %v1351 = vpop.f32.mrf.mxu0
      %1352 = vmatprep.mubr.bf16.mxu0 %v670
      %1353 = vmatmul.mubr.bf16.gmra.mxu0 %v669
      %v1354 = vpop.f32.mrf.mxu0
      %v1355 = vadd.f32 %v1194, %v1354
      %v1356 = vpop.f32.mrf.mxu0
      %v1357 = vpop.f32.mrf.mxu0
      %v1358 = vadd.f32 %v1197, %v1357
      %v1359 = vpop.f32.mrf.mxu0
      %1360 = vmatprep.mubr.bf16.mxu0 %v676
      %1361 = vmatmul.mubr.bf16.gmra.mxu0 %v675
      %v1362 = vpop.f32.mrf.mxu0
      %v1363 = vadd.f32 %v1202, %v1362
      %v1364 = vpop.f32.mrf.mxu0
      %v1365 = vpop.f32.mrf.mxu0
      %v1366 = vadd.f32 %v1205, %v1365
      %v1367 = vpop.f32.mrf.mxu0
      %1368 = vmatprep.mubr.bf16.mxu0 %v682
      %1369 = vmatmul.mubr.bf16.gmra.mxu0 %v681
      %v1370 = vpop.f32.mrf.mxu0
      %v1371 = vadd.f32 %v1210, %v1370
      %v1372 = vpop.f32.mrf.mxu0
      %v1373 = vpop.f32.mrf.mxu0
      %v1374 = vadd.f32 %v1213, %v1373
      %v1375 = vpop.f32.mrf.mxu0
      %1376 = vmatprep.mubr.bf16.mxu0 %v688
      %1377 = vmatmul.mubr.bf16.gmra.mxu0 %v687
      %v1378 = vpop.f32.mrf.mxu0
      %v1379 = vadd.f32 %v1218, %v1378
      %v1380 = vpop.f32.mrf.mxu0
      %v1381 = vpop.f32.mrf.mxu0
      %v1382 = vadd.f32 %v1221, %v1381
      %v1383 = vpop.f32.mrf.mxu0
      %1384 = vmatprep.mubr.bf16.mxu0 %v694
      %1385 = vmatmul.mubr.bf16.gmra.mxu0 %v693
      %v1386 = vpop.f32.mrf.mxu0
      %v1387 = vadd.f32 %v1226, %v1386
      %v1388 = vpop.f32.mrf.mxu0
      %v1389 = vpop.f32.mrf.mxu0
      %v1390 = vadd.f32 %v1229, %v1389
      %v1391 = vpop.f32.mrf.mxu0
      %1392 = vmatprep.mubr.bf16.mxu0 %v700
      %1393 = vmatmul.mubr.bf16.gmra.mxu0 %v699
      %v1394 = vpop.f32.mrf.mxu0
      %v1395 = vadd.f32 %v1234, %v1394
      %v1396 = vpop.f32.mrf.mxu0
      %v1397 = vpop.f32.mrf.mxu0
      %v1398 = vadd.f32 %v1237, %v1397
      %v1399 = vpop.f32.mrf.mxu0
      %1400 = vmatprep.mubr.bf16.mxu0 %v706
      %1401 = vmatmul.mubr.bf16.gmra.mxu0 %v705
      %v1402 = vpop.f32.mrf.mxu0
      %v1403 = vadd.f32 %v1242, %v1402
      %v1404 = vpop.f32.mrf.mxu0
      %v1405 = vpop.f32.mrf.mxu0
      %v1406 = vadd.f32 %v1245, %v1405
      %v1407 = vpop.f32.mrf.mxu0
      %1408 = vmatprep.mubr.bf16.mxu0 %v712
      %1409 = vmatmul.mubr.bf16.gmra.mxu0 %v711
      %v1410 = vpop.f32.mrf.mxu0
      %v1411 = vadd.f32 %v1250, %v1410
      %v1412 = vpop.f32.mrf.mxu0
      %v1413 = vpop.f32.mrf.mxu0
      %v1414 = vadd.f32 %v1253, %v1413
      %v1415 = vpop.f32.mrf.mxu0
      %1416 = vmatprep.mubr.bf16.mxu0 %v718
      %1417 = vmatmul.mubr.bf16.gmra.mxu0 %v717
      %v1418 = vpop.f32.mrf.mxu0
      %v1419 = vadd.f32 %v1258, %v1418
      %v1420 = vpop.f32.mrf.mxu0
      %v1421 = vpop.f32.mrf.mxu0
      %v1422 = vadd.f32 %v1261, %v1421
      %v1423 = vpop.f32.mrf.mxu0
      %1424 = vmatprep.mubr.bf16.mxu0 %v724
      %1425 = vmatmul.mubr.bf16.gmra.mxu0 %v723
      %v1426 = vpop.f32.mrf.mxu0
      %v1427 = vadd.f32 %v1266, %v1426
      %v1428 = vpop.f32.mrf.mxu0
      %v1429 = vpop.f32.mrf.mxu0
      %v1430 = vadd.f32 %v1269, %v1429
      %v1431 = vpop.f32.mrf.mxu0
      %1432 = vdwg.mxu0
      %1433 = vmatprep.subr.bf16.mxu0 0
      %1434 = vmatpush1.bf16.msra.mxu0 %v1054
      %1435 = vmatprep.subr.bf16.mxu0 0
      %1436 = vmatpush1.bf16.msra.mxu0 %v1053
      %1437 = vmatprep.subr.bf16.mxu0 0
      %1438 = vmatpush1.bf16.msra.mxu0 %v1052
      %1439 = vmatprep.subr.bf16.mxu0 0
      %1440 = vmatpush1.bf16.msra.mxu0 %v1051
      %1441 = vmatprep.subr.bf16.mxu0 0
      %1442 = vmatpush1.bf16.msra.mxu0 %v1050
      %1443 = vmatprep.subr.bf16.mxu0 0
      %1444 = vmatpush1.bf16.msra.mxu0 %v1049
      %1445 = vmatprep.subr.bf16.mxu0 0
      %1446 = vmatpush1.bf16.msra.mxu0 %v1048
      %1447 = vmatprep.subr.bf16.mxu0 0
      %1448 = vmatpush1.bf16.msra.mxu0 %v1047
      %1449 = vmatprep.subr.bf16.mxu0 0
      %1450 = vmatpush2.bf16.msra.mxu0 %v1062
      %1451 = vmatprep.subr.bf16.mxu0 0
      %1452 = vmatpush2.bf16.msra.mxu0 %v1061
      %1453 = vmatprep.subr.bf16.mxu0 0
      %1454 = vmatpush2.bf16.msra.mxu0 %v1060
      %1455 = vmatprep.subr.bf16.mxu0 0
      %1456 = vmatpush2.bf16.msra.mxu0 %v1059
      %1457 = vmatprep.subr.bf16.mxu0 0
      %1458 = vmatpush2.bf16.msra.mxu0 %v1058
      %1459 = vmatprep.subr.bf16.mxu0 0
      %1460 = vmatpush2.bf16.msra.mxu0 %v1057
      %1461 = vmatprep.subr.bf16.mxu0 0
      %1462 = vmatpush2.bf16.msra.mxu0 %v1056
      %1463 = vmatprep.subr.bf16.mxu0 0
      %1464 = vmatpush2.bf16.msra.mxu0 %v1055
      %1465 = vmatprep.mubr.bf16.mxu0 %v636
      %1466 = vmatmul.mubr.bf16.gmra.mxu0 %v635
      %v1467 = vpop.f32.mrf.mxu0
      %v1468 = vadd.f32 %v1307, %v1467
      %v1469 = vpop.f32.mrf.mxu0
      %v1470 = vpop.f32.mrf.mxu0
      %v1471 = vadd.f32 %v1310, %v1470
      %v1472 = vpop.f32.mrf.mxu0
      %1473 = vmatprep.mubr.bf16.mxu0 %v642
      %1474 = vmatmul.mubr.bf16.gmra.mxu0 %v641
      %v1475 = vpop.f32.mrf.mxu0
      %v1476 = vadd.f32 %v1315, %v1475
      %v1477 = vpop.f32.mrf.mxu0
      %v1478 = vpop.f32.mrf.mxu0
      %v1479 = vadd.f32 %v1318, %v1478
      %v1480 = vpop.f32.mrf.mxu0
      %1481 = vmatprep.mubr.bf16.mxu0 %v648
      %1482 = vmatmul.mubr.bf16.gmra.mxu0 %v647
      %v1483 = vpop.f32.mrf.mxu0
      %v1484 = vadd.f32 %v1323, %v1483
      %v1485 = vpop.f32.mrf.mxu0
      %v1486 = vpop.f32.mrf.mxu0
      %v1487 = vadd.f32 %v1326, %v1486
      %v1488 = vpop.f32.mrf.mxu0
      %1489 = vmatprep.mubr.bf16.mxu0 %v654
      %1490 = vmatmul.mubr.bf16.gmra.mxu0 %v653
      %v1491 = vpop.f32.mrf.mxu0
      %v1492 = vadd.f32 %v1331, %v1491
      %v1493 = vpop.f32.mrf.mxu0
      %v1494 = vpop.f32.mrf.mxu0
      %v1495 = vadd.f32 %v1334, %v1494
      %v1496 = vpop.f32.mrf.mxu0
      %1497 = vmatprep.mubr.bf16.mxu0 %v660
      %1498 = vmatmul.mubr.bf16.gmra.mxu0 %v659
      %v1499 = vpop.f32.mrf.mxu0
      %v1500 = vadd.f32 %v1339, %v1499
      %v1501 = vpop.f32.mrf.mxu0
      %v1502 = vpop.f32.mrf.mxu0
      %v1503 = vadd.f32 %v1342, %v1502
      %v1504 = vpop.f32.mrf.mxu0
      %1505 = vmatprep.mubr.bf16.mxu0 %v666
      %1506 = vmatmul.mubr.bf16.gmra.mxu0 %v665
      %v1507 = vpop.f32.mrf.mxu0
      %v1508 = vadd.f32 %v1347, %v1507
      %v1509 = vpop.f32.mrf.mxu0
      %v1510 = vpop.f32.mrf.mxu0
      %v1511 = vadd.f32 %v1350, %v1510
      %v1512 = vpop.f32.mrf.mxu0
      %1513 = vmatprep.mubr.bf16.mxu0 %v672
      %1514 = vmatmul.mubr.bf16.gmra.mxu0 %v671
      %v1515 = vpop.f32.mrf.mxu0
      %v1516 = vadd.f32 %v1355, %v1515
      %v1517 = vpop.f32.mrf.mxu0
      %v1518 = vpop.f32.mrf.mxu0
      %v1519 = vadd.f32 %v1358, %v1518
      %v1520 = vpop.f32.mrf.mxu0
      %1521 = vmatprep.mubr.bf16.mxu0 %v678
      %1522 = vmatmul.mubr.bf16.gmra.mxu0 %v677
      %v1523 = vpop.f32.mrf.mxu0
      %v1524 = vadd.f32 %v1363, %v1523
      %v1525 = vpop.f32.mrf.mxu0
      %v1526 = vpop.f32.mrf.mxu0
      %v1527 = vadd.f32 %v1366, %v1526
      %v1528 = vpop.f32.mrf.mxu0
      %1529 = vmatprep.mubr.bf16.mxu0 %v684
      %1530 = vmatmul.mubr.bf16.gmra.mxu0 %v683
      %v1531 = vpop.f32.mrf.mxu0
      %v1532 = vadd.f32 %v1371, %v1531
      %v1533 = vpop.f32.mrf.mxu0
      %v1534 = vpop.f32.mrf.mxu0
      %v1535 = vadd.f32 %v1374, %v1534
      %v1536 = vpop.f32.mrf.mxu0
      %1537 = vmatprep.mubr.bf16.mxu0 %v690
      %1538 = vmatmul.mubr.bf16.gmra.mxu0 %v689
      %v1539 = vpop.f32.mrf.mxu0
      %v1540 = vadd.f32 %v1379, %v1539
      %v1541 = vpop.f32.mrf.mxu0
      %v1542 = vpop.f32.mrf.mxu0
      %v1543 = vadd.f32 %v1382, %v1542
      %v1544 = vpop.f32.mrf.mxu0
      %1545 = vmatprep.mubr.bf16.mxu0 %v696
      %1546 = vmatmul.mubr.bf16.gmra.mxu0 %v695
      %v1547 = vpop.f32.mrf.mxu0
      %v1548 = vadd.f32 %v1387, %v1547
      %v1549 = vpop.f32.mrf.mxu0
      %v1550 = vpop.f32.mrf.mxu0
      %v1551 = vadd.f32 %v1390, %v1550
      %v1552 = vpop.f32.mrf.mxu0
      %1553 = vmatprep.mubr.bf16.mxu0 %v702
      %1554 = vmatmul.mubr.bf16.gmra.mxu0 %v701
      %v1555 = vpop.f32.mrf.mxu0
      %v1556 = vadd.f32 %v1395, %v1555
      %v1557 = vpop.f32.mrf.mxu0
      %v1558 = vpop.f32.mrf.mxu0
      %v1559 = vadd.f32 %v1398, %v1558
      %v1560 = vpop.f32.mrf.mxu0
      %1561 = vmatprep.mubr.bf16.mxu0 %v708
      %1562 = vmatmul.mubr.bf16.gmra.mxu0 %v707
      %v1563 = vpop.f32.mrf.mxu0
      %v1564 = vadd.f32 %v1403, %v1563
      %v1565 = vpop.f32.mrf.mxu0
      %v1566 = vpop.f32.mrf.mxu0
      %v1567 = vadd.f32 %v1406, %v1566
      %v1568 = vpop.f32.mrf.mxu0
      %1569 = vmatprep.mubr.bf16.mxu0 %v714
      %1570 = vmatmul.mubr.bf16.gmra.mxu0 %v713
      %v1571 = vpop.f32.mrf.mxu0
      %v1572 = vadd.f32 %v1411, %v1571
      %v1573 = vpop.f32.mrf.mxu0
      %v1574 = vpop.f32.mrf.mxu0
      %v1575 = vadd.f32 %v1414, %v1574
      %v1576 = vpop.f32.mrf.mxu0
      %1577 = vmatprep.mubr.bf16.mxu0 %v720
      %1578 = vmatmul.mubr.bf16.gmra.mxu0 %v719
      %v1579 = vpop.f32.mrf.mxu0
      %v1580 = vadd.f32 %v1419, %v1579
      %v1581 = vpop.f32.mrf.mxu0
      %v1582 = vpop.f32.mrf.mxu0
      %v1583 = vadd.f32 %v1422, %v1582
      %v1584 = vpop.f32.mrf.mxu0
      %1585 = vmatprep.mubr.bf16.mxu0 %v726
      %1586 = vmatmul.mubr.bf16.gmra.mxu0 %v725
      %v1587 = vpop.f32.mrf.mxu0
      %v1588 = vadd.f32 %v1427, %v1587
      %v1589 = vpop.f32.mrf.mxu0
      %v1590 = vpop.f32.mrf.mxu0
      %v1591 = vadd.f32 %v1430, %v1590
      %v1592 = vpop.f32.mrf.mxu0
      %1593 = vdwg.mxu0
      %vm1594 = vcmp.gt.f32.partialorder %v1468, 0.0
      %vm1595 = vcmp.gt.f32.partialorder %v1471, 0.0
      %vm1596 = vcmp.gt.f32.partialorder %v1476, 0.0
      %vm1597 = vcmp.gt.f32.partialorder %v1479, 0.0
      %vm1598 = vcmp.gt.f32.partialorder %v1484, 0.0
      %vm1599 = vcmp.gt.f32.partialorder %v1487, 0.0
      %vm1600 = vcmp.gt.f32.partialorder %v1492, 0.0
      %vm1601 = vcmp.gt.f32.partialorder %v1495, 0.0
      %vm1602 = vcmp.gt.f32.partialorder %v1500, 0.0
      %vm1603 = vcmp.gt.f32.partialorder %v1503, 0.0
      %vm1604 = vcmp.gt.f32.partialorder %v1508, 0.0
      %vm1605 = vcmp.gt.f32.partialorder %v1511, 0.0
      %vm1606 = vcmp.gt.f32.partialorder %v1516, 0.0
      %vm1607 = vcmp.gt.f32.partialorder %v1519, 0.0
      %vm1608 = vcmp.gt.f32.partialorder %v1524, 0.0
      %vm1609 = vcmp.gt.f32.partialorder %v1527, 0.0
      %vm1610 = vcmp.gt.f32.partialorder %v1532, 0.0
      %vm1611 = vcmp.gt.f32.partialorder %v1535, 0.0
      %vm1612 = vcmp.gt.f32.partialorder %v1540, 0.0
      %vm1613 = vcmp.gt.f32.partialorder %v1543, 0.0
      %vm1614 = vcmp.gt.f32.partialorder %v1548, 0.0
      %vm1615 = vcmp.gt.f32.partialorder %v1551, 0.0
      %vm1616 = vcmp.gt.f32.partialorder %v1556, 0.0
      %vm1617 = vcmp.gt.f32.partialorder %v1559, 0.0
      %vm1618 = vcmp.gt.f32.partialorder %v1564, 0.0
      %vm1619 = vcmp.gt.f32.partialorder %v1567, 0.0
      %vm1620 = vcmp.gt.f32.partialorder %v1572, 0.0
      %vm1621 = vcmp.gt.f32.partialorder %v1575, 0.0
      %vm1622 = vcmp.gt.f32.partialorder %v1580, 0.0
      %vm1623 = vcmp.gt.f32.partialorder %v1583, 0.0
      %vm1624 = vcmp.gt.f32.partialorder %v1588, 0.0
      %vm1625 = vcmp.gt.f32.partialorder %v1591, 0.0
      %v1626 = vmul.f32 %v1468, 0.2
      %v1627 = vmul.f32 %v1471, 0.2
      %v1628 = vmul.f32 %v1476, 0.2
      %v1629 = vmul.f32 %v1479, 0.2
      %v1630 = vmul.f32 %v1484, 0.2
      %v1631 = vmul.f32 %v1487, 0.2
      %v1632 = vmul.f32 %v1492, 0.2
      %v1633 = vmul.f32 %v1495, 0.2
      %v1634 = vmul.f32 %v1500, 0.2
      %v1635 = vmul.f32 %v1503, 0.2
      %v1636 = vmul.f32 %v1508, 0.2
      %v1637 = vmul.f32 %v1511, 0.2
      %v1638 = vmul.f32 %v1516, 0.2
      %v1639 = vmul.f32 %v1519, 0.2
      %v1640 = vmul.f32 %v1524, 0.2
      %v1641 = vmul.f32 %v1527, 0.2
      %v1642 = vmul.f32 %v1532, 0.2
      %v1643 = vmul.f32 %v1535, 0.2
      %v1644 = vmul.f32 %v1540, 0.2
      %v1645 = vmul.f32 %v1543, 0.2
      %v1646 = vmul.f32 %v1548, 0.2
      %v1647 = vmul.f32 %v1551, 0.2
      %v1648 = vmul.f32 %v1556, 0.2
      %v1649 = vmul.f32 %v1559, 0.2
      %v1650 = vmul.f32 %v1564, 0.2
      %v1651 = vmul.f32 %v1567, 0.2
      %v1652 = vmul.f32 %v1572, 0.2
      %v1653 = vmul.f32 %v1575, 0.2
      %v1654 = vmul.f32 %v1580, 0.2
      %v1655 = vmul.f32 %v1583, 0.2
      %v1656 = vmul.f32 %v1588, 0.2
      %v1657 = vmul.f32 %v1591, 0.2
      %v1658 = vsel %vm1594, %v1468, %v1626
      %v1659 = vsel %vm1595, %v1471, %v1627
      %v1660 = vsel %vm1596, %v1476, %v1628
      %v1661 = vsel %vm1597, %v1479, %v1629
      %v1662 = vsel %vm1598, %v1484, %v1630
      %v1663 = vsel %vm1599, %v1487, %v1631
      %v1664 = vsel %vm1600, %v1492, %v1632
      %v1665 = vsel %vm1601, %v1495, %v1633
      %v1666 = vsel %vm1602, %v1500, %v1634
      %v1667 = vsel %vm1603, %v1503, %v1635
      %v1668 = vsel %vm1604, %v1508, %v1636
      %v1669 = vsel %vm1605, %v1511, %v1637
      %v1670 = vsel %vm1606, %v1516, %v1638
      %v1671 = vsel %vm1607, %v1519, %v1639
      %v1672 = vsel %vm1608, %v1524, %v1640
      %v1673 = vsel %vm1609, %v1527, %v1641
      %v1674 = vsel %vm1610, %v1532, %v1642
      %v1675 = vsel %vm1611, %v1535, %v1643
      %v1676 = vsel %vm1612, %v1540, %v1644
      %v1677 = vsel %vm1613, %v1543, %v1645
      %v1678 = vsel %vm1614, %v1548, %v1646
      %v1679 = vsel %vm1615, %v1551, %v1647
      %v1680 = vsel %vm1616, %v1556, %v1648
      %v1681 = vsel %vm1617, %v1559, %v1649
      %v1682 = vsel %vm1618, %v1564, %v1650
      %v1683 = vsel %vm1619, %v1567, %v1651
      %v1684 = vsel %vm1620, %v1572, %v1652
      %v1685 = vsel %vm1621, %v1575, %v1653
      %v1686 = vsel %vm1622, %v1580, %v1654
      %v1687 = vsel %vm1623, %v1583, %v1655
      %v1688 = vsel %vm1624, %v1588, %v1656
      %v1689 = vsel %vm1625, %v1591, %v1657
      %v1690 = vpack.c.bf16 %v1659, %v1658
      %v1691 = vpack.c.bf16 %v1661, %v1660
      %v1692 = vpack.c.bf16 %v1663, %v1662
      %v1693 = vpack.c.bf16 %v1665, %v1664
      %v1694 = vpack.c.bf16 %v1667, %v1666
      %v1695 = vpack.c.bf16 %v1669, %v1668
      %v1696 = vpack.c.bf16 %v1671, %v1670
      %v1697 = vpack.c.bf16 %v1673, %v1672
      %v1698 = vpack.c.bf16 %v1675, %v1674
      %v1699 = vpack.c.bf16 %v1677, %v1676
      %v1700 = vpack.c.bf16 %v1679, %v1678
      %v1701 = vpack.c.bf16 %v1681, %v1680
      %v1702 = vpack.c.bf16 %v1683, %v1682
      %v1703 = vpack.c.bf16 %v1685, %v1684
      %v1704 = vpack.c.bf16 %v1687, %v1686
      %v1705 = vpack.c.bf16 %v1689, %v1688
      %v1722 = vunpack.c.l.b16 %v1690
      %v1723 = vunpack.c.h.b16 %v1690
      %v1724 = vunpack.c.l.b16 %v1691
      %v1725 = vunpack.c.h.b16 %v1691
      %v1726 = vunpack.c.l.b16 %v1692
      %v1727 = vunpack.c.h.b16 %v1692
      %v1728 = vunpack.c.l.b16 %v1693
      %v1729 = vunpack.c.h.b16 %v1693
      %v1730 = vunpack.c.l.b16 %v1694
      %v1731 = vunpack.c.h.b16 %v1694
      %v1732 = vunpack.c.l.b16 %v1695
      %v1733 = vunpack.c.h.b16 %v1695
      %v1734 = vunpack.c.l.b16 %v1696
      %v1735 = vunpack.c.h.b16 %v1696
      %v1736 = vunpack.c.l.b16 %v1697
      %v1737 = vunpack.c.h.b16 %v1697
      %v1738 = vunpack.c.l.b16 %v1698
      %v1739 = vunpack.c.h.b16 %v1698
      %v1740 = vunpack.c.l.b16 %v1699
      %v1741 = vunpack.c.h.b16 %v1699
      %v1742 = vunpack.c.l.b16 %v1700
      %v1743 = vunpack.c.h.b16 %v1700
      %v1744 = vunpack.c.l.b16 %v1701
      %v1745 = vunpack.c.h.b16 %v1701
      %v1746 = vunpack.c.l.b16 %v1702
      %v1747 = vunpack.c.h.b16 %v1702
      %v1748 = vunpack.c.l.b16 %v1703
      %v1749 = vunpack.c.h.b16 %v1703
      %v1750 = vunpack.c.l.b16 %v1704
      %v1751 = vunpack.c.h.b16 %v1704
      %v1752 = vunpack.c.l.b16 %v1705
      %v1753 = vunpack.c.h.b16 %v1705
      %v1754 = vpack.c.b16 %v1722, %v1722
      %v1755 = vpack.c.b16 %v1723, %v1723
      %v1756 = vpack.c.b16 %v1724, %v1724
      %v1757 = vpack.c.b16 %v1725, %v1725
      %v1758 = vpack.c.b16 %v1726, %v1726
      %v1759 = vpack.c.b16 %v1727, %v1727
      %v1760 = vpack.c.b16 %v1728, %v1728
      %v1761 = vpack.c.b16 %v1729, %v1729
      %v1762 = vpack.c.b16 %v1730, %v1730
      %v1763 = vpack.c.b16 %v1731, %v1731
      %v1764 = vpack.c.b16 %v1732, %v1732
      %v1765 = vpack.c.b16 %v1733, %v1733
      %v1766 = vpack.c.b16 %v1734, %v1734
      %v1767 = vpack.c.b16 %v1735, %v1735
      %v1768 = vpack.c.b16 %v1736, %v1736
      %v1769 = vpack.c.b16 %v1737, %v1737
      %v1770 = vpack.c.b16 %v1738, %v1738
      %v1771 = vpack.c.b16 %v1739, %v1739
      %v1772 = vpack.c.b16 %v1740, %v1740
      %v1773 = vpack.c.b16 %v1741, %v1741
      %v1774 = vpack.c.b16 %v1742, %v1742
      %v1775 = vpack.c.b16 %v1743, %v1743
      %v1776 = vpack.c.b16 %v1744, %v1744
      %v1777 = vpack.c.b16 %v1745, %v1745
      %v1778 = vpack.c.b16 %v1746, %v1746
      %v1779 = vpack.c.b16 %v1747, %v1747
      %v1780 = vpack.c.b16 %v1748, %v1748
      %v1781 = vpack.c.b16 %v1749, %v1749
      %v1782 = vpack.c.b16 %v1750, %v1750
      %v1783 = vpack.c.b16 %v1751, %v1751
      %v1784 = vpack.c.b16 %v1752, %v1752
      %v1785 = vpack.c.b16 %v1753, %v1753
      %1818 = vst [vmem:[%s148] sm:$0xf] %v1754
      %1819 = vst [vmem:[%s148 + $0x4] sm:$0xf] %v1755
      %1820 = vst [vmem:[%s148 + $0x8] sm:$0xf] %v1756
      %1821 = vst [vmem:[%s148 + $0xc] sm:$0xf] %v1757
      %1822 = vst [vmem:[%s148 + $0x10] sm:$0xf] %v1758
      %1823 = vst [vmem:[%s148 + $0x14] sm:$0xf] %v1759
      %1824 = vst [vmem:[%s148 + $0x18] sm:$0xf] %v1760
      %1825 = vst [vmem:[%s148 + $0x1c] sm:$0xf] %v1761
      %1826 = vst [vmem:[%s148 + $0x20] sm:$0xf] %v1762
      %1827 = vst [vmem:[%s148 + $0x24] sm:$0xf] %v1763
      %1828 = vst [vmem:[%s148 + $0x28] sm:$0xf] %v1764
      %1829 = vst [vmem:[%s148 + $0x2c] sm:$0xf] %v1765
      %1830 = vst [vmem:[%s148 + $0x30] sm:$0xf] %v1766
      %1831 = vst [vmem:[%s148 + $0x34] sm:$0xf] %v1767
      %1832 = vst [vmem:[%s148 + $0x38] sm:$0xf] %v1768
      %1833 = vst [vmem:[%s148 + $0x3c] sm:$0xf] %v1769
      %1834 = vst [vmem:[%s148 + $0x40] sm:$0xf] %v1770
      %1835 = vst [vmem:[%s148 + $0x44] sm:$0xf] %v1771
      %1836 = vst [vmem:[%s148 + $0x48] sm:$0xf] %v1772
      %1837 = vst [vmem:[%s148 + $0x4c] sm:$0xf] %v1773
      %1838 = vst [vmem:[%s148 + $0x50] sm:$0xf] %v1774
      %1839 = vst [vmem:[%s148 + $0x54] sm:$0xf] %v1775
      %1840 = vst [vmem:[%s148 + $0x58] sm:$0xf] %v1776
      %1841 = vst [vmem:[%s148 + $0x5c] sm:$0xf] %v1777
      %1842 = vst [vmem:[%s148 + $0x60] sm:$0xf] %v1778
      %1843 = vst [vmem:[%s148 + $0x64] sm:$0xf] %v1779
      %1844 = vst [vmem:[%s148 + $0x68] sm:$0xf] %v1780
      %1845 = vst [vmem:[%s148 + $0x6c] sm:$0xf] %v1781
      %1846 = vst [vmem:[%s148 + $0x70] sm:$0xf] %v1782
      %1847 = vst [vmem:[%s148 + $0x74] sm:$0xf] %v1783
      %1848 = vst [vmem:[%s148 + $0x78] sm:$0xf] %v1784
      %1849 = vst [vmem:[%s148 + $0x7c] sm:$0xf] %v1785
      %s1850 = smul.u32 32, %s13
      %p1851 = scmp.lt.s32.totalorder %s1850, 63
      %s1852 = scalar_select %p1851, %s1850, 63
      %s1853 = smul.addr %s1852, 4
      %s1854 = scalar_lea.vmem %s2, %s1853
      // Predicated region
      $region29: #{encoder_forward.4} parent=27 // pred_check
        %p1855 = pneg %p78
      $region30: #{encoder_forward.4} parent=27 // pred_check_branch
        %1857 = sbr.rel (%p1855) target = $region32
      $region31: #{encoder_forward.4} parent=27 // pred_region
        %s1858 = smul.u32 32, %s13
      $region32: #{encoder_forward.4} parent=27 // pred_fallthru
        _
    $region28: #{encoder_forward.4} parent=5 // pred_fallthru
      _
    %p1859 = scmp.le.s32.totalorder 2, %s8
    // Predicated region
    $region33: #{encoder_forward.4} parent=5 // pred_check
      %p1860 = pneg %p1859
    $region34: #{encoder_forward.4} parent=5 // pred_check_branch
      %1862 = sbr.rel (%p1860) target = $region36
    $region35: #{encoder_forward.4} parent=5 // pred_region
      %s1863 = ssub.s32 %s8, 2
      // Predicated region
      $region37: #{encoder_forward.4} parent=35 // pred_check
        %p1864 = pneg %p84
      $region38: #{encoder_forward.4} parent=35 // pred_check_branch
        %1866 = sbr.rel (%p1864) target = $region40
      $region39: #{encoder_forward.4} parent=35 // pred_region
        %s1867 = smul.u32 32, %s14
        %p1868 = scmp.lt.s32.totalorder %s1867, 63
        %s1869 = scalar_select %p1868, %s1867, 63
        %s1870 = smul.addr %s1869, 4
        %s1871 = scalar_lea.vmem %s2, %s1870
      $region40: #{encoder_forward.4} parent=35 // pred_fallthru
        _
    $region36: #{encoder_forward.4} parent=5 // pred_fallthru
      _
  $region6: #{encoder_forward.4} parent=0 // loop_footer
    %s12 = sadd.s32 1, %s8
  $region7: #{encoder_forward.4} parent=0 // loop_footer_branch
    %7 = sbr.rel target = $region3
  $region8: #{encoder_forward.4} parent=0 // loop_exit
    _

// kernel: encoder_forward.5
$region0: #{encoder_forward.5}
  #allocation0 [shape = 'u32[]', space=smem, size = 0x4, offset = 0x4, fixed_abs, tag = 'smem constant byte address 0x4 - core index']
  #allocation1 [shape = 'u32[144,128]{1,0:T(1,128)}', space=vmem, size = 0x12000, scoped, tag = 'internal scratch']
  #allocation2 [shape = 'f32[256,128]{1,0:T(8,128)}', space=vmem, size = 0x20000, scoped, tag = 'scratch operand']
  #allocation3 [shape = 'f32[1,128]{1,0:T(1,128)}', space=vmem, size = 0x200, scoped, tag = 'scratch operand']
  #allocation4 [shape = 'f32[1,128]{1,0:T(1,128)}', space=vmem, size = 0x200, scoped, tag = 'scratch operand']
  %s0 = inlined_call_operand.vmem [shape: bf16[256,1024], index: 0, kind: input, shape index: {}]
  %s1 = inlined_call_operand.vmem [shape: bf16[1024,128], index: 1, kind: input, shape index: {}]
  %s2 = inlined_call_operand.vmem [shape: f32[1,128], index: 2, kind: input, shape index: {}]
  %s3 = inlined_call_operand.vmem [shape: f32[1,128], index: 3, kind: input, shape index: {}]
  %s4 = inlined_call_operand.vmem [shape: bf16[256,128], index: 4, kind: output, shape index: {}]
  %s5 = sld [smem:[#allocation0]]
  $region57: #{encoder_forward.5} parent=0
    _
  %s7 = ssub.s32 1, %s5
  %s8 = scalar_select 0, %s7, %s5
  loop: start=0, step=1, limit=4
  $region2: #{encoder_forward.5} parent=0 // loop_pre_header
    _
  $region3: #{encoder_forward.5} parent=0 // loop_header
    %s10 = sphi 0, %s14
    %p11 = scmp.ge.s32.totalorder %s10, 4
    %s20 = sphi 0, %s22
    %s23 = sphi 0, %s20
    %s24 = sphi 0, %s23
    %s40 = sphi 0, %s24
    %s44 = sphi 0, %s44
    %s46 = sphi 0, %s44
    %s47 = sphi 0, %s46
    %s61 = sphi 0, %s47
    %s65 = sphi 0, %s65
    %s67 = sphi 0, %s65
    %s68 = sphi 0, %s67
    %s82 = sphi 0, %s68
    %s86 = sphi 0, %s86
    %s88 = sphi 0, %s86
    %s89 = sphi 0, %s88
    %s103 = sphi 0, %s89
    %s107 = sphi 0, %s107
    %s109 = sphi 0, %s107
    %s110 = sphi 0, %s109
    %s124 = sphi 0, %s110
  $region4: #{encoder_forward.5} parent=0 // loop_header_branch
    %13 = sbr.rel (%p11) target = $region8
  $region5: #{encoder_forward.5} parent=0 // loop_body
    %s15 = ssub.s32 %s10, 1
    %s16 = ssub.s32 %s10, 2
    %s17 = sadd.s32 %s10, 1
    %s18 = ssub.s32 %s10, %s17
    %p19 = scmp.eq.s32.totalorder %s18, 0
    %s21 = sadd.s32 %s20, 1
    %s22 = scalar_select %p19, %s20, %s21
    %p25 = pneg %p19
    %p26 = scmp.eq.s32.totalorder %s10, 1
    %p27 = por %p25, %p26
    %p28 = scmp.ne.s32.totalorder %s20, %s23
    %p29 = scmp.eq.s32.totalorder %s10, 0
    %p30 = por %p28, %p29
    %p31 = scmp.ne.s32.totalorder %s20, %s23
    %p32 = scmp.eq.s32.totalorder %s15, 1
    %p33 = por %p31, %p32
    %p34 = scmp.ne.s32.totalorder %s23, %s24
    %p35 = scmp.eq.s32.totalorder %s15, 0
    %p36 = por %p34, %p35
    %p37 = scmp.ne.s32.totalorder %s23, %s24
    %p38 = scmp.eq.s32.totalorder %s16, 1
    %p39 = por %p37, %p38
    %p41 = scmp.ne.s32.totalorder %s24, %s40
    %p42 = scmp.eq.s32.totalorder %s16, 0
    %p43 = por %p41, %p42
    %s45 = sadd.s32 %s44, 1
    %p48 = scmp.eq.s32.totalorder %s10, 1
    %p49 = scmp.ne.s32.totalorder %s44, %s46
    %p50 = scmp.eq.s32.totalorder %s10, 0
    %p51 = por %p49, %p50
    %p52 = scmp.ne.s32.totalorder %s44, %s46
    %p53 = scmp.eq.s32.totalorder %s15, 1
    %p54 = por %p52, %p53
    %p55 = scmp.ne.s32.totalorder %s46, %s47
    %p56 = scmp.eq.s32.totalorder %s15, 0
    %p57 = por %p55, %p56
    %p58 = scmp.ne.s32.totalorder %s46, %s47
    %p59 = scmp.eq.s32.totalorder %s16, 1
    %p60 = por %p58, %p59
    %p62 = scmp.ne.s32.totalorder %s47, %s61
    %p63 = scmp.eq.s32.totalorder %s16, 0
    %p64 = por %p62, %p63
    %s66 = sadd.s32 %s65, 1
    %p69 = scmp.eq.s32.totalorder %s10, 1
    %p70 = scmp.ne.s32.totalorder %s65, %s67
    %p71 = scmp.eq.s32.totalorder %s10, 0
    %p72 = por %p70, %p71
    %p73 = scmp.ne.s32.totalorder %s65, %s67
    %p74 = scmp.eq.s32.totalorder %s15, 1
    %p75 = por %p73, %p74
    %p76 = scmp.ne.s32.totalorder %s67, %s68
    %p77 = scmp.eq.s32.totalorder %s15, 0
    %p78 = por %p76, %p77
    %p79 = scmp.ne.s32.totalorder %s67, %s68
    %p80 = scmp.eq.s32.totalorder %s16, 1
    %p81 = por %p79, %p80
    %p83 = scmp.ne.s32.totalorder %s68, %s82
    %p84 = scmp.eq.s32.totalorder %s16, 0
    %p85 = por %p83, %p84
    %s87 = sadd.s32 %s86, 1
    %p90 = scmp.eq.s32.totalorder %s10, 1
    %p91 = scmp.ne.s32.totalorder %s86, %s88
    %p92 = scmp.eq.s32.totalorder %s10, 0
    %p93 = por %p91, %p92
    %p94 = scmp.ne.s32.totalorder %s86, %s88
    %p95 = scmp.eq.s32.totalorder %s15, 1
    %p96 = por %p94, %p95
    %p97 = scmp.ne.s32.totalorder %s88, %s89
    %p98 = scmp.eq.s32.totalorder %s15, 0
    %p99 = por %p97, %p98
    %p100 = scmp.ne.s32.totalorder %s88, %s89
    %p101 = scmp.eq.s32.totalorder %s16, 1
    %p102 = por %p100, %p101
    %p104 = scmp.ne.s32.totalorder %s89, %s103
    %p105 = scmp.eq.s32.totalorder %s16, 0
    %p106 = por %p104, %p105
    %s108 = sadd.s32 %s107, 1
    %p111 = scmp.eq.s32.totalorder %s10, 1
    %p112 = scmp.ne.s32.totalorder %s107, %s109
    %p113 = scmp.eq.s32.totalorder %s10, 0
    %p114 = por %p112, %p113
    %p115 = scmp.ne.s32.totalorder %s107, %s109
    %p116 = scmp.eq.s32.totalorder %s15, 1
    %p117 = por %p115, %p116
    %p118 = scmp.ne.s32.totalorder %s109, %s110
    %p119 = scmp.eq.s32.totalorder %s15, 0
    %p120 = por %p118, %p119
    %p121 = scmp.ne.s32.totalorder %s109, %s110
    %p122 = scmp.eq.s32.totalorder %s16, 1
    %p123 = por %p121, %p122
    %p125 = scmp.ne.s32.totalorder %s110, %s124
    %p126 = scmp.eq.s32.totalorder %s16, 0
    %p127 = por %p125, %p126
    %p128 = scmp.le.s32.totalorder 1, %s10
    %p129 = scmp.lt.s32.totalorder %s10, 3
    %p130 = pnand %p128, %p129
    %p131 = pneg %p130
    // Predicated region
    $region9: #{encoder_forward.5} parent=5 // pred_check
      _
    $region10: #{encoder_forward.5} parent=5 // pred_check_branch
      %133 = sbr.rel (%p130) target = $region12
    $region11: #{encoder_forward.5} parent=5 // pred_region
      %s134 = ssub.s32 %s10, 1
      // Predicated region
      $region13: #{encoder_forward.5} parent=11 // pred_check
        %p135 = pneg %p57
      $region14: #{encoder_forward.5} parent=11 // pred_check_branch
        %137 = sbr.rel (%p135) target = $region16
      $region15: #{encoder_forward.5} parent=11 // pred_region
        _
      $region16: #{encoder_forward.5} parent=11 // pred_fallthru
        _
      // Predicated region
      $region17: #{encoder_forward.5} parent=11 // pred_check
        %p138 = pneg %p78
      $region18: #{encoder_forward.5} parent=11 // pred_check_branch
        %140 = sbr.rel (%p138) target = $region20
      $region19: #{encoder_forward.5} parent=11 // pred_region
        _
      $region20: #{encoder_forward.5} parent=11 // pred_fallthru
        _
      // Predicated region
      $region21: #{encoder_forward.5} parent=11 // pred_check
        %p141 = pneg %p99
      $region22: #{encoder_forward.5} parent=11 // pred_check_branch
        %143 = sbr.rel (%p141) target = $region24
      $region23: #{encoder_forward.5} parent=11 // pred_region
        _
      $region24: #{encoder_forward.5} parent=11 // pred_fallthru
        _
    $region12: #{encoder_forward.5} parent=5 // pred_fallthru
      _
    %p144 = scmp.lt.s32.totalorder %s10, 2
    // Predicated region
    $region25: #{encoder_forward.5} parent=5 // pred_check
      %p145 = pneg %p144
    $region26: #{encoder_forward.5} parent=5 // pred_check_branch
      %147 = sbr.rel (%p145) target = $region28
    $region27: #{encoder_forward.5} parent=5 // pred_region
      // Predicated region
      $region29: #{encoder_forward.5} parent=27 // pred_check
        %p148 = pneg %p30
      $region30: #{encoder_forward.5} parent=27 // pred_check_branch
        %150 = sbr.rel (%p148) target = $region32
      $region31: #{encoder_forward.5} parent=27 // pred_region
        %s151 = smul.u32 16, %s10
        %p152 = scmp.lt.s32.totalorder %s151, 31
        %s153 = scalar_select %p152, %s151, 31
        %s154 = smul.addr %s153, 8
        %s155 = smul.addr %s154, 4
        %s156 = scalar_lea.vmem %s0, %s155
        %s157 = smul.u32 16, %s10
      $region32: #{encoder_forward.5} parent=27 // pred_fallthru
        _
    $region28: #{encoder_forward.5} parent=5 // pred_fallthru
      _
    %p158 = scmp.le.s32.totalorder 1, %s10
    %p159 = scmp.lt.s32.totalorder %s10, 3
    %p160 = pnand %p158, %p159
    %p161 = pneg %p160
    // Predicated region
    $region33: #{encoder_forward.5} parent=5 // pred_check
      _
    $region34: #{encoder_forward.5} parent=5 // pred_check_branch
      %163 = sbr.rel (%p160) target = $region36
    $region35: #{encoder_forward.5} parent=5 // pred_region
      %s164 = ssub.s32 %s10, 1
      %s165 = smul.u32 16, %s15
      %p166 = scmp.lt.s32.totalorder %s165, 31
      %s167 = scalar_select %p166, %s165, 31
      %s168 = smul.addr %s167, 8
      %s169 = smul.addr %s168, 4
      %s170 = scalar_lea.vmem %s0, %s169
      %p171 = pneg %p36
      %p172 = pneg %p33
      %p173 = pneg %p57
      %p174 = pneg %p54
      %p175 = pneg %p78
      %p176 = pneg %p75
      %p177 = pneg %p99
      %p178 = pneg %p96
      %p179 = pneg %p120
      %p180 = pneg %p117
      %s181 = smul.u32 16, %s15
      %p182 = scmp.lt.s32.totalorder %s181, 31
      %s183 = scalar_select %p182, %s181, 31
      %s184 = smul.addr %s183, 8
      %s185 = smul.addr %s184, 4
      %s186 = scalar_lea.vmem %s0, %s185
      %s187 = smul.u32 16, %s15
      %p189 = scmp.eq.s32.totalorder %s15, 0
      // Predicated region
      $region37: #{encoder_forward.5} parent=35 // pred_check
        %p190 = pneg %p189
      $region38: #{encoder_forward.5} parent=35 // pred_check_branch
        %192 = sbr.rel (%p190) target = $region40
      $region39: #{encoder_forward.5} parent=35 // pred_region
        %193 = vst [vmem:[#allocation3] sm:$0x1] 0.0
        %194 = vst [vmem:[#allocation4] sm:$0x1] 0.0
      $region40: #{encoder_forward.5} parent=35 // pred_fallthru
        _
      %v195 = vld [vmem:[%s186] sm:$0xff]
      %v196 = vld [vmem:[%s186 + $0x8] sm:$0xff]
      %v197 = vld [vmem:[%s186 + $0x10] sm:$0xff]
      %v198 = vld [vmem:[%s186 + $0x18] sm:$0xff]
      %v199 = vld [vmem:[%s186 + $0x20] sm:$0xff]
      %v200 = vld [vmem:[%s186 + $0x28] sm:$0xff]
      %v201 = vld [vmem:[%s186 + $0x30] sm:$0xff]
      %v202 = vld [vmem:[%s186 + $0x38] sm:$0xff]
      %v203 = vld [vmem:[%s186 + $0x40] sm:$0xff]
      %v204 = vld [vmem:[%s186 + $0x48] sm:$0xff]
      %v205 = vld [vmem:[%s186 + $0x50] sm:$0xff]
      %v206 = vld [vmem:[%s186 + $0x58] sm:$0xff]
      %v207 = vld [vmem:[%s186 + $0x60] sm:$0xff]
      %v208 = vld [vmem:[%s186 + $0x68] sm:$0xff]
      %v209 = vld [vmem:[%s186 + $0x70] sm:$0xff]
      %v210 = vld [vmem:[%s186 + $0x78] sm:$0xff]
      %v211 = vld [vmem:[%s186 + $0x80] sm:$0xff]
      %v212 = vld [vmem:[%s186 + $0x88] sm:$0xff]
      %v213 = vld [vmem:[%s186 + $0x90] sm:$0xff]
      %v214 = vld [vmem:[%s186 + $0x98] sm:$0xff]
      %v215 = vld [vmem:[%s186 + $0xa0] sm:$0xff]
      %v216 = vld [vmem:[%s186 + $0xa8] sm:$0xff]
      %v217 = vld [vmem:[%s186 + $0xb0] sm:$0xff]
      %v218 = vld [vmem:[%s186 + $0xb8] sm:$0xff]
      %v219 = vld [vmem:[%s186 + $0xc0] sm:$0xff]
      %v220 = vld [vmem:[%s186 + $0xc8] sm:$0xff]
      %v221 = vld [vmem:[%s186 + $0xd0] sm:$0xff]
      %v222 = vld [vmem:[%s186 + $0xd8] sm:$0xff]
      %v223 = vld [vmem:[%s186 + $0xe0] sm:$0xff]
      %v224 = vld [vmem:[%s186 + $0xe8] sm:$0xff]
      %v225 = vld [vmem:[%s186 + $0xf0] sm:$0xff]
      %v226 = vld [vmem:[%s186 + $0xf8] sm:$0xff]
      %v227 = vld [vmem:[%s186 + $0x100] sm:$0xff]
      %v228 = vld [vmem:[%s186 + $0x108] sm:$0xff]
      %v229 = vld [vmem:[%s186 + $0x110] sm:$0xff]
      %v230 = vld [vmem:[%s186 + $0x118] sm:$0xff]
      %v231 = vld [vmem:[%s186 + $0x120] sm:$0xff]
      %v232 = vld [vmem:[%s186 + $0x128] sm:$0xff]
      %v233 = vld [vmem:[%s186 + $0x130] sm:$0xff]
      %v234 = vld [vmem:[%s186 + $0x138] sm:$0xff]
      %v235 = vld [vmem:[%s186 + $0x140] sm:$0xff]
      %v236 = vld [vmem:[%s186 + $0x148] sm:$0xff]
      %v237 = vld [vmem:[%s186 + $0x150] sm:$0xff]
      %v238 = vld [vmem:[%s186 + $0x158] sm:$0xff]
      %v239 = vld [vmem:[%s186 + $0x160] sm:$0xff]
      %v240 = vld [vmem:[%s186 + $0x168] sm:$0xff]
      %v241 = vld [vmem:[%s186 + $0x170] sm:$0xff]
      %v242 = vld [vmem:[%s186 + $0x178] sm:$0xff]
      %v243 = vld [vmem:[%s186 + $0x180] sm:$0xff]
      %v244 = vld [vmem:[%s186 + $0x188] sm:$0xff]
      %v245 = vld [vmem:[%s186 + $0x190] sm:$0xff]
      %v246 = vld [vmem:[%s186 + $0x198] sm:$0xff]
      %v247 = vld [vmem:[%s186 + $0x1a0] sm:$0xff]
      %v248 = vld [vmem:[%s186 + $0x1a8] sm:$0xff]
      %v249 = vld [vmem:[%s186 + $0x1b0] sm:$0xff]
      %v250 = vld [vmem:[%s186 + $0x1b8] sm:$0xff]
      %v251 = vld [vmem:[%s186 + $0x1c0] sm:$0xff]
      %v252 = vld [vmem:[%s186 + $0x1c8] sm:$0xff]
      %v253 = vld [vmem:[%s186 + $0x1d0] sm:$0xff]
      %v254 = vld [vmem:[%s186 + $0x1d8] sm:$0xff]
      %v255 = vld [vmem:[%s186 + $0x1e0] sm:$0xff]
      %v256 = vld [vmem:[%s186 + $0x1e8] sm:$0xff]
      %v257 = vld [vmem:[%s186 + $0x1f0] sm:$0xff]
      %v258 = vld [vmem:[%s186 + $0x1f8] sm:$0xff]
      %v259 = vld [vmem:[%s1] sm:$0xf]
      %v260 = vld [vmem:[%s1 + $0x4] sm:$0xf]
      %v261 = vld [vmem:[%s1 + $0x8] sm:$0xf]
      %v262 = vld [vmem:[%s1 + $0xc] sm:$0xf]
      %v263 = vld [vmem:[%s1 + $0x10] sm:$0xf]
      %v264 = vld [vmem:[%s1 + $0x14] sm:$0xf]
      %v265 = vld [vmem:[%s1 + $0x18] sm:$0xf]
      %v266 = vld [vmem:[%s1 + $0x1c] sm:$0xf]
      %v267 = vld [vmem:[%s1 + $0x20] sm:$0xf]
      %v268 = vld [vmem:[%s1 + $0x24] sm:$0xf]
      %v269 = vld [vmem:[%s1 + $0x28] sm:$0xf]
      %v270 = vld [vmem:[%s1 + $0x2c] sm:$0xf]
      %v271 = vld [vmem:[%s1 + $0x30] sm:$0xf]
      %v272 = vld [vmem:[%s1 + $0x34] sm:$0xf]
      %v273 = vld [vmem:[%s1 + $0x38] sm:$0xf]
      %v274 = vld [vmem:[%s1 + $0x3c] sm:$0xf]
      %v275 = vld [vmem:[%s1 + $0x40] sm:$0xf]
      %v276 = vld [vmem:[%s1 + $0x44] sm:$0xf]
      %v277 = vld [vmem:[%s1 + $0x48] sm:$0xf]
      %v278 = vld [vmem:[%s1 + $0x4c] sm:$0xf]
      %v279 = vld [vmem:[%s1 + $0x50] sm:$0xf]
      %v280 = vld [vmem:[%s1 + $0x54] sm:$0xf]
      %v281 = vld [vmem:[%s1 + $0x58] sm:$0xf]
      %v282 = vld [vmem:[%s1 + $0x5c] sm:$0xf]
      %v283 = vld [vmem:[%s1 + $0x60] sm:$0xf]
      %v284 = vld [vmem:[%s1 + $0x64] sm:$0xf]
      %v285 = vld [vmem:[%s1 + $0x68] sm:$0xf]
      %v286 = vld [vmem:[%s1 + $0x6c] sm:$0xf]
      %v287 = vld [vmem:[%s1 + $0x70] sm:$0xf]
      %v288 = vld [vmem:[%s1 + $0x74] sm:$0xf]
      %v289 = vld [vmem:[%s1 + $0x78] sm:$0xf]
      %v290 = vld [vmem:[%s1 + $0x7c] sm:$0xf]
      %v291 = vld [vmem:[%s1 + $0x80] sm:$0xf]
      %v292 = vld [vmem:[%s1 + $0x84] sm:$0xf]
      %v293 = vld [vmem:[%s1 + $0x88] sm:$0xf]
      %v294 = vld [vmem:[%s1 + $0x8c] sm:$0xf]
      %v295 = vld [vmem:[%s1 + $0x90] sm:$0xf]
      %v296 = vld [vmem:[%s1 + $0x94] sm:$0xf]
      %v297 = vld [vmem:[%s1 + $0x98] sm:$0xf]
      %v298 = vld [vmem:[%s1 + $0x9c] sm:$0xf]
      %v299 = vld [vmem:[%s1 + $0xa0] sm:$0xf]
      %v300 = vld [vmem:[%s1 + $0xa4] sm:$0xf]
      %v301 = vld [vmem:[%s1 + $0xa8] sm:$0xf]
      %v302 = vld [vmem:[%s1 + $0xac] sm:$0xf]
      %v303 = vld [vmem:[%s1 + $0xb0] sm:$0xf]
      %v304 = vld [vmem:[%s1 + $0xb4] sm:$0xf]
      %v305 = vld [vmem:[%s1 + $0xb8] sm:$0xf]
      %v306 = vld [vmem:[%s1 + $0xbc] sm:$0xf]
      %v307 = vld [vmem:[%s1 + $0xc0] sm:$0xf]
      %v308 = vld [vmem:[%s1 + $0xc4] sm:$0xf]
      %v309 = vld [vmem:[%s1 + $0xc8] sm:$0xf]
      %v310 = vld [vmem:[%s1 + $0xcc] sm:$0xf]
      %v311 = vld [vmem:[%s1 + $0xd0] sm:$0xf]
      %v312 = vld [vmem:[%s1 + $0xd4] sm:$0xf]
      %v313 = vld [vmem:[%s1 + $0xd8] sm:$0xf]
      %v314 = vld [vmem:[%s1 + $0xdc] sm:$0xf]
      %v315 = vld [vmem:[%s1 + $0xe0] sm:$0xf]
      %v316 = vld [vmem:[%s1 + $0xe4] sm:$0xf]
      %v317 = vld [vmem:[%s1 + $0xe8] sm:$0xf]
      %v318 = vld [vmem:[%s1 + $0xec] sm:$0xf]
      %v319 = vld [vmem:[%s1 + $0xf0] sm:$0xf]
      %v320 = vld [vmem:[%s1 + $0xf4] sm:$0xf]
      %v321 = vld [vmem:[%s1 + $0xf8] sm:$0xf]
      %v322 = vld [vmem:[%s1 + $0xfc] sm:$0xf]
      %v323 = vld [vmem:[%s1 + $0x100] sm:$0xf]
      %v324 = vld [vmem:[%s1 + $0x104] sm:$0xf]
      %v325 = vld [vmem:[%s1 + $0x108] sm:$0xf]
      %v326 = vld [vmem:[%s1 + $0x10c] sm:$0xf]
      %v327 = vld [vmem:[%s1 + $0x110] sm:$0xf]
      %v328 = vld [vmem:[%s1 + $0x114] sm:$0xf]
      %v329 = vld [vmem:[%s1 + $0x118] sm:$0xf]
      %v330 = vld [vmem:[%s1 + $0x11c] sm:$0xf]
      %v331 = vld [vmem:[%s1 + $0x120] sm:$0xf]
      %v332 = vld [vmem:[%s1 + $0x124] sm:$0xf]
      %v333 = vld [vmem:[%s1 + $0x128] sm:$0xf]
      %v334 = vld [vmem:[%s1 + $0x12c] sm:$0xf]
      %v335 = vld [vmem:[%s1 + $0x130] sm:$0xf]
      %v336 = vld [vmem:[%s1 + $0x134] sm:$0xf]
      %v337 = vld [vmem:[%s1 + $0x138] sm:$0xf]
      %v338 = vld [vmem:[%s1 + $0x13c] sm:$0xf]
      %v339 = vld [vmem:[%s1 + $0x140] sm:$0xf]
      %v340 = vld [vmem:[%s1 + $0x144] sm:$0xf]
      %v341 = vld [vmem:[%s1 + $0x148] sm:$0xf]
      %v342 = vld [vmem:[%s1 + $0x14c] sm:$0xf]
      %v343 = vld [vmem:[%s1 + $0x150] sm:$0xf]
      %v344 = vld [vmem:[%s1 + $0x154] sm:$0xf]
      %v345 = vld [vmem:[%s1 + $0x158] sm:$0xf]
      %v346 = vld [vmem:[%s1 + $0x15c] sm:$0xf]
      %v347 = vld [vmem:[%s1 + $0x160] sm:$0xf]
      %v348 = vld [vmem:[%s1 + $0x164] sm:$0xf]
      %v349 = vld [vmem:[%s1 + $0x168] sm:$0xf]
      %v350 = vld [vmem:[%s1 + $0x16c] sm:$0xf]
      %v351 = vld [vmem:[%s1 + $0x170] sm:$0xf]
      %v352 = vld [vmem:[%s1 + $0x174] sm:$0xf]
      %v353 = vld [vmem:[%s1 + $0x178] sm:$0xf]
      %v354 = vld [vmem:[%s1 + $0x17c] sm:$0xf]
      %v355 = vld [vmem:[%s1 + $0x180] sm:$0xf]
      %v356 = vld [vmem:[%s1 + $0x184] sm:$0xf]
      %v357 = vld [vmem:[%s1 + $0x188] sm:$0xf]
      %v358 = vld [vmem:[%s1 + $0x18c] sm:$0xf]
      %v359 = vld [vmem:[%s1 + $0x190] sm:$0xf]
      %v360 = vld [vmem:[%s1 + $0x194] sm:$0xf]
      %v361 = vld [vmem:[%s1 + $0x198] sm:$0xf]
      %v362 = vld [vmem:[%s1 + $0x19c] sm:$0xf]
      %v363 = vld [vmem:[%s1 + $0x1a0] sm:$0xf]
      %v364 = vld [vmem:[%s1 + $0x1a4] sm:$0xf]
      %v365 = vld [vmem:[%s1 + $0x1a8] sm:$0xf]
      %v366 = vld [vmem:[%s1 + $0x1ac] sm:$0xf]
      %v367 = vld [vmem:[%s1 + $0x1b0] sm:$0xf]
      %v368 = vld [vmem:[%s1 + $0x1b4] sm:$0xf]
      %v369 = vld [vmem:[%s1 + $0x1b8] sm:$0xf]
      %v370 = vld [vmem:[%s1 + $0x1bc] sm:$0xf]
      %v371 = vld [vmem:[%s1 + $0x1c0] sm:$0xf]
      %v372 = vld [vmem:[%s1 + $0x1c4] sm:$0xf]
      %v373 = vld [vmem:[%s1 + $0x1c8] sm:$0xf]
      %v374 = vld [vmem:[%s1 + $0x1cc] sm:$0xf]
      %v375 = vld [vmem:[%s1 + $0x1d0] sm:$0xf]
      %v376 = vld [vmem:[%s1 + $0x1d4] sm:$0xf]
      %v377 = vld [vmem:[%s1 + $0x1d8] sm:$0xf]
      %v378 = vld [vmem:[%s1 + $0x1dc] sm:$0xf]
      %v379 = vld [vmem:[%s1 + $0x1e0] sm:$0xf]
      %v380 = vld [vmem:[%s1 + $0x1e4] sm:$0xf]
      %v381 = vld [vmem:[%s1 + $0x1e8] sm:$0xf]
      %v382 = vld [vmem:[%s1 + $0x1ec] sm:$0xf]
      %v383 = vld [vmem:[%s1 + $0x1f0] sm:$0xf]
      %v384 = vld [vmem:[%s1 + $0x1f4] sm:$0xf]
      %v385 = vld [vmem:[%s1 + $0x1f8] sm:$0xf]
      %v386 = vld [vmem:[%s1 + $0x1fc] sm:$0xf]
      %v451 = vunpack.c.l.b16 %v195
      %v452 = vunpack.c.h.b16 %v195
      %v453 = vunpack.c.l.b16 %v196
      %v454 = vunpack.c.h.b16 %v196
      %v455 = vunpack.c.l.b16 %v197
      %v456 = vunpack.c.h.b16 %v197
      %v457 = vunpack.c.l.b16 %v198
      %v458 = vunpack.c.h.b16 %v198
      %v459 = vunpack.c.l.b16 %v199
      %v460 = vunpack.c.h.b16 %v199
      %v461 = vunpack.c.l.b16 %v200
      %v462 = vunpack.c.h.b16 %v200
      %v463 = vunpack.c.l.b16 %v201
      %v464 = vunpack.c.h.b16 %v201
      %v465 = vunpack.c.l.b16 %v202
      %v466 = vunpack.c.h.b16 %v202
      %v467 = vunpack.c.l.b16 %v203
      %v468 = vunpack.c.h.b16 %v203
      %v469 = vunpack.c.l.b16 %v204
      %v470 = vunpack.c.h.b16 %v204
      %v471 = vunpack.c.l.b16 %v205
      %v472 = vunpack.c.h.b16 %v205
      %v473 = vunpack.c.l.b16 %v206
      %v474 = vunpack.c.h.b16 %v206
      %v475 = vunpack.c.l.b16 %v207
      %v476 = vunpack.c.h.b16 %v207
      %v477 = vunpack.c.l.b16 %v208
      %v478 = vunpack.c.h.b16 %v208
      %v479 = vunpack.c.l.b16 %v209
      %v480 = vunpack.c.h.b16 %v209
      %v481 = vunpack.c.l.b16 %v210
      %v482 = vunpack.c.h.b16 %v210
      %v483 = vunpack.c.l.b16 %v211
      %v484 = vunpack.c.h.b16 %v211
      %v485 = vunpack.c.l.b16 %v212
      %v486 = vunpack.c.h.b16 %v212
      %v487 = vunpack.c.l.b16 %v213
      %v488 = vunpack.c.h.b16 %v213
      %v489 = vunpack.c.l.b16 %v214
      %v490 = vunpack.c.h.b16 %v214
      %v491 = vunpack.c.l.b16 %v215
      %v492 = vunpack.c.h.b16 %v215
      %v493 = vunpack.c.l.b16 %v216
      %v494 = vunpack.c.h.b16 %v216
      %v495 = vunpack.c.l.b16 %v217
      %v496 = vunpack.c.h.b16 %v217
      %v497 = vunpack.c.l.b16 %v218
      %v498 = vunpack.c.h.b16 %v218
      %v499 = vunpack.c.l.b16 %v219
      %v500 = vunpack.c.h.b16 %v219
      %v501 = vunpack.c.l.b16 %v220
      %v502 = vunpack.c.h.b16 %v220
      %v503 = vunpack.c.l.b16 %v221
      %v504 = vunpack.c.h.b16 %v221
      %v505 = vunpack.c.l.b16 %v222
      %v506 = vunpack.c.h.b16 %v222
      %v507 = vunpack.c.l.b16 %v223
      %v508 = vunpack.c.h.b16 %v223
      %v509 = vunpack.c.l.b16 %v224
      %v510 = vunpack.c.h.b16 %v224
      %v511 = vunpack.c.l.b16 %v225
      %v512 = vunpack.c.h.b16 %v225
      %v513 = vunpack.c.l.b16 %v226
      %v514 = vunpack.c.h.b16 %v226
      %v515 = vunpack.c.l.b16 %v227
      %v516 = vunpack.c.h.b16 %v227
      %v517 = vunpack.c.l.b16 %v228
      %v518 = vunpack.c.h.b16 %v228
      %v519 = vunpack.c.l.b16 %v229
      %v520 = vunpack.c.h.b16 %v229
      %v521 = vunpack.c.l.b16 %v230
      %v522 = vunpack.c.h.b16 %v230
      %v523 = vunpack.c.l.b16 %v231
      %v524 = vunpack.c.h.b16 %v231
      %v525 = vunpack.c.l.b16 %v232
      %v526 = vunpack.c.h.b16 %v232
      %v527 = vunpack.c.l.b16 %v233
      %v528 = vunpack.c.h.b16 %v233
      %v529 = vunpack.c.l.b16 %v234
      %v530 = vunpack.c.h.b16 %v234
      %v531 = vunpack.c.l.b16 %v235
      %v532 = vunpack.c.h.b16 %v235
      %v533 = vunpack.c.l.b16 %v236
      %v534 = vunpack.c.h.b16 %v236
      %v535 = vunpack.c.l.b16 %v237
      %v536 = vunpack.c.h.b16 %v237
      %v537 = vunpack.c.l.b16 %v238
      %v538 = vunpack.c.h.b16 %v238
      %v539 = vunpack.c.l.b16 %v239
      %v540 = vunpack.c.h.b16 %v239
      %v541 = vunpack.c.l.b16 %v240
      %v542 = vunpack.c.h.b16 %v240
      %v543 = vunpack.c.l.b16 %v241
      %v544 = vunpack.c.h.b16 %v241
      %v545 = vunpack.c.l.b16 %v242
      %v546 = vunpack.c.h.b16 %v242
      %v547 = vunpack.c.l.b16 %v243
      %v548 = vunpack.c.h.b16 %v243
      %v549 = vunpack.c.l.b16 %v244
      %v550 = vunpack.c.h.b16 %v244
      %v551 = vunpack.c.l.b16 %v245
      %v552 = vunpack.c.h.b16 %v245
      %v553 = vunpack.c.l.b16 %v246
      %v554 = vunpack.c.h.b16 %v246
      %v555 = vunpack.c.l.b16 %v247
      %v556 = vunpack.c.h.b16 %v247
      %v557 = vunpack.c.l.b16 %v248
      %v558 = vunpack.c.h.b16 %v248
      %v559 = vunpack.c.l.b16 %v249
      %v560 = vunpack.c.h.b16 %v249
      %v561 = vunpack.c.l.b16 %v250
      %v562 = vunpack.c.h.b16 %v250
      %v563 = vunpack.c.l.b16 %v251
      %v564 = vunpack.c.h.b16 %v251
      %v565 = vunpack.c.l.b16 %v252
      %v566 = vunpack.c.h.b16 %v252
      %v567 = vunpack.c.l.b16 %v253
      %v568 = vunpack.c.h.b16 %v253
      %v569 = vunpack.c.l.b16 %v254
      %v570 = vunpack.c.h.b16 %v254
      %v571 = vunpack.c.l.b16 %v255
      %v572 = vunpack.c.h.b16 %v255
      %v573 = vunpack.c.l.b16 %v256
      %v574 = vunpack.c.h.b16 %v256
      %v575 = vunpack.c.l.b16 %v257
      %v576 = vunpack.c.h.b16 %v257
      %v577 = vunpack.c.l.b16 %v258
      %v578 = vunpack.c.h.b16 %v258
      %v579 = vpack.c.b16 %v459, %v451
      %v580 = vpack.c.b16 %v460, %v452
      %v581 = vpack.c.b16 %v461, %v453
      %v582 = vpack.c.b16 %v462, %v454
      %v583 = vpack.c.b16 %v463, %v455
      %v584 = vpack.c.b16 %v464, %v456
      %v585 = vpack.c.b16 %v465, %v457
      %v586 = vpack.c.b16 %v466, %v458
      %v587 = vpack.c.b16 %v475, %v467
      %v588 = vpack.c.b16 %v476, %v468
      %v589 = vpack.c.b16 %v477, %v469
      %v590 = vpack.c.b16 %v478, %v470
      %v591 = vpack.c.b16 %v479, %v471
      %v592 = vpack.c.b16 %v480, %v472
      %v593 = vpack.c.b16 %v481, %v473
      %v594 = vpack.c.b16 %v482, %v474
      %v595 = vpack.c.b16 %v491, %v483
      %v596 = vpack.c.b16 %v492, %v484
      %v597 = vpack.c.b16 %v493, %v485
      %v598 = vpack.c.b16 %v494, %v486
      %v599 = vpack.c.b16 %v495, %v487
      %v600 = vpack.c.b16 %v496, %v488
      %v601 = vpack.c.b16 %v497, %v489
      %v602 = vpack.c.b16 %v498, %v490
      %v603 = vpack.c.b16 %v507, %v499
      %v604 = vpack.c.b16 %v508, %v500
      %v605 = vpack.c.b16 %v509, %v501
      %v606 = vpack.c.b16 %v510, %v502
      %v607 = vpack.c.b16 %v511, %v503
      %v608 = vpack.c.b16 %v512, %v504
      %v609 = vpack.c.b16 %v513, %v505
      %v610 = vpack.c.b16 %v514, %v506
      %v611 = vpack.c.b16 %v523, %v515
      %v612 = vpack.c.b16 %v524, %v516
      %v613 = vpack.c.b16 %v525, %v517
      %v614 = vpack.c.b16 %v526, %v518
      %v615 = vpack.c.b16 %v527, %v519
      %v616 = vpack.c.b16 %v528, %v520
      %v617 = vpack.c.b16 %v529, %v521
      %v618 = vpack.c.b16 %v530, %v522
      %v619 = vpack.c.b16 %v539, %v531
      %v620 = vpack.c.b16 %v540, %v532
      %v621 = vpack.c.b16 %v541, %v533
      %v622 = vpack.c.b16 %v542, %v534
      %v623 = vpack.c.b16 %v543, %v535
      %v624 = vpack.c.b16 %v544, %v536
      %v625 = vpack.c.b16 %v545, %v537
      %v626 = vpack.c.b16 %v546, %v538
      %v627 = vpack.c.b16 %v555, %v547
      %v628 = vpack.c.b16 %v556, %v548
      %v629 = vpack.c.b16 %v557, %v549
      %v630 = vpack.c.b16 %v558, %v550
      %v631 = vpack.c.b16 %v559, %v551
      %v632 = vpack.c.b16 %v560, %v552
      %v633 = vpack.c.b16 %v561, %v553
      %v634 = vpack.c.b16 %v562, %v554
      %v635 = vpack.c.b16 %v571, %v563
      %v636 = vpack.c.b16 %v572, %v564
      %v637 = vpack.c.b16 %v573, %v565
      %v638 = vpack.c.b16 %v574, %v566
      %v639 = vpack.c.b16 %v575, %v567
      %v640 = vpack.c.b16 %v576, %v568
      %v641 = vpack.c.b16 %v577, %v569
      %v642 = vpack.c.b16 %v578, %v570
      %v835 = vunpack.c.l.b16 %v259
      %v836 = vunpack.c.l.b16 %v260
      %v837 = vunpack.c.l.b16 %v261
      %v838 = vunpack.c.l.b16 %v262
      %v839 = vunpack.c.l.b16 %v263
      %v840 = vunpack.c.l.b16 %v264
      %v841 = vunpack.c.l.b16 %v265
      %v842 = vunpack.c.l.b16 %v266
      %v843 = vunpack.c.l.b16 %v267
      %v844 = vunpack.c.l.b16 %v268
      %v845 = vunpack.c.l.b16 %v269
      %v846 = vunpack.c.l.b16 %v270
      %v847 = vunpack.c.l.b16 %v271
      %v848 = vunpack.c.l.b16 %v272
      %v849 = vunpack.c.l.b16 %v273
      %v850 = vunpack.c.l.b16 %v274
      %v851 = vunpack.c.l.b16 %v275
      %v852 = vunpack.c.l.b16 %v276
      %v853 = vunpack.c.l.b16 %v277
      %v854 = vunpack.c.l.b16 %v278
      %v855 = vunpack.c.l.b16 %v279
      %v856 = vunpack.c.l.b16 %v280
      %v857 = vunpack.c.l.b16 %v281
      %v858 = vunpack.c.l.b16 %v282
      %v859 = vunpack.c.l.b16 %v283
      %v860 = vunpack.c.l.b16 %v284
      %v861 = vunpack.c.l.b16 %v285
      %v862 = vunpack.c.l.b16 %v286
      %v863 = vunpack.c.l.b16 %v287
      %v864 = vunpack.c.l.b16 %v288
      %v865 = vunpack.c.l.b16 %v289
      %v866 = vunpack.c.l.b16 %v290
      %v867 = vunpack.c.l.b16 %v291
      %v868 = vunpack.c.l.b16 %v292
      %v869 = vunpack.c.l.b16 %v293
      %v870 = vunpack.c.l.b16 %v294
      %v871 = vunpack.c.l.b16 %v295
      %v872 = vunpack.c.l.b16 %v296
      %v873 = vunpack.c.l.b16 %v297
      %v874 = vunpack.c.l.b16 %v298
      %v875 = vunpack.c.l.b16 %v299
      %v876 = vunpack.c.l.b16 %v300
      %v877 = vunpack.c.l.b16 %v301
      %v878 = vunpack.c.l.b16 %v302
      %v879 = vunpack.c.l.b16 %v303
      %v880 = vunpack.c.l.b16 %v304
      %v881 = vunpack.c.l.b16 %v305
      %v882 = vunpack.c.l.b16 %v306
      %v883 = vunpack.c.l.b16 %v307
      %v884 = vunpack.c.l.b16 %v308
      %v885 = vunpack.c.l.b16 %v309
      %v886 = vunpack.c.l.b16 %v310
      %v887 = vunpack.c.l.b16 %v311
      %v888 = vunpack.c.l.b16 %v312
      %v889 = vunpack.c.l.b16 %v313
      %v890 = vunpack.c.l.b16 %v314
      %v891 = vunpack.c.l.b16 %v315
      %v892 = vunpack.c.l.b16 %v316
      %v893 = vunpack.c.l.b16 %v317
      %v894 = vunpack.c.l.b16 %v318
      %v895 = vunpack.c.l.b16 %v319
      %v896 = vunpack.c.l.b16 %v320
      %v897 = vunpack.c.l.b16 %v321
      %v898 = vunpack.c.l.b16 %v322
      %v899 = vunpack.c.l.b16 %v323
      %v900 = vunpack.c.l.b16 %v324
      %v901 = vunpack.c.l.b16 %v325
      %v902 = vunpack.c.l.b16 %v326
      %v903 = vunpack.c.l.b16 %v327
      %v904 = vunpack.c.l.b16 %v328
      %v905 = vunpack.c.l.b16 %v329
      %v906 = vunpack.c.l.b16 %v330
      %v907 = vunpack.c.l.b16 %v331
      %v908 = vunpack.c.l.b16 %v332
      %v909 = vunpack.c.l.b16 %v333
      %v910 = vunpack.c.l.b16 %v334
      %v911 = vunpack.c.l.b16 %v335
      %v912 = vunpack.c.l.b16 %v336
      %v913 = vunpack.c.l.b16 %v337
      %v914 = vunpack.c.l.b16 %v338
      %v915 = vunpack.c.l.b16 %v339
      %v916 = vunpack.c.l.b16 %v340
      %v917 = vunpack.c.l.b16 %v341
      %v918 = vunpack.c.l.b16 %v342
      %v919 = vunpack.c.l.b16 %v343
      %v920 = vunpack.c.l.b16 %v344
      %v921 = vunpack.c.l.b16 %v345
      %v922 = vunpack.c.l.b16 %v346
      %v923 = vunpack.c.l.b16 %v347
      %v924 = vunpack.c.l.b16 %v348
      %v925 = vunpack.c.l.b16 %v349
      %v926 = vunpack.c.l.b16 %v350
      %v927 = vunpack.c.l.b16 %v351
      %v928 = vunpack.c.l.b16 %v352
      %v929 = vunpack.c.l.b16 %v353
      %v930 = vunpack.c.l.b16 %v354
      %v931 = vunpack.c.l.b16 %v355
      %v932 = vunpack.c.l.b16 %v356
      %v933 = vunpack.c.l.b16 %v357
      %v934 = vunpack.c.l.b16 %v358
      %v935 = vunpack.c.l.b16 %v359
      %v936 = vunpack.c.l.b16 %v360
      %v937 = vunpack.c.l.b16 %v361
      %v938 = vunpack.c.l.b16 %v362
      %v939 = vunpack.c.l.b16 %v363
      %v940 = vunpack.c.l.b16 %v364
      %v941 = vunpack.c.l.b16 %v365
      %v942 = vunpack.c.l.b16 %v366
      %v943 = vunpack.c.l.b16 %v367
      %v944 = vunpack.c.l.b16 %v368
      %v945 = vunpack.c.l.b16 %v369
      %v946 = vunpack.c.l.b16 %v370
      %v947 = vunpack.c.l.b16 %v371
      %v948 = vunpack.c.l.b16 %v372
      %v949 = vunpack.c.l.b16 %v373
      %v950 = vunpack.c.l.b16 %v374
      %v951 = vunpack.c.l.b16 %v375
      %v952 = vunpack.c.l.b16 %v376
      %v953 = vunpack.c.l.b16 %v377
      %v954 = vunpack.c.l.b16 %v378
      %v955 = vunpack.c.l.b16 %v379
      %v956 = vunpack.c.l.b16 %v380
      %v957 = vunpack.c.l.b16 %v381
      %v958 = vunpack.c.l.b16 %v382
      %v959 = vunpack.c.l.b16 %v383
      %v960 = vunpack.c.l.b16 %v384
      %v961 = vunpack.c.l.b16 %v385
      %v962 = vunpack.c.l.b16 %v386
      %v963 = vpack.c.b16 %v836, %v835
      %v964 = vpack.c.b16 %v838, %v837
      %v965 = vpack.c.b16 %v840, %v839
      %v966 = vpack.c.b16 %v842, %v841
      %v967 = vpack.c.b16 %v844, %v843
      %v968 = vpack.c.b16 %v846, %v845
      %v969 = vpack.c.b16 %v848, %v847
      %v970 = vpack.c.b16 %v850, %v849
      %v971 = vpack.c.b16 %v852, %v851
      %v972 = vpack.c.b16 %v854, %v853
      %v973 = vpack.c.b16 %v856, %v855
      %v974 = vpack.c.b16 %v858, %v857
      %v975 = vpack.c.b16 %v860, %v859
      %v976 = vpack.c.b16 %v862, %v861
      %v977 = vpack.c.b16 %v864, %v863
      %v978 = vpack.c.b16 %v866, %v865
      %v979 = vpack.c.b16 %v868, %v867
      %v980 = vpack.c.b16 %v870, %v869
      %v981 = vpack.c.b16 %v872, %v871
      %v982 = vpack.c.b16 %v874, %v873
      %v983 = vpack.c.b16 %v876, %v875
      %v984 = vpack.c.b16 %v878, %v877
      %v985 = vpack.c.b16 %v880, %v879
      %v986 = vpack.c.b16 %v882, %v881
      %v987 = vpack.c.b16 %v884, %v883
      %v988 = vpack.c.b16 %v886, %v885
      %v989 = vpack.c.b16 %v888, %v887
      %v990 = vpack.c.b16 %v890, %v889
      %v991 = vpack.c.b16 %v892, %v891
      %v992 = vpack.c.b16 %v894, %v893
      %v993 = vpack.c.b16 %v896, %v895
      %v994 = vpack.c.b16 %v898, %v897
      %v995 = vpack.c.b16 %v900, %v899
      %v996 = vpack.c.b16 %v902, %v901
      %v997 = vpack.c.b16 %v904, %v903
      %v998 = vpack.c.b16 %v906, %v905
      %v999 = vpack.c.b16 %v908, %v907
      %v1000 = vpack.c.b16 %v910, %v909
      %v1001 = vpack.c.b16 %v912, %v911
      %v1002 = vpack.c.b16 %v914, %v913
      %v1003 = vpack.c.b16 %v916, %v915
      %v1004 = vpack.c.b16 %v918, %v917
      %v1005 = vpack.c.b16 %v920, %v919
      %v1006 = vpack.c.b16 %v922, %v921
      %v1007 = vpack.c.b16 %v924, %v923
      %v1008 = vpack.c.b16 %v926, %v925
      %v1009 = vpack.c.b16 %v928, %v927
      %v1010 = vpack.c.b16 %v930, %v929
      %v1011 = vpack.c.b16 %v932, %v931
      %v1012 = vpack.c.b16 %v934, %v933
      %v1013 = vpack.c.b16 %v936, %v935
      %v1014 = vpack.c.b16 %v938, %v937
      %v1015 = vpack.c.b16 %v940, %v939
      %v1016 = vpack.c.b16 %v942, %v941
      %v1017 = vpack.c.b16 %v944, %v943
      %v1018 = vpack.c.b16 %v946, %v945
      %v1019 = vpack.c.b16 %v948, %v947
      %v1020 = vpack.c.b16 %v950, %v949
      %v1021 = vpack.c.b16 %v952, %v951
      %v1022 = vpack.c.b16 %v954, %v953
      %v1023 = vpack.c.b16 %v956, %v955
      %v1024 = vpack.c.b16 %v958, %v957
      %v1025 = vpack.c.b16 %v960, %v959
      %v1026 = vpack.c.b16 %v962, %v961
      %1091 = vmatprep.subr.bf16.mxu0 0
      %1092 = vmatpush1.bf16.msra.mxu0 %v970
      %1093 = vmatprep.subr.bf16.mxu0 0
      %1094 = vmatpush1.bf16.msra.mxu0 %v969
      %1095 = vmatprep.subr.bf16.mxu0 0
      %1096 = vmatpush1.bf16.msra.mxu0 %v968
      %1097 = vmatprep.subr.bf16.mxu0 0
      %1098 = vmatpush1.bf16.msra.mxu0 %v967
      %1099 = vmatprep.subr.bf16.mxu0 0
      %1100 = vmatpush1.bf16.msra.mxu0 %v966
      %1101 = vmatprep.subr.bf16.mxu0 0
      %1102 = vmatpush1.bf16.msra.mxu0 %v965
      %1103 = vmatprep.subr.bf16.mxu0 0
      %1104 = vmatpush1.bf16.msra.mxu0 %v964
      %1105 = vmatprep.subr.bf16.mxu0 0
      %1106 = vmatpush1.bf16.msra.mxu0 %v963
      %1107 = vmatprep.subr.bf16.mxu0 0
      %1108 = vmatpush2.bf16.msra.mxu0 %v978
      %1109 = vmatprep.subr.bf16.mxu0 0
      %1110 = vmatpush2.bf16.msra.mxu0 %v977
      %1111 = vmatprep.subr.bf16.mxu0 0
      %1112 = vmatpush2.bf16.msra.mxu0 %v976
      %1113 = vmatprep.subr.bf16.mxu0 0
      %1114 = vmatpush2.bf16.msra.mxu0 %v975
      %1115 = vmatprep.subr.bf16.mxu0 0
      %1116 = vmatpush2.bf16.msra.mxu0 %v974
      %1117 = vmatprep.subr.bf16.mxu0 0
      %1118 = vmatpush2.bf16.msra.mxu0 %v973
      %1119 = vmatprep.subr.bf16.mxu0 0
      %1120 = vmatpush2.bf16.msra.mxu0 %v972
      %1121 = vmatprep.subr.bf16.mxu0 0
      %1122 = vmatpush2.bf16.msra.mxu0 %v971
      %1123 = vmatprep.mubr.bf16.mxu0 %v580
      %1124 = vmatmul.mubr.bf16.gmra.mxu0 %v579
      %v1125 = vpop.f32.mrf.mxu0
      %v1126 = vadd.f32 0.0, %v1125
      %v1127 = vpop.f32.mrf.mxu0
      %v1128 = vpop.f32.mrf.mxu0
      %v1129 = vadd.f32 0.0, %v1128
      %v1130 = vpop.f32.mrf.mxu0
      %1131 = vmatprep.mubr.bf16.mxu0 %v588
      %1132 = vmatmul.mubr.bf16.gmra.mxu0 %v587
      %v1133 = vpop.f32.mrf.mxu0
      %v1134 = vadd.f32 0.0, %v1133
      %v1135 = vpop.f32.mrf.mxu0
      %v1136 = vpop.f32.mrf.mxu0
      %v1137 = vadd.f32 0.0, %v1136
      %v1138 = vpop.f32.mrf.mxu0
      %1139 = vmatprep.mubr.bf16.mxu0 %v596
      %1140 = vmatmul.mubr.bf16.gmra.mxu0 %v595
      %v1141 = vpop.f32.mrf.mxu0
      %v1142 = vadd.f32 0.0, %v1141
      %v1143 = vpop.f32.mrf.mxu0
      %v1144 = vpop.f32.mrf.mxu0
      %v1145 = vadd.f32 0.0, %v1144
      %v1146 = vpop.f32.mrf.mxu0
      %1147 = vmatprep.mubr.bf16.mxu0 %v604
      %1148 = vmatmul.mubr.bf16.gmra.mxu0 %v603
      %v1149 = vpop.f32.mrf.mxu0
      %v1150 = vadd.f32 0.0, %v1149
      %v1151 = vpop.f32.mrf.mxu0
      %v1152 = vpop.f32.mrf.mxu0
      %v1153 = vadd.f32 0.0, %v1152
      %v1154 = vpop.f32.mrf.mxu0
      %1155 = vmatprep.mubr.bf16.mxu0 %v612
      %1156 = vmatmul.mubr.bf16.gmra.mxu0 %v611
      %v1157 = vpop.f32.mrf.mxu0
      %v1158 = vadd.f32 0.0, %v1157
      %v1159 = vpop.f32.mrf.mxu0
      %v1160 = vpop.f32.mrf.mxu0
      %v1161 = vadd.f32 0.0, %v1160
      %v1162 = vpop.f32.mrf.mxu0
      %1163 = vmatprep.mubr.bf16.mxu0 %v620
      %1164 = vmatmul.mubr.bf16.gmra.mxu0 %v619
      %v1165 = vpop.f32.mrf.mxu0
      %v1166 = vadd.f32 0.0, %v1165
      %v1167 = vpop.f32.mrf.mxu0
      %v1168 = vpop.f32.mrf.mxu0
      %v1169 = vadd.f32 0.0, %v1168
      %v1170 = vpop.f32.mrf.mxu0
      %1171 = vmatprep.mubr.bf16.mxu0 %v628
      %1172 = vmatmul.mubr.bf16.gmra.mxu0 %v627
      %v1173 = vpop.f32.mrf.mxu0
      %v1174 = vadd.f32 0.0, %v1173
      %v1175 = vpop.f32.mrf.mxu0
      %v1176 = vpop.f32.mrf.mxu0
      %v1177 = vadd.f32 0.0, %v1176
      %v1178 = vpop.f32.mrf.mxu0
      %1179 = vmatprep.mubr.bf16.mxu0 %v636
      %1180 = vmatmul.mubr.bf16.gmra.mxu0 %v635
      %v1181 = vpop.f32.mrf.mxu0
      %v1182 = vadd.f32 0.0, %v1181
      %v1183 = vpop.f32.mrf.mxu0
      %v1184 = vpop.f32.mrf.mxu0
      %v1185 = vadd.f32 0.0, %v1184
      %v1186 = vpop.f32.mrf.mxu0
      %1187 = vdwg.mxu0
      %1188 = vmatprep.subr.bf16.mxu0 0
      %1189 = vmatpush1.bf16.msra.mxu0 %v986
      %1190 = vmatprep.subr.bf16.mxu0 0
      %1191 = vmatpush1.bf16.msra.mxu0 %v985
      %1192 = vmatprep.subr.bf16.mxu0 0
      %1193 = vmatpush1.bf16.msra.mxu0 %v984
      %1194 = vmatprep.subr.bf16.mxu0 0
      %1195 = vmatpush1.bf16.msra.mxu0 %v983
      %1196 = vmatprep.subr.bf16.mxu0 0
      %1197 = vmatpush1.bf16.msra.mxu0 %v982
      %1198 = vmatprep.subr.bf16.mxu0 0
      %1199 = vmatpush1.bf16.msra.mxu0 %v981
      %1200 = vmatprep.subr.bf16.mxu0 0
      %1201 = vmatpush1.bf16.msra.mxu0 %v980
      %1202 = vmatprep.subr.bf16.mxu0 0
      %1203 = vmatpush1.bf16.msra.mxu0 %v979
      %1204 = vmatprep.subr.bf16.mxu0 0
      %1205 = vmatpush2.bf16.msra.mxu0 %v994
      %1206 = vmatprep.subr.bf16.mxu0 0
      %1207 = vmatpush2.bf16.msra.mxu0 %v993
      %1208 = vmatprep.subr.bf16.mxu0 0
      %1209 = vmatpush2.bf16.msra.mxu0 %v992
      %1210 = vmatprep.subr.bf16.mxu0 0
      %1211 = vmatpush2.bf16.msra.mxu0 %v991
      %1212 = vmatprep.subr.bf16.mxu0 0
      %1213 = vmatpush2.bf16.msra.mxu0 %v990
      %1214 = vmatprep.subr.bf16.mxu0 0
      %1215 = vmatpush2.bf16.msra.mxu0 %v989
      %1216 = vmatprep.subr.bf16.mxu0 0
      %1217 = vmatpush2.bf16.msra.mxu0 %v988
      %1218 = vmatprep.subr.bf16.mxu0 0
      %1219 = vmatpush2.bf16.msra.mxu0 %v987
      %1220 = vmatprep.mubr.bf16.mxu0 %v582
      %1221 = vmatmul.mubr.bf16.gmra.mxu0 %v581
      %v1222 = vpop.f32.mrf.mxu0
      %v1223 = vadd.f32 %v1126, %v1222
      %v1224 = vpop.f32.mrf.mxu0
      %v1225 = vpop.f32.mrf.mxu0
      %v1226 = vadd.f32 %v1129, %v1225
      %v1227 = vpop.f32.mrf.mxu0
      %1228 = vmatprep.mubr.bf16.mxu0 %v590
      %1229 = vmatmul.mubr.bf16.gmra.mxu0 %v589
      %v1230 = vpop.f32.mrf.mxu0
      %v1231 = vadd.f32 %v1134, %v1230
      %v1232 = vpop.f32.mrf.mxu0
      %v1233 = vpop.f32.mrf.mxu0
      %v1234 = vadd.f32 %v1137, %v1233
      %v1235 = vpop.f32.mrf.mxu0
      %1236 = vmatprep.mubr.bf16.mxu0 %v598
      %1237 = vmatmul.mubr.bf16.gmra.mxu0 %v597
      %v1238 = vpop.f32.mrf.mxu0
      %v1239 = vadd.f32 %v1142, %v1238
      %v1240 = vpop.f32.mrf.mxu0
      %v1241 = vpop.f32.mrf.mxu0
      %v1242 = vadd.f32 %v1145, %v1241
      %v1243 = vpop.f32.mrf.mxu0
      %1244 = vmatprep.mubr.bf16.mxu0 %v606
      %1245 = vmatmul.mubr.bf16.gmra.mxu0 %v605
      %v1246 = vpop.f32.mrf.mxu0
      %v1247 = vadd.f32 %v1150, %v1246
      %v1248 = vpop.f32.mrf.mxu0
      %v1249 = vpop.f32.mrf.mxu0
      %v1250 = vadd.f32 %v1153, %v1249
      %v1251 = vpop.f32.mrf.mxu0
      %1252 = vmatprep.mubr.bf16.mxu0 %v614
      %1253 = vmatmul.mubr.bf16.gmra.mxu0 %v613
      %v1254 = vpop.f32.mrf.mxu0
      %v1255 = vadd.f32 %v1158, %v1254
      %v1256 = vpop.f32.mrf.mxu0
      %v1257 = vpop.f32.mrf.mxu0
      %v1258 = vadd.f32 %v1161, %v1257
      %v1259 = vpop.f32.mrf.mxu0
      %1260 = vmatprep.mubr.bf16.mxu0 %v622
      %1261 = vmatmul.mubr.bf16.gmra.mxu0 %v621
      %v1262 = vpop.f32.mrf.mxu0
      %v1263 = vadd.f32 %v1166, %v1262
      %v1264 = vpop.f32.mrf.mxu0
      %v1265 = vpop.f32.mrf.mxu0
      %v1266 = vadd.f32 %v1169, %v1265
      %v1267 = vpop.f32.mrf.mxu0
      %1268 = vmatprep.mubr.bf16.mxu0 %v630
      %1269 = vmatmul.mubr.bf16.gmra.mxu0 %v629
      %v1270 = vpop.f32.mrf.mxu0
      %v1271 = vadd.f32 %v1174, %v1270
      %v1272 = vpop.f32.mrf.mxu0
      %v1273 = vpop.f32.mrf.mxu0
      %v1274 = vadd.f32 %v1177, %v1273
      %v1275 = vpop.f32.mrf.mxu0
      %1276 = vmatprep.mubr.bf16.mxu0 %v638
      %1277 = vmatmul.mubr.bf16.gmra.mxu0 %v637
      %v1278 = vpop.f32.mrf.mxu0
      %v1279 = vadd.f32 %v1182, %v1278
      %v1280 = vpop.f32.mrf.mxu0
      %v1281 = vpop.f32.mrf.mxu0
      %v1282 = vadd.f32 %v1185, %v1281
      %v1283 = vpop.f32.mrf.mxu0
      %1284 = vdwg.mxu0
      %1285 = vmatprep.subr.bf16.mxu0 0
      %1286 = vmatpush1.bf16.msra.mxu0 %v1002
      %1287 = vmatprep.subr.bf16.mxu0 0
      %1288 = vmatpush1.bf16.msra.mxu0 %v1001
      %1289 = vmatprep.subr.bf16.mxu0 0
      %1290 = vmatpush1.bf16.msra.mxu0 %v1000
      %1291 = vmatprep.subr.bf16.mxu0 0
      %1292 = vmatpush1.bf16.msra.mxu0 %v999
      %1293 = vmatprep.subr.bf16.mxu0 0
      %1294 = vmatpush1.bf16.msra.mxu0 %v998
      %1295 = vmatprep.subr.bf16.mxu0 0
      %1296 = vmatpush1.bf16.msra.mxu0 %v997
      %1297 = vmatprep.subr.bf16.mxu0 0
      %1298 = vmatpush1.bf16.msra.mxu0 %v996
      %1299 = vmatprep.subr.bf16.mxu0 0
      %1300 = vmatpush1.bf16.msra.mxu0 %v995
      %1301 = vmatprep.subr.bf16.mxu0 0
      %1302 = vmatpush2.bf16.msra.mxu0 %v1010
      %1303 = vmatprep.subr.bf16.mxu0 0
      %1304 = vmatpush2.bf16.msra.mxu0 %v1009
      %1305 = vmatprep.subr.bf16.mxu0 0
      %1306 = vmatpush2.bf16.msra.mxu0 %v1008
      %1307 = vmatprep.subr.bf16.mxu0 0
      %1308 = vmatpush2.bf16.msra.mxu0 %v1007
      %1309 = vmatprep.subr.bf16.mxu0 0
      %1310 = vmatpush2.bf16.msra.mxu0 %v1006
      %1311 = vmatprep.subr.bf16.mxu0 0
      %1312 = vmatpush2.bf16.msra.mxu0 %v1005
      %1313 = vmatprep.subr.bf16.mxu0 0
      %1314 = vmatpush2.bf16.msra.mxu0 %v1004
      %1315 = vmatprep.subr.bf16.mxu0 0
      %1316 = vmatpush2.bf16.msra.mxu0 %v1003
      %1317 = vmatprep.mubr.bf16.mxu0 %v584
      %1318 = vmatmul.mubr.bf16.gmra.mxu0 %v583
      %v1319 = vpop.f32.mrf.mxu0
      %v1320 = vadd.f32 %v1223, %v1319
      %v1321 = vpop.f32.mrf.mxu0
      %v1322 = vpop.f32.mrf.mxu0
      %v1323 = vadd.f32 %v1226, %v1322
      %v1324 = vpop.f32.mrf.mxu0
      %1325 = vmatprep.mubr.bf16.mxu0 %v592
      %1326 = vmatmul.mubr.bf16.gmra.mxu0 %v591
      %v1327 = vpop.f32.mrf.mxu0
      %v1328 = vadd.f32 %v1231, %v1327
      %v1329 = vpop.f32.mrf.mxu0
      %v1330 = vpop.f32.mrf.mxu0
      %v1331 = vadd.f32 %v1234, %v1330
      %v1332 = vpop.f32.mrf.mxu0
      %1333 = vmatprep.mubr.bf16.mxu0 %v600
      %1334 = vmatmul.mubr.bf16.gmra.mxu0 %v599
      %v1335 = vpop.f32.mrf.mxu0
      %v1336 = vadd.f32 %v1239, %v1335
      %v1337 = vpop.f32.mrf.mxu0
      %v1338 = vpop.f32.mrf.mxu0
      %v1339 = vadd.f32 %v1242, %v1338
      %v1340 = vpop.f32.mrf.mxu0
      %1341 = vmatprep.mubr.bf16.mxu0 %v608
      %1342 = vmatmul.mubr.bf16.gmra.mxu0 %v607
      %v1343 = vpop.f32.mrf.mxu0
      %v1344 = vadd.f32 %v1247, %v1343
      %v1345 = vpop.f32.mrf.mxu0
      %v1346 = vpop.f32.mrf.mxu0
      %v1347 = vadd.f32 %v1250, %v1346
      %v1348 = vpop.f32.mrf.mxu0
      %1349 = vmatprep.mubr.bf16.mxu0 %v616
      %1350 = vmatmul.mubr.bf16.gmra.mxu0 %v615
      %v1351 = vpop.f32.mrf.mxu0
      %v1352 = vadd.f32 %v1255, %v1351
      %v1353 = vpop.f32.mrf.mxu0
      %v1354 = vpop.f32.mrf.mxu0
      %v1355 = vadd.f32 %v1258, %v1354
      %v1356 = vpop.f32.mrf.mxu0
      %1357 = vmatprep.mubr.bf16.mxu0 %v624
      %1358 = vmatmul.mubr.bf16.gmra.mxu0 %v623
      %v1359 = vpop.f32.mrf.mxu0
      %v1360 = vadd.f32 %v1263, %v1359
      %v1361 = vpop.f32.mrf.mxu0
      %v1362 = vpop.f32.mrf.mxu0
      %v1363 = vadd.f32 %v1266, %v1362
      %v1364 = vpop.f32.mrf.mxu0
      %1365 = vmatprep.mubr.bf16.mxu0 %v632
      %1366 = vmatmul.mubr.bf16.gmra.mxu0 %v631
      %v1367 = vpop.f32.mrf.mxu0
      %v1368 = vadd.f32 %v1271, %v1367
      %v1369 = vpop.f32.mrf.mxu0
      %v1370 = vpop.f32.mrf.mxu0
      %v1371 = vadd.f32 %v1274, %v1370
      %v1372 = vpop.f32.mrf.mxu0
      %1373 = vmatprep.mubr.bf16.mxu0 %v640
      %1374 = vmatmul.mubr.bf16.gmra.mxu0 %v639
      %v1375 = vpop.f32.mrf.mxu0
      %v1376 = vadd.f32 %v1279, %v1375
      %v1377 = vpop.f32.mrf.mxu0
      %v1378 = vpop.f32.mrf.mxu0
      %v1379 = vadd.f32 %v1282, %v1378
      %v1380 = vpop.f32.mrf.mxu0
      %1381 = vdwg.mxu0
      %1382 = vmatprep.subr.bf16.mxu0 0
      %1383 = vmatpush1.bf16.msra.mxu0 %v1018
      %1384 = vmatprep.subr.bf16.mxu0 0
      %1385 = vmatpush1.bf16.msra.mxu0 %v1017
      %1386 = vmatprep.subr.bf16.mxu0 0
      %1387 = vmatpush1.bf16.msra.mxu0 %v1016
      %1388 = vmatprep.subr.bf16.mxu0 0
      %1389 = vmatpush1.bf16.msra.mxu0 %v1015
      %1390 = vmatprep.subr.bf16.mxu0 0
      %1391 = vmatpush1.bf16.msra.mxu0 %v1014
      %1392 = vmatprep.subr.bf16.mxu0 0
      %1393 = vmatpush1.bf16.msra.mxu0 %v1013
      %1394 = vmatprep.subr.bf16.mxu0 0
      %1395 = vmatpush1.bf16.msra.mxu0 %v1012
      %1396 = vmatprep.subr.bf16.mxu0 0
      %1397 = vmatpush1.bf16.msra.mxu0 %v1011
      %1398 = vmatprep.subr.bf16.mxu0 0
      %1399 = vmatpush2.bf16.msra.mxu0 %v1026
      %1400 = vmatprep.subr.bf16.mxu0 0
      %1401 = vmatpush2.bf16.msra.mxu0 %v1025
      %1402 = vmatprep.subr.bf16.mxu0 0
      %1403 = vmatpush2.bf16.msra.mxu0 %v1024
      %1404 = vmatprep.subr.bf16.mxu0 0
      %1405 = vmatpush2.bf16.msra.mxu0 %v1023
      %1406 = vmatprep.subr.bf16.mxu0 0
      %1407 = vmatpush2.bf16.msra.mxu0 %v1022
      %1408 = vmatprep.subr.bf16.mxu0 0
      %1409 = vmatpush2.bf16.msra.mxu0 %v1021
      %1410 = vmatprep.subr.bf16.mxu0 0
      %1411 = vmatpush2.bf16.msra.mxu0 %v1020
      %1412 = vmatprep.subr.bf16.mxu0 0
      %1413 = vmatpush2.bf16.msra.mxu0 %v1019
      %1414 = vmatprep.mubr.bf16.mxu0 %v586
      %1415 = vmatmul.mubr.bf16.gmra.mxu0 %v585
      %v1416 = vpop.f32.mrf.mxu0
      %v1417 = vadd.f32 %v1320, %v1416
      %v1418 = vpop.f32.mrf.mxu0
      %v1419 = vpop.f32.mrf.mxu0
      %v1420 = vadd.f32 %v1323, %v1419
      %v1421 = vpop.f32.mrf.mxu0
      %1422 = vmatprep.mubr.bf16.mxu0 %v594
      %1423 = vmatmul.mubr.bf16.gmra.mxu0 %v593
      %v1424 = vpop.f32.mrf.mxu0
      %v1425 = vadd.f32 %v1328, %v1424
      %v1426 = vpop.f32.mrf.mxu0
      %v1427 = vpop.f32.mrf.mxu0
      %v1428 = vadd.f32 %v1331, %v1427
      %v1429 = vpop.f32.mrf.mxu0
      %1430 = vmatprep.mubr.bf16.mxu0 %v602
      %1431 = vmatmul.mubr.bf16.gmra.mxu0 %v601
      %v1432 = vpop.f32.mrf.mxu0
      %v1433 = vadd.f32 %v1336, %v1432
      %v1434 = vpop.f32.mrf.mxu0
      %v1435 = vpop.f32.mrf.mxu0
      %v1436 = vadd.f32 %v1339, %v1435
      %v1437 = vpop.f32.mrf.mxu0
      %1438 = vmatprep.mubr.bf16.mxu0 %v610
      %1439 = vmatmul.mubr.bf16.gmra.mxu0 %v609
      %v1440 = vpop.f32.mrf.mxu0
      %v1441 = vadd.f32 %v1344, %v1440
      %v1442 = vpop.f32.mrf.mxu0
      %v1443 = vpop.f32.mrf.mxu0
      %v1444 = vadd.f32 %v1347, %v1443
      %v1445 = vpop.f32.mrf.mxu0
      %1446 = vmatprep.mubr.bf16.mxu0 %v618
      %1447 = vmatmul.mubr.bf16.gmra.mxu0 %v617
      %v1448 = vpop.f32.mrf.mxu0
      %v1449 = vadd.f32 %v1352, %v1448
      %v1450 = vpop.f32.mrf.mxu0
      %v1451 = vpop.f32.mrf.mxu0
      %v1452 = vadd.f32 %v1355, %v1451
      %v1453 = vpop.f32.mrf.mxu0
      %1454 = vmatprep.mubr.bf16.mxu0 %v626
      %1455 = vmatmul.mubr.bf16.gmra.mxu0 %v625
      %v1456 = vpop.f32.mrf.mxu0
      %v1457 = vadd.f32 %v1360, %v1456
      %v1458 = vpop.f32.mrf.mxu0
      %v1459 = vpop.f32.mrf.mxu0
      %v1460 = vadd.f32 %v1363, %v1459
      %v1461 = vpop.f32.mrf.mxu0
      %1462 = vmatprep.mubr.bf16.mxu0 %v634
      %1463 = vmatmul.mubr.bf16.gmra.mxu0 %v633
      %v1464 = vpop.f32.mrf.mxu0
      %v1465 = vadd.f32 %v1368, %v1464
      %v1466 = vpop.f32.mrf.mxu0
      %v1467 = vpop.f32.mrf.mxu0
      %v1468 = vadd.f32 %v1371, %v1467
      %v1469 = vpop.f32.mrf.mxu0
      %1470 = vmatprep.mubr.bf16.mxu0 %v642
      %1471 = vmatmul.mubr.bf16.gmra.mxu0 %v641
      %v1472 = vpop.f32.mrf.mxu0
      %v1473 = vadd.f32 %v1376, %v1472
      %v1474 = vpop.f32.mrf.mxu0
      %v1475 = vpop.f32.mrf.mxu0
      %v1476 = vadd.f32 %v1379, %v1475
      %v1477 = vpop.f32.mrf.mxu0
      %1478 = vdwg.mxu0
      %v1479 = vld [vmem:[#allocation3] sm:$0x1]
      %v1480 = vadd.f32 %v1417, %v1420
      %v1481 = vadd.f32 %v1480, %v1425
      %v1482 = vadd.f32 %v1481, %v1428
      %v1483 = vadd.f32 %v1482, %v1433
      %v1484 = vadd.f32 %v1483, %v1436
      %v1485 = vadd.f32 %v1484, %v1441
      %v1486 = vadd.f32 %v1485, %v1444
      %v1487 = vadd.f32 %v1486, %v1449
      %v1488 = vadd.f32 %v1487, %v1452
      %v1489 = vadd.f32 %v1488, %v1457
      %v1490 = vadd.f32 %v1489, %v1460
      %v1491 = vadd.f32 %v1490, %v1465
      %v1492 = vadd.f32 %v1491, %v1468
      %v1493 = vadd.f32 %v1492, %v1473
      %v1494 = vadd.f32 %v1493, %v1476
      %v1495 = vrot.slane %v1494, 4
      %v1496 = vadd.f32 %v1494, %v1495
      %v1497 = vrot.slane %v1496, 2
      %v1498 = vadd.f32 %v1496, %v1497
      %v1499 = vrot.slane %v1498, 1
      %v1500 = vadd.f32 %v1498, %v1499
      %v1501 = vadd.f32 %v1479, %v1500
      %1502 = vst [vmem:[#allocation3] sm:$0x1] %v1501
      %v1503 = vld [vmem:[#allocation4] sm:$0x1]
      %v1504 = vmul.f32 %v1417, %v1417
      %v1505 = vmul.f32 %v1420, %v1420
      %v1506 = vmul.f32 %v1425, %v1425
      %v1507 = vmul.f32 %v1428, %v1428
      %v1508 = vmul.f32 %v1433, %v1433
      %v1509 = vmul.f32 %v1436, %v1436
      %v1510 = vmul.f32 %v1441, %v1441
      %v1511 = vmul.f32 %v1444, %v1444
      %v1512 = vmul.f32 %v1449, %v1449
      %v1513 = vmul.f32 %v1452, %v1452
      %v1514 = vmul.f32 %v1457, %v1457
      %v1515 = vmul.f32 %v1460, %v1460
      %v1516 = vmul.f32 %v1465, %v1465
      %v1517 = vmul.f32 %v1468, %v1468
      %v1518 = vmul.f32 %v1473, %v1473
      %v1519 = vmul.f32 %v1476, %v1476
      %v1520 = vadd.f32 %v1504, %v1505
      %v1521 = vadd.f32 %v1520, %v1506
      %v1522 = vadd.f32 %v1521, %v1507
      %v1523 = vadd.f32 %v1522, %v1508
      %v1524 = vadd.f32 %v1523, %v1509
      %v1525 = vadd.f32 %v1524, %v1510
      %v1526 = vadd.f32 %v1525, %v1511
      %v1527 = vadd.f32 %v1526, %v1512
      %v1528 = vadd.f32 %v1527, %v1513
      %v1529 = vadd.f32 %v1528, %v1514
      %v1530 = vadd.f32 %v1529, %v1515
      %v1531 = vadd.f32 %v1530, %v1516
      %v1532 = vadd.f32 %v1531, %v1517
      %v1533 = vadd.f32 %v1532, %v1518
      %v1534 = vadd.f32 %v1533, %v1519
      %v1535 = vrot.slane %v1534, 4
      %v1536 = vadd.f32 %v1534, %v1535
      %v1537 = vrot.slane %v1536, 2
      %v1538 = vadd.f32 %v1536, %v1537
      %v1539 = vrot.slane %v1538, 1
      %v1540 = vadd.f32 %v1538, %v1539
      %v1541 = vadd.f32 %v1503, %v1540
      %1542 = vst [vmem:[#allocation4] sm:$0x1] %v1541
      %s1543 = smul.u32 %s15, 128
      %s1544 = scalar_lea.vmem [#allocation2], %s1543
      %1545 = vst [vmem:[%s1544] sm:$0xff] %v1417
      %1546 = vst [vmem:[%s1544 + $0x8] sm:$0xff] %v1420
      %1547 = vst [vmem:[%s1544 + $0x10] sm:$0xff] %v1425
      %1548 = vst [vmem:[%s1544 + $0x18] sm:$0xff] %v1428
      %1549 = vst [vmem:[%s1544 + $0x20] sm:$0xff] %v1433
      %1550 = vst [vmem:[%s1544 + $0x28] sm:$0xff] %v1436
      %1551 = vst [vmem:[%s1544 + $0x30] sm:$0xff] %v1441
      %1552 = vst [vmem:[%s1544 + $0x38] sm:$0xff] %v1444
      %1553 = vst [vmem:[%s1544 + $0x40] sm:$0xff] %v1449
      %1554 = vst [vmem:[%s1544 + $0x48] sm:$0xff] %v1452
      %1555 = vst [vmem:[%s1544 + $0x50] sm:$0xff] %v1457
      %1556 = vst [vmem:[%s1544 + $0x58] sm:$0xff] %v1460
      %1557 = vst [vmem:[%s1544 + $0x60] sm:$0xff] %v1465
      %1558 = vst [vmem:[%s1544 + $0x68] sm:$0xff] %v1468
      %1559 = vst [vmem:[%s1544 + $0x70] sm:$0xff] %v1473
      %1560 = vst [vmem:[%s1544 + $0x78] sm:$0xff] %v1476
      %p1561 = scmp.eq.s32.totalorder %s15, 1
      // Predicated region
      $region41: #{encoder_forward.5} parent=35 // pred_check
        %p1562 = pneg %p1561
      $region42: #{encoder_forward.5} parent=35 // pred_check_branch
        %1564 = sbr.rel (%p1562) target = $region44
      $region43: #{encoder_forward.5} parent=35 // pred_region
        %v1565 = vld [vmem:[#allocation3] sm:$0x1]
        %v1566 = vld [vmem:[#allocation4] sm:$0x1]
        %1567 = vrot.lane.b32.xlu0 %v1565, 16
        %v1568 = vpop.permute.xlu0 %1567
        %v1569 = vadd.f32 %v1565, %v1568
        %1570 = vrot.lane.b32.xlu0 %v1566, 16
        %v1571 = vpop.permute.xlu0 %1570
        %v1572 = vadd.f32 %v1566, %v1571
        %1573 = vrot.lane.b32.xlu0 %v1565, 32
        %v1574 = vpop.permute.xlu0 %1573
        %v1575 = vadd.f32 %v1569, %v1574
        %1576 = vrot.lane.b32.xlu0 %v1566, 32
        %v1577 = vpop.permute.xlu0 %1576
        %v1578 = vadd.f32 %v1572, %v1577
        %1579 = vrot.lane.b32.xlu0 %v1565, 48
        %v1580 = vpop.permute.xlu0 %1579
        %v1581 = vadd.f32 %v1575, %v1580
        %1582 = vrot.lane.b32.xlu0 %v1566, 48
        %v1583 = vpop.permute.xlu0 %1582
        %v1584 = vadd.f32 %v1578, %v1583
        %1585 = vrot.lane.b32.xlu0 %v1565, 64
        %v1586 = vpop.permute.xlu0 %1585
        %v1587 = vadd.f32 %v1581, %v1586
        %1588 = vrot.lane.b32.xlu0 %v1566, 64
        %v1589 = vpop.permute.xlu0 %1588
        %v1590 = vadd.f32 %v1584, %v1589
        %1591 = vrot.lane.b32.xlu0 %v1565, 80
        %v1592 = vpop.permute.xlu0 %1591
        %v1593 = vadd.f32 %v1587, %v1592
        %1594 = vrot.lane.b32.xlu0 %v1566, 80
        %v1595 = vpop.permute.xlu0 %1594
        %v1596 = vadd.f32 %v1590, %v1595
        %1597 = vrot.lane.b32.xlu0 %v1565, 96
        %v1598 = vpop.permute.xlu0 %1597
        %v1599 = vadd.f32 %v1593, %v1598
        %1600 = vrot.lane.b32.xlu0 %v1566, 96
        %v1601 = vpop.permute.xlu0 %1600
        %v1602 = vadd.f32 %v1596, %v1601
        %1603 = vrot.lane.b32.xlu0 %v1565, 112
        %v1604 = vpop.permute.xlu0 %1603
        %v1605 = vadd.f32 %v1599, %v1604
        %1606 = vrot.lane.b32.xlu0 %v1566, 112
        %v1607 = vpop.permute.xlu0 %1606
        %v1608 = vadd.f32 %v1602, %v1607
        %v1609 = vrcp.pop 2048.0
        %v1610 = vmul.f32 %v1605, %v1609
        %v1611 = vmul.f32 %v1608, %v1609
        %v1612 = vmul.f32 %v1610, %v1610
        %v1613 = vsub.f32 %v1611, %v1612
        %v1614 = vadd.f32 %v1613, 1e-05
        %v1615 = vrsqrt.pop %v1614
        %v1616 = vld [vmem:[%s2] sm:$0x1]
        %v1617 = vmul.f32 %v1615, %v1616
        %v1618 = vld [vmem:[%s3] sm:$0x1]
        %v1619 = vmul.f32 %v1610, %v1617
        %v1620 = vsub.f32 %v1618, %v1619
        %v1621 = vld [vmem:[#allocation2] sm:$0xff]
        %v1622 = vld [vmem:[#allocation2 + $0x8] sm:$0xff]
        %v1623 = vld [vmem:[#allocation2 + $0x10] sm:$0xff]
        %v1624 = vld [vmem:[#allocation2 + $0x18] sm:$0xff]
        %v1625 = vld [vmem:[#allocation2 + $0x20] sm:$0xff]
        %v1626 = vld [vmem:[#allocation2 + $0x28] sm:$0xff]
        %v1627 = vld [vmem:[#allocation2 + $0x30] sm:$0xff]
        %v1628 = vld [vmem:[#allocation2 + $0x38] sm:$0xff]
        %v1629 = vld [vmem:[#allocation2 + $0x40] sm:$0xff]
        %v1630 = vld [vmem:[#allocation2 + $0x48] sm:$0xff]
        %v1631 = vld [vmem:[#allocation2 + $0x50] sm:$0xff]
        %v1632 = vld [vmem:[#allocation2 + $0x58] sm:$0xff]
        %v1633 = vld [vmem:[#allocation2 + $0x60] sm:$0xff]
        %v1634 = vld [vmem:[#allocation2 + $0x68] sm:$0xff]
        %v1635 = vld [vmem:[#allocation2 + $0x70] sm:$0xff]
        %v1636 = vld [vmem:[#allocation2 + $0x78] sm:$0xff]
        %v1637 = vld [vmem:[#allocation2 + $0x80] sm:$0xff]
        %v1638 = vld [vmem:[#allocation2 + $0x88] sm:$0xff]
        %v1639 = vld [vmem:[#allocation2 + $0x90] sm:$0xff]
        %v1640 = vld [vmem:[#allocation2 + $0x98] sm:$0xff]
        %v1641 = vld [vmem:[#allocation2 + $0xa0] sm:$0xff]
        %v1642 = vld [vmem:[#allocation2 + $0xa8] sm:$0xff]
        %v1643 = vld [vmem:[#allocation2 + $0xb0] sm:$0xff]
        %v1644 = vld [vmem:[#allocation2 + $0xb8] sm:$0xff]
        %v1645 = vld [vmem:[#allocation2 + $0xc0] sm:$0xff]
        %v1646 = vld [vmem:[#allocation2 + $0xc8] sm:$0xff]
        %v1647 = vld [vmem:[#allocation2 + $0xd0] sm:$0xff]
        %v1648 = vld [vmem:[#allocation2 + $0xd8] sm:$0xff]
        %v1649 = vld [vmem:[#allocation2 + $0xe0] sm:$0xff]
        %v1650 = vld [vmem:[#allocation2 + $0xe8] sm:$0xff]
        %v1651 = vld [vmem:[#allocation2 + $0xf0] sm:$0xff]
        %v1652 = vld [vmem:[#allocation2 + $0xf8] sm:$0xff]
        %v1654 = vlaneseq
        %v1655 = vshrl.u32 %v1654, 7
        %v1656 = vsub.s32 0, %v1655
        %v1657 = vrot.slane %v1617, %v1656
        %v1659 = vmul.f32 %v1621, %v1657
        %v1660 = vmul.f32 %v1622, %v1657
        %v1661 = vmul.f32 %v1623, %v1657
        %v1662 = vmul.f32 %v1624, %v1657
        %v1663 = vmul.f32 %v1625, %v1657
        %v1664 = vmul.f32 %v1626, %v1657
        %v1665 = vmul.f32 %v1627, %v1657
        %v1666 = vmul.f32 %v1628, %v1657
        %v1667 = vmul.f32 %v1629, %v1657
        %v1668 = vmul.f32 %v1630, %v1657
        %v1669 = vmul.f32 %v1631, %v1657
        %v1670 = vmul.f32 %v1632, %v1657
        %v1671 = vmul.f32 %v1633, %v1657
        %v1672 = vmul.f32 %v1634, %v1657
        %v1673 = vmul.f32 %v1635, %v1657
        %v1674 = vmul.f32 %v1636, %v1657
        %v1675 = vmul.f32 %v1637, %v1657
        %v1676 = vmul.f32 %v1638, %v1657
        %v1677 = vmul.f32 %v1639, %v1657
        %v1678 = vmul.f32 %v1640, %v1657
        %v1679 = vmul.f32 %v1641, %v1657
        %v1680 = vmul.f32 %v1642, %v1657
        %v1681 = vmul.f32 %v1643, %v1657
        %v1682 = vmul.f32 %v1644, %v1657
        %v1683 = vmul.f32 %v1645, %v1657
        %v1684 = vmul.f32 %v1646, %v1657
        %v1685 = vmul.f32 %v1647, %v1657
        %v1686 = vmul.f32 %v1648, %v1657
        %v1687 = vmul.f32 %v1649, %v1657
        %v1688 = vmul.f32 %v1650, %v1657
        %v1689 = vmul.f32 %v1651, %v1657
        %v1690 = vmul.f32 %v1652, %v1657
        %v1692 = vlaneseq
        %v1693 = vshrl.u32 %v1692, 7
        %v1694 = vsub.s32 0, %v1693
        %v1695 = vrot.slane %v1620, %v1694
        %v1697 = vadd.f32 %v1659, %v1695
        %v1698 = vadd.f32 %v1660, %v1695
        %v1699 = vadd.f32 %v1661, %v1695
        %v1700 = vadd.f32 %v1662, %v1695
        %v1701 = vadd.f32 %v1663, %v1695
        %v1702 = vadd.f32 %v1664, %v1695
        %v1703 = vadd.f32 %v1665, %v1695
        %v1704 = vadd.f32 %v1666, %v1695
        %v1705 = vadd.f32 %v1667, %v1695
        %v1706 = vadd.f32 %v1668, %v1695
        %v1707 = vadd.f32 %v1669, %v1695
        %v1708 = vadd.f32 %v1670, %v1695
        %v1709 = vadd.f32 %v1671, %v1695
        %v1710 = vadd.f32 %v1672, %v1695
        %v1711 = vadd.f32 %v1673, %v1695
        %v1712 = vadd.f32 %v1674, %v1695
        %v1713 = vadd.f32 %v1675, %v1695
        %v1714 = vadd.f32 %v1676, %v1695
        %v1715 = vadd.f32 %v1677, %v1695
        %v1716 = vadd.f32 %v1678, %v1695
        %v1717 = vadd.f32 %v1679, %v1695
        %v1718 = vadd.f32 %v1680, %v1695
        %v1719 = vadd.f32 %v1681, %v1695
        %v1720 = vadd.f32 %v1682, %v1695
        %v1721 = vadd.f32 %v1683, %v1695
        %v1722 = vadd.f32 %v1684, %v1695
        %v1723 = vadd.f32 %v1685, %v1695
        %v1724 = vadd.f32 %v1686, %v1695
        %v1725 = vadd.f32 %v1687, %v1695
        %v1726 = vadd.f32 %v1688, %v1695
        %v1727 = vadd.f32 %v1689, %v1695
        %v1728 = vadd.f32 %v1690, %v1695
        %vm1729 = vcmp.gt.f32.partialorder %v1697, 0.0
        %vm1730 = vcmp.gt.f32.partialorder %v1698, 0.0
        %vm1731 = vcmp.gt.f32.partialorder %v1699, 0.0
        %vm1732 = vcmp.gt.f32.partialorder %v1700, 0.0
        %vm1733 = vcmp.gt.f32.partialorder %v1701, 0.0
        %vm1734 = vcmp.gt.f32.partialorder %v1702, 0.0
        %vm1735 = vcmp.gt.f32.partialorder %v1703, 0.0
        %vm1736 = vcmp.gt.f32.partialorder %v1704, 0.0
        %vm1737 = vcmp.gt.f32.partialorder %v1705, 0.0
        %vm1738 = vcmp.gt.f32.partialorder %v1706, 0.0
        %vm1739 = vcmp.gt.f32.partialorder %v1707, 0.0
        %vm1740 = vcmp.gt.f32.partialorder %v1708, 0.0
        %vm1741 = vcmp.gt.f32.partialorder %v1709, 0.0
        %vm1742 = vcmp.gt.f32.partialorder %v1710, 0.0
        %vm1743 = vcmp.gt.f32.partialorder %v1711, 0.0
        %vm1744 = vcmp.gt.f32.partialorder %v1712, 0.0
        %vm1745 = vcmp.gt.f32.partialorder %v1713, 0.0
        %vm1746 = vcmp.gt.f32.partialorder %v1714, 0.0
        %vm1747 = vcmp.gt.f32.partialorder %v1715, 0.0
        %vm1748 = vcmp.gt.f32.partialorder %v1716, 0.0
        %vm1749 = vcmp.gt.f32.partialorder %v1717, 0.0
        %vm1750 = vcmp.gt.f32.partialorder %v1718, 0.0
        %vm1751 = vcmp.gt.f32.partialorder %v1719, 0.0
        %vm1752 = vcmp.gt.f32.partialorder %v1720, 0.0
        %vm1753 = vcmp.gt.f32.partialorder %v1721, 0.0
        %vm1754 = vcmp.gt.f32.partialorder %v1722, 0.0
        %vm1755 = vcmp.gt.f32.partialorder %v1723, 0.0
        %vm1756 = vcmp.gt.f32.partialorder %v1724, 0.0
        %vm1757 = vcmp.gt.f32.partialorder %v1725, 0.0
        %vm1758 = vcmp.gt.f32.partialorder %v1726, 0.0
        %vm1759 = vcmp.gt.f32.partialorder %v1727, 0.0
        %vm1760 = vcmp.gt.f32.partialorder %v1728, 0.0
        %v1761 = vmul.f32 %v1697, 0.2
        %v1762 = vmul.f32 %v1698, 0.2
        %v1763 = vmul.f32 %v1699, 0.2
        %v1764 = vmul.f32 %v1700, 0.2
        %v1765 = vmul.f32 %v1701, 0.2
        %v1766 = vmul.f32 %v1702, 0.2
        %v1767 = vmul.f32 %v1703, 0.2
        %v1768 = vmul.f32 %v1704, 0.2
        %v1769 = vmul.f32 %v1705, 0.2
        %v1770 = vmul.f32 %v1706, 0.2
        %v1771 = vmul.f32 %v1707, 0.2
        %v1772 = vmul.f32 %v1708, 0.2
        %v1773 = vmul.f32 %v1709, 0.2
        %v1774 = vmul.f32 %v1710, 0.2
        %v1775 = vmul.f32 %v1711, 0.2
        %v1776 = vmul.f32 %v1712, 0.2
        %v1777 = vmul.f32 %v1713, 0.2
        %v1778 = vmul.f32 %v1714, 0.2
        %v1779 = vmul.f32 %v1715, 0.2
        %v1780 = vmul.f32 %v1716, 0.2
        %v1781 = vmul.f32 %v1717, 0.2
        %v1782 = vmul.f32 %v1718, 0.2
        %v1783 = vmul.f32 %v1719, 0.2
        %v1784 = vmul.f32 %v1720, 0.2
        %v1785 = vmul.f32 %v1721, 0.2
        %v1786 = vmul.f32 %v1722, 0.2
        %v1787 = vmul.f32 %v1723, 0.2
        %v1788 = vmul.f32 %v1724, 0.2
        %v1789 = vmul.f32 %v1725, 0.2
        %v1790 = vmul.f32 %v1726, 0.2
        %v1791 = vmul.f32 %v1727, 0.2
        %v1792 = vmul.f32 %v1728, 0.2
        %v1793 = vsel %vm1729, %v1697, %v1761
        %v1794 = vsel %vm1730, %v1698, %v1762
        %v1795 = vsel %vm1731, %v1699, %v1763
        %v1796 = vsel %vm1732, %v1700, %v1764
        %v1797 = vsel %vm1733, %v1701, %v1765
        %v1798 = vsel %vm1734, %v1702, %v1766
        %v1799 = vsel %vm1735, %v1703, %v1767
        %v1800 = vsel %vm1736, %v1704, %v1768
        %v1801 = vsel %vm1737, %v1705, %v1769
        %v1802 = vsel %vm1738, %v1706, %v1770
        %v1803 = vsel %vm1739, %v1707, %v1771
        %v1804 = vsel %vm1740, %v1708, %v1772
        %v1805 = vsel %vm1741, %v1709, %v1773
        %v1806 = vsel %vm1742, %v1710, %v1774
        %v1807 = vsel %vm1743, %v1711, %v1775
        %v1808 = vsel %vm1744, %v1712, %v1776
        %v1809 = vsel %vm1745, %v1713, %v1777
        %v1810 = vsel %vm1746, %v1714, %v1778
        %v1811 = vsel %vm1747, %v1715, %v1779
        %v1812 = vsel %vm1748, %v1716, %v1780
        %v1813 = vsel %vm1749, %v1717, %v1781
        %v1814 = vsel %vm1750, %v1718, %v1782
        %v1815 = vsel %vm1751, %v1719, %v1783
        %v1816 = vsel %vm1752, %v1720, %v1784
        %v1817 = vsel %vm1753, %v1721, %v1785
        %v1818 = vsel %vm1754, %v1722, %v1786
        %v1819 = vsel %vm1755, %v1723, %v1787
        %v1820 = vsel %vm1756, %v1724, %v1788
        %v1821 = vsel %vm1757, %v1725, %v1789
        %v1822 = vsel %vm1758, %v1726, %v1790
        %v1823 = vsel %vm1759, %v1727, %v1791
        %v1824 = vsel %vm1760, %v1728, %v1792
        %v1825 = vpack.c.bf16 %v1794, %v1793
        %v1826 = vpack.c.bf16 %v1796, %v1795
        %v1827 = vpack.c.bf16 %v1798, %v1797
        %v1828 = vpack.c.bf16 %v1800, %v1799
        %v1829 = vpack.c.bf16 %v1802, %v1801
        %v1830 = vpack.c.bf16 %v1804, %v1803
        %v1831 = vpack.c.bf16 %v1806, %v1805
        %v1832 = vpack.c.bf16 %v1808, %v1807
        %v1833 = vpack.c.bf16 %v1810, %v1809
        %v1834 = vpack.c.bf16 %v1812, %v1811
        %v1835 = vpack.c.bf16 %v1814, %v1813
        %v1836 = vpack.c.bf16 %v1816, %v1815
        %v1837 = vpack.c.bf16 %v1818, %v1817
        %v1838 = vpack.c.bf16 %v1820, %v1819
        %v1839 = vpack.c.bf16 %v1822, %v1821
        %v1840 = vpack.c.bf16 %v1824, %v1823
        %v1857 = vunpack.c.l.b16 %v1825
        %v1858 = vunpack.c.h.b16 %v1825
        %v1859 = vunpack.c.l.b16 %v1826
        %v1860 = vunpack.c.h.b16 %v1826
        %v1861 = vunpack.c.l.b16 %v1827
        %v1862 = vunpack.c.h.b16 %v1827
        %v1863 = vunpack.c.l.b16 %v1828
        %v1864 = vunpack.c.h.b16 %v1828
        %v1865 = vunpack.c.l.b16 %v1829
        %v1866 = vunpack.c.h.b16 %v1829
        %v1867 = vunpack.c.l.b16 %v1830
        %v1868 = vunpack.c.h.b16 %v1830
        %v1869 = vunpack.c.l.b16 %v1831
        %v1870 = vunpack.c.h.b16 %v1831
        %v1871 = vunpack.c.l.b16 %v1832
        %v1872 = vunpack.c.h.b16 %v1832
        %v1873 = vunpack.c.l.b16 %v1833
        %v1874 = vunpack.c.h.b16 %v1833
        %v1875 = vunpack.c.l.b16 %v1834
        %v1876 = vunpack.c.h.b16 %v1834
        %v1877 = vunpack.c.l.b16 %v1835
        %v1878 = vunpack.c.h.b16 %v1835
        %v1879 = vunpack.c.l.b16 %v1836
        %v1880 = vunpack.c.h.b16 %v1836
        %v1881 = vunpack.c.l.b16 %v1837
        %v1882 = vunpack.c.h.b16 %v1837
        %v1883 = vunpack.c.l.b16 %v1838
        %v1884 = vunpack.c.h.b16 %v1838
        %v1885 = vunpack.c.l.b16 %v1839
        %v1886 = vunpack.c.h.b16 %v1839
        %v1887 = vunpack.c.l.b16 %v1840
        %v1888 = vunpack.c.h.b16 %v1840
        %v1889 = vpack.c.b16 %v1857, %v1857
        %v1890 = vpack.c.b16 %v1858, %v1858
        %v1891 = vpack.c.b16 %v1859, %v1859
        %v1892 = vpack.c.b16 %v1860, %v1860
        %v1893 = vpack.c.b16 %v1861, %v1861
        %v1894 = vpack.c.b16 %v1862, %v1862
        %v1895 = vpack.c.b16 %v1863, %v1863
        %v1896 = vpack.c.b16 %v1864, %v1864
        %v1897 = vpack.c.b16 %v1865, %v1865
        %v1898 = vpack.c.b16 %v1866, %v1866
        %v1899 = vpack.c.b16 %v1867, %v1867
        %v1900 = vpack.c.b16 %v1868, %v1868
        %v1901 = vpack.c.b16 %v1869, %v1869
        %v1902 = vpack.c.b16 %v1870, %v1870
        %v1903 = vpack.c.b16 %v1871, %v1871
        %v1904 = vpack.c.b16 %v1872, %v1872
        %v1905 = vpack.c.b16 %v1873, %v1873
        %v1906 = vpack.c.b16 %v1874, %v1874
        %v1907 = vpack.c.b16 %v1875, %v1875
        %v1908 = vpack.c.b16 %v1876, %v1876
        %v1909 = vpack.c.b16 %v1877, %v1877
        %v1910 = vpack.c.b16 %v1878, %v1878
        %v1911 = vpack.c.b16 %v1879, %v1879
        %v1912 = vpack.c.b16 %v1880, %v1880
        %v1913 = vpack.c.b16 %v1881, %v1881
        %v1914 = vpack.c.b16 %v1882, %v1882
        %v1915 = vpack.c.b16 %v1883, %v1883
        %v1916 = vpack.c.b16 %v1884, %v1884
        %v1917 = vpack.c.b16 %v1885, %v1885
        %v1918 = vpack.c.b16 %v1886, %v1886
        %v1919 = vpack.c.b16 %v1887, %v1887
        %v1920 = vpack.c.b16 %v1888, %v1888
        %1953 = vst [vmem:[%s4] sm:$0xf] %v1889
        %1954 = vst [vmem:[%s4 + $0x4] sm:$0xf] %v1890
        %1955 = vst [vmem:[%s4 + $0x8] sm:$0xf] %v1891
        %1956 = vst [vmem:[%s4 + $0xc] sm:$0xf] %v1892
        %1957 = vst [vmem:[%s4 + $0x10] sm:$0xf] %v1893
        %1958 = vst [vmem:[%s4 + $0x14] sm:$0xf] %v1894
        %1959 = vst [vmem:[%s4 + $0x18] sm:$0xf] %v1895
        %1960 = vst [vmem:[%s4 + $0x1c] sm:$0xf] %v1896
        %1961 = vst [vmem:[%s4 + $0x20] sm:$0xf] %v1897
        %1962 = vst [vmem:[%s4 + $0x24] sm:$0xf] %v1898
        %1963 = vst [vmem:[%s4 + $0x28] sm:$0xf] %v1899
        %1964 = vst [vmem:[%s4 + $0x2c] sm:$0xf] %v1900
        %1965 = vst [vmem:[%s4 + $0x30] sm:$0xf] %v1901
        %1966 = vst [vmem:[%s4 + $0x34] sm:$0xf] %v1902
        %1967 = vst [vmem:[%s4 + $0x38] sm:$0xf] %v1903
        %1968 = vst [vmem:[%s4 + $0x3c] sm:$0xf] %v1904
        %1969 = vst [vmem:[%s4 + $0x40] sm:$0xf] %v1905
        %1970 = vst [vmem:[%s4 + $0x44] sm:$0xf] %v1906
        %1971 = vst [vmem:[%s4 + $0x48] sm:$0xf] %v1907
        %1972 = vst [vmem:[%s4 + $0x4c] sm:$0xf] %v1908
        %1973 = vst [vmem:[%s4 + $0x50] sm:$0xf] %v1909
        %1974 = vst [vmem:[%s4 + $0x54] sm:$0xf] %v1910
        %1975 = vst [vmem:[%s4 + $0x58] sm:$0xf] %v1911
        %1976 = vst [vmem:[%s4 + $0x5c] sm:$0xf] %v1912
        %1977 = vst [vmem:[%s4 + $0x60] sm:$0xf] %v1913
        %1978 = vst [vmem:[%s4 + $0x64] sm:$0xf] %v1914
        %1979 = vst [vmem:[%s4 + $0x68] sm:$0xf] %v1915
        %1980 = vst [vmem:[%s4 + $0x6c] sm:$0xf] %v1916
        %1981 = vst [vmem:[%s4 + $0x70] sm:$0xf] %v1917
        %1982 = vst [vmem:[%s4 + $0x74] sm:$0xf] %v1918
        %1983 = vst [vmem:[%s4 + $0x78] sm:$0xf] %v1919
        %1984 = vst [vmem:[%s4 + $0x7c] sm:$0xf] %v1920
      $region44: #{encoder_forward.5} parent=35 // pred_fallthru
        _
      // Predicated region
      $region45: #{encoder_forward.5} parent=35 // pred_check
        %p1985 = pneg %p117
      $region46: #{encoder_forward.5} parent=35 // pred_check_branch
        %1987 = sbr.rel (%p1985) target = $region48
      $region47: #{encoder_forward.5} parent=35 // pred_region
        _
      $region48: #{encoder_forward.5} parent=35 // pred_fallthru
        _
      // Predicated region
      $region49: #{encoder_forward.5} parent=35 // pred_check
        %p1988 = pneg %p117
      $region50: #{encoder_forward.5} parent=35 // pred_check_branch
        %1990 = sbr.rel (%p1988) target = $region52
      $region51: #{encoder_forward.5} parent=35 // pred_region
        _
      $region52: #{encoder_forward.5} parent=35 // pred_fallthru
        _
    $region36: #{encoder_forward.5} parent=5 // pred_fallthru
      _
    %p1991 = scmp.le.s32.totalorder 2, %s10
    // Predicated region
    $region53: #{encoder_forward.5} parent=5 // pred_check
      %p1992 = pneg %p1991
    $region54: #{encoder_forward.5} parent=5 // pred_check_branch
      %1994 = sbr.rel (%p1992) target = $region56
    $region55: #{encoder_forward.5} parent=5 // pred_region
      %s1995 = ssub.s32 %s10, 2
    $region56: #{encoder_forward.5} parent=5 // pred_fallthru
      _
  $region6: #{encoder_forward.5} parent=0 // loop_footer
    %s14 = sadd.s32 1, %s10
  $region7: #{encoder_forward.5} parent=0 // loop_footer_branch
    %9 = sbr.rel target = $region3
  $region8: #{encoder_forward.5} parent=0 // loop_exit
    _

// kernel: encoder_forward.6
$region0: #{encoder_forward.6}
  #allocation0 [shape = 'u32[]', space=smem, size = 0x4, offset = 0x4, fixed_abs, tag = 'smem constant byte address 0x4 - core index']
  #allocation1 [shape = 'u32[144,128]{1,0:T(1,128)}', space=vmem, size = 0x12000, scoped, tag = 'internal scratch']
  #allocation2 [shape = 'f32[128,128]{1,0:T(8,128)}', space=vmem, size = 0x10000, scoped, tag = 'scratch operand']
  #allocation3 [shape = 'f32[1,128]{1,0:T(1,128)}', space=vmem, size = 0x200, scoped, tag = 'scratch operand']
  #allocation4 [shape = 'f32[1,128]{1,0:T(1,128)}', space=vmem, size = 0x200, scoped, tag = 'scratch operand']
  %s0 = inlined_call_operand.vmem [shape: bf16[128,1024], index: 0, kind: input, shape index: {}]
  %s1 = inlined_call_operand.vmem [shape: bf16[1024,128], index: 1, kind: input, shape index: {}]
  %s2 = inlined_call_operand.vmem [shape: f32[1,128], index: 2, kind: input, shape index: {}]
  %s3 = inlined_call_operand.vmem [shape: f32[1,128], index: 3, kind: input, shape index: {}]
  %s4 = inlined_call_operand.vmem [shape: bf16[128,128], index: 4, kind: output, shape index: {}]
  %s5 = sld [smem:[#allocation0]]
  $region34: #{encoder_forward.6} parent=0
    _
  %s7 = ssub.s32 1, %s5
  %s8 = scalar_select 0, %s7, %s5
  // Predicated region
  $region2: #{encoder_forward.6} parent=0 // pred_check
    _
  $region3: #{encoder_forward.6} parent=0 // pred_check_branch
    %10 = sbr.rel (0) target = $region5
  $region4: #{encoder_forward.6} parent=0 // pred_region
    _
  $region5: #{encoder_forward.6} parent=0 // pred_fallthru
    _
  // Predicated region
  $region6: #{encoder_forward.6} parent=0 // pred_check
    _
  $region7: #{encoder_forward.6} parent=0 // pred_check_branch
    %12 = sbr.rel (0) target = $region9
  $region8: #{encoder_forward.6} parent=0 // pred_region
    _
  $region9: #{encoder_forward.6} parent=0 // pred_fallthru
    _
  // Predicated region
  $region10: #{encoder_forward.6} parent=0 // pred_check
    _
  $region11: #{encoder_forward.6} parent=0 // pred_check_branch
    %14 = sbr.rel (0) target = $region13
  $region12: #{encoder_forward.6} parent=0 // pred_region
    _
  $region13: #{encoder_forward.6} parent=0 // pred_fallthru
    _
  // Predicated region
  $region14: #{encoder_forward.6} parent=0 // pred_check
    _
  $region15: #{encoder_forward.6} parent=0 // pred_check_branch
    %16 = sbr.rel (0) target = $region17
  $region16: #{encoder_forward.6} parent=0 // pred_region
    _
  $region17: #{encoder_forward.6} parent=0 // pred_fallthru
    _
  %p18 = scmp.eq.s32.totalorder 0, 0
  // Predicated region
  $region18: #{encoder_forward.6} parent=0 // pred_check
    %p19 = pneg %p18
  $region19: #{encoder_forward.6} parent=0 // pred_check_branch
    %21 = sbr.rel (%p19) target = $region21
  $region20: #{encoder_forward.6} parent=0 // pred_region
    %22 = vst [vmem:[#allocation3] sm:$0x1] 0.0
    %23 = vst [vmem:[#allocation4] sm:$0x1] 0.0
  $region21: #{encoder_forward.6} parent=0 // pred_fallthru
    _
  %v24 = vld [vmem:[%s0] sm:$0xff]
  %v25 = vld [vmem:[%s0 + $0x8] sm:$0xff]
  %v26 = vld [vmem:[%s0 + $0x10] sm:$0xff]
  %v27 = vld [vmem:[%s0 + $0x18] sm:$0xff]
  %v28 = vld [vmem:[%s0 + $0x20] sm:$0xff]
  %v29 = vld [vmem:[%s0 + $0x28] sm:$0xff]
  %v30 = vld [vmem:[%s0 + $0x30] sm:$0xff]
  %v31 = vld [vmem:[%s0 + $0x38] sm:$0xff]
  %v32 = vld [vmem:[%s0 + $0x40] sm:$0xff]
  %v33 = vld [vmem:[%s0 + $0x48] sm:$0xff]
  %v34 = vld [vmem:[%s0 + $0x50] sm:$0xff]
  %v35 = vld [vmem:[%s0 + $0x58] sm:$0xff]
  %v36 = vld [vmem:[%s0 + $0x60] sm:$0xff]
  %v37 = vld [vmem:[%s0 + $0x68] sm:$0xff]
  %v38 = vld [vmem:[%s0 + $0x70] sm:$0xff]
  %v39 = vld [vmem:[%s0 + $0x78] sm:$0xff]
  %v40 = vld [vmem:[%s0 + $0x80] sm:$0xff]
  %v41 = vld [vmem:[%s0 + $0x88] sm:$0xff]
  %v42 = vld [vmem:[%s0 + $0x90] sm:$0xff]
  %v43 = vld [vmem:[%s0 + $0x98] sm:$0xff]
  %v44 = vld [vmem:[%s0 + $0xa0] sm:$0xff]
  %v45 = vld [vmem:[%s0 + $0xa8] sm:$0xff]
  %v46 = vld [vmem:[%s0 + $0xb0] sm:$0xff]
  %v47 = vld [vmem:[%s0 + $0xb8] sm:$0xff]
  %v48 = vld [vmem:[%s0 + $0xc0] sm:$0xff]
  %v49 = vld [vmem:[%s0 + $0xc8] sm:$0xff]
  %v50 = vld [vmem:[%s0 + $0xd0] sm:$0xff]
  %v51 = vld [vmem:[%s0 + $0xd8] sm:$0xff]
  %v52 = vld [vmem:[%s0 + $0xe0] sm:$0xff]
  %v53 = vld [vmem:[%s0 + $0xe8] sm:$0xff]
  %v54 = vld [vmem:[%s0 + $0xf0] sm:$0xff]
  %v55 = vld [vmem:[%s0 + $0xf8] sm:$0xff]
  %v56 = vld [vmem:[%s0 + $0x100] sm:$0xff]
  %v57 = vld [vmem:[%s0 + $0x108] sm:$0xff]
  %v58 = vld [vmem:[%s0 + $0x110] sm:$0xff]
  %v59 = vld [vmem:[%s0 + $0x118] sm:$0xff]
  %v60 = vld [vmem:[%s0 + $0x120] sm:$0xff]
  %v61 = vld [vmem:[%s0 + $0x128] sm:$0xff]
  %v62 = vld [vmem:[%s0 + $0x130] sm:$0xff]
  %v63 = vld [vmem:[%s0 + $0x138] sm:$0xff]
  %v64 = vld [vmem:[%s0 + $0x140] sm:$0xff]
  %v65 = vld [vmem:[%s0 + $0x148] sm:$0xff]
  %v66 = vld [vmem:[%s0 + $0x150] sm:$0xff]
  %v67 = vld [vmem:[%s0 + $0x158] sm:$0xff]
  %v68 = vld [vmem:[%s0 + $0x160] sm:$0xff]
  %v69 = vld [vmem:[%s0 + $0x168] sm:$0xff]
  %v70 = vld [vmem:[%s0 + $0x170] sm:$0xff]
  %v71 = vld [vmem:[%s0 + $0x178] sm:$0xff]
  %v72 = vld [vmem:[%s0 + $0x180] sm:$0xff]
  %v73 = vld [vmem:[%s0 + $0x188] sm:$0xff]
  %v74 = vld [vmem:[%s0 + $0x190] sm:$0xff]
  %v75 = vld [vmem:[%s0 + $0x198] sm:$0xff]
  %v76 = vld [vmem:[%s0 + $0x1a0] sm:$0xff]
  %v77 = vld [vmem:[%s0 + $0x1a8] sm:$0xff]
  %v78 = vld [vmem:[%s0 + $0x1b0] sm:$0xff]
  %v79 = vld [vmem:[%s0 + $0x1b8] sm:$0xff]
  %v80 = vld [vmem:[%s0 + $0x1c0] sm:$0xff]
  %v81 = vld [vmem:[%s0 + $0x1c8] sm:$0xff]
  %v82 = vld [vmem:[%s0 + $0x1d0] sm:$0xff]
  %v83 = vld [vmem:[%s0 + $0x1d8] sm:$0xff]
  %v84 = vld [vmem:[%s0 + $0x1e0] sm:$0xff]
  %v85 = vld [vmem:[%s0 + $0x1e8] sm:$0xff]
  %v86 = vld [vmem:[%s0 + $0x1f0] sm:$0xff]
  %v87 = vld [vmem:[%s0 + $0x1f8] sm:$0xff]
  %v88 = vld [vmem:[%s1] sm:$0xf]
  %v89 = vld [vmem:[%s1 + $0x4] sm:$0xf]
  %v90 = vld [vmem:[%s1 + $0x8] sm:$0xf]
  %v91 = vld [vmem:[%s1 + $0xc] sm:$0xf]
  %v92 = vld [vmem:[%s1 + $0x10] sm:$0xf]
  %v93 = vld [vmem:[%s1 + $0x14] sm:$0xf]
  %v94 = vld [vmem:[%s1 + $0x18] sm:$0xf]
  %v95 = vld [vmem:[%s1 + $0x1c] sm:$0xf]
  %v96 = vld [vmem:[%s1 + $0x20] sm:$0xf]
  %v97 = vld [vmem:[%s1 + $0x24] sm:$0xf]
  %v98 = vld [vmem:[%s1 + $0x28] sm:$0xf]
  %v99 = vld [vmem:[%s1 + $0x2c] sm:$0xf]
  %v100 = vld [vmem:[%s1 + $0x30] sm:$0xf]
  %v101 = vld [vmem:[%s1 + $0x34] sm:$0xf]
  %v102 = vld [vmem:[%s1 + $0x38] sm:$0xf]
  %v103 = vld [vmem:[%s1 + $0x3c] sm:$0xf]
  %v104 = vld [vmem:[%s1 + $0x40] sm:$0xf]
  %v105 = vld [vmem:[%s1 + $0x44] sm:$0xf]
  %v106 = vld [vmem:[%s1 + $0x48] sm:$0xf]
  %v107 = vld [vmem:[%s1 + $0x4c] sm:$0xf]
  %v108 = vld [vmem:[%s1 + $0x50] sm:$0xf]
  %v109 = vld [vmem:[%s1 + $0x54] sm:$0xf]
  %v110 = vld [vmem:[%s1 + $0x58] sm:$0xf]
  %v111 = vld [vmem:[%s1 + $0x5c] sm:$0xf]
  %v112 = vld [vmem:[%s1 + $0x60] sm:$0xf]
  %v113 = vld [vmem:[%s1 + $0x64] sm:$0xf]
  %v114 = vld [vmem:[%s1 + $0x68] sm:$0xf]
  %v115 = vld [vmem:[%s1 + $0x6c] sm:$0xf]
  %v116 = vld [vmem:[%s1 + $0x70] sm:$0xf]
  %v117 = vld [vmem:[%s1 + $0x74] sm:$0xf]
  %v118 = vld [vmem:[%s1 + $0x78] sm:$0xf]
  %v119 = vld [vmem:[%s1 + $0x7c] sm:$0xf]
  %v120 = vld [vmem:[%s1 + $0x80] sm:$0xf]
  %v121 = vld [vmem:[%s1 + $0x84] sm:$0xf]
  %v122 = vld [vmem:[%s1 + $0x88] sm:$0xf]
  %v123 = vld [vmem:[%s1 + $0x8c] sm:$0xf]
  %v124 = vld [vmem:[%s1 + $0x90] sm:$0xf]
  %v125 = vld [vmem:[%s1 + $0x94] sm:$0xf]
  %v126 = vld [vmem:[%s1 + $0x98] sm:$0xf]
  %v127 = vld [vmem:[%s1 + $0x9c] sm:$0xf]
  %v128 = vld [vmem:[%s1 + $0xa0] sm:$0xf]
  %v129 = vld [vmem:[%s1 + $0xa4] sm:$0xf]
  %v130 = vld [vmem:[%s1 + $0xa8] sm:$0xf]
  %v131 = vld [vmem:[%s1 + $0xac] sm:$0xf]
  %v132 = vld [vmem:[%s1 + $0xb0] sm:$0xf]
  %v133 = vld [vmem:[%s1 + $0xb4] sm:$0xf]
  %v134 = vld [vmem:[%s1 + $0xb8] sm:$0xf]
  %v135 = vld [vmem:[%s1 + $0xbc] sm:$0xf]
  %v136 = vld [vmem:[%s1 + $0xc0] sm:$0xf]
  %v137 = vld [vmem:[%s1 + $0xc4] sm:$0xf]
  %v138 = vld [vmem:[%s1 + $0xc8] sm:$0xf]
  %v139 = vld [vmem:[%s1 + $0xcc] sm:$0xf]
  %v140 = vld [vmem:[%s1 + $0xd0] sm:$0xf]
  %v141 = vld [vmem:[%s1 + $0xd4] sm:$0xf]
  %v142 = vld [vmem:[%s1 + $0xd8] sm:$0xf]
  %v143 = vld [vmem:[%s1 + $0xdc] sm:$0xf]
  %v144 = vld [vmem:[%s1 + $0xe0] sm:$0xf]
  %v145 = vld [vmem:[%s1 + $0xe4] sm:$0xf]
  %v146 = vld [vmem:[%s1 + $0xe8] sm:$0xf]
  %v147 = vld [vmem:[%s1 + $0xec] sm:$0xf]
  %v148 = vld [vmem:[%s1 + $0xf0] sm:$0xf]
  %v149 = vld [vmem:[%s1 + $0xf4] sm:$0xf]
  %v150 = vld [vmem:[%s1 + $0xf8] sm:$0xf]
  %v151 = vld [vmem:[%s1 + $0xfc] sm:$0xf]
  %v152 = vld [vmem:[%s1 + $0x100] sm:$0xf]
  %v153 = vld [vmem:[%s1 + $0x104] sm:$0xf]
  %v154 = vld [vmem:[%s1 + $0x108] sm:$0xf]
  %v155 = vld [vmem:[%s1 + $0x10c] sm:$0xf]
  %v156 = vld [vmem:[%s1 + $0x110] sm:$0xf]
  %v157 = vld [vmem:[%s1 + $0x114] sm:$0xf]
  %v158 = vld [vmem:[%s1 + $0x118] sm:$0xf]
  %v159 = vld [vmem:[%s1 + $0x11c] sm:$0xf]
  %v160 = vld [vmem:[%s1 + $0x120] sm:$0xf]
  %v161 = vld [vmem:[%s1 + $0x124] sm:$0xf]
  %v162 = vld [vmem:[%s1 + $0x128] sm:$0xf]
  %v163 = vld [vmem:[%s1 + $0x12c] sm:$0xf]
  %v164 = vld [vmem:[%s1 + $0x130] sm:$0xf]
  %v165 = vld [vmem:[%s1 + $0x134] sm:$0xf]
  %v166 = vld [vmem:[%s1 + $0x138] sm:$0xf]
  %v167 = vld [vmem:[%s1 + $0x13c] sm:$0xf]
  %v168 = vld [vmem:[%s1 + $0x140] sm:$0xf]
  %v169 = vld [vmem:[%s1 + $0x144] sm:$0xf]
  %v170 = vld [vmem:[%s1 + $0x148] sm:$0xf]
  %v171 = vld [vmem:[%s1 + $0x14c] sm:$0xf]
  %v172 = vld [vmem:[%s1 + $0x150] sm:$0xf]
  %v173 = vld [vmem:[%s1 + $0x154] sm:$0xf]
  %v174 = vld [vmem:[%s1 + $0x158] sm:$0xf]
  %v175 = vld [vmem:[%s1 + $0x15c] sm:$0xf]
  %v176 = vld [vmem:[%s1 + $0x160] sm:$0xf]
  %v177 = vld [vmem:[%s1 + $0x164] sm:$0xf]
  %v178 = vld [vmem:[%s1 + $0x168] sm:$0xf]
  %v179 = vld [vmem:[%s1 + $0x16c] sm:$0xf]
  %v180 = vld [vmem:[%s1 + $0x170] sm:$0xf]
  %v181 = vld [vmem:[%s1 + $0x174] sm:$0xf]
  %v182 = vld [vmem:[%s1 + $0x178] sm:$0xf]
  %v183 = vld [vmem:[%s1 + $0x17c] sm:$0xf]
  %v184 = vld [vmem:[%s1 + $0x180] sm:$0xf]
  %v185 = vld [vmem:[%s1 + $0x184] sm:$0xf]
  %v186 = vld [vmem:[%s1 + $0x188] sm:$0xf]
  %v187 = vld [vmem:[%s1 + $0x18c] sm:$0xf]
  %v188 = vld [vmem:[%s1 + $0x190] sm:$0xf]
  %v189 = vld [vmem:[%s1 + $0x194] sm:$0xf]
  %v190 = vld [vmem:[%s1 + $0x198] sm:$0xf]
  %v191 = vld [vmem:[%s1 + $0x19c] sm:$0xf]
  %v192 = vld [vmem:[%s1 + $0x1a0] sm:$0xf]
  %v193 = vld [vmem:[%s1 + $0x1a4] sm:$0xf]
  %v194 = vld [vmem:[%s1 + $0x1a8] sm:$0xf]
  %v195 = vld [vmem:[%s1 + $0x1ac] sm:$0xf]
  %v196 = vld [vmem:[%s1 + $0x1b0] sm:$0xf]
  %v197 = vld [vmem:[%s1 + $0x1b4] sm:$0xf]
  %v198 = vld [vmem:[%s1 + $0x1b8] sm:$0xf]
  %v199 = vld [vmem:[%s1 + $0x1bc] sm:$0xf]
  %v200 = vld [vmem:[%s1 + $0x1c0] sm:$0xf]
  %v201 = vld [vmem:[%s1 + $0x1c4] sm:$0xf]
  %v202 = vld [vmem:[%s1 + $0x1c8] sm:$0xf]
  %v203 = vld [vmem:[%s1 + $0x1cc] sm:$0xf]
  %v204 = vld [vmem:[%s1 + $0x1d0] sm:$0xf]
  %v205 = vld [vmem:[%s1 + $0x1d4] sm:$0xf]
  %v206 = vld [vmem:[%s1 + $0x1d8] sm:$0xf]
  %v207 = vld [vmem:[%s1 + $0x1dc] sm:$0xf]
  %v208 = vld [vmem:[%s1 + $0x1e0] sm:$0xf]
  %v209 = vld [vmem:[%s1 + $0x1e4] sm:$0xf]
  %v210 = vld [vmem:[%s1 + $0x1e8] sm:$0xf]
  %v211 = vld [vmem:[%s1 + $0x1ec] sm:$0xf]
  %v212 = vld [vmem:[%s1 + $0x1f0] sm:$0xf]
  %v213 = vld [vmem:[%s1 + $0x1f4] sm:$0xf]
  %v214 = vld [vmem:[%s1 + $0x1f8] sm:$0xf]
  %v215 = vld [vmem:[%s1 + $0x1fc] sm:$0xf]
  %v280 = vunpack.c.l.b16 %v24
  %v281 = vunpack.c.h.b16 %v24
  %v282 = vunpack.c.l.b16 %v25
  %v283 = vunpack.c.h.b16 %v25
  %v284 = vunpack.c.l.b16 %v26
  %v285 = vunpack.c.h.b16 %v26
  %v286 = vunpack.c.l.b16 %v27
  %v287 = vunpack.c.h.b16 %v27
  %v288 = vunpack.c.l.b16 %v28
  %v289 = vunpack.c.h.b16 %v28
  %v290 = vunpack.c.l.b16 %v29
  %v291 = vunpack.c.h.b16 %v29
  %v292 = vunpack.c.l.b16 %v30
  %v293 = vunpack.c.h.b16 %v30
  %v294 = vunpack.c.l.b16 %v31
  %v295 = vunpack.c.h.b16 %v31
  %v296 = vunpack.c.l.b16 %v32
  %v297 = vunpack.c.h.b16 %v32
  %v298 = vunpack.c.l.b16 %v33
  %v299 = vunpack.c.h.b16 %v33
  %v300 = vunpack.c.l.b16 %v34
  %v301 = vunpack.c.h.b16 %v34
  %v302 = vunpack.c.l.b16 %v35
  %v303 = vunpack.c.h.b16 %v35
  %v304 = vunpack.c.l.b16 %v36
  %v305 = vunpack.c.h.b16 %v36
  %v306 = vunpack.c.l.b16 %v37
  %v307 = vunpack.c.h.b16 %v37
  %v308 = vunpack.c.l.b16 %v38
  %v309 = vunpack.c.h.b16 %v38
  %v310 = vunpack.c.l.b16 %v39
  %v311 = vunpack.c.h.b16 %v39
  %v312 = vunpack.c.l.b16 %v40
  %v313 = vunpack.c.h.b16 %v40
  %v314 = vunpack.c.l.b16 %v41
  %v315 = vunpack.c.h.b16 %v41
  %v316 = vunpack.c.l.b16 %v42
  %v317 = vunpack.c.h.b16 %v42
  %v318 = vunpack.c.l.b16 %v43
  %v319 = vunpack.c.h.b16 %v43
  %v320 = vunpack.c.l.b16 %v44
  %v321 = vunpack.c.h.b16 %v44
  %v322 = vunpack.c.l.b16 %v45
  %v323 = vunpack.c.h.b16 %v45
  %v324 = vunpack.c.l.b16 %v46
  %v325 = vunpack.c.h.b16 %v46
  %v326 = vunpack.c.l.b16 %v47
  %v327 = vunpack.c.h.b16 %v47
  %v328 = vunpack.c.l.b16 %v48
  %v329 = vunpack.c.h.b16 %v48
  %v330 = vunpack.c.l.b16 %v49
  %v331 = vunpack.c.h.b16 %v49
  %v332 = vunpack.c.l.b16 %v50
  %v333 = vunpack.c.h.b16 %v50
  %v334 = vunpack.c.l.b16 %v51
  %v335 = vunpack.c.h.b16 %v51
  %v336 = vunpack.c.l.b16 %v52
  %v337 = vunpack.c.h.b16 %v52
  %v338 = vunpack.c.l.b16 %v53
  %v339 = vunpack.c.h.b16 %v53
  %v340 = vunpack.c.l.b16 %v54
  %v341 = vunpack.c.h.b16 %v54
  %v342 = vunpack.c.l.b16 %v55
  %v343 = vunpack.c.h.b16 %v55
  %v344 = vunpack.c.l.b16 %v56
  %v345 = vunpack.c.h.b16 %v56
  %v346 = vunpack.c.l.b16 %v57
  %v347 = vunpack.c.h.b16 %v57
  %v348 = vunpack.c.l.b16 %v58
  %v349 = vunpack.c.h.b16 %v58
  %v350 = vunpack.c.l.b16 %v59
  %v351 = vunpack.c.h.b16 %v59
  %v352 = vunpack.c.l.b16 %v60
  %v353 = vunpack.c.h.b16 %v60
  %v354 = vunpack.c.l.b16 %v61
  %v355 = vunpack.c.h.b16 %v61
  %v356 = vunpack.c.l.b16 %v62
  %v357 = vunpack.c.h.b16 %v62
  %v358 = vunpack.c.l.b16 %v63
  %v359 = vunpack.c.h.b16 %v63
  %v360 = vunpack.c.l.b16 %v64
  %v361 = vunpack.c.h.b16 %v64
  %v362 = vunpack.c.l.b16 %v65
  %v363 = vunpack.c.h.b16 %v65
  %v364 = vunpack.c.l.b16 %v66
  %v365 = vunpack.c.h.b16 %v66
  %v366 = vunpack.c.l.b16 %v67
  %v367 = vunpack.c.h.b16 %v67
  %v368 = vunpack.c.l.b16 %v68
  %v369 = vunpack.c.h.b16 %v68
  %v370 = vunpack.c.l.b16 %v69
  %v371 = vunpack.c.h.b16 %v69
  %v372 = vunpack.c.l.b16 %v70
  %v373 = vunpack.c.h.b16 %v70
  %v374 = vunpack.c.l.b16 %v71
  %v375 = vunpack.c.h.b16 %v71
  %v376 = vunpack.c.l.b16 %v72
  %v377 = vunpack.c.h.b16 %v72
  %v378 = vunpack.c.l.b16 %v73
  %v379 = vunpack.c.h.b16 %v73
  %v380 = vunpack.c.l.b16 %v74
  %v381 = vunpack.c.h.b16 %v74
  %v382 = vunpack.c.l.b16 %v75
  %v383 = vunpack.c.h.b16 %v75
  %v384 = vunpack.c.l.b16 %v76
  %v385 = vunpack.c.h.b16 %v76
  %v386 = vunpack.c.l.b16 %v77
  %v387 = vunpack.c.h.b16 %v77
  %v388 = vunpack.c.l.b16 %v78
  %v389 = vunpack.c.h.b16 %v78
  %v390 = vunpack.c.l.b16 %v79
  %v391 = vunpack.c.h.b16 %v79
  %v392 = vunpack.c.l.b16 %v80
  %v393 = vunpack.c.h.b16 %v80
  %v394 = vunpack.c.l.b16 %v81
  %v395 = vunpack.c.h.b16 %v81
  %v396 = vunpack.c.l.b16 %v82
  %v397 = vunpack.c.h.b16 %v82
  %v398 = vunpack.c.l.b16 %v83
  %v399 = vunpack.c.h.b16 %v83
  %v400 = vunpack.c.l.b16 %v84
  %v401 = vunpack.c.h.b16 %v84
  %v402 = vunpack.c.l.b16 %v85
  %v403 = vunpack.c.h.b16 %v85
  %v404 = vunpack.c.l.b16 %v86
  %v405 = vunpack.c.h.b16 %v86
  %v406 = vunpack.c.l.b16 %v87
  %v407 = vunpack.c.h.b16 %v87
  %v408 = vpack.c.b16 %v288, %v280
  %v409 = vpack.c.b16 %v289, %v281
  %v410 = vpack.c.b16 %v290, %v282
  %v411 = vpack.c.b16 %v291, %v283
  %v412 = vpack.c.b16 %v292, %v284
  %v413 = vpack.c.b16 %v293, %v285
  %v414 = vpack.c.b16 %v294, %v286
  %v415 = vpack.c.b16 %v295, %v287
  %v416 = vpack.c.b16 %v304, %v296
  %v417 = vpack.c.b16 %v305, %v297
  %v418 = vpack.c.b16 %v306, %v298
  %v419 = vpack.c.b16 %v307, %v299
  %v420 = vpack.c.b16 %v308, %v300
  %v421 = vpack.c.b16 %v309, %v301
  %v422 = vpack.c.b16 %v310, %v302
  %v423 = vpack.c.b16 %v311, %v303
  %v424 = vpack.c.b16 %v320, %v312
  %v425 = vpack.c.b16 %v321, %v313
  %v426 = vpack.c.b16 %v322, %v314
  %v427 = vpack.c.b16 %v323, %v315
  %v428 = vpack.c.b16 %v324, %v316
  %v429 = vpack.c.b16 %v325, %v317
  %v430 = vpack.c.b16 %v326, %v318
  %v431 = vpack.c.b16 %v327, %v319
  %v432 = vpack.c.b16 %v336, %v328
  %v433 = vpack.c.b16 %v337, %v329
  %v434 = vpack.c.b16 %v338, %v330
  %v435 = vpack.c.b16 %v339, %v331
  %v436 = vpack.c.b16 %v340, %v332
  %v437 = vpack.c.b16 %v341, %v333
  %v438 = vpack.c.b16 %v342, %v334
  %v439 = vpack.c.b16 %v343, %v335
  %v440 = vpack.c.b16 %v352, %v344
  %v441 = vpack.c.b16 %v353, %v345
  %v442 = vpack.c.b16 %v354, %v346
  %v443 = vpack.c.b16 %v355, %v347
  %v444 = vpack.c.b16 %v356, %v348
  %v445 = vpack.c.b16 %v357, %v349
  %v446 = vpack.c.b16 %v358, %v350
  %v447 = vpack.c.b16 %v359, %v351
  %v448 = vpack.c.b16 %v368, %v360
  %v449 = vpack.c.b16 %v369, %v361
  %v450 = vpack.c.b16 %v370, %v362
  %v451 = vpack.c.b16 %v371, %v363
  %v452 = vpack.c.b16 %v372, %v364
  %v453 = vpack.c.b16 %v373, %v365
  %v454 = vpack.c.b16 %v374, %v366
  %v455 = vpack.c.b16 %v375, %v367
  %v456 = vpack.c.b16 %v384, %v376
  %v457 = vpack.c.b16 %v385, %v377
  %v458 = vpack.c.b16 %v386, %v378
  %v459 = vpack.c.b16 %v387, %v379
  %v460 = vpack.c.b16 %v388, %v380
  %v461 = vpack.c.b16 %v389, %v381
  %v462 = vpack.c.b16 %v390, %v382
  %v463 = vpack.c.b16 %v391, %v383
  %v464 = vpack.c.b16 %v400, %v392
  %v465 = vpack.c.b16 %v401, %v393
  %v466 = vpack.c.b16 %v402, %v394
  %v467 = vpack.c.b16 %v403, %v395
  %v468 = vpack.c.b16 %v404, %v396
  %v469 = vpack.c.b16 %v405, %v397
  %v470 = vpack.c.b16 %v406, %v398
  %v471 = vpack.c.b16 %v407, %v399
  %v664 = vunpack.c.l.b16 %v88
  %v665 = vunpack.c.l.b16 %v89
  %v666 = vunpack.c.l.b16 %v90
  %v667 = vunpack.c.l.b16 %v91
  %v668 = vunpack.c.l.b16 %v92
  %v669 = vunpack.c.l.b16 %v93
  %v670 = vunpack.c.l.b16 %v94
  %v671 = vunpack.c.l.b16 %v95
  %v672 = vunpack.c.l.b16 %v96
  %v673 = vunpack.c.l.b16 %v97
  %v674 = vunpack.c.l.b16 %v98
  %v675 = vunpack.c.l.b16 %v99
  %v676 = vunpack.c.l.b16 %v100
  %v677 = vunpack.c.l.b16 %v101
  %v678 = vunpack.c.l.b16 %v102
  %v679 = vunpack.c.l.b16 %v103
  %v680 = vunpack.c.l.b16 %v104
  %v681 = vunpack.c.l.b16 %v105
  %v682 = vunpack.c.l.b16 %v106
  %v683 = vunpack.c.l.b16 %v107
  %v684 = vunpack.c.l.b16 %v108
  %v685 = vunpack.c.l.b16 %v109
  %v686 = vunpack.c.l.b16 %v110
  %v687 = vunpack.c.l.b16 %v111
  %v688 = vunpack.c.l.b16 %v112
  %v689 = vunpack.c.l.b16 %v113
  %v690 = vunpack.c.l.b16 %v114
  %v691 = vunpack.c.l.b16 %v115
  %v692 = vunpack.c.l.b16 %v116
  %v693 = vunpack.c.l.b16 %v117
  %v694 = vunpack.c.l.b16 %v118
  %v695 = vunpack.c.l.b16 %v119
  %v696 = vunpack.c.l.b16 %v120
  %v697 = vunpack.c.l.b16 %v121
  %v698 = vunpack.c.l.b16 %v122
  %v699 = vunpack.c.l.b16 %v123
  %v700 = vunpack.c.l.b16 %v124
  %v701 = vunpack.c.l.b16 %v125
  %v702 = vunpack.c.l.b16 %v126
  %v703 = vunpack.c.l.b16 %v127
  %v704 = vunpack.c.l.b16 %v128
  %v705 = vunpack.c.l.b16 %v129
  %v706 = vunpack.c.l.b16 %v130
  %v707 = vunpack.c.l.b16 %v131
  %v708 = vunpack.c.l.b16 %v132
  %v709 = vunpack.c.l.b16 %v133
  %v710 = vunpack.c.l.b16 %v134
  %v711 = vunpack.c.l.b16 %v135
  %v712 = vunpack.c.l.b16 %v136
  %v713 = vunpack.c.l.b16 %v137
  %v714 = vunpack.c.l.b16 %v138
  %v715 = vunpack.c.l.b16 %v139
  %v716 = vunpack.c.l.b16 %v140
  %v717 = vunpack.c.l.b16 %v141
  %v718 = vunpack.c.l.b16 %v142
  %v719 = vunpack.c.l.b16 %v143
  %v720 = vunpack.c.l.b16 %v144
  %v721 = vunpack.c.l.b16 %v145
  %v722 = vunpack.c.l.b16 %v146
  %v723 = vunpack.c.l.b16 %v147
  %v724 = vunpack.c.l.b16 %v148
  %v725 = vunpack.c.l.b16 %v149
  %v726 = vunpack.c.l.b16 %v150
  %v727 = vunpack.c.l.b16 %v151
  %v728 = vunpack.c.l.b16 %v152
  %v729 = vunpack.c.l.b16 %v153
  %v730 = vunpack.c.l.b16 %v154
  %v731 = vunpack.c.l.b16 %v155
  %v732 = vunpack.c.l.b16 %v156
  %v733 = vunpack.c.l.b16 %v157
  %v734 = vunpack.c.l.b16 %v158
  %v735 = vunpack.c.l.b16 %v159
  %v736 = vunpack.c.l.b16 %v160
  %v737 = vunpack.c.l.b16 %v161
  %v738 = vunpack.c.l.b16 %v162
  %v739 = vunpack.c.l.b16 %v163
  %v740 = vunpack.c.l.b16 %v164
  %v741 = vunpack.c.l.b16 %v165
  %v742 = vunpack.c.l.b16 %v166
  %v743 = vunpack.c.l.b16 %v167
  %v744 = vunpack.c.l.b16 %v168
  %v745 = vunpack.c.l.b16 %v169
  %v746 = vunpack.c.l.b16 %v170
  %v747 = vunpack.c.l.b16 %v171
  %v748 = vunpack.c.l.b16 %v172
  %v749 = vunpack.c.l.b16 %v173
  %v750 = vunpack.c.l.b16 %v174
  %v751 = vunpack.c.l.b16 %v175
  %v752 = vunpack.c.l.b16 %v176
  %v753 = vunpack.c.l.b16 %v177
  %v754 = vunpack.c.l.b16 %v178
  %v755 = vunpack.c.l.b16 %v179
  %v756 = vunpack.c.l.b16 %v180
  %v757 = vunpack.c.l.b16 %v181
  %v758 = vunpack.c.l.b16 %v182
  %v759 = vunpack.c.l.b16 %v183
  %v760 = vunpack.c.l.b16 %v184
  %v761 = vunpack.c.l.b16 %v185
  %v762 = vunpack.c.l.b16 %v186
  %v763 = vunpack.c.l.b16 %v187
  %v764 = vunpack.c.l.b16 %v188
  %v765 = vunpack.c.l.b16 %v189
  %v766 = vunpack.c.l.b16 %v190
  %v767 = vunpack.c.l.b16 %v191
  %v768 = vunpack.c.l.b16 %v192
  %v769 = vunpack.c.l.b16 %v193
  %v770 = vunpack.c.l.b16 %v194
  %v771 = vunpack.c.l.b16 %v195
  %v772 = vunpack.c.l.b16 %v196
  %v773 = vunpack.c.l.b16 %v197
  %v774 = vunpack.c.l.b16 %v198
  %v775 = vunpack.c.l.b16 %v199
  %v776 = vunpack.c.l.b16 %v200
  %v777 = vunpack.c.l.b16 %v201
  %v778 = vunpack.c.l.b16 %v202
  %v779 = vunpack.c.l.b16 %v203
  %v780 = vunpack.c.l.b16 %v204
  %v781 = vunpack.c.l.b16 %v205
  %v782 = vunpack.c.l.b16 %v206
  %v783 = vunpack.c.l.b16 %v207
  %v784 = vunpack.c.l.b16 %v208
  %v785 = vunpack.c.l.b16 %v209
  %v786 = vunpack.c.l.b16 %v210
  %v787 = vunpack.c.l.b16 %v211
  %v788 = vunpack.c.l.b16 %v212
  %v789 = vunpack.c.l.b16 %v213
  %v790 = vunpack.c.l.b16 %v214
  %v791 = vunpack.c.l.b16 %v215
  %v792 = vpack.c.b16 %v665, %v664
  %v793 = vpack.c.b16 %v667, %v666
  %v794 = vpack.c.b16 %v669, %v668
  %v795 = vpack.c.b16 %v671, %v670
  %v796 = vpack.c.b16 %v673, %v672
  %v797 = vpack.c.b16 %v675, %v674
  %v798 = vpack.c.b16 %v677, %v676
  %v799 = vpack.c.b16 %v679, %v678
  %v800 = vpack.c.b16 %v681, %v680
  %v801 = vpack.c.b16 %v683, %v682
  %v802 = vpack.c.b16 %v685, %v684
  %v803 = vpack.c.b16 %v687, %v686
  %v804 = vpack.c.b16 %v689, %v688
  %v805 = vpack.c.b16 %v691, %v690
  %v806 = vpack.c.b16 %v693, %v692
  %v807 = vpack.c.b16 %v695, %v694
  %v808 = vpack.c.b16 %v697, %v696
  %v809 = vpack.c.b16 %v699, %v698
  %v810 = vpack.c.b16 %v701, %v700
  %v811 = vpack.c.b16 %v703, %v702
  %v812 = vpack.c.b16 %v705, %v704
  %v813 = vpack.c.b16 %v707, %v706
  %v814 = vpack.c.b16 %v709, %v708
  %v815 = vpack.c.b16 %v711, %v710
  %v816 = vpack.c.b16 %v713, %v712
  %v817 = vpack.c.b16 %v715, %v714
  %v818 = vpack.c.b16 %v717, %v716
  %v819 = vpack.c.b16 %v719, %v718
  %v820 = vpack.c.b16 %v721, %v720
  %v821 = vpack.c.b16 %v723, %v722
  %v822 = vpack.c.b16 %v725, %v724
  %v823 = vpack.c.b16 %v727, %v726
  %v824 = vpack.c.b16 %v729, %v728
  %v825 = vpack.c.b16 %v731, %v730
  %v826 = vpack.c.b16 %v733, %v732
  %v827 = vpack.c.b16 %v735, %v734
  %v828 = vpack.c.b16 %v737, %v736
  %v829 = vpack.c.b16 %v739, %v738
  %v830 = vpack.c.b16 %v741, %v740
  %v831 = vpack.c.b16 %v743, %v742
  %v832 = vpack.c.b16 %v745, %v744
  %v833 = vpack.c.b16 %v747, %v746
  %v834 = vpack.c.b16 %v749, %v748
  %v835 = vpack.c.b16 %v751, %v750
  %v836 = vpack.c.b16 %v753, %v752
  %v837 = vpack.c.b16 %v755, %v754
  %v838 = vpack.c.b16 %v757, %v756
  %v839 = vpack.c.b16 %v759, %v758
  %v840 = vpack.c.b16 %v761, %v760
  %v841 = vpack.c.b16 %v763, %v762
  %v842 = vpack.c.b16 %v765, %v764
  %v843 = vpack.c.b16 %v767, %v766
  %v844 = vpack.c.b16 %v769, %v768
  %v845 = vpack.c.b16 %v771, %v770
  %v846 = vpack.c.b16 %v773, %v772
  %v847 = vpack.c.b16 %v775, %v774
  %v848 = vpack.c.b16 %v777, %v776
  %v849 = vpack.c.b16 %v779, %v778
  %v850 = vpack.c.b16 %v781, %v780
  %v851 = vpack.c.b16 %v783, %v782
  %v852 = vpack.c.b16 %v785, %v784
  %v853 = vpack.c.b16 %v787, %v786
  %v854 = vpack.c.b16 %v789, %v788
  %v855 = vpack.c.b16 %v791, %v790
  %920 = vmatprep.subr.bf16.mxu0 0
  %921 = vmatpush1.bf16.msra.mxu0 %v799
  %922 = vmatprep.subr.bf16.mxu0 0
  %923 = vmatpush1.bf16.msra.mxu0 %v798
  %924 = vmatprep.subr.bf16.mxu0 0
  %925 = vmatpush1.bf16.msra.mxu0 %v797
  %926 = vmatprep.subr.bf16.mxu0 0
  %927 = vmatpush1.bf16.msra.mxu0 %v796
  %928 = vmatprep.subr.bf16.mxu0 0
  %929 = vmatpush1.bf16.msra.mxu0 %v795
  %930 = vmatprep.subr.bf16.mxu0 0
  %931 = vmatpush1.bf16.msra.mxu0 %v794
  %932 = vmatprep.subr.bf16.mxu0 0
  %933 = vmatpush1.bf16.msra.mxu0 %v793
  %934 = vmatprep.subr.bf16.mxu0 0
  %935 = vmatpush1.bf16.msra.mxu0 %v792
  %936 = vmatprep.subr.bf16.mxu0 0
  %937 = vmatpush2.bf16.msra.mxu0 %v807
  %938 = vmatprep.subr.bf16.mxu0 0
  %939 = vmatpush2.bf16.msra.mxu0 %v806
  %940 = vmatprep.subr.bf16.mxu0 0
  %941 = vmatpush2.bf16.msra.mxu0 %v805
  %942 = vmatprep.subr.bf16.mxu0 0
  %943 = vmatpush2.bf16.msra.mxu0 %v804
  %944 = vmatprep.subr.bf16.mxu0 0
  %945 = vmatpush2.bf16.msra.mxu0 %v803
  %946 = vmatprep.subr.bf16.mxu0 0
  %947 = vmatpush2.bf16.msra.mxu0 %v802
  %948 = vmatprep.subr.bf16.mxu0 0
  %949 = vmatpush2.bf16.msra.mxu0 %v801
  %950 = vmatprep.subr.bf16.mxu0 0
  %951 = vmatpush2.bf16.msra.mxu0 %v800
  %952 = vmatprep.mubr.bf16.mxu0 %v409
  %953 = vmatmul.mubr.bf16.gmra.mxu0 %v408
  %v954 = vpop.f32.mrf.mxu0
  %v955 = vadd.f32 0.0, %v954
  %v956 = vpop.f32.mrf.mxu0
  %v957 = vpop.f32.mrf.mxu0
  %v958 = vadd.f32 0.0, %v957
  %v959 = vpop.f32.mrf.mxu0
  %960 = vmatprep.mubr.bf16.mxu0 %v417
  %961 = vmatmul.mubr.bf16.gmra.mxu0 %v416
  %v962 = vpop.f32.mrf.mxu0
  %v963 = vadd.f32 0.0, %v962
  %v964 = vpop.f32.mrf.mxu0
  %v965 = vpop.f32.mrf.mxu0
  %v966 = vadd.f32 0.0, %v965
  %v967 = vpop.f32.mrf.mxu0
  %968 = vmatprep.mubr.bf16.mxu0 %v425
  %969 = vmatmul.mubr.bf16.gmra.mxu0 %v424
  %v970 = vpop.f32.mrf.mxu0
  %v971 = vadd.f32 0.0, %v970
  %v972 = vpop.f32.mrf.mxu0
  %v973 = vpop.f32.mrf.mxu0
  %v974 = vadd.f32 0.0, %v973
  %v975 = vpop.f32.mrf.mxu0
  %976 = vmatprep.mubr.bf16.mxu0 %v433
  %977 = vmatmul.mubr.bf16.gmra.mxu0 %v432
  %v978 = vpop.f32.mrf.mxu0
  %v979 = vadd.f32 0.0, %v978
  %v980 = vpop.f32.mrf.mxu0
  %v981 = vpop.f32.mrf.mxu0
  %v982 = vadd.f32 0.0, %v981
  %v983 = vpop.f32.mrf.mxu0
  %984 = vmatprep.mubr.bf16.mxu0 %v441
  %985 = vmatmul.mubr.bf16.gmra.mxu0 %v440
  %v986 = vpop.f32.mrf.mxu0
  %v987 = vadd.f32 0.0, %v986
  %v988 = vpop.f32.mrf.mxu0
  %v989 = vpop.f32.mrf.mxu0
  %v990 = vadd.f32 0.0, %v989
  %v991 = vpop.f32.mrf.mxu0
  %992 = vmatprep.mubr.bf16.mxu0 %v449
  %993 = vmatmul.mubr.bf16.gmra.mxu0 %v448
  %v994 = vpop.f32.mrf.mxu0
  %v995 = vadd.f32 0.0, %v994
  %v996 = vpop.f32.mrf.mxu0
  %v997 = vpop.f32.mrf.mxu0
  %v998 = vadd.f32 0.0, %v997
  %v999 = vpop.f32.mrf.mxu0
  %1000 = vmatprep.mubr.bf16.mxu0 %v457
  %1001 = vmatmul.mubr.bf16.gmra.mxu0 %v456
  %v1002 = vpop.f32.mrf.mxu0
  %v1003 = vadd.f32 0.0, %v1002
  %v1004 = vpop.f32.mrf.mxu0
  %v1005 = vpop.f32.mrf.mxu0
  %v1006 = vadd.f32 0.0, %v1005
  %v1007 = vpop.f32.mrf.mxu0
  %1008 = vmatprep.mubr.bf16.mxu0 %v465
  %1009 = vmatmul.mubr.bf16.gmra.mxu0 %v464
  %v1010 = vpop.f32.mrf.mxu0
  %v1011 = vadd.f32 0.0, %v1010
  %v1012 = vpop.f32.mrf.mxu0
  %v1013 = vpop.f32.mrf.mxu0
  %v1014 = vadd.f32 0.0, %v1013
  %v1015 = vpop.f32.mrf.mxu0
  %1016 = vdwg.mxu0
  %1017 = vmatprep.subr.bf16.mxu0 0
  %1018 = vmatpush1.bf16.msra.mxu0 %v815
  %1019 = vmatprep.subr.bf16.mxu0 0
  %1020 = vmatpush1.bf16.msra.mxu0 %v814
  %1021 = vmatprep.subr.bf16.mxu0 0
  %1022 = vmatpush1.bf16.msra.mxu0 %v813
  %1023 = vmatprep.subr.bf16.mxu0 0
  %1024 = vmatpush1.bf16.msra.mxu0 %v812
  %1025 = vmatprep.subr.bf16.mxu0 0
  %1026 = vmatpush1.bf16.msra.mxu0 %v811
  %1027 = vmatprep.subr.bf16.mxu0 0
  %1028 = vmatpush1.bf16.msra.mxu0 %v810
  %1029 = vmatprep.subr.bf16.mxu0 0
  %1030 = vmatpush1.bf16.msra.mxu0 %v809
  %1031 = vmatprep.subr.bf16.mxu0 0
  %1032 = vmatpush1.bf16.msra.mxu0 %v808
  %1033 = vmatprep.subr.bf16.mxu0 0
  %1034 = vmatpush2.bf16.msra.mxu0 %v823
  %1035 = vmatprep.subr.bf16.mxu0 0
  %1036 = vmatpush2.bf16.msra.mxu0 %v822
  %1037 = vmatprep.subr.bf16.mxu0 0
  %1038 = vmatpush2.bf16.msra.mxu0 %v821
  %1039 = vmatprep.subr.bf16.mxu0 0
  %1040 = vmatpush2.bf16.msra.mxu0 %v820
  %1041 = vmatprep.subr.bf16.mxu0 0
  %1042 = vmatpush2.bf16.msra.mxu0 %v819
  %1043 = vmatprep.subr.bf16.mxu0 0
  %1044 = vmatpush2.bf16.msra.mxu0 %v818
  %1045 = vmatprep.subr.bf16.mxu0 0
  %1046 = vmatpush2.bf16.msra.mxu0 %v817
  %1047 = vmatprep.subr.bf16.mxu0 0
  %1048 = vmatpush2.bf16.msra.mxu0 %v816
  %1049 = vmatprep.mubr.bf16.mxu0 %v411
  %1050 = vmatmul.mubr.bf16.gmra.mxu0 %v410
  %v1051 = vpop.f32.mrf.mxu0
  %v1052 = vadd.f32 %v955, %v1051
  %v1053 = vpop.f32.mrf.mxu0
  %v1054 = vpop.f32.mrf.mxu0
  %v1055 = vadd.f32 %v958, %v1054
  %v1056 = vpop.f32.mrf.mxu0
  %1057 = vmatprep.mubr.bf16.mxu0 %v419
  %1058 = vmatmul.mubr.bf16.gmra.mxu0 %v418
  %v1059 = vpop.f32.mrf.mxu0
  %v1060 = vadd.f32 %v963, %v1059
  %v1061 = vpop.f32.mrf.mxu0
  %v1062 = vpop.f32.mrf.mxu0
  %v1063 = vadd.f32 %v966, %v1062
  %v1064 = vpop.f32.mrf.mxu0
  %1065 = vmatprep.mubr.bf16.mxu0 %v427
  %1066 = vmatmul.mubr.bf16.gmra.mxu0 %v426
  %v1067 = vpop.f32.mrf.mxu0
  %v1068 = vadd.f32 %v971, %v1067
  %v1069 = vpop.f32.mrf.mxu0
  %v1070 = vpop.f32.mrf.mxu0
  %v1071 = vadd.f32 %v974, %v1070
  %v1072 = vpop.f32.mrf.mxu0
  %1073 = vmatprep.mubr.bf16.mxu0 %v435
  %1074 = vmatmul.mubr.bf16.gmra.mxu0 %v434
  %v1075 = vpop.f32.mrf.mxu0
  %v1076 = vadd.f32 %v979, %v1075
  %v1077 = vpop.f32.mrf.mxu0
  %v1078 = vpop.f32.mrf.mxu0
  %v1079 = vadd.f32 %v982, %v1078
  %v1080 = vpop.f32.mrf.mxu0
  %1081 = vmatprep.mubr.bf16.mxu0 %v443
  %1082 = vmatmul.mubr.bf16.gmra.mxu0 %v442
  %v1083 = vpop.f32.mrf.mxu0
  %v1084 = vadd.f32 %v987, %v1083
  %v1085 = vpop.f32.mrf.mxu0
  %v1086 = vpop.f32.mrf.mxu0
  %v1087 = vadd.f32 %v990, %v1086
  %v1088 = vpop.f32.mrf.mxu0
  %1089 = vmatprep.mubr.bf16.mxu0 %v451
  %1090 = vmatmul.mubr.bf16.gmra.mxu0 %v450
  %v1091 = vpop.f32.mrf.mxu0
  %v1092 = vadd.f32 %v995, %v1091
  %v1093 = vpop.f32.mrf.mxu0
  %v1094 = vpop.f32.mrf.mxu0
  %v1095 = vadd.f32 %v998, %v1094
  %v1096 = vpop.f32.mrf.mxu0
  %1097 = vmatprep.mubr.bf16.mxu0 %v459
  %1098 = vmatmul.mubr.bf16.gmra.mxu0 %v458
  %v1099 = vpop.f32.mrf.mxu0
  %v1100 = vadd.f32 %v1003, %v1099
  %v1101 = vpop.f32.mrf.mxu0
  %v1102 = vpop.f32.mrf.mxu0
  %v1103 = vadd.f32 %v1006, %v1102
  %v1104 = vpop.f32.mrf.mxu0
  %1105 = vmatprep.mubr.bf16.mxu0 %v467
  %1106 = vmatmul.mubr.bf16.gmra.mxu0 %v466
  %v1107 = vpop.f32.mrf.mxu0
  %v1108 = vadd.f32 %v1011, %v1107
  %v1109 = vpop.f32.mrf.mxu0
  %v1110 = vpop.f32.mrf.mxu0
  %v1111 = vadd.f32 %v1014, %v1110
  %v1112 = vpop.f32.mrf.mxu0
  %1113 = vdwg.mxu0
  %1114 = vmatprep.subr.bf16.mxu0 0
  %1115 = vmatpush1.bf16.msra.mxu0 %v831
  %1116 = vmatprep.subr.bf16.mxu0 0
  %1117 = vmatpush1.bf16.msra.mxu0 %v830
  %1118 = vmatprep.subr.bf16.mxu0 0
  %1119 = vmatpush1.bf16.msra.mxu0 %v829
  %1120 = vmatprep.subr.bf16.mxu0 0
  %1121 = vmatpush1.bf16.msra.mxu0 %v828
  %1122 = vmatprep.subr.bf16.mxu0 0
  %1123 = vmatpush1.bf16.msra.mxu0 %v827
  %1124 = vmatprep.subr.bf16.mxu0 0
  %1125 = vmatpush1.bf16.msra.mxu0 %v826
  %1126 = vmatprep.subr.bf16.mxu0 0
  %1127 = vmatpush1.bf16.msra.mxu0 %v825
  %1128 = vmatprep.subr.bf16.mxu0 0
  %1129 = vmatpush1.bf16.msra.mxu0 %v824
  %1130 = vmatprep.subr.bf16.mxu0 0
  %1131 = vmatpush2.bf16.msra.mxu0 %v839
  %1132 = vmatprep.subr.bf16.mxu0 0
  %1133 = vmatpush2.bf16.msra.mxu0 %v838
  %1134 = vmatprep.subr.bf16.mxu0 0
  %1135 = vmatpush2.bf16.msra.mxu0 %v837
  %1136 = vmatprep.subr.bf16.mxu0 0
  %1137 = vmatpush2.bf16.msra.mxu0 %v836
  %1138 = vmatprep.subr.bf16.mxu0 0
  %1139 = vmatpush2.bf16.msra.mxu0 %v835
  %1140 = vmatprep.subr.bf16.mxu0 0
  %1141 = vmatpush2.bf16.msra.mxu0 %v834
  %1142 = vmatprep.subr.bf16.mxu0 0
  %1143 = vmatpush2.bf16.msra.mxu0 %v833
  %1144 = vmatprep.subr.bf16.mxu0 0
  %1145 = vmatpush2.bf16.msra.mxu0 %v832
  %1146 = vmatprep.mubr.bf16.mxu0 %v413
  %1147 = vmatmul.mubr.bf16.gmra.mxu0 %v412
  %v1148 = vpop.f32.mrf.mxu0
  %v1149 = vadd.f32 %v1052, %v1148
  %v1150 = vpop.f32.mrf.mxu0
  %v1151 = vpop.f32.mrf.mxu0
  %v1152 = vadd.f32 %v1055, %v1151
  %v1153 = vpop.f32.mrf.mxu0
  %1154 = vmatprep.mubr.bf16.mxu0 %v421
  %1155 = vmatmul.mubr.bf16.gmra.mxu0 %v420
  %v1156 = vpop.f32.mrf.mxu0
  %v1157 = vadd.f32 %v1060, %v1156
  %v1158 = vpop.f32.mrf.mxu0
  %v1159 = vpop.f32.mrf.mxu0
  %v1160 = vadd.f32 %v1063, %v1159
  %v1161 = vpop.f32.mrf.mxu0
  %1162 = vmatprep.mubr.bf16.mxu0 %v429
  %1163 = vmatmul.mubr.bf16.gmra.mxu0 %v428
  %v1164 = vpop.f32.mrf.mxu0
  %v1165 = vadd.f32 %v1068, %v1164
  %v1166 = vpop.f32.mrf.mxu0
  %v1167 = vpop.f32.mrf.mxu0
  %v1168 = vadd.f32 %v1071, %v1167
  %v1169 = vpop.f32.mrf.mxu0
  %1170 = vmatprep.mubr.bf16.mxu0 %v437
  %1171 = vmatmul.mubr.bf16.gmra.mxu0 %v436
  %v1172 = vpop.f32.mrf.mxu0
  %v1173 = vadd.f32 %v1076, %v1172
  %v1174 = vpop.f32.mrf.mxu0
  %v1175 = vpop.f32.mrf.mxu0
  %v1176 = vadd.f32 %v1079, %v1175
  %v1177 = vpop.f32.mrf.mxu0
  %1178 = vmatprep.mubr.bf16.mxu0 %v445
  %1179 = vmatmul.mubr.bf16.gmra.mxu0 %v444
  %v1180 = vpop.f32.mrf.mxu0
  %v1181 = vadd.f32 %v1084, %v1180
  %v1182 = vpop.f32.mrf.mxu0
  %v1183 = vpop.f32.mrf.mxu0
  %v1184 = vadd.f32 %v1087, %v1183
  %v1185 = vpop.f32.mrf.mxu0
  %1186 = vmatprep.mubr.bf16.mxu0 %v453
  %1187 = vmatmul.mubr.bf16.gmra.mxu0 %v452
  %v1188 = vpop.f32.mrf.mxu0
  %v1189 = vadd.f32 %v1092, %v1188
  %v1190 = vpop.f32.mrf.mxu0
  %v1191 = vpop.f32.mrf.mxu0
  %v1192 = vadd.f32 %v1095, %v1191
  %v1193 = vpop.f32.mrf.mxu0
  %1194 = vmatprep.mubr.bf16.mxu0 %v461
  %1195 = vmatmul.mubr.bf16.gmra.mxu0 %v460
  %v1196 = vpop.f32.mrf.mxu0
  %v1197 = vadd.f32 %v1100, %v1196
  %v1198 = vpop.f32.mrf.mxu0
  %v1199 = vpop.f32.mrf.mxu0
  %v1200 = vadd.f32 %v1103, %v1199
  %v1201 = vpop.f32.mrf.mxu0
  %1202 = vmatprep.mubr.bf16.mxu0 %v469
  %1203 = vmatmul.mubr.bf16.gmra.mxu0 %v468
  %v1204 = vpop.f32.mrf.mxu0
  %v1205 = vadd.f32 %v1108, %v1204
  %v1206 = vpop.f32.mrf.mxu0
  %v1207 = vpop.f32.mrf.mxu0
  %v1208 = vadd.f32 %v1111, %v1207
  %v1209 = vpop.f32.mrf.mxu0
  %1210 = vdwg.mxu0
  %1211 = vmatprep.subr.bf16.mxu0 0
  %1212 = vmatpush1.bf16.msra.mxu0 %v847
  %1213 = vmatprep.subr.bf16.mxu0 0
  %1214 = vmatpush1.bf16.msra.mxu0 %v846
  %1215 = vmatprep.subr.bf16.mxu0 0
  %1216 = vmatpush1.bf16.msra.mxu0 %v845
  %1217 = vmatprep.subr.bf16.mxu0 0
  %1218 = vmatpush1.bf16.msra.mxu0 %v844
  %1219 = vmatprep.subr.bf16.mxu0 0
  %1220 = vmatpush1.bf16.msra.mxu0 %v843
  %1221 = vmatprep.subr.bf16.mxu0 0
  %1222 = vmatpush1.bf16.msra.mxu0 %v842
  %1223 = vmatprep.subr.bf16.mxu0 0
  %1224 = vmatpush1.bf16.msra.mxu0 %v841
  %1225 = vmatprep.subr.bf16.mxu0 0
  %1226 = vmatpush1.bf16.msra.mxu0 %v840
  %1227 = vmatprep.subr.bf16.mxu0 0
  %1228 = vmatpush2.bf16.msra.mxu0 %v855
  %1229 = vmatprep.subr.bf16.mxu0 0
  %1230 = vmatpush2.bf16.msra.mxu0 %v854
  %1231 = vmatprep.subr.bf16.mxu0 0
  %1232 = vmatpush2.bf16.msra.mxu0 %v853
  %1233 = vmatprep.subr.bf16.mxu0 0
  %1234 = vmatpush2.bf16.msra.mxu0 %v852
  %1235 = vmatprep.subr.bf16.mxu0 0
  %1236 = vmatpush2.bf16.msra.mxu0 %v851
  %1237 = vmatprep.subr.bf16.mxu0 0
  %1238 = vmatpush2.bf16.msra.mxu0 %v850
  %1239 = vmatprep.subr.bf16.mxu0 0
  %1240 = vmatpush2.bf16.msra.mxu0 %v849
  %1241 = vmatprep.subr.bf16.mxu0 0
  %1242 = vmatpush2.bf16.msra.mxu0 %v848
  %1243 = vmatprep.mubr.bf16.mxu0 %v415
  %1244 = vmatmul.mubr.bf16.gmra.mxu0 %v414
  %v1245 = vpop.f32.mrf.mxu0
  %v1246 = vadd.f32 %v1149, %v1245
  %v1247 = vpop.f32.mrf.mxu0
  %v1248 = vpop.f32.mrf.mxu0
  %v1249 = vadd.f32 %v1152, %v1248
  %v1250 = vpop.f32.mrf.mxu0
  %1251 = vmatprep.mubr.bf16.mxu0 %v423
  %1252 = vmatmul.mubr.bf16.gmra.mxu0 %v422
  %v1253 = vpop.f32.mrf.mxu0
  %v1254 = vadd.f32 %v1157, %v1253
  %v1255 = vpop.f32.mrf.mxu0
  %v1256 = vpop.f32.mrf.mxu0
  %v1257 = vadd.f32 %v1160, %v1256
  %v1258 = vpop.f32.mrf.mxu0
  %1259 = vmatprep.mubr.bf16.mxu0 %v431
  %1260 = vmatmul.mubr.bf16.gmra.mxu0 %v430
  %v1261 = vpop.f32.mrf.mxu0
  %v1262 = vadd.f32 %v1165, %v1261
  %v1263 = vpop.f32.mrf.mxu0
  %v1264 = vpop.f32.mrf.mxu0
  %v1265 = vadd.f32 %v1168, %v1264
  %v1266 = vpop.f32.mrf.mxu0
  %1267 = vmatprep.mubr.bf16.mxu0 %v439
  %1268 = vmatmul.mubr.bf16.gmra.mxu0 %v438
  %v1269 = vpop.f32.mrf.mxu0
  %v1270 = vadd.f32 %v1173, %v1269
  %v1271 = vpop.f32.mrf.mxu0
  %v1272 = vpop.f32.mrf.mxu0
  %v1273 = vadd.f32 %v1176, %v1272
  %v1274 = vpop.f32.mrf.mxu0
  %1275 = vmatprep.mubr.bf16.mxu0 %v447
  %1276 = vmatmul.mubr.bf16.gmra.mxu0 %v446
  %v1277 = vpop.f32.mrf.mxu0
  %v1278 = vadd.f32 %v1181, %v1277
  %v1279 = vpop.f32.mrf.mxu0
  %v1280 = vpop.f32.mrf.mxu0
  %v1281 = vadd.f32 %v1184, %v1280
  %v1282 = vpop.f32.mrf.mxu0
  %1283 = vmatprep.mubr.bf16.mxu0 %v455
  %1284 = vmatmul.mubr.bf16.gmra.mxu0 %v454
  %v1285 = vpop.f32.mrf.mxu0
  %v1286 = vadd.f32 %v1189, %v1285
  %v1287 = vpop.f32.mrf.mxu0
  %v1288 = vpop.f32.mrf.mxu0
  %v1289 = vadd.f32 %v1192, %v1288
  %v1290 = vpop.f32.mrf.mxu0
  %1291 = vmatprep.mubr.bf16.mxu0 %v463
  %1292 = vmatmul.mubr.bf16.gmra.mxu0 %v462
  %v1293 = vpop.f32.mrf.mxu0
  %v1294 = vadd.f32 %v1197, %v1293
  %v1295 = vpop.f32.mrf.mxu0
  %v1296 = vpop.f32.mrf.mxu0
  %v1297 = vadd.f32 %v1200, %v1296
  %v1298 = vpop.f32.mrf.mxu0
  %1299 = vmatprep.mubr.bf16.mxu0 %v471
  %1300 = vmatmul.mubr.bf16.gmra.mxu0 %v470
  %v1301 = vpop.f32.mrf.mxu0
  %v1302 = vadd.f32 %v1205, %v1301
  %v1303 = vpop.f32.mrf.mxu0
  %v1304 = vpop.f32.mrf.mxu0
  %v1305 = vadd.f32 %v1208, %v1304
  %v1306 = vpop.f32.mrf.mxu0
  %1307 = vdwg.mxu0
  %v1308 = vld [vmem:[#allocation3] sm:$0x1]
  %v1309 = vadd.f32 %v1246, %v1249
  %v1310 = vadd.f32 %v1309, %v1254
  %v1311 = vadd.f32 %v1310, %v1257
  %v1312 = vadd.f32 %v1311, %v1262
  %v1313 = vadd.f32 %v1312, %v1265
  %v1314 = vadd.f32 %v1313, %v1270
  %v1315 = vadd.f32 %v1314, %v1273
  %v1316 = vadd.f32 %v1315, %v1278
  %v1317 = vadd.f32 %v1316, %v1281
  %v1318 = vadd.f32 %v1317, %v1286
  %v1319 = vadd.f32 %v1318, %v1289
  %v1320 = vadd.f32 %v1319, %v1294
  %v1321 = vadd.f32 %v1320, %v1297
  %v1322 = vadd.f32 %v1321, %v1302
  %v1323 = vadd.f32 %v1322, %v1305
  %v1324 = vrot.slane %v1323, 4
  %v1325 = vadd.f32 %v1323, %v1324
  %v1326 = vrot.slane %v1325, 2
  %v1327 = vadd.f32 %v1325, %v1326
  %v1328 = vrot.slane %v1327, 1
  %v1329 = vadd.f32 %v1327, %v1328
  %v1330 = vadd.f32 %v1308, %v1329
  %1331 = vst [vmem:[#allocation3] sm:$0x1] %v1330
  %v1332 = vld [vmem:[#allocation4] sm:$0x1]
  %v1333 = vmul.f32 %v1246, %v1246
  %v1334 = vmul.f32 %v1249, %v1249
  %v1335 = vmul.f32 %v1254, %v1254
  %v1336 = vmul.f32 %v1257, %v1257
  %v1337 = vmul.f32 %v1262, %v1262
  %v1338 = vmul.f32 %v1265, %v1265
  %v1339 = vmul.f32 %v1270, %v1270
  %v1340 = vmul.f32 %v1273, %v1273
  %v1341 = vmul.f32 %v1278, %v1278
  %v1342 = vmul.f32 %v1281, %v1281
  %v1343 = vmul.f32 %v1286, %v1286
  %v1344 = vmul.f32 %v1289, %v1289
  %v1345 = vmul.f32 %v1294, %v1294
  %v1346 = vmul.f32 %v1297, %v1297
  %v1347 = vmul.f32 %v1302, %v1302
  %v1348 = vmul.f32 %v1305, %v1305
  %v1349 = vadd.f32 %v1333, %v1334
  %v1350 = vadd.f32 %v1349, %v1335
  %v1351 = vadd.f32 %v1350, %v1336
  %v1352 = vadd.f32 %v1351, %v1337
  %v1353 = vadd.f32 %v1352, %v1338
  %v1354 = vadd.f32 %v1353, %v1339
  %v1355 = vadd.f32 %v1354, %v1340
  %v1356 = vadd.f32 %v1355, %v1341
  %v1357 = vadd.f32 %v1356, %v1342
  %v1358 = vadd.f32 %v1357, %v1343
  %v1359 = vadd.f32 %v1358, %v1344
  %v1360 = vadd.f32 %v1359, %v1345
  %v1361 = vadd.f32 %v1360, %v1346
  %v1362 = vadd.f32 %v1361, %v1347
  %v1363 = vadd.f32 %v1362, %v1348
  %v1364 = vrot.slane %v1363, 4
  %v1365 = vadd.f32 %v1363, %v1364
  %v1366 = vrot.slane %v1365, 2
  %v1367 = vadd.f32 %v1365, %v1366
  %v1368 = vrot.slane %v1367, 1
  %v1369 = vadd.f32 %v1367, %v1368
  %v1370 = vadd.f32 %v1332, %v1369
  %1371 = vst [vmem:[#allocation4] sm:$0x1] %v1370
  %s1372 = smul.u32 0, 128
  %s1373 = scalar_lea.vmem [#allocation2], %s1372
  %1374 = vst [vmem:[%s1373] sm:$0xff] %v1246
  %1375 = vst [vmem:[%s1373 + $0x8] sm:$0xff] %v1249
  %1376 = vst [vmem:[%s1373 + $0x10] sm:$0xff] %v1254
  %1377 = vst [vmem:[%s1373 + $0x18] sm:$0xff] %v1257
  %1378 = vst [vmem:[%s1373 + $0x20] sm:$0xff] %v1262
  %1379 = vst [vmem:[%s1373 + $0x28] sm:$0xff] %v1265
  %1380 = vst [vmem:[%s1373 + $0x30] sm:$0xff] %v1270
  %1381 = vst [vmem:[%s1373 + $0x38] sm:$0xff] %v1273
  %1382 = vst [vmem:[%s1373 + $0x40] sm:$0xff] %v1278
  %1383 = vst [vmem:[%s1373 + $0x48] sm:$0xff] %v1281
  %1384 = vst [vmem:[%s1373 + $0x50] sm:$0xff] %v1286
  %1385 = vst [vmem:[%s1373 + $0x58] sm:$0xff] %v1289
  %1386 = vst [vmem:[%s1373 + $0x60] sm:$0xff] %v1294
  %1387 = vst [vmem:[%s1373 + $0x68] sm:$0xff] %v1297
  %1388 = vst [vmem:[%s1373 + $0x70] sm:$0xff] %v1302
  %1389 = vst [vmem:[%s1373 + $0x78] sm:$0xff] %v1305
  // Predicated region
  $region22: #{encoder_forward.6} parent=0 // pred_check
    %p1390 = pneg %p18
  $region23: #{encoder_forward.6} parent=0 // pred_check_branch
    %1392 = sbr.rel (%p1390) target = $region25
  $region24: #{encoder_forward.6} parent=0 // pred_region
    %v1393 = vld [vmem:[#allocation3] sm:$0x1]
    %v1394 = vld [vmem:[#allocation4] sm:$0x1]
    %1395 = vrot.lane.b32.xlu0 %v1393, 32
    %v1396 = vpop.permute.xlu0 %1395
    %v1397 = vadd.f32 %v1393, %v1396
    %1398 = vrot.lane.b32.xlu0 %v1394, 32
    %v1399 = vpop.permute.xlu0 %1398
    %v1400 = vadd.f32 %v1394, %v1399
    %1401 = vrot.lane.b32.xlu0 %v1393, 64
    %v1402 = vpop.permute.xlu0 %1401
    %v1403 = vadd.f32 %v1397, %v1402
    %1404 = vrot.lane.b32.xlu0 %v1394, 64
    %v1405 = vpop.permute.xlu0 %1404
    %v1406 = vadd.f32 %v1400, %v1405
    %1407 = vrot.lane.b32.xlu0 %v1393, 96
    %v1408 = vpop.permute.xlu0 %1407
    %v1409 = vadd.f32 %v1403, %v1408
    %1410 = vrot.lane.b32.xlu0 %v1394, 96
    %v1411 = vpop.permute.xlu0 %1410
    %v1412 = vadd.f32 %v1406, %v1411
    %v1413 = vrcp.pop 512.0
    %v1414 = vmul.f32 %v1409, %v1413
    %v1415 = vmul.f32 %v1412, %v1413
    %v1416 = vmul.f32 %v1414, %v1414
    %v1417 = vsub.f32 %v1415, %v1416
    %v1418 = vadd.f32 %v1417, 1e-05
    %v1419 = vrsqrt.pop %v1418
    %v1420 = vld [vmem:[%s2] sm:$0x1]
    %v1421 = vmul.f32 %v1419, %v1420
    %v1422 = vld [vmem:[%s3] sm:$0x1]
    %v1423 = vmul.f32 %v1414, %v1421
    %v1424 = vsub.f32 %v1422, %v1423
    %v1425 = vld [vmem:[#allocation2] sm:$0xff]
    %v1426 = vld [vmem:[#allocation2 + $0x8] sm:$0xff]
    %v1427 = vld [vmem:[#allocation2 + $0x10] sm:$0xff]
    %v1428 = vld [vmem:[#allocation2 + $0x18] sm:$0xff]
    %v1429 = vld [vmem:[#allocation2 + $0x20] sm:$0xff]
    %v1430 = vld [vmem:[#allocation2 + $0x28] sm:$0xff]
    %v1431 = vld [vmem:[#allocation2 + $0x30] sm:$0xff]
    %v1432 = vld [vmem:[#allocation2 + $0x38] sm:$0xff]
    %v1433 = vld [vmem:[#allocation2 + $0x40] sm:$0xff]
    %v1434 = vld [vmem:[#allocation2 + $0x48] sm:$0xff]
    %v1435 = vld [vmem:[#allocation2 + $0x50] sm:$0xff]
    %v1436 = vld [vmem:[#allocation2 + $0x58] sm:$0xff]
    %v1437 = vld [vmem:[#allocation2 + $0x60] sm:$0xff]
    %v1438 = vld [vmem:[#allocation2 + $0x68] sm:$0xff]
    %v1439 = vld [vmem:[#allocation2 + $0x70] sm:$0xff]
    %v1440 = vld [vmem:[#allocation2 + $0x78] sm:$0xff]
    %v1442 = vlaneseq
    %v1443 = vshrl.u32 %v1442, 7
    %v1444 = vsub.s32 0, %v1443
    %v1445 = vrot.slane %v1421, %v1444
    %v1447 = vmul.f32 %v1425, %v1445
    %v1448 = vmul.f32 %v1426, %v1445
    %v1449 = vmul.f32 %v1427, %v1445
    %v1450 = vmul.f32 %v1428, %v1445
    %v1451 = vmul.f32 %v1429, %v1445
    %v1452 = vmul.f32 %v1430, %v1445
    %v1453 = vmul.f32 %v1431, %v1445
    %v1454 = vmul.f32 %v1432, %v1445
    %v1455 = vmul.f32 %v1433, %v1445
    %v1456 = vmul.f32 %v1434, %v1445
    %v1457 = vmul.f32 %v1435, %v1445
    %v1458 = vmul.f32 %v1436, %v1445
    %v1459 = vmul.f32 %v1437, %v1445
    %v1460 = vmul.f32 %v1438, %v1445
    %v1461 = vmul.f32 %v1439, %v1445
    %v1462 = vmul.f32 %v1440, %v1445
    %v1464 = vlaneseq
    %v1465 = vshrl.u32 %v1464, 7
    %v1466 = vsub.s32 0, %v1465
    %v1467 = vrot.slane %v1424, %v1466
    %v1469 = vadd.f32 %v1447, %v1467
    %v1470 = vadd.f32 %v1448, %v1467
    %v1471 = vadd.f32 %v1449, %v1467
    %v1472 = vadd.f32 %v1450, %v1467
    %v1473 = vadd.f32 %v1451, %v1467
    %v1474 = vadd.f32 %v1452, %v1467
    %v1475 = vadd.f32 %v1453, %v1467
    %v1476 = vadd.f32 %v1454, %v1467
    %v1477 = vadd.f32 %v1455, %v1467
    %v1478 = vadd.f32 %v1456, %v1467
    %v1479 = vadd.f32 %v1457, %v1467
    %v1480 = vadd.f32 %v1458, %v1467
    %v1481 = vadd.f32 %v1459, %v1467
    %v1482 = vadd.f32 %v1460, %v1467
    %v1483 = vadd.f32 %v1461, %v1467
    %v1484 = vadd.f32 %v1462, %v1467
    %vm1485 = vcmp.gt.f32.partialorder %v1469, 0.0
    %vm1486 = vcmp.gt.f32.partialorder %v1470, 0.0
    %vm1487 = vcmp.gt.f32.partialorder %v1471, 0.0
    %vm1488 = vcmp.gt.f32.partialorder %v1472, 0.0
    %vm1489 = vcmp.gt.f32.partialorder %v1473, 0.0
    %vm1490 = vcmp.gt.f32.partialorder %v1474, 0.0
    %vm1491 = vcmp.gt.f32.partialorder %v1475, 0.0
    %vm1492 = vcmp.gt.f32.partialorder %v1476, 0.0
    %vm1493 = vcmp.gt.f32.partialorder %v1477, 0.0
    %vm1494 = vcmp.gt.f32.partialorder %v1478, 0.0
    %vm1495 = vcmp.gt.f32.partialorder %v1479, 0.0
    %vm1496 = vcmp.gt.f32.partialorder %v1480, 0.0
    %vm1497 = vcmp.gt.f32.partialorder %v1481, 0.0
    %vm1498 = vcmp.gt.f32.partialorder %v1482, 0.0
    %vm1499 = vcmp.gt.f32.partialorder %v1483, 0.0
    %vm1500 = vcmp.gt.f32.partialorder %v1484, 0.0
    %v1501 = vmul.f32 %v1469, 0.2
    %v1502 = vmul.f32 %v1470, 0.2
    %v1503 = vmul.f32 %v1471, 0.2
    %v1504 = vmul.f32 %v1472, 0.2
    %v1505 = vmul.f32 %v1473, 0.2
    %v1506 = vmul.f32 %v1474, 0.2
    %v1507 = vmul.f32 %v1475, 0.2
    %v1508 = vmul.f32 %v1476, 0.2
    %v1509 = vmul.f32 %v1477, 0.2
    %v1510 = vmul.f32 %v1478, 0.2
    %v1511 = vmul.f32 %v1479, 0.2
    %v1512 = vmul.f32 %v1480, 0.2
    %v1513 = vmul.f32 %v1481, 0.2
    %v1514 = vmul.f32 %v1482, 0.2
    %v1515 = vmul.f32 %v1483, 0.2
    %v1516 = vmul.f32 %v1484, 0.2
    %v1517 = vsel %vm1485, %v1469, %v1501
    %v1518 = vsel %vm1486, %v1470, %v1502
    %v1519 = vsel %vm1487, %v1471, %v1503
    %v1520 = vsel %vm1488, %v1472, %v1504
    %v1521 = vsel %vm1489, %v1473, %v1505
    %v1522 = vsel %vm1490, %v1474, %v1506
    %v1523 = vsel %vm1491, %v1475, %v1507
    %v1524 = vsel %vm1492, %v1476, %v1508
    %v1525 = vsel %vm1493, %v1477, %v1509
    %v1526 = vsel %vm1494, %v1478, %v1510
    %v1527 = vsel %vm1495, %v1479, %v1511
    %v1528 = vsel %vm1496, %v1480, %v1512
    %v1529 = vsel %vm1497, %v1481, %v1513
    %v1530 = vsel %vm1498, %v1482, %v1514
    %v1531 = vsel %vm1499, %v1483, %v1515
    %v1532 = vsel %vm1500, %v1484, %v1516
    %v1533 = vpack.c.bf16 %v1518, %v1517
    %v1534 = vpack.c.bf16 %v1520, %v1519
    %v1535 = vpack.c.bf16 %v1522, %v1521
    %v1536 = vpack.c.bf16 %v1524, %v1523
    %v1537 = vpack.c.bf16 %v1526, %v1525
    %v1538 = vpack.c.bf16 %v1528, %v1527
    %v1539 = vpack.c.bf16 %v1530, %v1529
    %v1540 = vpack.c.bf16 %v1532, %v1531
    %v1549 = vunpack.c.l.b16 %v1533
    %v1550 = vunpack.c.h.b16 %v1533
    %v1551 = vunpack.c.l.b16 %v1534
    %v1552 = vunpack.c.h.b16 %v1534
    %v1553 = vunpack.c.l.b16 %v1535
    %v1554 = vunpack.c.h.b16 %v1535
    %v1555 = vunpack.c.l.b16 %v1536
    %v1556 = vunpack.c.h.b16 %v1536
    %v1557 = vunpack.c.l.b16 %v1537
    %v1558 = vunpack.c.h.b16 %v1537
    %v1559 = vunpack.c.l.b16 %v1538
    %v1560 = vunpack.c.h.b16 %v1538
    %v1561 = vunpack.c.l.b16 %v1539
    %v1562 = vunpack.c.h.b16 %v1539
    %v1563 = vunpack.c.l.b16 %v1540
    %v1564 = vunpack.c.h.b16 %v1540
    %v1565 = vpack.c.b16 %v1549, %v1549
    %v1566 = vpack.c.b16 %v1550, %v1550
    %v1567 = vpack.c.b16 %v1551, %v1551
    %v1568 = vpack.c.b16 %v1552, %v1552
    %v1569 = vpack.c.b16 %v1553, %v1553
    %v1570 = vpack.c.b16 %v1554, %v1554
    %v1571 = vpack.c.b16 %v1555, %v1555
    %v1572 = vpack.c.b16 %v1556, %v1556
    %v1573 = vpack.c.b16 %v1557, %v1557
    %v1574 = vpack.c.b16 %v1558, %v1558
    %v1575 = vpack.c.b16 %v1559, %v1559
    %v1576 = vpack.c.b16 %v1560, %v1560
    %v1577 = vpack.c.b16 %v1561, %v1561
    %v1578 = vpack.c.b16 %v1562, %v1562
    %v1579 = vpack.c.b16 %v1563, %v1563
    %v1580 = vpack.c.b16 %v1564, %v1564
    %1597 = vst [vmem:[%s4] sm:$0xf] %v1565
    %1598 = vst [vmem:[%s4 + $0x4] sm:$0xf] %v1566
    %1599 = vst [vmem:[%s4 + $0x8] sm:$0xf] %v1567
    %1600 = vst [vmem:[%s4 + $0xc] sm:$0xf] %v1568
    %1601 = vst [vmem:[%s4 + $0x10] sm:$0xf] %v1569
    %1602 = vst [vmem:[%s4 + $0x14] sm:$0xf] %v1570
    %1603 = vst [vmem:[%s4 + $0x18] sm:$0xf] %v1571
    %1604 = vst [vmem:[%s4 + $0x1c] sm:$0xf] %v1572
    %1605 = vst [vmem:[%s4 + $0x20] sm:$0xf] %v1573
    %1606 = vst [vmem:[%s4 + $0x24] sm:$0xf] %v1574
    %1607 = vst [vmem:[%s4 + $0x28] sm:$0xf] %v1575
    %1608 = vst [vmem:[%s4 + $0x2c] sm:$0xf] %v1576
    %1609 = vst [vmem:[%s4 + $0x30] sm:$0xf] %v1577
    %1610 = vst [vmem:[%s4 + $0x34] sm:$0xf] %v1578
    %1611 = vst [vmem:[%s4 + $0x38] sm:$0xf] %v1579
    %1612 = vst [vmem:[%s4 + $0x3c] sm:$0xf] %v1580
  $region25: #{encoder_forward.6} parent=0 // pred_fallthru
    _
  // Predicated region
  $region26: #{encoder_forward.6} parent=0 // pred_check
    _
  $region27: #{encoder_forward.6} parent=0 // pred_check_branch
    %1614 = sbr.rel (0) target = $region29
  $region28: #{encoder_forward.6} parent=0 // pred_region
    _
  $region29: #{encoder_forward.6} parent=0 // pred_fallthru
    _
  // Predicated region
  $region30: #{encoder_forward.6} parent=0 // pred_check
    _
  $region31: #{encoder_forward.6} parent=0 // pred_check_branch
    %1616 = sbr.rel (0) target = $region33
  $region32: #{encoder_forward.6} parent=0 // pred_region
    _
  $region33: #{encoder_forward.6} parent=0 // pred_fallthru
    _

// kernel: encoder_forward.7
$region0: #{encoder_forward.7}
  #allocation0 [shape = 'u32[]', space=smem, size = 0x4, offset = 0x4, fixed_abs, tag = 'smem constant byte address 0x4 - core index']
  #allocation1 [shape = 'u32[144,128]{1,0:T(1,128)}', space=vmem, size = 0x12000, scoped, tag = 'internal scratch']
  #allocation2 [shape = 'f32[2,64]{1,0:T(2,128)}', space=vmem, size = 0x400, scoped, tag = 'scratch operand']
  %s0 = inlined_call_operand.vmem [shape: bf16[2,8192], index: 0, kind: input, shape index: {}]
  %s1 = inlined_call_operand.vmem [shape: bf16[8192,64], index: 1, kind: input, shape index: {}]
  %s2 = inlined_call_operand.vmem [shape: f32[1,64], index: 2, kind: input, shape index: {}]
  %s3 = inlined_call_operand.vmem [shape: f32[1,64], index: 3, kind: input, shape index: {}]
  %s4 = inlined_call_operand.vmem [shape: f32[64,8], index: 4, kind: input, shape index: {}]
  %s5 = inlined_call_operand.vmem [shape: f32[1,8], index: 5, kind: input, shape index: {}]
  %s6 = inlined_call_operand.hbm [shape: f32[2,8], index: 6, kind: output, shape index: {}]
  %s7 = sld [smem:[#allocation0]]
  $region65: #{encoder_forward.7} parent=0
    _
  %s9 = ssub.s32 1, %s7
  %s10 = scalar_select 0, %s9, %s7
  $region1: #{encoder_forward.7} parent=0
    #allocation3 [shape = 'u8[1024]{0}', space=vmem, size = 0x400, scoped, tag = 'output window, operand 0, single buffered']
    #allocation4 [shape = 's32[2]{0}', space=sflag, size = 0x8, scoped, tag = 'scoped memory for encoder_forward.7']
    %11 = vsyncpa [#allocation4], 0
    loop: start=0, step=1, limit=6
    $region2: #{encoder_forward.7} parent=1 // loop_pre_header
      _
    $region3: #{encoder_forward.7} parent=1 // loop_header
      %s13 = sphi 0, %s17
      %p14 = scmp.ge.s32.totalorder %s13, 6
      %s23 = sphi 0, %s25
      %s26 = sphi 0, %s23
      %s27 = sphi 0, %s26
      %s43 = sphi 0, %s27
      %s49 = sphi 0, %s51
      %s52 = sphi 0, %s49
      %s53 = sphi 0, %s52
      %s69 = sphi 0, %s53
      %s73 = sphi 0, %s73
      %s75 = sphi 0, %s73
      %s76 = sphi 0, %s75
      %s90 = sphi 0, %s76
      %s94 = sphi 0, %s94
      %s96 = sphi 0, %s94
      %s97 = sphi 0, %s96
      %s111 = sphi 0, %s97
      %s115 = sphi 0, %s115
      %s117 = sphi 0, %s115
      %s118 = sphi 0, %s117
      %s132 = sphi 0, %s118
      %s136 = sphi 0, %s136
      %s138 = sphi 0, %s136
      %s139 = sphi 0, %s138
      %s153 = sphi 0, %s139
      %s157 = sphi 0, %s157
      %s159 = sphi 0, %s157
      %s160 = sphi 0, %s159
      %s174 = sphi 0, %s160
    $region4: #{encoder_forward.7} parent=1 // loop_header_branch
      %16 = sbr.rel (%p14) target = $region8
    $region5: #{encoder_forward.7} parent=1 // loop_body
      %s18 = ssub.s32 %s13, 1
      %s19 = ssub.s32 %s13, 2
      %s20 = sadd.s32 %s13, 1
      %s21 = ssub.s32 %s13, %s20
      %p22 = scmp.eq.s32.totalorder %s21, 0
      %s24 = sadd.s32 %s23, 1
      %s25 = scalar_select %p22, %s23, %s24
      %p28 = pneg %p22
      %p29 = scmp.eq.s32.totalorder %s13, 3
      %p30 = por %p28, %p29
      %p31 = scmp.ne.s32.totalorder %s23, %s26
      %p32 = scmp.eq.s32.totalorder %s13, 0
      %p33 = por %p31, %p32
      %p34 = scmp.ne.s32.totalorder %s23, %s26
      %p35 = scmp.eq.s32.totalorder %s18, 3
      %p36 = por %p34, %p35
      %p37 = scmp.ne.s32.totalorder %s26, %s27
      %p38 = scmp.eq.s32.totalorder %s18, 0
      %p39 = por %p37, %p38
      %p40 = scmp.ne.s32.totalorder %s26, %s27
      %p41 = scmp.eq.s32.totalorder %s19, 3
      %p42 = por %p40, %p41
      %p44 = scmp.ne.s32.totalorder %s27, %s43
      %p45 = scmp.eq.s32.totalorder %s19, 0
      %p46 = por %p44, %p45
      %s47 = ssub.s32 %s13, %s20
      %p48 = scmp.eq.s32.totalorder %s47, 0
      %s50 = sadd.s32 %s49, 1
      %s51 = scalar_select %p48, %s49, %s50
      %p54 = pneg %p48
      %p55 = scmp.eq.s32.totalorder %s13, 3
      %p56 = por %p54, %p55
      %p57 = scmp.ne.s32.totalorder %s49, %s52
      %p58 = scmp.eq.s32.totalorder %s13, 0
      %p59 = por %p57, %p58
      %p60 = scmp.ne.s32.totalorder %s49, %s52
      %p61 = scmp.eq.s32.totalorder %s18, 3
      %p62 = por %p60, %p61
      %p63 = scmp.ne.s32.totalorder %s52, %s53
      %p64 = scmp.eq.s32.totalorder %s18, 0
      %p65 = por %p63, %p64
      %p66 = scmp.ne.s32.totalorder %s52, %s53
      %p67 = scmp.eq.s32.totalorder %s19, 3
      %p68 = por %p66, %p67
      %p70 = scmp.ne.s32.totalorder %s53, %s69
      %p71 = scmp.eq.s32.totalorder %s19, 0
      %p72 = por %p70, %p71
      %s74 = sadd.s32 %s73, 1
      %p77 = scmp.eq.s32.totalorder %s13, 3
      %p78 = scmp.ne.s32.totalorder %s73, %s75
      %p79 = scmp.eq.s32.totalorder %s13, 0
      %p80 = por %p78, %p79
      %p81 = scmp.ne.s32.totalorder %s73, %s75
      %p82 = scmp.eq.s32.totalorder %s18, 3
      %p83 = por %p81, %p82
      %p84 = scmp.ne.s32.totalorder %s75, %s76
      %p85 = scmp.eq.s32.totalorder %s18, 0
      %p86 = por %p84, %p85
      %p87 = scmp.ne.s32.totalorder %s75, %s76
      %p88 = scmp.eq.s32.totalorder %s19, 3
      %p89 = por %p87, %p88
      %p91 = scmp.ne.s32.totalorder %s76, %s90
      %p92 = scmp.eq.s32.totalorder %s19, 0
      %p93 = por %p91, %p92
      %s95 = sadd.s32 %s94, 1
      %p98 = scmp.eq.s32.totalorder %s13, 3
      %p99 = scmp.ne.s32.totalorder %s94, %s96
      %p100 = scmp.eq.s32.totalorder %s13, 0
      %p101 = por %p99, %p100
      %p102 = scmp.ne.s32.totalorder %s94, %s96
      %p103 = scmp.eq.s32.totalorder %s18, 3
      %p104 = por %p102, %p103
      %p105 = scmp.ne.s32.totalorder %s96, %s97
      %p106 = scmp.eq.s32.totalorder %s18, 0
      %p107 = por %p105, %p106
      %p108 = scmp.ne.s32.totalorder %s96, %s97
      %p109 = scmp.eq.s32.totalorder %s19, 3
      %p110 = por %p108, %p109
      %p112 = scmp.ne.s32.totalorder %s97, %s111
      %p113 = scmp.eq.s32.totalorder %s19, 0
      %p114 = por %p112, %p113
      %s116 = sadd.s32 %s115, 1
      %p119 = scmp.eq.s32.totalorder %s13, 3
      %p120 = scmp.ne.s32.totalorder %s115, %s117
      %p121 = scmp.eq.s32.totalorder %s13, 0
      %p122 = por %p120, %p121
      %p123 = scmp.ne.s32.totalorder %s115, %s117
      %p124 = scmp.eq.s32.totalorder %s18, 3
      %p125 = por %p123, %p124
      %p126 = scmp.ne.s32.totalorder %s117, %s118
      %p127 = scmp.eq.s32.totalorder %s18, 0
      %p128 = por %p126, %p127
      %p129 = scmp.ne.s32.totalorder %s117, %s118
      %p130 = scmp.eq.s32.totalorder %s19, 3
      %p131 = por %p129, %p130
      %p133 = scmp.ne.s32.totalorder %s118, %s132
      %p134 = scmp.eq.s32.totalorder %s19, 0
      %p135 = por %p133, %p134
      %s137 = sadd.s32 %s136, 1
      %p140 = scmp.eq.s32.totalorder %s13, 3
      %p141 = scmp.ne.s32.totalorder %s136, %s138
      %p142 = scmp.eq.s32.totalorder %s13, 0
      %p143 = por %p141, %p142
      %p144 = scmp.ne.s32.totalorder %s136, %s138
      %p145 = scmp.eq.s32.totalorder %s18, 3
      %p146 = por %p144, %p145
      %p147 = scmp.ne.s32.totalorder %s138, %s139
      %p148 = scmp.eq.s32.totalorder %s18, 0
      %p149 = por %p147, %p148
      %p150 = scmp.ne.s32.totalorder %s138, %s139
      %p151 = scmp.eq.s32.totalorder %s19, 3
      %p152 = por %p150, %p151
      %p154 = scmp.ne.s32.totalorder %s139, %s153
      %p155 = scmp.eq.s32.totalorder %s19, 0
      %p156 = por %p154, %p155
      %s158 = sadd.s32 %s157, 1
      %p161 = scmp.eq.s32.totalorder %s13, 3
      %p162 = scmp.ne.s32.totalorder %s157, %s159
      %p163 = scmp.eq.s32.totalorder %s13, 0
      %p164 = por %p162, %p163
      %p165 = scmp.ne.s32.totalorder %s157, %s159
      %p166 = scmp.eq.s32.totalorder %s18, 3
      %p167 = por %p165, %p166
      %p168 = scmp.ne.s32.totalorder %s159, %s160
      %p169 = scmp.eq.s32.totalorder %s18, 0
      %p170 = por %p168, %p169
      %p171 = scmp.ne.s32.totalorder %s159, %s160
      %p172 = scmp.eq.s32.totalorder %s19, 3
      %p173 = por %p171, %p172
      %p175 = scmp.ne.s32.totalorder %s160, %s174
      %p176 = scmp.eq.s32.totalorder %s19, 0
      %p177 = por %p175, %p176
      %p178 = scmp.le.s32.totalorder 1, %s13
      %p179 = scmp.lt.s32.totalorder %s13, 5
      %p180 = pnand %p178, %p179
      %p181 = pneg %p180
      // Predicated region
      $region9: #{encoder_forward.7} parent=5 // pred_check
        _
      $region10: #{encoder_forward.7} parent=5 // pred_check_branch
        %183 = sbr.rel (%p180) target = $region12
      $region11: #{encoder_forward.7} parent=5 // pred_region
        %s184 = ssub.s32 %s13, 1
        // Predicated region
        $region13: #{encoder_forward.7} parent=11 // pred_check
          %p185 = pneg %p86
        $region14: #{encoder_forward.7} parent=11 // pred_check_branch
          %187 = sbr.rel (%p185) target = $region16
        $region15: #{encoder_forward.7} parent=11 // pred_region
          _
        $region16: #{encoder_forward.7} parent=11 // pred_fallthru
          _
        // Predicated region
        $region17: #{encoder_forward.7} parent=11 // pred_check
          %p188 = pneg %p107
        $region18: #{encoder_forward.7} parent=11 // pred_check_branch
          %190 = sbr.rel (%p188) target = $region20
        $region19: #{encoder_forward.7} parent=11 // pred_region
          _
        $region20: #{encoder_forward.7} parent=11 // pred_fallthru
          _
        // Predicated region
        $region21: #{encoder_forward.7} parent=11 // pred_check
          %p191 = pneg %p128
        $region22: #{encoder_forward.7} parent=11 // pred_check_branch
          %193 = sbr.rel (%p191) target = $region24
        $region23: #{encoder_forward.7} parent=11 // pred_region
          _
        $region24: #{encoder_forward.7} parent=11 // pred_fallthru
          _
        // Predicated region
        $region25: #{encoder_forward.7} parent=11 // pred_check
          %p194 = pneg %p149
        $region26: #{encoder_forward.7} parent=11 // pred_check_branch
          %196 = sbr.rel (%p194) target = $region28
        $region27: #{encoder_forward.7} parent=11 // pred_region
          _
        $region28: #{encoder_forward.7} parent=11 // pred_fallthru
          _
      $region12: #{encoder_forward.7} parent=5 // pred_fallthru
        _
      %p197 = scmp.lt.s32.totalorder %s13, 4
      // Predicated region
      $region29: #{encoder_forward.7} parent=5 // pred_check
        %p198 = pneg %p197
      $region30: #{encoder_forward.7} parent=5 // pred_check_branch
        %200 = sbr.rel (%p198) target = $region32
      $region31: #{encoder_forward.7} parent=5 // pred_region
        // Predicated region
        $region33: #{encoder_forward.7} parent=31 // pred_check
          %p201 = pneg %p33
        $region34: #{encoder_forward.7} parent=31 // pred_check_branch
          %203 = sbr.rel (%p201) target = $region36
        $region35: #{encoder_forward.7} parent=31 // pred_region
          %s204 = smul.u32 16, %s13
          %p205 = scmp.lt.s32.totalorder %s204, 63
          %s206 = scalar_select %p205, %s204, 63
          %s207 = scalar_lea.vmem %s0, %s206
          %s208 = smul.u32 16, %s13
        $region36: #{encoder_forward.7} parent=31 // pred_fallthru
          _
        // Predicated region
        $region37: #{encoder_forward.7} parent=31 // pred_check
          %p209 = pneg %p59
        $region38: #{encoder_forward.7} parent=31 // pred_check_branch
          %211 = sbr.rel (%p209) target = $region40
        $region39: #{encoder_forward.7} parent=31 // pred_region
          %s212 = smul.u32 256, %s13
          %p213 = scmp.lt.s32.totalorder %s212, 1023
          %s214 = scalar_select %p213, %s212, 1023
          %s215 = smul.addr %s214, 4
          %s216 = scalar_lea.vmem %s1, %s215
          %s217 = smul.u32 256, %s13
        $region40: #{encoder_forward.7} parent=31 // pred_fallthru
          _
      $region32: #{encoder_forward.7} parent=5 // pred_fallthru
        _
      %p218 = scmp.le.s32.totalorder 1, %s13
      %p219 = scmp.lt.s32.totalorder %s13, 5
      %p220 = pnand %p218, %p219
      %p221 = pneg %p220
      // Predicated region
      $region41: #{encoder_forward.7} parent=5 // pred_check
        _
      $region42: #{encoder_forward.7} parent=5 // pred_check_branch
        %223 = sbr.rel (%p220) target = $region44
      $region43: #{encoder_forward.7} parent=5 // pred_region
        %s224 = ssub.s32 %s13, 1
        %s225 = smul.u32 16, %s18
        %p226 = scmp.lt.s32.totalorder %s225, 63
        %s227 = scalar_select %p226, %s225, 63
        %s228 = scalar_lea.vmem %s0, %s227
        %p229 = pneg %p39
        %p230 = pneg %p36
        %s231 = smul.u32 256, %s18
        %p232 = scmp.lt.s32.totalorder %s231, 1023
        %s233 = scalar_select %p232, %s231, 1023
        %s234 = smul.addr %s233, 4
        %s235 = scalar_lea.vmem %s1, %s234
        %p236 = pneg %p65
        %p237 = pneg %p62
        %p238 = pneg %p86
        %p239 = pneg %p83
        %p240 = pneg %p107
        %p241 = pneg %p104
        %p242 = pneg %p128
        %p243 = pneg %p125
        %p244 = pneg %p149
        %p245 = pneg %p146
        %p246 = pneg %p170
        %p247 = pneg %p167
        %s248 = smul.u32 16, %s18
        %p249 = scmp.lt.s32.totalorder %s248, 63
        %s250 = scalar_select %p249, %s248, 63
        %s251 = scalar_lea.vmem %s0, %s250
        %s252 = smul.u32 16, %s18
        %s253 = smul.u32 256, %s18
        %p254 = scmp.lt.s32.totalorder %s253, 1023
        %s255 = scalar_select %p254, %s253, 1023
        %s256 = smul.addr %s255, 4
        %s257 = scalar_lea.vmem %s1, %s256
        %s258 = smul.u32 256, %s18
        %p260 = scmp.eq.s32.totalorder %s18, 0
        // Predicated region
        $region45: #{encoder_forward.7} parent=43 // pred_check
          %p261 = pneg %p260
        $region46: #{encoder_forward.7} parent=43 // pred_check_branch
          %263 = sbr.rel (%p261) target = $region48
        $region47: #{encoder_forward.7} parent=43 // pred_region
          %vm264 = vcmask 517120
          %265 = vst.msk [vmem:[#allocation2] sm:$0x3] %vm264, 0.0
        $region48: #{encoder_forward.7} parent=43 // pred_fallthru
          _
        %v266 = vld [vmem:[#allocation2] sm:$0x3]
        %v267 = vld [vmem:[%s251] sm:$0xff]
        %v268 = vld [vmem:[%s251 + $0x8] sm:$0xff]
        %v269 = vld [vmem:[%s257] sm:$0xf]
        %v270 = vld [vmem:[%s257 + $0x4] sm:$0xf]
        %v271 = vld [vmem:[%s257 + $0x8] sm:$0xf]
        %v272 = vld [vmem:[%s257 + $0xc] sm:$0xf]
        %v273 = vld [vmem:[%s257 + $0x10] sm:$0xf]
        %v274 = vld [vmem:[%s257 + $0x14] sm:$0xf]
        %v275 = vld [vmem:[%s257 + $0x18] sm:$0xf]
        %v276 = vld [vmem:[%s257 + $0x1c] sm:$0xf]
        %v277 = vld [vmem:[%s257 + $0x20] sm:$0xf]
        %v278 = vld [vmem:[%s257 + $0x24] sm:$0xf]
        %v279 = vld [vmem:[%s257 + $0x28] sm:$0xf]
        %v280 = vld [vmem:[%s257 + $0x2c] sm:$0xf]
        %v281 = vld [vmem:[%s257 + $0x30] sm:$0xf]
        %v282 = vld [vmem:[%s257 + $0x34] sm:$0xf]
        %v283 = vld [vmem:[%s257 + $0x38] sm:$0xf]
        %v284 = vld [vmem:[%s257 + $0x3c] sm:$0xf]
        %v285 = vld [vmem:[%s257 + $0x40] sm:$0xf]
        %v286 = vld [vmem:[%s257 + $0x44] sm:$0xf]
        %v287 = vld [vmem:[%s257 + $0x48] sm:$0xf]
        %v288 = vld [vmem:[%s257 + $0x4c] sm:$0xf]
        %v289 = vld [vmem:[%s257 + $0x50] sm:$0xf]
        %v290 = vld [vmem:[%s257 + $0x54] sm:$0xf]
        %v291 = vld [vmem:[%s257 + $0x58] sm:$0xf]
        %v292 = vld [vmem:[%s257 + $0x5c] sm:$0xf]
        %v293 = vld [vmem:[%s257 + $0x60] sm:$0xf]
        %v294 = vld [vmem:[%s257 + $0x64] sm:$0xf]
        %v295 = vld [vmem:[%s257 + $0x68] sm:$0xf]
        %v296 = vld [vmem:[%s257 + $0x6c] sm:$0xf]
        %v297 = vld [vmem:[%s257 + $0x70] sm:$0xf]
        %v298 = vld [vmem:[%s257 + $0x74] sm:$0xf]
        %v299 = vld [vmem:[%s257 + $0x78] sm:$0xf]
        %v300 = vld [vmem:[%s257 + $0x7c] sm:$0xf]
        %v301 = vld [vmem:[%s257 + $0x80] sm:$0xf]
        %v302 = vld [vmem:[%s257 + $0x84] sm:$0xf]
        %v303 = vld [vmem:[%s257 + $0x88] sm:$0xf]
        %v304 = vld [vmem:[%s257 + $0x8c] sm:$0xf]
        %v305 = vld [vmem:[%s257 + $0x90] sm:$0xf]
        %v306 = vld [vmem:[%s257 + $0x94] sm:$0xf]
        %v307 = vld [vmem:[%s257 + $0x98] sm:$0xf]
        %v308 = vld [vmem:[%s257 + $0x9c] sm:$0xf]
        %v309 = vld [vmem:[%s257 + $0xa0] sm:$0xf]
        %v310 = vld [vmem:[%s257 + $0xa4] sm:$0xf]
        %v311 = vld [vmem:[%s257 + $0xa8] sm:$0xf]
        %v312 = vld [vmem:[%s257 + $0xac] sm:$0xf]
        %v313 = vld [vmem:[%s257 + $0xb0] sm:$0xf]
        %v314 = vld [vmem:[%s257 + $0xb4] sm:$0xf]
        %v315 = vld [vmem:[%s257 + $0xb8] sm:$0xf]
        %v316 = vld [vmem:[%s257 + $0xbc] sm:$0xf]
        %v317 = vld [vmem:[%s257 + $0xc0] sm:$0xf]
        %v318 = vld [vmem:[%s257 + $0xc4] sm:$0xf]
        %v319 = vld [vmem:[%s257 + $0xc8] sm:$0xf]
        %v320 = vld [vmem:[%s257 + $0xcc] sm:$0xf]
        %v321 = vld [vmem:[%s257 + $0xd0] sm:$0xf]
        %v322 = vld [vmem:[%s257 + $0xd4] sm:$0xf]
        %v323 = vld [vmem:[%s257 + $0xd8] sm:$0xf]
        %v324 = vld [vmem:[%s257 + $0xdc] sm:$0xf]
        %v325 = vld [vmem:[%s257 + $0xe0] sm:$0xf]
        %v326 = vld [vmem:[%s257 + $0xe4] sm:$0xf]
        %v327 = vld [vmem:[%s257 + $0xe8] sm:$0xf]
        %v328 = vld [vmem:[%s257 + $0xec] sm:$0xf]
        %v329 = vld [vmem:[%s257 + $0xf0] sm:$0xf]
        %v330 = vld [vmem:[%s257 + $0xf4] sm:$0xf]
        %v331 = vld [vmem:[%s257 + $0xf8] sm:$0xf]
        %v332 = vld [vmem:[%s257 + $0xfc] sm:$0xf]
        %v333 = vld [vmem:[%s257 + $0x100] sm:$0xf]
        %v334 = vld [vmem:[%s257 + $0x104] sm:$0xf]
        %v335 = vld [vmem:[%s257 + $0x108] sm:$0xf]
        %v336 = vld [vmem:[%s257 + $0x10c] sm:$0xf]
        %v337 = vld [vmem:[%s257 + $0x110] sm:$0xf]
        %v338 = vld [vmem:[%s257 + $0x114] sm:$0xf]
        %v339 = vld [vmem:[%s257 + $0x118] sm:$0xf]
        %v340 = vld [vmem:[%s257 + $0x11c] sm:$0xf]
        %v341 = vld [vmem:[%s257 + $0x120] sm:$0xf]
        %v342 = vld [vmem:[%s257 + $0x124] sm:$0xf]
        %v343 = vld [vmem:[%s257 + $0x128] sm:$0xf]
        %v344 = vld [vmem:[%s257 + $0x12c] sm:$0xf]
        %v345 = vld [vmem:[%s257 + $0x130] sm:$0xf]
        %v346 = vld [vmem:[%s257 + $0x134] sm:$0xf]
        %v347 = vld [vmem:[%s257 + $0x138] sm:$0xf]
        %v348 = vld [vmem:[%s257 + $0x13c] sm:$0xf]
        %v349 = vld [vmem:[%s257 + $0x140] sm:$0xf]
        %v350 = vld [vmem:[%s257 + $0x144] sm:$0xf]
        %v351 = vld [vmem:[%s257 + $0x148] sm:$0xf]
        %v352 = vld [vmem:[%s257 + $0x14c] sm:$0xf]
        %v353 = vld [vmem:[%s257 + $0x150] sm:$0xf]
        %v354 = vld [vmem:[%s257 + $0x154] sm:$0xf]
        %v355 = vld [vmem:[%s257 + $0x158] sm:$0xf]
        %v356 = vld [vmem:[%s257 + $0x15c] sm:$0xf]
        %v357 = vld [vmem:[%s257 + $0x160] sm:$0xf]
        %v358 = vld [vmem:[%s257 + $0x164] sm:$0xf]
        %v359 = vld [vmem:[%s257 + $0x168] sm:$0xf]
        %v360 = vld [vmem:[%s257 + $0x16c] sm:$0xf]
        %v361 = vld [vmem:[%s257 + $0x170] sm:$0xf]
        %v362 = vld [vmem:[%s257 + $0x174] sm:$0xf]
        %v363 = vld [vmem:[%s257 + $0x178] sm:$0xf]
        %v364 = vld [vmem:[%s257 + $0x17c] sm:$0xf]
        %v365 = vld [vmem:[%s257 + $0x180] sm:$0xf]
        %v366 = vld [vmem:[%s257 + $0x184] sm:$0xf]
        %v367 = vld [vmem:[%s257 + $0x188] sm:$0xf]
        %v368 = vld [vmem:[%s257 + $0x18c] sm:$0xf]
        %v369 = vld [vmem:[%s257 + $0x190] sm:$0xf]
        %v370 = vld [vmem:[%s257 + $0x194] sm:$0xf]
        %v371 = vld [vmem:[%s257 + $0x198] sm:$0xf]
        %v372 = vld [vmem:[%s257 + $0x19c] sm:$0xf]
        %v373 = vld [vmem:[%s257 + $0x1a0] sm:$0xf]
        %v374 = vld [vmem:[%s257 + $0x1a4] sm:$0xf]
        %v375 = vld [vmem:[%s257 + $0x1a8] sm:$0xf]
        %v376 = vld [vmem:[%s257 + $0x1ac] sm:$0xf]
        %v377 = vld [vmem:[%s257 + $0x1b0] sm:$0xf]
        %v378 = vld [vmem:[%s257 + $0x1b4] sm:$0xf]
        %v379 = vld [vmem:[%s257 + $0x1b8] sm:$0xf]
        %v380 = vld [vmem:[%s257 + $0x1bc] sm:$0xf]
        %v381 = vld [vmem:[%s257 + $0x1c0] sm:$0xf]
        %v382 = vld [vmem:[%s257 + $0x1c4] sm:$0xf]
        %v383 = vld [vmem:[%s257 + $0x1c8] sm:$0xf]
        %v384 = vld [vmem:[%s257 + $0x1cc] sm:$0xf]
        %v385 = vld [vmem:[%s257 + $0x1d0] sm:$0xf]
        %v386 = vld [vmem:[%s257 + $0x1d4] sm:$0xf]
        %v387 = vld [vmem:[%s257 + $0x1d8] sm:$0xf]
        %v388 = vld [vmem:[%s257 + $0x1dc] sm:$0xf]
        %v389 = vld [vmem:[%s257 + $0x1e0] sm:$0xf]
        %v390 = vld [vmem:[%s257 + $0x1e4] sm:$0xf]
        %v391 = vld [vmem:[%s257 + $0x1e8] sm:$0xf]
        %v392 = vld [vmem:[%s257 + $0x1ec] sm:$0xf]
        %v393 = vld [vmem:[%s257 + $0x1f0] sm:$0xf]
        %v394 = vld [vmem:[%s257 + $0x1f4] sm:$0xf]
        %v395 = vld [vmem:[%s257 + $0x1f8] sm:$0xf]
        %v396 = vld [vmem:[%s257 + $0x1fc] sm:$0xf]
        %v397 = vld [vmem:[%s257 + $0x200] sm:$0xf]
        %v398 = vld [vmem:[%s257 + $0x204] sm:$0xf]
        %v399 = vld [vmem:[%s257 + $0x208] sm:$0xf]
        %v400 = vld [vmem:[%s257 + $0x20c] sm:$0xf]
        %v401 = vld [vmem:[%s257 + $0x210] sm:$0xf]
        %v402 = vld [vmem:[%s257 + $0x214] sm:$0xf]
        %v403 = vld [vmem:[%s257 + $0x218] sm:$0xf]
        %v404 = vld [vmem:[%s257 + $0x21c] sm:$0xf]
        %v405 = vld [vmem:[%s257 + $0x220] sm:$0xf]
        %v406 = vld [vmem:[%s257 + $0x224] sm:$0xf]
        %v407 = vld [vmem:[%s257 + $0x228] sm:$0xf]
        %v408 = vld [vmem:[%s257 + $0x22c] sm:$0xf]
        %v409 = vld [vmem:[%s257 + $0x230] sm:$0xf]
        %v410 = vld [vmem:[%s257 + $0x234] sm:$0xf]
        %v411 = vld [vmem:[%s257 + $0x238] sm:$0xf]
        %v412 = vld [vmem:[%s257 + $0x23c] sm:$0xf]
        %v413 = vld [vmem:[%s257 + $0x240] sm:$0xf]
        %v414 = vld [vmem:[%s257 + $0x244] sm:$0xf]
        %v415 = vld [vmem:[%s257 + $0x248] sm:$0xf]
        %v416 = vld [vmem:[%s257 + $0x24c] sm:$0xf]
        %v417 = vld [vmem:[%s257 + $0x250] sm:$0xf]
        %v418 = vld [vmem:[%s257 + $0x254] sm:$0xf]
        %v419 = vld [vmem:[%s257 + $0x258] sm:$0xf]
        %v420 = vld [vmem:[%s257 + $0x25c] sm:$0xf]
        %v421 = vld [vmem:[%s257 + $0x260] sm:$0xf]
        %v422 = vld [vmem:[%s257 + $0x264] sm:$0xf]
        %v423 = vld [vmem:[%s257 + $0x268] sm:$0xf]
        %v424 = vld [vmem:[%s257 + $0x26c] sm:$0xf]
        %v425 = vld [vmem:[%s257 + $0x270] sm:$0xf]
        %v426 = vld [vmem:[%s257 + $0x274] sm:$0xf]
        %v427 = vld [vmem:[%s257 + $0x278] sm:$0xf]
        %v428 = vld [vmem:[%s257 + $0x27c] sm:$0xf]
        %v429 = vld [vmem:[%s257 + $0x280] sm:$0xf]
        %v430 = vld [vmem:[%s257 + $0x284] sm:$0xf]
        %v431 = vld [vmem:[%s257 + $0x288] sm:$0xf]
        %v432 = vld [vmem:[%s257 + $0x28c] sm:$0xf]
        %v433 = vld [vmem:[%s257 + $0x290] sm:$0xf]
        %v434 = vld [vmem:[%s257 + $0x294] sm:$0xf]
        %v435 = vld [vmem:[%s257 + $0x298] sm:$0xf]
        %v436 = vld [vmem:[%s257 + $0x29c] sm:$0xf]
        %v437 = vld [vmem:[%s257 + $0x2a0] sm:$0xf]
        %v438 = vld [vmem:[%s257 + $0x2a4] sm:$0xf]
        %v439 = vld [vmem:[%s257 + $0x2a8] sm:$0xf]
        %v440 = vld [vmem:[%s257 + $0x2ac] sm:$0xf]
        %v441 = vld [vmem:[%s257 + $0x2b0] sm:$0xf]
        %v442 = vld [vmem:[%s257 + $0x2b4] sm:$0xf]
        %v443 = vld [vmem:[%s257 + $0x2b8] sm:$0xf]
        %v444 = vld [vmem:[%s257 + $0x2bc] sm:$0xf]
        %v445 = vld [vmem:[%s257 + $0x2c0] sm:$0xf]
        %v446 = vld [vmem:[%s257 + $0x2c4] sm:$0xf]
        %v447 = vld [vmem:[%s257 + $0x2c8] sm:$0xf]
        %v448 = vld [vmem:[%s257 + $0x2cc] sm:$0xf]
        %v449 = vld [vmem:[%s257 + $0x2d0] sm:$0xf]
        %v450 = vld [vmem:[%s257 + $0x2d4] sm:$0xf]
        %v451 = vld [vmem:[%s257 + $0x2d8] sm:$0xf]
        %v452 = vld [vmem:[%s257 + $0x2dc] sm:$0xf]
        %v453 = vld [vmem:[%s257 + $0x2e0] sm:$0xf]
        %v454 = vld [vmem:[%s257 + $0x2e4] sm:$0xf]
        %v455 = vld [vmem:[%s257 + $0x2e8] sm:$0xf]
        %v456 = vld [vmem:[%s257 + $0x2ec] sm:$0xf]
        %v457 = vld [vmem:[%s257 + $0x2f0] sm:$0xf]
        %v458 = vld [vmem:[%s257 + $0x2f4] sm:$0xf]
        %v459 = vld [vmem:[%s257 + $0x2f8] sm:$0xf]
        %v460 = vld [vmem:[%s257 + $0x2fc] sm:$0xf]
        %v461 = vld [vmem:[%s257 + $0x300] sm:$0xf]
        %v462 = vld [vmem:[%s257 + $0x304] sm:$0xf]
        %v463 = vld [vmem:[%s257 + $0x308] sm:$0xf]
        %v464 = vld [vmem:[%s257 + $0x30c] sm:$0xf]
        %v465 = vld [vmem:[%s257 + $0x310] sm:$0xf]
        %v466 = vld [vmem:[%s257 + $0x314] sm:$0xf]
        %v467 = vld [vmem:[%s257 + $0x318] sm:$0xf]
        %v468 = vld [vmem:[%s257 + $0x31c] sm:$0xf]
        %v469 = vld [vmem:[%s257 + $0x320] sm:$0xf]
        %v470 = vld [vmem:[%s257 + $0x324] sm:$0xf]
        %v471 = vld [vmem:[%s257 + $0x328] sm:$0xf]
        %v472 = vld [vmem:[%s257 + $0x32c] sm:$0xf]
        %v473 = vld [vmem:[%s257 + $0x330] sm:$0xf]
        %v474 = vld [vmem:[%s257 + $0x334] sm:$0xf]
        %v475 = vld [vmem:[%s257 + $0x338] sm:$0xf]
        %v476 = vld [vmem:[%s257 + $0x33c] sm:$0xf]
        %v477 = vld [vmem:[%s257 + $0x340] sm:$0xf]
        %v478 = vld [vmem:[%s257 + $0x344] sm:$0xf]
        %v479 = vld [vmem:[%s257 + $0x348] sm:$0xf]
        %v480 = vld [vmem:[%s257 + $0x34c] sm:$0xf]
        %v481 = vld [vmem:[%s257 + $0x350] sm:$0xf]
        %v482 = vld [vmem:[%s257 + $0x354] sm:$0xf]
        %v483 = vld [vmem:[%s257 + $0x358] sm:$0xf]
        %v484 = vld [vmem:[%s257 + $0x35c] sm:$0xf]
        %v485 = vld [vmem:[%s257 + $0x360] sm:$0xf]
        %v486 = vld [vmem:[%s257 + $0x364] sm:$0xf]
        %v487 = vld [vmem:[%s257 + $0x368] sm:$0xf]
        %v488 = vld [vmem:[%s257 + $0x36c] sm:$0xf]
        %v489 = vld [vmem:[%s257 + $0x370] sm:$0xf]
        %v490 = vld [vmem:[%s257 + $0x374] sm:$0xf]
        %v491 = vld [vmem:[%s257 + $0x378] sm:$0xf]
        %v492 = vld [vmem:[%s257 + $0x37c] sm:$0xf]
        %v493 = vld [vmem:[%s257 + $0x380] sm:$0xf]
        %v494 = vld [vmem:[%s257 + $0x384] sm:$0xf]
        %v495 = vld [vmem:[%s257 + $0x388] sm:$0xf]
        %v496 = vld [vmem:[%s257 + $0x38c] sm:$0xf]
        %v497 = vld [vmem:[%s257 + $0x390] sm:$0xf]
        %v498 = vld [vmem:[%s257 + $0x394] sm:$0xf]
        %v499 = vld [vmem:[%s257 + $0x398] sm:$0xf]
        %v500 = vld [vmem:[%s257 + $0x39c] sm:$0xf]
        %v501 = vld [vmem:[%s257 + $0x3a0] sm:$0xf]
        %v502 = vld [vmem:[%s257 + $0x3a4] sm:$0xf]
        %v503 = vld [vmem:[%s257 + $0x3a8] sm:$0xf]
        %v504 = vld [vmem:[%s257 + $0x3ac] sm:$0xf]
        %v505 = vld [vmem:[%s257 + $0x3b0] sm:$0xf]
        %v506 = vld [vmem:[%s257 + $0x3b4] sm:$0xf]
        %v507 = vld [vmem:[%s257 + $0x3b8] sm:$0xf]
        %v508 = vld [vmem:[%s257 + $0x3bc] sm:$0xf]
        %v509 = vld [vmem:[%s257 + $0x3c0] sm:$0xf]
        %v510 = vld [vmem:[%s257 + $0x3c4] sm:$0xf]
        %v511 = vld [vmem:[%s257 + $0x3c8] sm:$0xf]
        %v512 = vld [vmem:[%s257 + $0x3cc] sm:$0xf]
        %v513 = vld [vmem:[%s257 + $0x3d0] sm:$0xf]
        %v514 = vld [vmem:[%s257 + $0x3d4] sm:$0xf]
        %v515 = vld [vmem:[%s257 + $0x3d8] sm:$0xf]
        %v516 = vld [vmem:[%s257 + $0x3dc] sm:$0xf]
        %v517 = vld [vmem:[%s257 + $0x3e0] sm:$0xf]
        %v518 = vld [vmem:[%s257 + $0x3e4] sm:$0xf]
        %v519 = vld [vmem:[%s257 + $0x3e8] sm:$0xf]
        %v520 = vld [vmem:[%s257 + $0x3ec] sm:$0xf]
        %v521 = vld [vmem:[%s257 + $0x3f0] sm:$0xf]
        %v522 = vld [vmem:[%s257 + $0x3f4] sm:$0xf]
        %v523 = vld [vmem:[%s257 + $0x3f8] sm:$0xf]
        %v524 = vld [vmem:[%s257 + $0x3fc] sm:$0xf]
        %v527 = vcombine.high %v267, %v267
        %v529 = vunpack.c.l.s4 1966171168
        %v530 = vunpack.c.0.s8 %v529
        %v531 = vlaneseq
        %v532 = vshrl.u32 %v531, 7
        %v533 = vsub.s32 %v530, %v532
        %v534 = vrot.slane %v267, %v533
        %v536 = vunpack.c.l.s4 1966171168
        %v537 = vunpack.c.0.s8 %v536
        %v538 = vlaneseq
        %v539 = vshrl.u32 %v538, 7
        %v540 = vsub.s32 %v537, %v539
        %v541 = vrot.slane %v527, %v540
        %v542 = vcombine.high %v534, %v534
        %v543 = vcombine.high %v541, %v541
        %v545 = vunpack.c.l.s4 1966171168
        %v546 = vunpack.c.0.s8 %v545
        %v547 = vlaneseq
        %v548 = vshrl.u32 %v547, 7
        %v549 = vsub.s32 %v546, %v548
        %v550 = vrot.slane %v534, %v549
        %v552 = vunpack.c.l.s4 1966171168
        %v553 = vunpack.c.0.s8 %v552
        %v554 = vlaneseq
        %v555 = vshrl.u32 %v554, 7
        %v556 = vsub.s32 %v553, %v555
        %v557 = vrot.slane %v541, %v556
        %v559 = vunpack.c.l.s4 1966171168
        %v560 = vunpack.c.0.s8 %v559
        %v561 = vlaneseq
        %v562 = vshrl.u32 %v561, 7
        %v563 = vsub.s32 %v560, %v562
        %v564 = vrot.slane %v542, %v563
        %v566 = vunpack.c.l.s4 1966171168
        %v567 = vunpack.c.0.s8 %v566
        %v568 = vlaneseq
        %v569 = vshrl.u32 %v568, 7
        %v570 = vsub.s32 %v567, %v569
        %v571 = vrot.slane %v543, %v570
        %v572 = vcombine.high %v550, %v550
        %v573 = vcombine.high %v557, %v557
        %v574 = vcombine.high %v564, %v564
        %v575 = vcombine.high %v571, %v571
        %v576 = vcombine.high %v268, %v268
        %v578 = vunpack.c.l.s4 1966171168
        %v579 = vunpack.c.0.s8 %v578
        %v580 = vlaneseq
        %v581 = vshrl.u32 %v580, 7
        %v582 = vsub.s32 %v579, %v581
        %v583 = vrot.slane %v268, %v582
        %v585 = vunpack.c.l.s4 1966171168
        %v586 = vunpack.c.0.s8 %v585
        %v587 = vlaneseq
        %v588 = vshrl.u32 %v587, 7
        %v589 = vsub.s32 %v586, %v588
        %v590 = vrot.slane %v576, %v589
        %v591 = vcombine.high %v583, %v583
        %v592 = vcombine.high %v590, %v590
        %v594 = vunpack.c.l.s4 1966171168
        %v595 = vunpack.c.0.s8 %v594
        %v596 = vlaneseq
        %v597 = vshrl.u32 %v596, 7
        %v598 = vsub.s32 %v595, %v597
        %v599 = vrot.slane %v583, %v598
        %v601 = vunpack.c.l.s4 1966171168
        %v602 = vunpack.c.0.s8 %v601
        %v603 = vlaneseq
        %v604 = vshrl.u32 %v603, 7
        %v605 = vsub.s32 %v602, %v604
        %v606 = vrot.slane %v590, %v605
        %v608 = vunpack.c.l.s4 1966171168
        %v609 = vunpack.c.0.s8 %v608
        %v610 = vlaneseq
        %v611 = vshrl.u32 %v610, 7
        %v612 = vsub.s32 %v609, %v611
        %v613 = vrot.slane %v591, %v612
        %v615 = vunpack.c.l.s4 1966171168
        %v616 = vunpack.c.0.s8 %v615
        %v617 = vlaneseq
        %v618 = vshrl.u32 %v617, 7
        %v619 = vsub.s32 %v616, %v618
        %v620 = vrot.slane %v592, %v619
        %v621 = vcombine.high %v599, %v599
        %v622 = vcombine.high %v606, %v606
        %v623 = vcombine.high %v613, %v613
        %v624 = vcombine.high %v620, %v620
        %v897 = vunpack.c.l.b16 %v269
        %v898 = vunpack.c.l.b16 %v270
        %v899 = vunpack.c.l.b16 %v271
        %v900 = vunpack.c.l.b16 %v272
        %v901 = vunpack.c.l.b16 %v273
        %v902 = vunpack.c.l.b16 %v274
        %v903 = vunpack.c.l.b16 %v275
        %v904 = vunpack.c.l.b16 %v276
        %v905 = vunpack.c.l.b16 %v277
        %v906 = vunpack.c.l.b16 %v278
        %v907 = vunpack.c.l.b16 %v279
        %v908 = vunpack.c.l.b16 %v280
        %v909 = vunpack.c.l.b16 %v281
        %v910 = vunpack.c.l.b16 %v282
        %v911 = vunpack.c.l.b16 %v283
        %v912 = vunpack.c.l.b16 %v284
        %v913 = vunpack.c.l.b16 %v285
        %v914 = vunpack.c.l.b16 %v286
        %v915 = vunpack.c.l.b16 %v287
        %v916 = vunpack.c.l.b16 %v288
        %v917 = vunpack.c.l.b16 %v289
        %v918 = vunpack.c.l.b16 %v290
        %v919 = vunpack.c.l.b16 %v291
        %v920 = vunpack.c.l.b16 %v292
        %v921 = vunpack.c.l.b16 %v293
        %v922 = vunpack.c.l.b16 %v294
        %v923 = vunpack.c.l.b16 %v295
        %v924 = vunpack.c.l.b16 %v296
        %v925 = vunpack.c.l.b16 %v297
        %v926 = vunpack.c.l.b16 %v298
        %v927 = vunpack.c.l.b16 %v299
        %v928 = vunpack.c.l.b16 %v300
        %v929 = vunpack.c.l.b16 %v301
        %v930 = vunpack.c.l.b16 %v302
        %v931 = vunpack.c.l.b16 %v303
        %v932 = vunpack.c.l.b16 %v304
        %v933 = vunpack.c.l.b16 %v305
        %v934 = vunpack.c.l.b16 %v306
        %v935 = vunpack.c.l.b16 %v307
        %v936 = vunpack.c.l.b16 %v308
        %v937 = vunpack.c.l.b16 %v309
        %v938 = vunpack.c.l.b16 %v310
        %v939 = vunpack.c.l.b16 %v311
        %v940 = vunpack.c.l.b16 %v312
        %v941 = vunpack.c.l.b16 %v313
        %v942 = vunpack.c.l.b16 %v314
        %v943 = vunpack.c.l.b16 %v315
        %v944 = vunpack.c.l.b16 %v316
        %v945 = vunpack.c.l.b16 %v317
        %v946 = vunpack.c.l.b16 %v318
        %v947 = vunpack.c.l.b16 %v319
        %v948 = vunpack.c.l.b16 %v320
        %v949 = vunpack.c.l.b16 %v321
        %v950 = vunpack.c.l.b16 %v322
        %v951 = vunpack.c.l.b16 %v323
        %v952 = vunpack.c.l.b16 %v324
        %v953 = vunpack.c.l.b16 %v325
        %v954 = vunpack.c.l.b16 %v326
        %v955 = vunpack.c.l.b16 %v327
        %v956 = vunpack.c.l.b16 %v328
        %v957 = vunpack.c.l.b16 %v329
        %v958 = vunpack.c.l.b16 %v330
        %v959 = vunpack.c.l.b16 %v331
        %v960 = vunpack.c.l.b16 %v332
        %v961 = vunpack.c.l.b16 %v333
        %v962 = vunpack.c.l.b16 %v334
        %v963 = vunpack.c.l.b16 %v335
        %v964 = vunpack.c.l.b16 %v336
        %v965 = vunpack.c.l.b16 %v337
        %v966 = vunpack.c.l.b16 %v338
        %v967 = vunpack.c.l.b16 %v339
        %v968 = vunpack.c.l.b16 %v340
        %v969 = vunpack.c.l.b16 %v341
        %v970 = vunpack.c.l.b16 %v342
        %v971 = vunpack.c.l.b16 %v343
        %v972 = vunpack.c.l.b16 %v344
        %v973 = vunpack.c.l.b16 %v345
        %v974 = vunpack.c.l.b16 %v346
        %v975 = vunpack.c.l.b16 %v347
        %v976 = vunpack.c.l.b16 %v348
        %v977 = vunpack.c.l.b16 %v349
        %v978 = vunpack.c.l.b16 %v350
        %v979 = vunpack.c.l.b16 %v351
        %v980 = vunpack.c.l.b16 %v352
        %v981 = vunpack.c.l.b16 %v353
        %v982 = vunpack.c.l.b16 %v354
        %v983 = vunpack.c.l.b16 %v355
        %v984 = vunpack.c.l.b16 %v356
        %v985 = vunpack.c.l.b16 %v357
        %v986 = vunpack.c.l.b16 %v358
        %v987 = vunpack.c.l.b16 %v359
        %v988 = vunpack.c.l.b16 %v360
        %v989 = vunpack.c.l.b16 %v361
        %v990 = vunpack.c.l.b16 %v362
        %v991 = vunpack.c.l.b16 %v363
        %v992 = vunpack.c.l.b16 %v364
        %v993 = vunpack.c.l.b16 %v365
        %v994 = vunpack.c.l.b16 %v366
        %v995 = vunpack.c.l.b16 %v367
        %v996 = vunpack.c.l.b16 %v368
        %v997 = vunpack.c.l.b16 %v369
        %v998 = vunpack.c.l.b16 %v370
        %v999 = vunpack.c.l.b16 %v371
        %v1000 = vunpack.c.l.b16 %v372
        %v1001 = vunpack.c.l.b16 %v373
        %v1002 = vunpack.c.l.b16 %v374
        %v1003 = vunpack.c.l.b16 %v375
        %v1004 = vunpack.c.l.b16 %v376
        %v1005 = vunpack.c.l.b16 %v377
        %v1006 = vunpack.c.l.b16 %v378
        %v1007 = vunpack.c.l.b16 %v379
        %v1008 = vunpack.c.l.b16 %v380
        %v1009 = vunpack.c.l.b16 %v381
        %v1010 = vunpack.c.l.b16 %v382
        %v1011 = vunpack.c.l.b16 %v383
        %v1012 = vunpack.c.l.b16 %v384
        %v1013 = vunpack.c.l.b16 %v385
        %v1014 = vunpack.c.l.b16 %v386
        %v1015 = vunpack.c.l.b16 %v387
        %v1016 = vunpack.c.l.b16 %v388
        %v1017 = vunpack.c.l.b16 %v389
        %v1018 = vunpack.c.l.b16 %v390
        %v1019 = vunpack.c.l.b16 %v391
        %v1020 = vunpack.c.l.b16 %v392
        %v1021 = vunpack.c.l.b16 %v393
        %v1022 = vunpack.c.l.b16 %v394
        %v1023 = vunpack.c.l.b16 %v395
        %v1024 = vunpack.c.l.b16 %v396
        %v1025 = vunpack.c.l.b16 %v397
        %v1026 = vunpack.c.l.b16 %v398
        %v1027 = vunpack.c.l.b16 %v399
        %v1028 = vunpack.c.l.b16 %v400
        %v1029 = vunpack.c.l.b16 %v401
        %v1030 = vunpack.c.l.b16 %v402
        %v1031 = vunpack.c.l.b16 %v403
        %v1032 = vunpack.c.l.b16 %v404
        %v1033 = vunpack.c.l.b16 %v405
        %v1034 = vunpack.c.l.b16 %v406
        %v1035 = vunpack.c.l.b16 %v407
        %v1036 = vunpack.c.l.b16 %v408
        %v1037 = vunpack.c.l.b16 %v409
        %v1038 = vunpack.c.l.b16 %v410
        %v1039 = vunpack.c.l.b16 %v411
        %v1040 = vunpack.c.l.b16 %v412
        %v1041 = vunpack.c.l.b16 %v413
        %v1042 = vunpack.c.l.b16 %v414
        %v1043 = vunpack.c.l.b16 %v415
        %v1044 = vunpack.c.l.b16 %v416
        %v1045 = vunpack.c.l.b16 %v417
        %v1046 = vunpack.c.l.b16 %v418
        %v1047 = vunpack.c.l.b16 %v419
        %v1048 = vunpack.c.l.b16 %v420
        %v1049 = vunpack.c.l.b16 %v421
        %v1050 = vunpack.c.l.b16 %v422
        %v1051 = vunpack.c.l.b16 %v423
        %v1052 = vunpack.c.l.b16 %v424
        %v1053 = vunpack.c.l.b16 %v425
        %v1054 = vunpack.c.l.b16 %v426
        %v1055 = vunpack.c.l.b16 %v427
        %v1056 = vunpack.c.l.b16 %v428
        %v1057 = vunpack.c.l.b16 %v429
        %v1058 = vunpack.c.l.b16 %v430
        %v1059 = vunpack.c.l.b16 %v431
        %v1060 = vunpack.c.l.b16 %v432
        %v1061 = vunpack.c.l.b16 %v433
        %v1062 = vunpack.c.l.b16 %v434
        %v1063 = vunpack.c.l.b16 %v435
        %v1064 = vunpack.c.l.b16 %v436
        %v1065 = vunpack.c.l.b16 %v437
        %v1066 = vunpack.c.l.b16 %v438
        %v1067 = vunpack.c.l.b16 %v439
        %v1068 = vunpack.c.l.b16 %v440
        %v1069 = vunpack.c.l.b16 %v441
        %v1070 = vunpack.c.l.b16 %v442
        %v1071 = vunpack.c.l.b16 %v443
        %v1072 = vunpack.c.l.b16 %v444
        %v1073 = vunpack.c.l.b16 %v445
        %v1074 = vunpack.c.l.b16 %v446
        %v1075 = vunpack.c.l.b16 %v447
        %v1076 = vunpack.c.l.b16 %v448
        %v1077 = vunpack.c.l.b16 %v449
        %v1078 = vunpack.c.l.b16 %v450
        %v1079 = vunpack.c.l.b16 %v451
        %v1080 = vunpack.c.l.b16 %v452
        %v1081 = vunpack.c.l.b16 %v453
        %v1082 = vunpack.c.l.b16 %v454
        %v1083 = vunpack.c.l.b16 %v455
        %v1084 = vunpack.c.l.b16 %v456
        %v1085 = vunpack.c.l.b16 %v457
        %v1086 = vunpack.c.l.b16 %v458
        %v1087 = vunpack.c.l.b16 %v459
        %v1088 = vunpack.c.l.b16 %v460
        %v1089 = vunpack.c.l.b16 %v461
        %v1090 = vunpack.c.l.b16 %v462
        %v1091 = vunpack.c.l.b16 %v463
        %v1092 = vunpack.c.l.b16 %v464
        %v1093 = vunpack.c.l.b16 %v465
        %v1094 = vunpack.c.l.b16 %v466
        %v1095 = vunpack.c.l.b16 %v467
        %v1096 = vunpack.c.l.b16 %v468
        %v1097 = vunpack.c.l.b16 %v469
        %v1098 = vunpack.c.l.b16 %v470
        %v1099 = vunpack.c.l.b16 %v471
        %v1100 = vunpack.c.l.b16 %v472
        %v1101 = vunpack.c.l.b16 %v473
        %v1102 = vunpack.c.l.b16 %v474
        %v1103 = vunpack.c.l.b16 %v475
        %v1104 = vunpack.c.l.b16 %v476
        %v1105 = vunpack.c.l.b16 %v477
        %v1106 = vunpack.c.l.b16 %v478
        %v1107 = vunpack.c.l.b16 %v479
        %v1108 = vunpack.c.l.b16 %v480
        %v1109 = vunpack.c.l.b16 %v481
        %v1110 = vunpack.c.l.b16 %v482
        %v1111 = vunpack.c.l.b16 %v483
        %v1112 = vunpack.c.l.b16 %v484
        %v1113 = vunpack.c.l.b16 %v485
        %v1114 = vunpack.c.l.b16 %v486
        %v1115 = vunpack.c.l.b16 %v487
        %v1116 = vunpack.c.l.b16 %v488
        %v1117 = vunpack.c.l.b16 %v489
        %v1118 = vunpack.c.l.b16 %v490
        %v1119 = vunpack.c.l.b16 %v491
        %v1120 = vunpack.c.l.b16 %v492
        %v1121 = vunpack.c.l.b16 %v493
        %v1122 = vunpack.c.l.b16 %v494
        %v1123 = vunpack.c.l.b16 %v495
        %v1124 = vunpack.c.l.b16 %v496
        %v1125 = vunpack.c.l.b16 %v497
        %v1126 = vunpack.c.l.b16 %v498
        %v1127 = vunpack.c.l.b16 %v499
        %v1128 = vunpack.c.l.b16 %v500
        %v1129 = vunpack.c.l.b16 %v501
        %v1130 = vunpack.c.l.b16 %v502
        %v1131 = vunpack.c.l.b16 %v503
        %v1132 = vunpack.c.l.b16 %v504
        %v1133 = vunpack.c.l.b16 %v505
        %v1134 = vunpack.c.l.b16 %v506
        %v1135 = vunpack.c.l.b16 %v507
        %v1136 = vunpack.c.l.b16 %v508
        %v1137 = vunpack.c.l.b16 %v509
        %v1138 = vunpack.c.l.b16 %v510
        %v1139 = vunpack.c.l.b16 %v511
        %v1140 = vunpack.c.l.b16 %v512
        %v1141 = vunpack.c.l.b16 %v513
        %v1142 = vunpack.c.l.b16 %v514
        %v1143 = vunpack.c.l.b16 %v515
        %v1144 = vunpack.c.l.b16 %v516
        %v1145 = vunpack.c.l.b16 %v517
        %v1146 = vunpack.c.l.b16 %v518
        %v1147 = vunpack.c.l.b16 %v519
        %v1148 = vunpack.c.l.b16 %v520
        %v1149 = vunpack.c.l.b16 %v521
        %v1150 = vunpack.c.l.b16 %v522
        %v1151 = vunpack.c.l.b16 %v523
        %v1152 = vunpack.c.l.b16 %v524
        %v1153 = vpack.c.b16 %v898, %v897
        %v1154 = vpack.c.b16 %v900, %v899
        %v1155 = vpack.c.b16 %v902, %v901
        %v1156 = vpack.c.b16 %v904, %v903
        %v1157 = vpack.c.b16 %v906, %v905
        %v1158 = vpack.c.b16 %v908, %v907
        %v1159 = vpack.c.b16 %v910, %v909
        %v1160 = vpack.c.b16 %v912, %v911
        %v1161 = vpack.c.b16 %v914, %v913
        %v1162 = vpack.c.b16 %v916, %v915
        %v1163 = vpack.c.b16 %v918, %v917
        %v1164 = vpack.c.b16 %v920, %v919
        %v1165 = vpack.c.b16 %v922, %v921
        %v1166 = vpack.c.b16 %v924, %v923
        %v1167 = vpack.c.b16 %v926, %v925
        %v1168 = vpack.c.b16 %v928, %v927
        %v1169 = vpack.c.b16 %v930, %v929
        %v1170 = vpack.c.b16 %v932, %v931
        %v1171 = vpack.c.b16 %v934, %v933
        %v1172 = vpack.c.b16 %v936, %v935
        %v1173 = vpack.c.b16 %v938, %v937
        %v1174 = vpack.c.b16 %v940, %v939
        %v1175 = vpack.c.b16 %v942, %v941
        %v1176 = vpack.c.b16 %v944, %v943
        %v1177 = vpack.c.b16 %v946, %v945
        %v1178 = vpack.c.b16 %v948, %v947
        %v1179 = vpack.c.b16 %v950, %v949
        %v1180 = vpack.c.b16 %v952, %v951
        %v1181 = vpack.c.b16 %v954, %v953
        %v1182 = vpack.c.b16 %v956, %v955
        %v1183 = vpack.c.b16 %v958, %v957
        %v1184 = vpack.c.b16 %v960, %v959
        %v1185 = vpack.c.b16 %v962, %v961
        %v1186 = vpack.c.b16 %v964, %v963
        %v1187 = vpack.c.b16 %v966, %v965
        %v1188 = vpack.c.b16 %v968, %v967
        %v1189 = vpack.c.b16 %v970, %v969
        %v1190 = vpack.c.b16 %v972, %v971
        %v1191 = vpack.c.b16 %v974, %v973
        %v1192 = vpack.c.b16 %v976, %v975
        %v1193 = vpack.c.b16 %v978, %v977
        %v1194 = vpack.c.b16 %v980, %v979
        %v1195 = vpack.c.b16 %v982, %v981
        %v1196 = vpack.c.b16 %v984, %v983
        %v1197 = vpack.c.b16 %v986, %v985
        %v1198 = vpack.c.b16 %v988, %v987
        %v1199 = vpack.c.b16 %v990, %v989
        %v1200 = vpack.c.b16 %v992, %v991
        %v1201 = vpack.c.b16 %v994, %v993
        %v1202 = vpack.c.b16 %v996, %v995
        %v1203 = vpack.c.b16 %v998, %v997
        %v1204 = vpack.c.b16 %v1000, %v999
        %v1205 = vpack.c.b16 %v1002, %v1001
        %v1206 = vpack.c.b16 %v1004, %v1003
        %v1207 = vpack.c.b16 %v1006, %v1005
        %v1208 = vpack.c.b16 %v1008, %v1007
        %v1209 = vpack.c.b16 %v1010, %v1009
        %v1210 = vpack.c.b16 %v1012, %v1011
        %v1211 = vpack.c.b16 %v1014, %v1013
        %v1212 = vpack.c.b16 %v1016, %v1015
        %v1213 = vpack.c.b16 %v1018, %v1017
        %v1214 = vpack.c.b16 %v1020, %v1019
        %v1215 = vpack.c.b16 %v1022, %v1021
        %v1216 = vpack.c.b16 %v1024, %v1023
        %v1217 = vpack.c.b16 %v1026, %v1025
        %v1218 = vpack.c.b16 %v1028, %v1027
        %v1219 = vpack.c.b16 %v1030, %v1029
        %v1220 = vpack.c.b16 %v1032, %v1031
        %v1221 = vpack.c.b16 %v1034, %v1033
        %v1222 = vpack.c.b16 %v1036, %v1035
        %v1223 = vpack.c.b16 %v1038, %v1037
        %v1224 = vpack.c.b16 %v1040, %v1039
        %v1225 = vpack.c.b16 %v1042, %v1041
        %v1226 = vpack.c.b16 %v1044, %v1043
        %v1227 = vpack.c.b16 %v1046, %v1045
        %v1228 = vpack.c.b16 %v1048, %v1047
        %v1229 = vpack.c.b16 %v1050, %v1049
        %v1230 = vpack.c.b16 %v1052, %v1051
        %v1231 = vpack.c.b16 %v1054, %v1053
        %v1232 = vpack.c.b16 %v1056, %v1055
        %v1233 = vpack.c.b16 %v1058, %v1057
        %v1234 = vpack.c.b16 %v1060, %v1059
        %v1235 = vpack.c.b16 %v1062, %v1061
        %v1236 = vpack.c.b16 %v1064, %v1063
        %v1237 = vpack.c.b16 %v1066, %v1065
        %v1238 = vpack.c.b16 %v1068, %v1067
        %v1239 = vpack.c.b16 %v1070, %v1069
        %v1240 = vpack.c.b16 %v1072, %v1071
        %v1241 = vpack.c.b16 %v1074, %v1073
        %v1242 = vpack.c.b16 %v1076, %v1075
        %v1243 = vpack.c.b16 %v1078, %v1077
        %v1244 = vpack.c.b16 %v1080, %v1079
        %v1245 = vpack.c.b16 %v1082, %v1081
        %v1246 = vpack.c.b16 %v1084, %v1083
        %v1247 = vpack.c.b16 %v1086, %v1085
        %v1248 = vpack.c.b16 %v1088, %v1087
        %v1249 = vpack.c.b16 %v1090, %v1089
        %v1250 = vpack.c.b16 %v1092, %v1091
        %v1251 = vpack.c.b16 %v1094, %v1093
        %v1252 = vpack.c.b16 %v1096, %v1095
        %v1253 = vpack.c.b16 %v1098, %v1097
        %v1254 = vpack.c.b16 %v1100, %v1099
        %v1255 = vpack.c.b16 %v1102, %v1101
        %v1256 = vpack.c.b16 %v1104, %v1103
        %v1257 = vpack.c.b16 %v1106, %v1105
        %v1258 = vpack.c.b16 %v1108, %v1107
        %v1259 = vpack.c.b16 %v1110, %v1109
        %v1260 = vpack.c.b16 %v1112, %v1111
        %v1261 = vpack.c.b16 %v1114, %v1113
        %v1262 = vpack.c.b16 %v1116, %v1115
        %v1263 = vpack.c.b16 %v1118, %v1117
        %v1264 = vpack.c.b16 %v1120, %v1119
        %v1265 = vpack.c.b16 %v1122, %v1121
        %v1266 = vpack.c.b16 %v1124, %v1123
        %v1267 = vpack.c.b16 %v1126, %v1125
        %v1268 = vpack.c.b16 %v1128, %v1127
        %v1269 = vpack.c.b16 %v1130, %v1129
        %v1270 = vpack.c.b16 %v1132, %v1131
        %v1271 = vpack.c.b16 %v1134, %v1133
        %v1272 = vpack.c.b16 %v1136, %v1135
        %v1273 = vpack.c.b16 %v1138, %v1137
        %v1274 = vpack.c.b16 %v1140, %v1139
        %v1275 = vpack.c.b16 %v1142, %v1141
        %v1276 = vpack.c.b16 %v1144, %v1143
        %v1277 = vpack.c.b16 %v1146, %v1145
        %v1278 = vpack.c.b16 %v1148, %v1147
        %v1279 = vpack.c.b16 %v1150, %v1149
        %v1280 = vpack.c.b16 %v1152, %v1151
        %1409 = vmatprep.subr.bf16.mxu0 0
        %1410 = vmatpush1.bf16.msra.mxu0 %v1160
        %1411 = vmatprep.subr.bf16.mxu0 0
        %1412 = vmatpush1.bf16.msra.mxu0 %v1159
        %1413 = vmatprep.subr.bf16.mxu0 0
        %1414 = vmatpush1.bf16.msra.mxu0 %v1158
        %1415 = vmatprep.subr.bf16.mxu0 0
        %1416 = vmatpush1.bf16.msra.mxu0 %v1157
        %1417 = vmatprep.subr.bf16.mxu0 0
        %1418 = vmatpush1.bf16.msra.mxu0 %v1156
        %1419 = vmatprep.subr.bf16.mxu0 0
        %1420 = vmatpush1.bf16.msra.mxu0 %v1155
        %1421 = vmatprep.subr.bf16.mxu0 0
        %1422 = vmatpush1.bf16.msra.mxu0 %v1154
        %1423 = vmatprep.subr.bf16.mxu0 0
        %1424 = vmatpush1.bf16.msra.mxu0 %v1153
        %1425 = vmatprep.subr.bf16.mxu0 0
        %1426 = vmatpush2.bf16.msra.mxu0 %v1168
        %1427 = vmatprep.subr.bf16.mxu0 0
        %1428 = vmatpush2.bf16.msra.mxu0 %v1167
        %1429 = vmatprep.subr.bf16.mxu0 0
        %1430 = vmatpush2.bf16.msra.mxu0 %v1166
        %1431 = vmatprep.subr.bf16.mxu0 0
        %1432 = vmatpush2.bf16.msra.mxu0 %v1165
        %1433 = vmatprep.subr.bf16.mxu0 0
        %1434 = vmatpush2.bf16.msra.mxu0 %v1164
        %1435 = vmatprep.subr.bf16.mxu0 0
        %1436 = vmatpush2.bf16.msra.mxu0 %v1163
        %1437 = vmatprep.subr.bf16.mxu0 0
        %1438 = vmatpush2.bf16.msra.mxu0 %v1162
        %1439 = vmatprep.subr.bf16.mxu0 0
        %1440 = vmatpush2.bf16.msra.mxu0 %v1161
        %1441 = vmatprep.mubr.bf16.mxu0 %v564
        %1442 = vmatmul.mubr.bf16.gmra.mxu0 %v550
        %v1443 = vpop.f32.mrf.mxu0
        %v1444 = vadd.f32 0.0, %v1443
        %v1445 = vpop.f32.mrf.mxu0
        %v1446 = vpop.f32.mrf.mxu0
        %v1447 = vpop.f32.mrf.mxu0
        %1448 = vdwg.mxu0
        %1449 = vmatprep.subr.bf16.mxu0 0
        %1450 = vmatpush1.bf16.msra.mxu0 %v1176
        %1451 = vmatprep.subr.bf16.mxu0 0
        %1452 = vmatpush1.bf16.msra.mxu0 %v1175
        %1453 = vmatprep.subr.bf16.mxu0 0
        %1454 = vmatpush1.bf16.msra.mxu0 %v1174
        %1455 = vmatprep.subr.bf16.mxu0 0
        %1456 = vmatpush1.bf16.msra.mxu0 %v1173
        %1457 = vmatprep.subr.bf16.mxu0 0
        %1458 = vmatpush1.bf16.msra.mxu0 %v1172
        %1459 = vmatprep.subr.bf16.mxu0 0
        %1460 = vmatpush1.bf16.msra.mxu0 %v1171
        %1461 = vmatprep.subr.bf16.mxu0 0
        %1462 = vmatpush1.bf16.msra.mxu0 %v1170
        %1463 = vmatprep.subr.bf16.mxu0 0
        %1464 = vmatpush1.bf16.msra.mxu0 %v1169
        %1465 = vmatprep.subr.bf16.mxu0 0
        %1466 = vmatpush2.bf16.msra.mxu0 %v1184
        %1467 = vmatprep.subr.bf16.mxu0 0
        %1468 = vmatpush2.bf16.msra.mxu0 %v1183
        %1469 = vmatprep.subr.bf16.mxu0 0
        %1470 = vmatpush2.bf16.msra.mxu0 %v1182
        %1471 = vmatprep.subr.bf16.mxu0 0
        %1472 = vmatpush2.bf16.msra.mxu0 %v1181
        %1473 = vmatprep.subr.bf16.mxu0 0
        %1474 = vmatpush2.bf16.msra.mxu0 %v1180
        %1475 = vmatprep.subr.bf16.mxu0 0
        %1476 = vmatpush2.bf16.msra.mxu0 %v1179
        %1477 = vmatprep.subr.bf16.mxu0 0
        %1478 = vmatpush2.bf16.msra.mxu0 %v1178
        %1479 = vmatprep.subr.bf16.mxu0 0
        %1480 = vmatpush2.bf16.msra.mxu0 %v1177
        %1481 = vmatprep.mubr.bf16.mxu0 %v574
        %1482 = vmatmul.mubr.bf16.gmra.mxu0 %v572
        %v1483 = vpop.f32.mrf.mxu0
        %v1484 = vadd.f32 %v1444, %v1483
        %v1485 = vpop.f32.mrf.mxu0
        %v1486 = vpop.f32.mrf.mxu0
        %v1487 = vpop.f32.mrf.mxu0
        %1488 = vdwg.mxu0
        %1489 = vmatprep.subr.bf16.mxu0 0
        %1490 = vmatpush1.bf16.msra.mxu0 %v1192
        %1491 = vmatprep.subr.bf16.mxu0 0
        %1492 = vmatpush1.bf16.msra.mxu0 %v1191
        %1493 = vmatprep.subr.bf16.mxu0 0
        %1494 = vmatpush1.bf16.msra.mxu0 %v1190
        %1495 = vmatprep.subr.bf16.mxu0 0
        %1496 = vmatpush1.bf16.msra.mxu0 %v1189
        %1497 = vmatprep.subr.bf16.mxu0 0
        %1498 = vmatpush1.bf16.msra.mxu0 %v1188
        %1499 = vmatprep.subr.bf16.mxu0 0
        %1500 = vmatpush1.bf16.msra.mxu0 %v1187
        %1501 = vmatprep.subr.bf16.mxu0 0
        %1502 = vmatpush1.bf16.msra.mxu0 %v1186
        %1503 = vmatprep.subr.bf16.mxu0 0
        %1504 = vmatpush1.bf16.msra.mxu0 %v1185
        %1505 = vmatprep.subr.bf16.mxu0 0
        %1506 = vmatpush2.bf16.msra.mxu0 %v1200
        %1507 = vmatprep.subr.bf16.mxu0 0
        %1508 = vmatpush2.bf16.msra.mxu0 %v1199
        %1509 = vmatprep.subr.bf16.mxu0 0
        %1510 = vmatpush2.bf16.msra.mxu0 %v1198
        %1511 = vmatprep.subr.bf16.mxu0 0
        %1512 = vmatpush2.bf16.msra.mxu0 %v1197
        %1513 = vmatprep.subr.bf16.mxu0 0
        %1514 = vmatpush2.bf16.msra.mxu0 %v1196
        %1515 = vmatprep.subr.bf16.mxu0 0
        %1516 = vmatpush2.bf16.msra.mxu0 %v1195
        %1517 = vmatprep.subr.bf16.mxu0 0
        %1518 = vmatpush2.bf16.msra.mxu0 %v1194
        %1519 = vmatprep.subr.bf16.mxu0 0
        %1520 = vmatpush2.bf16.msra.mxu0 %v1193
        %1521 = vmatprep.mubr.bf16.mxu0 %v571
        %1522 = vmatmul.mubr.bf16.gmra.mxu0 %v557
        %v1523 = vpop.f32.mrf.mxu0
        %v1524 = vadd.f32 %v1484, %v1523
        %v1525 = vpop.f32.mrf.mxu0
        %v1526 = vpop.f32.mrf.mxu0
        %v1527 = vpop.f32.mrf.mxu0
        %1528 = vdwg.mxu0
        %1529 = vmatprep.subr.bf16.mxu0 0
        %1530 = vmatpush1.bf16.msra.mxu0 %v1208
        %1531 = vmatprep.subr.bf16.mxu0 0
        %1532 = vmatpush1.bf16.msra.mxu0 %v1207
        %1533 = vmatprep.subr.bf16.mxu0 0
        %1534 = vmatpush1.bf16.msra.mxu0 %v1206
        %1535 = vmatprep.subr.bf16.mxu0 0
        %1536 = vmatpush1.bf16.msra.mxu0 %v1205
        %1537 = vmatprep.subr.bf16.mxu0 0
        %1538 = vmatpush1.bf16.msra.mxu0 %v1204
        %1539 = vmatprep.subr.bf16.mxu0 0
        %1540 = vmatpush1.bf16.msra.mxu0 %v1203
        %1541 = vmatprep.subr.bf16.mxu0 0
        %1542 = vmatpush1.bf16.msra.mxu0 %v1202
        %1543 = vmatprep.subr.bf16.mxu0 0
        %1544 = vmatpush1.bf16.msra.mxu0 %v1201
        %1545 = vmatprep.subr.bf16.mxu0 0
        %1546 = vmatpush2.bf16.msra.mxu0 %v1216
        %1547 = vmatprep.subr.bf16.mxu0 0
        %1548 = vmatpush2.bf16.msra.mxu0 %v1215
        %1549 = vmatprep.subr.bf16.mxu0 0
        %1550 = vmatpush2.bf16.msra.mxu0 %v1214
        %1551 = vmatprep.subr.bf16.mxu0 0
        %1552 = vmatpush2.bf16.msra.mxu0 %v1213
        %1553 = vmatprep.subr.bf16.mxu0 0
        %1554 = vmatpush2.bf16.msra.mxu0 %v1212
        %1555 = vmatprep.subr.bf16.mxu0 0
        %1556 = vmatpush2.bf16.msra.mxu0 %v1211
        %1557 = vmatprep.subr.bf16.mxu0 0
        %1558 = vmatpush2.bf16.msra.mxu0 %v1210
        %1559 = vmatprep.subr.bf16.mxu0 0
        %1560 = vmatpush2.bf16.msra.mxu0 %v1209
        %1561 = vmatprep.mubr.bf16.mxu0 %v575
        %1562 = vmatmul.mubr.bf16.gmra.mxu0 %v573
        %v1563 = vpop.f32.mrf.mxu0
        %v1564 = vadd.f32 %v1524, %v1563
        %v1565 = vpop.f32.mrf.mxu0
        %v1566 = vpop.f32.mrf.mxu0
        %v1567 = vpop.f32.mrf.mxu0
        %1568 = vdwg.mxu0
        %1569 = vmatprep.subr.bf16.mxu0 0
        %1570 = vmatpush1.bf16.msra.mxu0 %v1224
        %1571 = vmatprep.subr.bf16.mxu0 0
        %1572 = vmatpush1.bf16.msra.mxu0 %v1223
        %1573 = vmatprep.subr.bf16.mxu0 0
        %1574 = vmatpush1.bf16.msra.mxu0 %v1222
        %1575 = vmatprep.subr.bf16.mxu0 0
        %1576 = vmatpush1.bf16.msra.mxu0 %v1221
        %1577 = vmatprep.subr.bf16.mxu0 0
        %1578 = vmatpush1.bf16.msra.mxu0 %v1220
        %1579 = vmatprep.subr.bf16.mxu0 0
        %1580 = vmatpush1.bf16.msra.mxu0 %v1219
        %1581 = vmatprep.subr.bf16.mxu0 0
        %1582 = vmatpush1.bf16.msra.mxu0 %v1218
        %1583 = vmatprep.subr.bf16.mxu0 0
        %1584 = vmatpush1.bf16.msra.mxu0 %v1217
        %1585 = vmatprep.subr.bf16.mxu0 0
        %1586 = vmatpush2.bf16.msra.mxu0 %v1232
        %1587 = vmatprep.subr.bf16.mxu0 0
        %1588 = vmatpush2.bf16.msra.mxu0 %v1231
        %1589 = vmatprep.subr.bf16.mxu0 0
        %1590 = vmatpush2.bf16.msra.mxu0 %v1230
        %1591 = vmatprep.subr.bf16.mxu0 0
        %1592 = vmatpush2.bf16.msra.mxu0 %v1229
        %1593 = vmatprep.subr.bf16.mxu0 0
        %1594 = vmatpush2.bf16.msra.mxu0 %v1228
        %1595 = vmatprep.subr.bf16.mxu0 0
        %1596 = vmatpush2.bf16.msra.mxu0 %v1227
        %1597 = vmatprep.subr.bf16.mxu0 0
        %1598 = vmatpush2.bf16.msra.mxu0 %v1226
        %1599 = vmatprep.subr.bf16.mxu0 0
        %1600 = vmatpush2.bf16.msra.mxu0 %v1225
        %1601 = vmatprep.mubr.bf16.mxu0 %v613
        %1602 = vmatmul.mubr.bf16.gmra.mxu0 %v599
        %v1603 = vpop.f32.mrf.mxu0
        %v1604 = vadd.f32 %v1564, %v1603
        %v1605 = vpop.f32.mrf.mxu0
        %v1606 = vpop.f32.mrf.mxu0
        %v1607 = vpop.f32.mrf.mxu0
        %1608 = vdwg.mxu0
        %1609 = vmatprep.subr.bf16.mxu0 0
        %1610 = vmatpush1.bf16.msra.mxu0 %v1240
        %1611 = vmatprep.subr.bf16.mxu0 0
        %1612 = vmatpush1.bf16.msra.mxu0 %v1239
        %1613 = vmatprep.subr.bf16.mxu0 0
        %1614 = vmatpush1.bf16.msra.mxu0 %v1238
        %1615 = vmatprep.subr.bf16.mxu0 0
        %1616 = vmatpush1.bf16.msra.mxu0 %v1237
        %1617 = vmatprep.subr.bf16.mxu0 0
        %1618 = vmatpush1.bf16.msra.mxu0 %v1236
        %1619 = vmatprep.subr.bf16.mxu0 0
        %1620 = vmatpush1.bf16.msra.mxu0 %v1235
        %1621 = vmatprep.subr.bf16.mxu0 0
        %1622 = vmatpush1.bf16.msra.mxu0 %v1234
        %1623 = vmatprep.subr.bf16.mxu0 0
        %1624 = vmatpush1.bf16.msra.mxu0 %v1233
        %1625 = vmatprep.subr.bf16.mxu0 0
        %1626 = vmatpush2.bf16.msra.mxu0 %v1248
        %1627 = vmatprep.subr.bf16.mxu0 0
        %1628 = vmatpush2.bf16.msra.mxu0 %v1247
        %1629 = vmatprep.subr.bf16.mxu0 0
        %1630 = vmatpush2.bf16.msra.mxu0 %v1246
        %1631 = vmatprep.subr.bf16.mxu0 0
        %1632 = vmatpush2.bf16.msra.mxu0 %v1245
        %1633 = vmatprep.subr.bf16.mxu0 0
        %1634 = vmatpush2.bf16.msra.mxu0 %v1244
        %1635 = vmatprep.subr.bf16.mxu0 0
        %1636 = vmatpush2.bf16.msra.mxu0 %v1243
        %1637 = vmatprep.subr.bf16.mxu0 0
        %1638 = vmatpush2.bf16.msra.mxu0 %v1242
        %1639 = vmatprep.subr.bf16.mxu0 0
        %1640 = vmatpush2.bf16.msra.mxu0 %v1241
        %1641 = vmatprep.mubr.bf16.mxu0 %v623
        %1642 = vmatmul.mubr.bf16.gmra.mxu0 %v621
        %v1643 = vpop.f32.mrf.mxu0
        %v1644 = vadd.f32 %v1604, %v1643
        %v1645 = vpop.f32.mrf.mxu0
        %v1646 = vpop.f32.mrf.mxu0
        %v1647 = vpop.f32.mrf.mxu0
        %1648 = vdwg.mxu0
        %1649 = vmatprep.subr.bf16.mxu0 0
        %1650 = vmatpush1.bf16.msra.mxu0 %v1256
        %1651 = vmatprep.subr.bf16.mxu0 0
        %1652 = vmatpush1.bf16.msra.mxu0 %v1255
        %1653 = vmatprep.subr.bf16.mxu0 0
        %1654 = vmatpush1.bf16.msra.mxu0 %v1254
        %1655 = vmatprep.subr.bf16.mxu0 0
        %1656 = vmatpush1.bf16.msra.mxu0 %v1253
        %1657 = vmatprep.subr.bf16.mxu0 0
        %1658 = vmatpush1.bf16.msra.mxu0 %v1252
        %1659 = vmatprep.subr.bf16.mxu0 0
        %1660 = vmatpush1.bf16.msra.mxu0 %v1251
        %1661 = vmatprep.subr.bf16.mxu0 0
        %1662 = vmatpush1.bf16.msra.mxu0 %v1250
        %1663 = vmatprep.subr.bf16.mxu0 0
        %1664 = vmatpush1.bf16.msra.mxu0 %v1249
        %1665 = vmatprep.subr.bf16.mxu0 0
        %1666 = vmatpush2.bf16.msra.mxu0 %v1264
        %1667 = vmatprep.subr.bf16.mxu0 0
        %1668 = vmatpush2.bf16.msra.mxu0 %v1263
        %1669 = vmatprep.subr.bf16.mxu0 0
        %1670 = vmatpush2.bf16.msra.mxu0 %v1262
        %1671 = vmatprep.subr.bf16.mxu0 0
        %1672 = vmatpush2.bf16.msra.mxu0 %v1261
        %1673 = vmatprep.subr.bf16.mxu0 0
        %1674 = vmatpush2.bf16.msra.mxu0 %v1260
        %1675 = vmatprep.subr.bf16.mxu0 0
        %1676 = vmatpush2.bf16.msra.mxu0 %v1259
        %1677 = vmatprep.subr.bf16.mxu0 0
        %1678 = vmatpush2.bf16.msra.mxu0 %v1258
        %1679 = vmatprep.subr.bf16.mxu0 0
        %1680 = vmatpush2.bf16.msra.mxu0 %v1257
        %1681 = vmatprep.mubr.bf16.mxu0 %v620
        %1682 = vmatmul.mubr.bf16.gmra.mxu0 %v606
        %v1683 = vpop.f32.mrf.mxu0
        %v1684 = vadd.f32 %v1644, %v1683
        %v1685 = vpop.f32.mrf.mxu0
        %v1686 = vpop.f32.mrf.mxu0
        %v1687 = vpop.f32.mrf.mxu0
        %1688 = vdwg.mxu0
        %1689 = vmatprep.subr.bf16.mxu0 0
        %1690 = vmatpush1.bf16.msra.mxu0 %v1272
        %1691 = vmatprep.subr.bf16.mxu0 0
        %1692 = vmatpush1.bf16.msra.mxu0 %v1271
        %1693 = vmatprep.subr.bf16.mxu0 0
        %1694 = vmatpush1.bf16.msra.mxu0 %v1270
        %1695 = vmatprep.subr.bf16.mxu0 0
        %1696 = vmatpush1.bf16.msra.mxu0 %v1269
        %1697 = vmatprep.subr.bf16.mxu0 0
        %1698 = vmatpush1.bf16.msra.mxu0 %v1268
        %1699 = vmatprep.subr.bf16.mxu0 0
        %1700 = vmatpush1.bf16.msra.mxu0 %v1267
        %1701 = vmatprep.subr.bf16.mxu0 0
        %1702 = vmatpush1.bf16.msra.mxu0 %v1266
        %1703 = vmatprep.subr.bf16.mxu0 0
        %1704 = vmatpush1.bf16.msra.mxu0 %v1265
        %1705 = vmatprep.subr.bf16.mxu0 0
        %1706 = vmatpush2.bf16.msra.mxu0 %v1280
        %1707 = vmatprep.subr.bf16.mxu0 0
        %1708 = vmatpush2.bf16.msra.mxu0 %v1279
        %1709 = vmatprep.subr.bf16.mxu0 0
        %1710 = vmatpush2.bf16.msra.mxu0 %v1278
        %1711 = vmatprep.subr.bf16.mxu0 0
        %1712 = vmatpush2.bf16.msra.mxu0 %v1277
        %1713 = vmatprep.subr.bf16.mxu0 0
        %1714 = vmatpush2.bf16.msra.mxu0 %v1276
        %1715 = vmatprep.subr.bf16.mxu0 0
        %1716 = vmatpush2.bf16.msra.mxu0 %v1275
        %1717 = vmatprep.subr.bf16.mxu0 0
        %1718 = vmatpush2.bf16.msra.mxu0 %v1274
        %1719 = vmatprep.subr.bf16.mxu0 0
        %1720 = vmatpush2.bf16.msra.mxu0 %v1273
        %1721 = vmatprep.mubr.bf16.mxu0 %v624
        %1722 = vmatmul.mubr.bf16.gmra.mxu0 %v622
        %v1723 = vpop.f32.mrf.mxu0
        %v1724 = vadd.f32 %v1684, %v1723
        %v1725 = vpop.f32.mrf.mxu0
        %v1726 = vpop.f32.mrf.mxu0
        %v1727 = vpop.f32.mrf.mxu0
        %1728 = vdwg.mxu0
        %v1729 = vadd.f32 %v266, %v1724
        %vm1730 = vcmask 517120
        %1731 = vst.msk [vmem:[#allocation2] sm:$0x3] %vm1730, %v1729
        %p1732 = scmp.eq.s32.totalorder %s18, 3
        // Predicated region
        $region49: #{encoder_forward.7} parent=43 // pred_check
          %p1733 = pneg %p1732
        $region50: #{encoder_forward.7} parent=43 // pred_check_branch
          %1735 = sbr.rel (%p1733) target = $region52
        $region51: #{encoder_forward.7} parent=43 // pred_region
          %v1736 = vld [vmem:[#allocation2] sm:$0x3]
          %v1737 = vsel %vm1730, %v1736, 0.0
          %v1738 = vrot.slane %v1737, 4
          %v1739 = vadd.f32 %v1737, %v1738
          %v1740 = vrot.slane %v1739, 2
          %v1741 = vadd.f32 %v1739, %v1740
          %v1742 = vrot.slane %v1741, 1
          %v1743 = vadd.f32 %v1741, %v1742
          %v1744 = vrcp.pop 2.0
          %v1745 = vmul.f32 %v1743, %v1744
          %v1746 = vsub.f32 %v1736, %v1745
          %v1747 = vmul.f32 %v1746, %v1746
          %v1748 = vsel %vm1730, %v1747, 0.0
          %v1749 = vrot.slane %v1748, 4
          %v1750 = vadd.f32 %v1748, %v1749
          %v1751 = vrot.slane %v1750, 2
          %v1752 = vadd.f32 %v1750, %v1751
          %v1753 = vrot.slane %v1752, 1
          %v1754 = vadd.f32 %v1752, %v1753
          %v1755 = vmul.f32 %v1754, %v1744
          %v1756 = vadd.f32 %v1755, 1e-05
          %v1757 = vrsqrt.pop %v1756
          %v1758 = vmul.f32 %v1746, %v1757
          %v1759 = vld [vmem:[%s2] sm:$0x1]
          %v1761 = vlaneseq
          %v1762 = vshrl.u32 %v1761, 7
          %v1763 = vsub.s32 0, %v1762
          %v1764 = vrot.slane %v1759, %v1763
          %v1766 = vmul.f32 %v1758, %v1764
          %v1767 = vld [vmem:[%s3] sm:$0x1]
          %v1769 = vlaneseq
          %v1770 = vshrl.u32 %v1769, 7
          %v1771 = vsub.s32 0, %v1770
          %v1772 = vrot.slane %v1767, %v1771
          %v1774 = vadd.f32 %v1766, %v1772
          %vm1775 = vcmp.gt.f32.partialorder %v1774, 0.0
          %v1776 = vmul.f32 %v1774, 0.2
          %v1777 = vsel %vm1775, %v1774, %v1776
          %v1778 = vld [vmem:[%s4] sm:$0xff]
          %v1779 = vld [vmem:[%s4 + $0x8] sm:$0xff]
          %v1780 = vld [vmem:[%s4 + $0x10] sm:$0xff]
          %v1781 = vld [vmem:[%s4 + $0x18] sm:$0xff]
          %v1782 = vld [vmem:[%s4 + $0x20] sm:$0xff]
          %v1783 = vld [vmem:[%s4 + $0x28] sm:$0xff]
          %v1784 = vld [vmem:[%s4 + $0x30] sm:$0xff]
          %v1785 = vld [vmem:[%s4 + $0x38] sm:$0xff]
          %v1786 = vld [vmem:[%s5] sm:$0x1]
          %v1788 = vlaneseq
          %v1789 = vshrl.u32 %v1788, 7
          %v1790 = vsub.s32 0, %v1789
          %v1791 = vrot.slane %v1786, %v1790
          %vm1793 = vcmask 523264
          %v1795 = vsel %vm1793, %v1777, 0
          %1797 = vmatprep.subr.mxu0 0.0
          %1798 = vmatpush1.msra.mxu0 0.0
          %1799 = vmatprep.subr.mxu0 0.0
          %1800 = vmatpush1.msra.mxu0 0.0
          %1801 = vmatprep.subr.mxu0 0.0
          %1802 = vmatpush1.msra.mxu0 0.0
          %1803 = vmatprep.subr.mxu0 0.0
          %1804 = vmatpush1.msra.mxu0 0.0
          %1805 = vmatprep.subr.mxu0 0.0
          %1806 = vmatpush1.msra.mxu0 0.0
          %1807 = vmatprep.subr.mxu0 0.0
          %1808 = vmatpush1.msra.mxu0 0.0
          %1809 = vmatprep.subr.mxu0 0.0
          %1810 = vmatpush1.msra.mxu0 0.0
          %1811 = vmatprep.subr.mxu0 0.0
          %1812 = vmatpush1.msra.mxu0 0.0
          %1813 = vmatprep.subr.mxu0 0.0
          %1814 = vmatpush1.msra.mxu0 %v1785
          %1815 = vmatprep.subr.mxu0 0.0
          %1816 = vmatpush1.msra.mxu0 %v1784
          %1817 = vmatprep.subr.mxu0 0.0
          %1818 = vmatpush1.msra.mxu0 %v1783
          %1819 = vmatprep.subr.mxu0 0.0
          %1820 = vmatpush1.msra.mxu0 %v1782
          %1821 = vmatprep.subr.mxu0 0.0
          %1822 = vmatpush1.msra.mxu0 %v1781
          %1823 = vmatprep.subr.mxu0 0.0
          %1824 = vmatpush1.msra.mxu0 %v1780
          %1825 = vmatprep.subr.mxu0 0.0
          %1826 = vmatpush1.msra.mxu0 %v1779
          %1827 = vmatprep.subr.mxu0 0.0
          %1828 = vmatpush1.msra.mxu0 %v1778
          %1829 = vmatprep.subr.mxu0 0.0
          %1830 = vmatpush2.msra.mxu0 0.0
          %1831 = vmatprep.subr.mxu0 0.0
          %1832 = vmatpush2.msra.mxu0 0.0
          %1833 = vmatprep.subr.mxu0 0.0
          %1834 = vmatpush2.msra.mxu0 0.0
          %1835 = vmatprep.subr.mxu0 0.0
          %1836 = vmatpush2.msra.mxu0 0.0
          %1837 = vmatprep.subr.mxu0 0.0
          %1838 = vmatpush2.msra.mxu0 0.0
          %1839 = vmatprep.subr.mxu0 0.0
          %1840 = vmatpush2.msra.mxu0 0.0
          %1841 = vmatprep.subr.mxu0 0.0
          %1842 = vmatpush2.msra.mxu0 0.0
          %1843 = vmatprep.subr.mxu0 0.0
          %1844 = vmatpush2.msra.mxu0 0.0
          %1845 = vmatprep.subr.mxu0 0.0
          %1846 = vmatpush2.msra.mxu0 0.0
          %1847 = vmatprep.subr.mxu0 0.0
          %1848 = vmatpush2.msra.mxu0 0.0
          %1849 = vmatprep.subr.mxu0 0.0
          %1850 = vmatpush2.msra.mxu0 0.0
          %1851 = vmatprep.subr.mxu0 0.0
          %1852 = vmatpush2.msra.mxu0 0.0
          %1853 = vmatprep.subr.mxu0 0.0
          %1854 = vmatpush2.msra.mxu0 0.0
          %1855 = vmatprep.subr.mxu0 0.0
          %1856 = vmatpush2.msra.mxu0 0.0
          %1857 = vmatprep.subr.mxu0 0.0
          %1858 = vmatpush2.msra.mxu0 0.0
          %1859 = vmatprep.subr.mxu0 0.0
          %1860 = vmatpush2.msra.mxu0 0.0
          %1861 = vmatprep.mubr.f32.mxu0 0.0
          %1862 = vmatmul.mubr.f32.gmra.mxu0 %v1795
          %v1863 = vpop.f32.mrf.mxu0
          %v1864 = vadd.f32 %v1791, %v1863
          %v1865 = vpop.f32.mrf.mxu0
          %1866 = vdwg.mxu0
          %vm1867 = vcmask 58368
          %1868 = vst.msk [vmem:[#allocation3] sm:$0x3] %vm1867, %v1864
        $region52: #{encoder_forward.7} parent=43 // pred_fallthru
          _
        // Predicated region
        $region53: #{encoder_forward.7} parent=43 // pred_check
          %p1869 = pneg %p167
        $region54: #{encoder_forward.7} parent=43 // pred_check_branch
          %1871 = sbr.rel (%p1869) target = $region56
        $region55: #{encoder_forward.7} parent=43 // pred_region
          %s1873 = ssub.s32 32, 32
          %1874 = vsyncadd [#allocation4], %s1873
          %s1876 = sshll.u32 [#allocation3], 4
          %s1877 = int_to_ptr.vmem [resolvable:$true] %s1876
          %1879 = dma.vmem_to_hbm [thread:$0]  %s1877, 32, %s6, [#allocation4]
        $region56: #{encoder_forward.7} parent=43 // pred_fallthru
          _
        // Predicated region
        $region57: #{encoder_forward.7} parent=43 // pred_check
          %p1880 = pneg %p167
        $region58: #{encoder_forward.7} parent=43 // pred_check_branch
          %1882 = sbr.rel (%p1880) target = $region60
        $region59: #{encoder_forward.7} parent=43 // pred_region
          %1883 = dma.done [#allocation4], 32
        $region60: #{encoder_forward.7} parent=43 // pred_fallthru
          _
      $region44: #{encoder_forward.7} parent=5 // pred_fallthru
        _
      %p1884 = scmp.le.s32.totalorder 2, %s13
      // Predicated region
      $region61: #{encoder_forward.7} parent=5 // pred_check
        %p1885 = pneg %p1884
      $region62: #{encoder_forward.7} parent=5 // pred_check_branch
        %1887 = sbr.rel (%p1885) target = $region64
      $region63: #{encoder_forward.7} parent=5 // pred_region
        %s1888 = ssub.s32 %s13, 2
      $region64: #{encoder_forward.7} parent=5 // pred_fallthru
        _
    $region6: #{encoder_forward.7} parent=1 // loop_footer
      %s17 = sadd.s32 1, %s13
    $region7: #{encoder_forward.7} parent=1 // loop_footer_branch
      %12 = sbr.rel target = $region3
    $region8: #{encoder_forward.7} parent=1 // loop_exit
      _
    %1889 = vsyncpa [#allocation4], 1
    %s1890 = scalar_lea.sflag [#allocation4], 1
    %1891 = vsyncpa %s1890, 1

</llo_original>
